<compile_context>
chip_gen: v7x
topology: tpu7x:2x2x1
jax: 0.10.0
libtpu: 0.0.40
codegen_flags: <defaults>
</compile_context>

<pallas_src>
import jax
import jax.numpy as jnp
from jax.experimental import pallas as pl
from jax.experimental.pallas import tpu as pltpu

NEG_SLOPE = 0.2  # nn.LeakyReLU(0.2)


def _leaky_relu(t):
    # max(x, 0.2*x) == LeakyReLU(0.2) for slope < 1
    return jnp.maximum(t, NEG_SLOPE * t)


def _round_up(x, m):
    return ((x + m - 1) // m) * m


# ----------------------------------------------------------------------------
# Pallas kernel
# ----------------------------------------------------------------------------
def _make_kernel(nb, H, W, Wp, lpad, Cin, Cmid, Cout, use_downsample, mm_dtype):
    R = H * W
    M = nb * R  # matmul M dimension (nb images folded together)

    def body(x_ref, w1_ref, b1_ref, w2_ref, b2_ref, w3_ref, b3_ref, wd_ref,
             out_ref, pad_ref):
        x = x_ref[...].reshape(M, Cin)                        # (M, Cin)

        # --- LeakyReLU -> conv1 (1x1) -> LeakyReLU ---------------------------
        a = _leaky_relu(x)
        h1 = jnp.dot(a.astype(mm_dtype), w1_ref[...],
                     preferred_element_type=jnp.float32) + b1_ref[...]
        h1 = _leaky_relu(h1)                                  # (M, Cmid) f32

        # --- conv2: 3x3, stride 1, padding 1 ---------------------------------
        # Zero-haloed scratch, one slab per image: interior at column offset
        # `lpad` (a sublane-tile multiple for mm_dtype), >=1 zero column on
        # each side, zero rows top/bottom.  Halo is re-zeroed every step so
        # the kernel stays correct when the "parallel" grid is split across
        # TensorCores with per-core scratch; interior is overwritten anyway.
        pdt = pad_ref.dtype
        zrow = jnp.zeros((nb, 1, Wp, Cmid), pdt)
        pad_ref[:, 0:1, :, :] = zrow                          # top halo row
        pad_ref[:, H + 1:H + 2, :, :] = zrow                  # bottom halo row
        pad_ref[:, :, 0:lpad, :] = jnp.zeros((nb, H + 2, lpad, Cmid), pdt)
        pad_ref[:, :, lpad + W:Wp, :] = jnp.zeros(
            (nb, H + 2, Wp - lpad - W, Cmid), pdt)
        pad_ref[:, 1:H + 1, lpad:lpad + W, :] = (
            h1.reshape(nb, H, W, Cmid).astype(pdt))           # aligned write

        # Hoisted dx shifts: column offset (lpad-1+kx) for kx in {0,1,2}.
        # kx=1 is a plain aligned read; kx=0/2 are the only two sublane-shifted
        # (relayout) reads around the whole 3x3 conv.
        sh = [pad_ref[:, :, lpad - 1 + kx:lpad - 1 + kx + W, :]
              for kx in range(3)]                             # (nb, H+2, W, Cmid)

        # 9 accumulating tap matmuls into one f32 accumulator (no im2col
        # concat).  Taps are cheap dy slices of the hoisted shift buffers.
        acc = jnp.zeros((M, Cmid), jnp.float32)
        for ky in range(3):
            for kx in range(3):
                tap = sh[kx][:, ky:ky + H, :, :].reshape(M, Cmid)
                acc = acc + jnp.dot(tap, w2_ref[ky * 3 + kx],
                                    preferred_element_type=jnp.float32)
        h2 = _leaky_relu(acc + b2_ref[...])                   # (M, Cmid) f32

        # --- conv3 (1x1) + residual (1x1 downsample conv, no bias) ----------
        out = jnp.dot(h2.astype(mm_dtype), w3_ref[...],
                      preferred_element_type=jnp.float32) + b3_ref[...]
        if use_downsample:
            res = jnp.dot(x.astype(mm_dtype), wd_ref[...],
                          preferred_element_type=jnp.float32)
        else:
            res = x                           # only valid when Cin == Cout
        out_ref[...] = (out + res).reshape(nb, R, Cout).astype(out_ref.dtype)

    if use_downsample:
        def kernel(x_ref, w1_ref, b1_ref, w2_ref, b2_ref, w3_ref, b3_ref,
                   wd_ref, out_ref, pad_ref):
            body(x_ref, w1_ref, b1_ref, w2_ref, b2_ref, w3_ref, b3_ref,
                 wd_ref, out_ref, pad_ref)
    else:
        def kernel(x_ref, w1_ref, b1_ref, w2_ref, b2_ref, w3_ref, b3_ref,
                   out_ref, pad_ref):
            body(x_ref, w1_ref, b1_ref, w2_ref, b2_ref, w3_ref, b3_ref,
                 None, out_ref, pad_ref)
    return kernel


def _pick_images_per_step(N, R, Cin, Cout):
    # Fold several images into one grid step: amortizes ~0.35us/step overhead
    # and enlarges the matmul M dimension, while keeping per-step blocks small
    # enough to leave VMEM headroom (and grid steps for pipelining when the
    # batch is large).
    best = 1
    for nb in range(1, N + 1):
        if N % nb:
            continue
        if nb * R > 4096:                              # keep M per step bounded
            continue
        if nb * R * (Cin + Cout) * 4 > (8 << 20):      # keep blocks modest
            continue
        best = nb
    return best


# ----------------------------------------------------------------------------
# Channels-last entry point (preferred: no NCHW transposes)
# ----------------------------------------------------------------------------
def residual_block_forward_nhwc(x_nhwc, params, *, numIn, numOut, stride=1,
                                matmul_dtype=jnp.bfloat16,
                                out_dtype=jnp.float32):
    """ResidualBlock forward, (N, H, W, Cin) -> (N, H, W, Cout)."""
    assert stride == 1, "kernel implements the stride=1 (default) path"
    N, H, W, Cin = x_nhwc.shape
    assert Cin == numIn
    Cmid = numOut // 2
    Cout = numOut
    R = H * W

    # Faithfully reproduce the Python-precedence quirk of the PyTorch forward:
    #   `self.stride != 1 | self.numIn != self.numOut`
    # parses as the chained comparison
    #   (stride != (1 | numIn)) and ((1 | numIn) != numOut).
    use_downsample = (stride != (1 | numIn)) and ((1 | numIn) != numOut)
    if not use_downsample:
        assert numIn == numOut, "identity residual path requires numIn == numOut"

    w1, b1, w2, b2, w3, b3, wd = params
    # PyTorch OIHW conv weights -> matmul layouts (in, out); matmul operands in
    # matmul_dtype (MXU), biases stay f32.
    w1_k = jnp.transpose(w1[:, :, 0, 0]).astype(matmul_dtype)        # (Cin, Cmid)
    w2_k = jnp.transpose(w2, (2, 3, 1, 0)).reshape(9, Cmid, Cmid)
    w2_k = w2_k.astype(matmul_dtype)                                 # (9, Cmid, Cmid)
    w3_k = jnp.transpose(w3[:, :, 0, 0]).astype(matmul_dtype)        # (Cmid, Cout)
    b1_k = b1.reshape(1, Cmid).astype(jnp.float32)
    b2_k = b2.reshape(1, Cmid).astype(jnp.float32)
    b3_k = b3.reshape(1, Cout).astype(jnp.float32)

    x2 = x_nhwc.reshape(N, R, Cin)           # free reshape, channels on lanes

    nb = _pick_images_per_step(N, R, Cin, Cout)

    # Halo-scratch geometry: interior at sublane offset `lpad` (multiple of the
    # sublane tile for matmul_dtype) with >=1 zero column on each side; width
    # padded to a tile multiple so writes/centre reads are unmasked.
    mm_is = jnp.dtype(matmul_dtype).itemsize
    q = 8 * (4 // mm_is)                     # 8 rows (f32) / 16 rows (bf16)
    lpad = q
    Wp = lpad + _round_up(W + 1, q)

    def resident(arr):
        # Whole array resident in VMEM; constant block index, revisited every
        # step -> single-buffered (no point double-buffering weights).
        shape = arr.shape
        return pl.BlockSpec(shape, lambda n: (0,) * len(shape),
                            pipeline_mode=pl.Buffered(1))

    in_specs = [
        pl.BlockSpec((nb, R, Cin), lambda n: (n, 0, 0)),   # nb images / step
        resident(w1_k), resident(b1_k),
        resident(w2_k), resident(b2_k),
        resident(w3_k), resident(b3_k),
    ]
    args = [x2, w1_k, b1_k, w2_k, b2_k, w3_k, b3_k]
    if use_downsample:
        wd_k = jnp.transpose(wd[:, :, 0, 0]).astype(matmul_dtype)    # (Cin, Cout)
        in_specs.append(resident(wd_k))
        args.append(wd_k)
    # (when use_downsample is False, wd is neither converted nor DMA'd)

    kernel = _make_kernel(nb, H, W, Wp, lpad, Cin, Cmid, Cout,
                          use_downsample, matmul_dtype)

    # --- VMEM budget ---------------------------------------------------------
    x_is = jnp.dtype(x2.dtype).itemsize
    out_is = jnp.dtype(out_dtype).itemsize
    w_bytes = sum(int(a.size) * a.dtype.itemsize for a in args[1:])
    blk_bytes = nb * R * (Cin * x_is + Cout * out_is)    # per-step x + out block
    pad_bytes = nb * (H + 2) * Wp * Cmid * mm_is         # halo scratch
    sh_bytes = 3 * nb * (H + 2) * W * Cmid * mm_is       # hoisted dx-shift copies
    act_bytes = nb * R * (3 * Cmid + 2 * Cout) * 4       # h1/acc/h2 + out/res f32
    needed = (2 * blk_bytes          # x/out double-buffered
              + w_bytes              # weights single-buffered (Buffered(1))
              + pad_bytes + sh_bytes + act_bytes
              + (8 << 20))           # compiler temporaries headroom
    try:
        phys = int(pltpu.get_tpu_info().vmem_capacity_bytes)
    except Exception:
        phys = 64 << 20                                  # conservative (v7x)
    vmem_limit = int(max(16 << 20, min(needed, int(phys * 0.85))))

    ds_flops = (Cin * Cout) if use_downsample else 0
    cost = pl.CostEstimate(
        flops=2 * N * R * (Cin * Cmid + 9 * Cmid * Cmid + Cmid * Cout + ds_flops),
        transcendentals=0,
        bytes_accessed=int(x2.size * x_is + N * R * Cout * out_is + w_bytes),
    )

    out2 = pl.pallas_call(
        kernel,
        out_shape=jax.ShapeDtypeStruct((N, R, Cout), out_dtype),
        grid=(N // nb,),
        in_specs=in_specs,
        out_specs=pl.BlockSpec((nb, R, Cout), lambda n: (n, 0, 0)),
        scratch_shapes=[pltpu.VMEM((nb, H + 2, Wp, Cmid), matmul_dtype)],
        compiler_params=pltpu.CompilerParams(
            dimension_semantics=("parallel",),
            vmem_limit_bytes=vmem_limit),
        cost_estimate=cost,
    )(*args)

    return out2.reshape(N, H, W, Cout)


# ----------------------------------------------------------------------------
# NCHW adapter matching the PyTorch module interface
# ----------------------------------------------------------------------------
def residual_block_forward(x_nchw, params, *, numIn, numOut, stride=1,
                           matmul_dtype=jnp.bfloat16, out_dtype=jnp.float32):
    # NOTE: in a full network keep activations channels-last (and bf16) between
    # blocks and call residual_block_forward_nhwc directly -- these transposes
    # are full HBM round-trips of the activation.
    x_nhwc = jnp.transpose(x_nchw, (0, 2, 3, 1))
    out = residual_block_forward_nhwc(x_nhwc, params, numIn=numIn,
                                      numOut=numOut, stride=stride,
                                      matmul_dtype=matmul_dtype,
                                      out_dtype=out_dtype)
    return jnp.transpose(out, (0, 3, 1, 2))                          # NCHW


# ----------------------------------------------------------------------------
# Deterministic parameter setup (synthetic, not a checkpoint load)
# ----------------------------------------------------------------------------
def spectral_normalize(w, key, n_iters=50):
    # spectral_norm divides the weight by its largest singular value, estimated
    # by power iteration on weight.reshape(out, -1).  PyTorch runs one step per
    # forward against a persistent random `u`; here we run it to convergence
    # (same fixed point), deterministically, as parameter-setup glue.
    out_c = w.shape[0]
    w_mat = w.reshape(out_c, -1)
    u = jax.random.normal(key, (out_c,), jnp.float32)
    u = u / (jnp.linalg.norm(u) + 1e-12)
    v = w_mat.T @ u
    for _ in range(n_iters):
        v = w_mat.T @ u
        v = v / (jnp.linalg.norm(v) + 1e-12)
        u = w_mat @ v
        u = u / (jnp.linalg.norm(u) + 1e-12)
    sigma = jnp.dot(u, w_mat @ v)
    return w / sigma


def init_params(key, numIn, numOut):
    Cmid = numOut // 2
    ks = jax.random.split(key, 11)
    w1 = jax.random.normal(ks[0], (Cmid, numIn, 1, 1), jnp.float32) * 0.1
    b1 = jax.random.normal(ks[1], (Cmid,), jnp.float32) * 0.1
    w2 = jax.random.normal(ks[2], (Cmid, Cmid, 3, 3), jnp.float32) * 0.1
    b2 = jax.random.normal(ks[3], (Cmid,), jnp.float32) * 0.1
    w3 = jax.random.normal(ks[4], (numOut, Cmid, 1, 1), jnp.float32) * 0.1
    b3 = jax.random.normal(ks[5], (numOut,), jnp.float32) * 0.1
    wd = jax.random.normal(ks[6], (numOut, numIn, 1, 1), jnp.float32) * 0.1
    # spectral_norm wraps weights only (biases untouched)
    w1 = spectral_normalize(w1, ks[7])
    w2 = spectral_normalize(w2, ks[8])
    w3 = spectral_normalize(w3, ks[9])
    wd = spectral_normalize(wd, ks[10])
    return (w1, b1, w2, b2, w3, b3, wd)


# ----------------------------------------------------------------------------
# Pure-JAX reference (sanity check only)
# ----------------------------------------------------------------------------
def reference_forward(x, params, *, numIn, numOut, stride=1):
    w1, b1, w2, b2, w3, b3, wd = params

    def conv(t, w, b=None, stride=1, pad=0):
        o = jax.lax.conv_general_dilated(
            t, w, window_strides=(stride, stride),
            padding=[(pad, pad), (pad, pad)],
            dimension_numbers=("NCHW", "OIHW", "NCHW"),
            precision=jax.lax.Precision.HIGHEST)
        if b is not None:
            o = o + b.reshape(1, -1, 1, 1)
        return o

    residual = x
    h = _leaky_relu(x)
    h = conv(h, w1, b1)
    h = _leaky_relu(h)
    h = conv(h, w2, b2, stride=stride, pad=1)
    h = _leaky_relu(h)
    out = conv(h, w3, b3)
    if (stride != (1 | numIn)) and ((1 | numIn) != numOut):
        residual = conv(residual, wd, stride=stride)
    return out + residual


# ----------------------------------------------------------------------------
if __name__ == "__main__":
    numIn, numOut, stride = 16, 32, 1
    N, H, W = 2, 16, 16

    key = jax.random.PRNGKey(0)
    kx, kp = jax.random.split(key)
    x = jax.random.normal(kx, (N, numIn, H, W), jnp.float32)  # NCHW, like PyTorch
    params = init_params(kp, numIn, numOut)

    ref = reference_forward(x, params, numIn=numIn, numOut=numOut, stride=stride)

    # 1) f32 matmuls: must match the lax.conv reference tightly.
    out_f32 = residual_block_forward(x, params, numIn=numIn, numOut=numOut,
                                     stride=stride, matmul_dtype=jnp.float32)
    out_f32 = jax.block_until_ready(out_f32)
    assert out_f32.shape == (N, numOut, H, W)
    err_f32 = float(jnp.max(jnp.abs(out_f32 - ref)))
    assert err_f32 < 1e-3, f"f32 kernel mismatch vs reference: {err_f32}"

    # 2) bf16 matmul operands, f32 accumulation: the performance config.
    out_bf16 = residual_block_forward(x, params, numIn=numIn, numOut=numOut,
                                      stride=stride, matmul_dtype=jnp.bfloat16)
    out_bf16 = jax.block_until_ready(out_bf16)
    assert out_bf16.shape == (N, numOut, H, W)
    err_bf16 = float(jnp.max(jnp.abs(out_bf16 - ref)))
    assert err_bf16 < 5e-2, f"bf16 kernel mismatch vs reference: {err_bf16}"

    print("KERNEL_OK")
</pallas_src>

<mosaic_0001>
module attributes {stable_mosaic.version = 11 : i64} {
  func.func @kernel(%arg0: i32, %arg1: memref<2x256x16xf32, #tpu.memory_space<vmem>>, %arg2: memref<16x16xf32, #tpu.memory_space<vmem>>, %arg3: memref<1x16xf32, #tpu.memory_space<vmem>>, %arg4: memref<9x16x16xf32, #tpu.memory_space<vmem>>, %arg5: memref<1x16xf32, #tpu.memory_space<vmem>>, %arg6: memref<16x32xf32, #tpu.memory_space<vmem>>, %arg7: memref<1x32xf32, #tpu.memory_space<vmem>>, %arg8: memref<16x32xf32, #tpu.memory_space<vmem>>, %arg9: memref<2x256x32xf32, #tpu.memory_space<vmem>>, %arg10: memref<2x18x32x16xf32, #tpu.memory_space<vmem>>) attributes {dimension_semantics = [#tpu.dimension_semantics<parallel>], iteration_bounds = array<i64: 1>, scalar_prefetch = 0 : i64, scratch_operands = 1 : i64, tpu.core_type = #tpu.core_type<tc>, window_params = [{transform_indices = @transform_0, window_bounds = array<i64: 2, 256, 16>}, {pipeline_mode = #tpu.pipeline_mode<synchronous>, transform_indices = @transform_1, window_bounds = array<i64: 16, 16>}, {pipeline_mode = #tpu.pipeline_mode<synchronous>, transform_indices = @transform_2, window_bounds = array<i64: 1, 16>}, {pipeline_mode = #tpu.pipeline_mode<synchronous>, transform_indices = @transform_3, window_bounds = array<i64: 9, 16, 16>}, {pipeline_mode = #tpu.pipeline_mode<synchronous>, transform_indices = @transform_4, window_bounds = array<i64: 1, 16>}, {pipeline_mode = #tpu.pipeline_mode<synchronous>, transform_indices = @transform_5, window_bounds = array<i64: 16, 32>}, {pipeline_mode = #tpu.pipeline_mode<synchronous>, transform_indices = @transform_6, window_bounds = array<i64: 1, 32>}, {pipeline_mode = #tpu.pipeline_mode<synchronous>, transform_indices = @transform_7, window_bounds = array<i64: 16, 32>}, {transform_indices = @transform_8, window_bounds = array<i64: 2, 256, 32>}]} {
    %c0 = arith.constant 0 : index
    %c0_0 = arith.constant 0 : index
    %c0_1 = arith.constant 0 : index
    %0 = vector.load %arg1[%c0, %c0_0, %c0_1] : memref<2x256x16xf32, #tpu.memory_space<vmem>>, vector<2x256x16xf32>
    %1 = vector.shape_cast %0 : vector<2x256x16xf32> to vector<512x16xf32>
    %cst = arith.constant 2.000000e-01 : f32
    %2 = vector.broadcast %cst : f32 to vector<512x16xf32>
    %3 = arith.mulf %2, %1 : vector<512x16xf32>
    %4 = arith.maximumf %1, %3 : vector<512x16xf32>
    %c0_2 = arith.constant 0 : index
    %c0_3 = arith.constant 0 : index
    %5 = vector.load %arg2[%c0_2, %c0_3] : memref<16x16xf32, #tpu.memory_space<vmem>>, vector<16x16xf32>
    %cst_4 = arith.constant dense<0.000000e+00> : vector<512x16xf32>
    %6 = tpu.matmul %4, %5, %cst_4 {dimension_numbers = #tpu.dot_dimension_numbers<[1], [0], [0], [1], [0, 0, 1, 1], [], []>} : vector<512x16xf32>, vector<16x16xf32>, vector<512x16xf32> -> vector<512x16xf32>
    %c0_5 = arith.constant 0 : index
    %c0_6 = arith.constant 0 : index
    %7 = vector.load %arg3[%c0_5, %c0_6] : memref<1x16xf32, #tpu.memory_space<vmem>>, vector<1x16xf32>
    %8 = vector.broadcast %7 : vector<1x16xf32> to vector<512x16xf32>
    %9 = arith.addf %6, %8 : vector<512x16xf32>
    %cst_7 = arith.constant 2.000000e-01 : f32
    %10 = vector.broadcast %cst_7 : f32 to vector<512x16xf32>
    %11 = arith.mulf %10, %9 : vector<512x16xf32>
    %12 = arith.maximumf %9, %11 : vector<512x16xf32>
    %cst_8 = arith.constant 0.000000e+00 : f32
    %13 = vector.broadcast %cst_8 : f32 to vector<2x1x32x16xf32>
    %c0_9 = arith.constant 0 : index
    %c0_10 = arith.constant 0 : index
    %c0_11 = arith.constant 0 : index
    %c0_12 = arith.constant 0 : index
    %14 = vector.load %arg10[%c0_9, %c0_10, %c0_11, %c0_12] : memref<2x18x32x16xf32, #tpu.memory_space<vmem>>, vector<2x1x32x16xf32>
    tpu.vector_store %arg10[%c0_9, %c0_10, %c0_11, %c0_12], %13 {strides = array<i32>} : memref<2x18x32x16xf32, #tpu.memory_space<vmem>>, vector<2x1x32x16xf32>,
    %c0_13 = arith.constant 0 : index
    %c17 = arith.constant 17 : index
    %c0_14 = arith.constant 0 : index
    %c0_15 = arith.constant 0 : index
    %15 = vector.load %arg10[%c0_13, %c17, %c0_14, %c0_15] : memref<2x18x32x16xf32, #tpu.memory_space<vmem>>, vector<2x1x32x16xf32>
    tpu.vector_store %arg10[%c0_13, %c17, %c0_14, %c0_15], %13 {strides = array<i32>} : memref<2x18x32x16xf32, #tpu.memory_space<vmem>>, vector<2x1x32x16xf32>,
    %cst_16 = arith.constant 0.000000e+00 : f32
    %16 = vector.broadcast %cst_16 : f32 to vector<2x18x8x16xf32>
    %c0_17 = arith.constant 0 : index
    %c0_18 = arith.constant 0 : index
    %c0_19 = arith.constant 0 : index
    %c0_20 = arith.constant 0 : index
    %17 = vector.load %arg10[%c0_17, %c0_18, %c0_19, %c0_20] : memref<2x18x32x16xf32, #tpu.memory_space<vmem>>, vector<2x18x8x16xf32>
    tpu.vector_store %arg10[%c0_17, %c0_18, %c0_19, %c0_20], %16 {strides = array<i32>} : memref<2x18x32x16xf32, #tpu.memory_space<vmem>>, vector<2x18x8x16xf32>,
    %cst_21 = arith.constant 0.000000e+00 : f32
    %18 = vector.broadcast %cst_21 : f32 to vector<2x18x8x16xf32>
    %c0_22 = arith.constant 0 : index
    %c0_23 = arith.constant 0 : index
    %c24 = arith.constant 24 : index
    %c0_24 = arith.constant 0 : index
    %19 = vector.load %arg10[%c0_22, %c0_23, %c24, %c0_24] : memref<2x18x32x16xf32, #tpu.memory_space<vmem>>, vector<2x18x8x16xf32>
    tpu.vector_store %arg10[%c0_22, %c0_23, %c24, %c0_24], %18 {strides = array<i32>} : memref<2x18x32x16xf32, #tpu.memory_space<vmem>>, vector<2x18x8x16xf32>,
    %20 = vector.shape_cast %12 : vector<512x16xf32> to vector<2x16x16x16xf32>
    %c0_25 = arith.constant 0 : index
    %c1 = arith.constant 1 : index
    %c8 = arith.constant 8 : index
    %c0_26 = arith.constant 0 : index
    %21 = vector.load %arg10[%c0_25, %c1, %c8, %c0_26] : memref<2x18x32x16xf32, #tpu.memory_space<vmem>>, vector<2x16x16x16xf32>
    tpu.vector_store %arg10[%c0_25, %c1, %c8, %c0_26], %20 {strides = array<i32>} : memref<2x18x32x16xf32, #tpu.memory_space<vmem>>, vector<2x16x16x16xf32>,
    %c0_27 = arith.constant 0 : index
    %c0_28 = arith.constant 0 : index
    %c7 = arith.constant 7 : index
    %c0_29 = arith.constant 0 : index
    %22 = vector.load %arg10[%c0_27, %c0_28, %c7, %c0_29] : memref<2x18x32x16xf32, #tpu.memory_space<vmem>>, vector<2x18x16x16xf32>
    %c0_30 = arith.constant 0 : index
    %c0_31 = arith.constant 0 : index
    %c8_32 = arith.constant 8 : index
    %c0_33 = arith.constant 0 : index
    %23 = vector.load %arg10[%c0_30, %c0_31, %c8_32, %c0_33] : memref<2x18x32x16xf32, #tpu.memory_space<vmem>>, vector<2x18x16x16xf32>
    %c0_34 = arith.constant 0 : index
    %c0_35 = arith.constant 0 : index
    %c9 = arith.constant 9 : index
    %c0_36 = arith.constant 0 : index
    %24 = vector.load %arg10[%c0_34, %c0_35, %c9, %c0_36] : memref<2x18x32x16xf32, #tpu.memory_space<vmem>>, vector<2x18x16x16xf32>
    %cst_37 = arith.constant 0.000000e+00 : f32
    %25 = vector.broadcast %cst_37 : f32 to vector<512x16xf32>
    %26 = vector.extract_strided_slice %22 {offsets = [0, 0, 0, 0], sizes = [2, 16, 16, 16], strides = [1, 1, 1, 1]} : vector<2x18x16x16xf32> to vector<2x16x16x16xf32>
    %27 = vector.shape_cast %26 : vector<2x16x16x16xf32> to vector<512x16xf32>
    %c0_38 = arith.constant 0 : index
    %c0_39 = arith.constant 0 : index
    %c0_40 = arith.constant 0 : index
    %28 = vector.load %arg4[%c0_38, %c0_39, %c0_40] : memref<9x16x16xf32, #tpu.memory_space<vmem>>, vector<1x16x16xf32>
    %29 = vector.shape_cast %28 : vector<1x16x16xf32> to vector<16x16xf32>
    %cst_41 = arith.constant dense<0.000000e+00> : vector<512x16xf32>
    %30 = tpu.matmul %27, %29, %cst_41 {dimension_numbers = #tpu.dot_dimension_numbers<[1], [0], [0], [1], [0, 0, 1, 1], [], []>} : vector<512x16xf32>, vector<16x16xf32>, vector<512x16xf32> -> vector<512x16xf32>
    %31 = arith.addf %25, %30 : vector<512x16xf32>
    %32 = vector.extract_strided_slice %23 {offsets = [0, 0, 0, 0], sizes = [2, 16, 16, 16], strides = [1, 1, 1, 1]} : vector<2x18x16x16xf32> to vector<2x16x16x16xf32>
    %33 = vector.shape_cast %32 : vector<2x16x16x16xf32> to vector<512x16xf32>
    %c1_42 = arith.constant 1 : index
    %c0_43 = arith.constant 0 : index
    %c0_44 = arith.constant 0 : index
    %34 = vector.load %arg4[%c1_42, %c0_43, %c0_44] : memref<9x16x16xf32, #tpu.memory_space<vmem>>, vector<1x16x16xf32>
    %35 = vector.shape_cast %34 : vector<1x16x16xf32> to vector<16x16xf32>
    %cst_45 = arith.constant dense<0.000000e+00> : vector<512x16xf32>
    %36 = tpu.matmul %33, %35, %cst_45 {dimension_numbers = #tpu.dot_dimension_numbers<[1], [0], [0], [1], [0, 0, 1, 1], [], []>} : vector<512x16xf32>, vector<16x16xf32>, vector<512x16xf32> -> vector<512x16xf32>
    %37 = arith.addf %31, %36 : vector<512x16xf32>
    %38 = vector.extract_strided_slice %24 {offsets = [0, 0, 0, 0], sizes = [2, 16, 16, 16], strides = [1, 1, 1, 1]} : vector<2x18x16x16xf32> to vector<2x16x16x16xf32>
    %39 = vector.shape_cast %38 : vector<2x16x16x16xf32> to vector<512x16xf32>
    %c2 = arith.constant 2 : index
    %c0_46 = arith.constant 0 : index
    %c0_47 = arith.constant 0 : index
    %40 = vector.load %arg4[%c2, %c0_46, %c0_47] : memref<9x16x16xf32, #tpu.memory_space<vmem>>, vector<1x16x16xf32>
    %41 = vector.shape_cast %40 : vector<1x16x16xf32> to vector<16x16xf32>
    %cst_48 = arith.constant dense<0.000000e+00> : vector<512x16xf32>
    %42 = tpu.matmul %39, %41, %cst_48 {dimension_numbers = #tpu.dot_dimension_numbers<[1], [0], [0], [1], [0, 0, 1, 1], [], []>} : vector<512x16xf32>, vector<16x16xf32>, vector<512x16xf32> -> vector<512x16xf32>
    %43 = arith.addf %37, %42 : vector<512x16xf32>
    %44 = vector.extract_strided_slice %22 {offsets = [0, 1, 0, 0], sizes = [2, 16, 16, 16], strides = [1, 1, 1, 1]} : vector<2x18x16x16xf32> to vector<2x16x16x16xf32>
    %45 = vector.shape_cast %44 : vector<2x16x16x16xf32> to vector<512x16xf32>
    %c3 = arith.constant 3 : index
    %c0_49 = arith.constant 0 : index
    %c0_50 = arith.constant 0 : index
    %46 = vector.load %arg4[%c3, %c0_49, %c0_50] : memref<9x16x16xf32, #tpu.memory_space<vmem>>, vector<1x16x16xf32>
    %47 = vector.shape_cast %46 : vector<1x16x16xf32> to vector<16x16xf32>
    %cst_51 = arith.constant dense<0.000000e+00> : vector<512x16xf32>
    %48 = tpu.matmul %45, %47, %cst_51 {dimension_numbers = #tpu.dot_dimension_numbers<[1], [0], [0], [1], [0, 0, 1, 1], [], []>} : vector<512x16xf32>, vector<16x16xf32>, vector<512x16xf32> -> vector<512x16xf32>
    %49 = arith.addf %43, %48 : vector<512x16xf32>
    %50 = vector.extract_strided_slice %23 {offsets = [0, 1, 0, 0], sizes = [2, 16, 16, 16], strides = [1, 1, 1, 1]} : vector<2x18x16x16xf32> to vector<2x16x16x16xf32>
    %51 = vector.shape_cast %50 : vector<2x16x16x16xf32> to vector<512x16xf32>
    %c4 = arith.constant 4 : index
    %c0_52 = arith.constant 0 : index
    %c0_53 = arith.constant 0 : index
    %52 = vector.load %arg4[%c4, %c0_52, %c0_53] : memref<9x16x16xf32, #tpu.memory_space<vmem>>, vector<1x16x16xf32>
    %53 = vector.shape_cast %52 : vector<1x16x16xf32> to vector<16x16xf32>
    %cst_54 = arith.constant dense<0.000000e+00> : vector<512x16xf32>
    %54 = tpu.matmul %51, %53, %cst_54 {dimension_numbers = #tpu.dot_dimension_numbers<[1], [0], [0], [1], [0, 0, 1, 1], [], []>} : vector<512x16xf32>, vector<16x16xf32>, vector<512x16xf32> -> vector<512x16xf32>
    %55 = arith.addf %49, %54 : vector<512x16xf32>
    %56 = vector.extract_strided_slice %24 {offsets = [0, 1, 0, 0], sizes = [2, 16, 16, 16], strides = [1, 1, 1, 1]} : vector<2x18x16x16xf32> to vector<2x16x16x16xf32>
    %57 = vector.shape_cast %56 : vector<2x16x16x16xf32> to vector<512x16xf32>
    %c5 = arith.constant 5 : index
    %c0_55 = arith.constant 0 : index
    %c0_56 = arith.constant 0 : index
    %58 = vector.load %arg4[%c5, %c0_55, %c0_56] : memref<9x16x16xf32, #tpu.memory_space<vmem>>, vector<1x16x16xf32>
    %59 = vector.shape_cast %58 : vector<1x16x16xf32> to vector<16x16xf32>
    %cst_57 = arith.constant dense<0.000000e+00> : vector<512x16xf32>
    %60 = tpu.matmul %57, %59, %cst_57 {dimension_numbers = #tpu.dot_dimension_numbers<[1], [0], [0], [1], [0, 0, 1, 1], [], []>} : vector<512x16xf32>, vector<16x16xf32>, vector<512x16xf32> -> vector<512x16xf32>
    %61 = arith.addf %55, %60 : vector<512x16xf32>
    %62 = vector.extract_strided_slice %22 {offsets = [0, 2, 0, 0], sizes = [2, 16, 16, 16], strides = [1, 1, 1, 1]} : vector<2x18x16x16xf32> to vector<2x16x16x16xf32>
    %63 = vector.shape_cast %62 : vector<2x16x16x16xf32> to vector<512x16xf32>
    %c6 = arith.constant 6 : index
    %c0_58 = arith.constant 0 : index
    %c0_59 = arith.constant 0 : index
    %64 = vector.load %arg4[%c6, %c0_58, %c0_59] : memref<9x16x16xf32, #tpu.memory_space<vmem>>, vector<1x16x16xf32>
    %65 = vector.shape_cast %64 : vector<1x16x16xf32> to vector<16x16xf32>
    %cst_60 = arith.constant dense<0.000000e+00> : vector<512x16xf32>
    %66 = tpu.matmul %63, %65, %cst_60 {dimension_numbers = #tpu.dot_dimension_numbers<[1], [0], [0], [1], [0, 0, 1, 1], [], []>} : vector<512x16xf32>, vector<16x16xf32>, vector<512x16xf32> -> vector<512x16xf32>
    %67 = arith.addf %61, %66 : vector<512x16xf32>
    %68 = vector.extract_strided_slice %23 {offsets = [0, 2, 0, 0], sizes = [2, 16, 16, 16], strides = [1, 1, 1, 1]} : vector<2x18x16x16xf32> to vector<2x16x16x16xf32>
    %69 = vector.shape_cast %68 : vector<2x16x16x16xf32> to vector<512x16xf32>
    %c7_61 = arith.constant 7 : index
    %c0_62 = arith.constant 0 : index
    %c0_63 = arith.constant 0 : index
    %70 = vector.load %arg4[%c7_61, %c0_62, %c0_63] : memref<9x16x16xf32, #tpu.memory_space<vmem>>, vector<1x16x16xf32>
    %71 = vector.shape_cast %70 : vector<1x16x16xf32> to vector<16x16xf32>
    %cst_64 = arith.constant dense<0.000000e+00> : vector<512x16xf32>
    %72 = tpu.matmul %69, %71, %cst_64 {dimension_numbers = #tpu.dot_dimension_numbers<[1], [0], [0], [1], [0, 0, 1, 1], [], []>} : vector<512x16xf32>, vector<16x16xf32>, vector<512x16xf32> -> vector<512x16xf32>
    %73 = arith.addf %67, %72 : vector<512x16xf32>
    %74 = vector.extract_strided_slice %24 {offsets = [0, 2, 0, 0], sizes = [2, 16, 16, 16], strides = [1, 1, 1, 1]} : vector<2x18x16x16xf32> to vector<2x16x16x16xf32>
    %75 = vector.shape_cast %74 : vector<2x16x16x16xf32> to vector<512x16xf32>
    %c8_65 = arith.constant 8 : index
    %c0_66 = arith.constant 0 : index
    %c0_67 = arith.constant 0 : index
    %76 = vector.load %arg4[%c8_65, %c0_66, %c0_67] : memref<9x16x16xf32, #tpu.memory_space<vmem>>, vector<1x16x16xf32>
    %77 = vector.shape_cast %76 : vector<1x16x16xf32> to vector<16x16xf32>
    %cst_68 = arith.constant dense<0.000000e+00> : vector<512x16xf32>
    %78 = tpu.matmul %75, %77, %cst_68 {dimension_numbers = #tpu.dot_dimension_numbers<[1], [0], [0], [1], [0, 0, 1, 1], [], []>} : vector<512x16xf32>, vector<16x16xf32>, vector<512x16xf32> -> vector<512x16xf32>
    %79 = arith.addf %73, %78 : vector<512x16xf32>
    %c0_69 = arith.constant 0 : index
    %c0_70 = arith.constant 0 : index
    %80 = vector.load %arg5[%c0_69, %c0_70] : memref<1x16xf32, #tpu.memory_space<vmem>>, vector<1x16xf32>
    %81 = vector.broadcast %80 : vector<1x16xf32> to vector<512x16xf32>
    %82 = arith.addf %79, %81 : vector<512x16xf32>
    %cst_71 = arith.constant 2.000000e-01 : f32
    %83 = vector.broadcast %cst_71 : f32 to vector<512x16xf32>
    %84 = arith.mulf %83, %82 : vector<512x16xf32>
    %85 = arith.maximumf %82, %84 : vector<512x16xf32>
    %c0_72 = arith.constant 0 : index
    %c0_73 = arith.constant 0 : index
    %86 = vector.load %arg6[%c0_72, %c0_73] : memref<16x32xf32, #tpu.memory_space<vmem>>, vector<16x32xf32>
    %cst_74 = arith.constant dense<0.000000e+00> : vector<512x32xf32>
    %87 = tpu.matmul %85, %86, %cst_74 {dimension_numbers = #tpu.dot_dimension_numbers<[1], [0], [0], [1], [0, 0, 1, 1], [], []>} : vector<512x16xf32>, vector<16x32xf32>, vector<512x32xf32> -> vector<512x32xf32>
    %c0_75 = arith.constant 0 : index
    %c0_76 = arith.constant 0 : index
    %88 = vector.load %arg7[%c0_75, %c0_76] : memref<1x32xf32, #tpu.memory_space<vmem>>, vector<1x32xf32>
    %89 = vector.broadcast %88 : vector<1x32xf32> to vector<512x32xf32>
    %90 = arith.addf %87, %89 : vector<512x32xf32>
    %c0_77 = arith.constant 0 : index
    %c0_78 = arith.constant 0 : index
    %91 = vector.load %arg8[%c0_77, %c0_78] : memref<16x32xf32, #tpu.memory_space<vmem>>, vector<16x32xf32>
    %cst_79 = arith.constant dense<0.000000e+00> : vector<512x32xf32>
    %92 = tpu.matmul %1, %91, %cst_79 {dimension_numbers = #tpu.dot_dimension_numbers<[1], [0], [0], [1], [0, 0, 1, 1], [], []>} : vector<512x16xf32>, vector<16x32xf32>, vector<512x32xf32> -> vector<512x32xf32>
    %93 = arith.addf %90, %92 : vector<512x32xf32>
    %94 = vector.shape_cast %93 : vector<512x32xf32> to vector<2x256x32xf32>
    %c0_80 = arith.constant 0 : index
    %c0_81 = arith.constant 0 : index
    %c0_82 = arith.constant 0 : index
    %95 = vector.load %arg9[%c0_80, %c0_81, %c0_82] : memref<2x256x32xf32, #tpu.memory_space<vmem>>, vector<2x256x32xf32>
    tpu.vector_store %arg9[%c0_80, %c0_81, %c0_82], %94 {strides = array<i32>} : memref<2x256x32xf32, #tpu.memory_space<vmem>>, vector<2x256x32xf32>,
    return
  }
  func.func @transform_0(%arg0: i32) -> (i32, i32, i32) {
    %c0_i32 = arith.constant 0 : i32
    %c0_i32_0 = arith.constant 0 : i32
    %c0_i32_1 = arith.constant 0 : i32
    return %arg0, %c0_i32, %c0_i32_0 : i32, i32, i32
  }
  func.func @transform_1(%arg0: i32) -> (i32, i32) {
    %c0_i32 = arith.constant 0 : i32
    %c0_i32_0 = arith.constant 0 : i32
    %c0_i32_1 = arith.constant 0 : i32
    return %c0_i32, %c0_i32_0 : i32, i32
  }
  func.func @transform_2(%arg0: i32) -> (i32, i32) {
    %c0_i32 = arith.constant 0 : i32
    %c0_i32_0 = arith.constant 0 : i32
    %c0_i32_1 = arith.constant 0 : i32
    return %c0_i32, %c0_i32_0 : i32, i32
  }
  func.func @transform_3(%arg0: i32) -> (i32, i32, i32) {
    %c0_i32 = arith.constant 0 : i32
    %c0_i32_0 = arith.constant 0 : i32
    %c0_i32_1 = arith.constant 0 : i32
    %c0_i32_2 = arith.constant 0 : i32
    return %c0_i32, %c0_i32_0, %c0_i32_1 : i32, i32, i32
  }
  func.func @transform_4(%arg0: i32) -> (i32, i32) {
    %c0_i32 = arith.constant 0 : i32
    %c0_i32_0 = arith.constant 0 : i32
    %c0_i32_1 = arith.constant 0 : i32
    return %c0_i32, %c0_i32_0 : i32, i32
  }
  func.func @transform_5(%arg0: i32) -> (i32, i32) {
    %c0_i32 = arith.constant 0 : i32
    %c0_i32_0 = arith.constant 0 : i32
    %c0_i32_1 = arith.constant 0 : i32
    return %c0_i32, %c0_i32_0 : i32, i32
  }
  func.func @transform_6(%arg0: i32) -> (i32, i32) {
    %c0_i32 = arith.constant 0 : i32
    %c0_i32_0 = arith.constant 0 : i32
    %c0_i32_1 = arith.constant 0 : i32
    return %c0_i32, %c0_i32_0 : i32, i32
  }
  func.func @transform_7(%arg0: i32) -> (i32, i32) {
    %c0_i32 = arith.constant 0 : i32
    %c0_i32_0 = arith.constant 0 : i32
    %c0_i32_1 = arith.constant 0 : i32
    return %c0_i32, %c0_i32_0 : i32, i32
  }
  func.func @transform_8(%arg0: i32) -> (i32, i32, i32) {
    %c0_i32 = arith.constant 0 : i32
    %c0_i32_0 = arith.constant 0 : i32
    %c0_i32_1 = arith.constant 0 : i32
    return %arg0, %c0_i32, %c0_i32_0 : i32, i32, i32
  }
}

</mosaic_0001>

<llo_original>
// kernel: tpu_custom_call.1
$region0: #{tpu_custom_call.1}
  #allocation0 [shape = 'u32[]', space=smem, size = 0x4, offset = 0x4, fixed_abs, tag = 'smem constant byte address 0x4 - core index']
  #allocation1 [shape = 'u32[144,128]{1,0:T(1,128)}', space=vmem, size = 0x12000, scoped, tag = 'internal scratch']
  #allocation2 [shape = 'f32[2,18,32,16]{3,2,1,0:T(8,128)}', space=vmem, size = 0x90000, scoped, tag = 'scratch operand']
  %s0 = inlined_call_operand.vmem [shape: f32[2,256,16], index: 0, kind: input, shape index: {}]
  %s1 = inlined_call_operand.vmem [shape: f32[16,16], index: 1, kind: input, shape index: {}]
  %s2 = inlined_call_operand.vmem [shape: f32[1,16], index: 2, kind: input, shape index: {}]
  %s3 = inlined_call_operand.vmem [shape: f32[9,16,16], index: 3, kind: input, shape index: {}]
  %s4 = inlined_call_operand.vmem [shape: f32[1,16], index: 4, kind: input, shape index: {}]
  %s5 = inlined_call_operand.vmem [shape: f32[16,32], index: 5, kind: input, shape index: {}]
  %s6 = inlined_call_operand.vmem [shape: f32[1,32], index: 6, kind: input, shape index: {}]
  %s7 = inlined_call_operand.vmem [shape: f32[16,32], index: 7, kind: input, shape index: {}]
  %s8 = inlined_call_operand.vmem [shape: f32[2,256,32], index: 8, kind: output, shape index: {}]
  %s9 = sld [smem:[#allocation0]]
  $region42: #{tpu_custom_call.1} parent=0
    _
  %s11 = ssub.s32 1, %s9
  %s12 = scalar_select 0, %s11, %s9
  // Predicated region
  $region2: #{tpu_custom_call.1} parent=0 // pred_check
    _
  $region3: #{tpu_custom_call.1} parent=0 // pred_check_branch
    %14 = sbr.rel (0) target = $region5
  $region4: #{tpu_custom_call.1} parent=0 // pred_region
    _
  $region5: #{tpu_custom_call.1} parent=0 // pred_fallthru
    _
  // Predicated region
  $region6: #{tpu_custom_call.1} parent=0 // pred_check
    _
  $region7: #{tpu_custom_call.1} parent=0 // pred_check_branch
    %16 = sbr.rel (0) target = $region9
  $region8: #{tpu_custom_call.1} parent=0 // pred_region
    _
  $region9: #{tpu_custom_call.1} parent=0 // pred_fallthru
    _
  // Predicated region
  $region10: #{tpu_custom_call.1} parent=0 // pred_check
    _
  $region11: #{tpu_custom_call.1} parent=0 // pred_check_branch
    %18 = sbr.rel (0) target = $region13
  $region12: #{tpu_custom_call.1} parent=0 // pred_region
    _
  $region13: #{tpu_custom_call.1} parent=0 // pred_fallthru
    _
  // Predicated region
  $region14: #{tpu_custom_call.1} parent=0 // pred_check
    _
  $region15: #{tpu_custom_call.1} parent=0 // pred_check_branch
    %20 = sbr.rel (0) target = $region17
  $region16: #{tpu_custom_call.1} parent=0 // pred_region
    _
  $region17: #{tpu_custom_call.1} parent=0 // pred_fallthru
    _
  // Predicated region
  $region18: #{tpu_custom_call.1} parent=0 // pred_check
    _
  $region19: #{tpu_custom_call.1} parent=0 // pred_check_branch
    %22 = sbr.rel (0) target = $region21
  $region20: #{tpu_custom_call.1} parent=0 // pred_region
    _
  $region21: #{tpu_custom_call.1} parent=0 // pred_fallthru
    _
  // Predicated region
  $region22: #{tpu_custom_call.1} parent=0 // pred_check
    _
  $region23: #{tpu_custom_call.1} parent=0 // pred_check_branch
    %24 = sbr.rel (0) target = $region25
  $region24: #{tpu_custom_call.1} parent=0 // pred_region
    _
  $region25: #{tpu_custom_call.1} parent=0 // pred_fallthru
    _
  // Predicated region
  $region26: #{tpu_custom_call.1} parent=0 // pred_check
    _
  $region27: #{tpu_custom_call.1} parent=0 // pred_check_branch
    %26 = sbr.rel (0) target = $region29
  $region28: #{tpu_custom_call.1} parent=0 // pred_region
    _
  $region29: #{tpu_custom_call.1} parent=0 // pred_fallthru
    _
  // Predicated region
  $region30: #{tpu_custom_call.1} parent=0 // pred_check
    _
  $region31: #{tpu_custom_call.1} parent=0 // pred_check_branch
    %28 = sbr.rel (0) target = $region33
  $region32: #{tpu_custom_call.1} parent=0 // pred_region
    _
  $region33: #{tpu_custom_call.1} parent=0 // pred_fallthru
    _
  %v29 = vld [vmem:[%s0] sm:$0xff]
  %v30 = vld [vmem:[%s0 + $0x8] sm:$0xff]
  %v31 = vld [vmem:[%s0 + $0x10] sm:$0xff]
  %v32 = vld [vmem:[%s0 + $0x18] sm:$0xff]
  %v33 = vld [vmem:[%s0 + $0x20] sm:$0xff]
  %v34 = vld [vmem:[%s0 + $0x28] sm:$0xff]
  %v35 = vld [vmem:[%s0 + $0x30] sm:$0xff]
  %v36 = vld [vmem:[%s0 + $0x38] sm:$0xff]
  %v37 = vld [vmem:[%s0 + $0x40] sm:$0xff]
  %v38 = vld [vmem:[%s0 + $0x48] sm:$0xff]
  %v39 = vld [vmem:[%s0 + $0x50] sm:$0xff]
  %v40 = vld [vmem:[%s0 + $0x58] sm:$0xff]
  %v41 = vld [vmem:[%s0 + $0x60] sm:$0xff]
  %v42 = vld [vmem:[%s0 + $0x68] sm:$0xff]
  %v43 = vld [vmem:[%s0 + $0x70] sm:$0xff]
  %v44 = vld [vmem:[%s0 + $0x78] sm:$0xff]
  %v45 = vld [vmem:[%s0 + $0x80] sm:$0xff]
  %v46 = vld [vmem:[%s0 + $0x88] sm:$0xff]
  %v47 = vld [vmem:[%s0 + $0x90] sm:$0xff]
  %v48 = vld [vmem:[%s0 + $0x98] sm:$0xff]
  %v49 = vld [vmem:[%s0 + $0xa0] sm:$0xff]
  %v50 = vld [vmem:[%s0 + $0xa8] sm:$0xff]
  %v51 = vld [vmem:[%s0 + $0xb0] sm:$0xff]
  %v52 = vld [vmem:[%s0 + $0xb8] sm:$0xff]
  %v53 = vld [vmem:[%s0 + $0xc0] sm:$0xff]
  %v54 = vld [vmem:[%s0 + $0xc8] sm:$0xff]
  %v55 = vld [vmem:[%s0 + $0xd0] sm:$0xff]
  %v56 = vld [vmem:[%s0 + $0xd8] sm:$0xff]
  %v57 = vld [vmem:[%s0 + $0xe0] sm:$0xff]
  %v58 = vld [vmem:[%s0 + $0xe8] sm:$0xff]
  %v59 = vld [vmem:[%s0 + $0xf0] sm:$0xff]
  %v60 = vld [vmem:[%s0 + $0xf8] sm:$0xff]
  %v61 = vld [vmem:[%s0 + $0x100] sm:$0xff]
  %v62 = vld [vmem:[%s0 + $0x108] sm:$0xff]
  %v63 = vld [vmem:[%s0 + $0x110] sm:$0xff]
  %v64 = vld [vmem:[%s0 + $0x118] sm:$0xff]
  %v65 = vld [vmem:[%s0 + $0x120] sm:$0xff]
  %v66 = vld [vmem:[%s0 + $0x128] sm:$0xff]
  %v67 = vld [vmem:[%s0 + $0x130] sm:$0xff]
  %v68 = vld [vmem:[%s0 + $0x138] sm:$0xff]
  %v69 = vld [vmem:[%s0 + $0x140] sm:$0xff]
  %v70 = vld [vmem:[%s0 + $0x148] sm:$0xff]
  %v71 = vld [vmem:[%s0 + $0x150] sm:$0xff]
  %v72 = vld [vmem:[%s0 + $0x158] sm:$0xff]
  %v73 = vld [vmem:[%s0 + $0x160] sm:$0xff]
  %v74 = vld [vmem:[%s0 + $0x168] sm:$0xff]
  %v75 = vld [vmem:[%s0 + $0x170] sm:$0xff]
  %v76 = vld [vmem:[%s0 + $0x178] sm:$0xff]
  %v77 = vld [vmem:[%s0 + $0x180] sm:$0xff]
  %v78 = vld [vmem:[%s0 + $0x188] sm:$0xff]
  %v79 = vld [vmem:[%s0 + $0x190] sm:$0xff]
  %v80 = vld [vmem:[%s0 + $0x198] sm:$0xff]
  %v81 = vld [vmem:[%s0 + $0x1a0] sm:$0xff]
  %v82 = vld [vmem:[%s0 + $0x1a8] sm:$0xff]
  %v83 = vld [vmem:[%s0 + $0x1b0] sm:$0xff]
  %v84 = vld [vmem:[%s0 + $0x1b8] sm:$0xff]
  %v85 = vld [vmem:[%s0 + $0x1c0] sm:$0xff]
  %v86 = vld [vmem:[%s0 + $0x1c8] sm:$0xff]
  %v87 = vld [vmem:[%s0 + $0x1d0] sm:$0xff]
  %v88 = vld [vmem:[%s0 + $0x1d8] sm:$0xff]
  %v89 = vld [vmem:[%s0 + $0x1e0] sm:$0xff]
  %v90 = vld [vmem:[%s0 + $0x1e8] sm:$0xff]
  %v91 = vld [vmem:[%s0 + $0x1f0] sm:$0xff]
  %v92 = vld [vmem:[%s0 + $0x1f8] sm:$0xff]
  %v93 = vmul.f32 %v29, 0.2
  %v94 = vmul.f32 %v30, 0.2
  %v95 = vmul.f32 %v31, 0.2
  %v96 = vmul.f32 %v32, 0.2
  %v97 = vmul.f32 %v33, 0.2
  %v98 = vmul.f32 %v34, 0.2
  %v99 = vmul.f32 %v35, 0.2
  %v100 = vmul.f32 %v36, 0.2
  %v101 = vmul.f32 %v37, 0.2
  %v102 = vmul.f32 %v38, 0.2
  %v103 = vmul.f32 %v39, 0.2
  %v104 = vmul.f32 %v40, 0.2
  %v105 = vmul.f32 %v41, 0.2
  %v106 = vmul.f32 %v42, 0.2
  %v107 = vmul.f32 %v43, 0.2
  %v108 = vmul.f32 %v44, 0.2
  %v109 = vmul.f32 %v45, 0.2
  %v110 = vmul.f32 %v46, 0.2
  %v111 = vmul.f32 %v47, 0.2
  %v112 = vmul.f32 %v48, 0.2
  %v113 = vmul.f32 %v49, 0.2
  %v114 = vmul.f32 %v50, 0.2
  %v115 = vmul.f32 %v51, 0.2
  %v116 = vmul.f32 %v52, 0.2
  %v117 = vmul.f32 %v53, 0.2
  %v118 = vmul.f32 %v54, 0.2
  %v119 = vmul.f32 %v55, 0.2
  %v120 = vmul.f32 %v56, 0.2
  %v121 = vmul.f32 %v57, 0.2
  %v122 = vmul.f32 %v58, 0.2
  %v123 = vmul.f32 %v59, 0.2
  %v124 = vmul.f32 %v60, 0.2
  %v125 = vmul.f32 %v61, 0.2
  %v126 = vmul.f32 %v62, 0.2
  %v127 = vmul.f32 %v63, 0.2
  %v128 = vmul.f32 %v64, 0.2
  %v129 = vmul.f32 %v65, 0.2
  %v130 = vmul.f32 %v66, 0.2
  %v131 = vmul.f32 %v67, 0.2
  %v132 = vmul.f32 %v68, 0.2
  %v133 = vmul.f32 %v69, 0.2
  %v134 = vmul.f32 %v70, 0.2
  %v135 = vmul.f32 %v71, 0.2
  %v136 = vmul.f32 %v72, 0.2
  %v137 = vmul.f32 %v73, 0.2
  %v138 = vmul.f32 %v74, 0.2
  %v139 = vmul.f32 %v75, 0.2
  %v140 = vmul.f32 %v76, 0.2
  %v141 = vmul.f32 %v77, 0.2
  %v142 = vmul.f32 %v78, 0.2
  %v143 = vmul.f32 %v79, 0.2
  %v144 = vmul.f32 %v80, 0.2
  %v145 = vmul.f32 %v81, 0.2
  %v146 = vmul.f32 %v82, 0.2
  %v147 = vmul.f32 %v83, 0.2
  %v148 = vmul.f32 %v84, 0.2
  %v149 = vmul.f32 %v85, 0.2
  %v150 = vmul.f32 %v86, 0.2
  %v151 = vmul.f32 %v87, 0.2
  %v152 = vmul.f32 %v88, 0.2
  %v153 = vmul.f32 %v89, 0.2
  %v154 = vmul.f32 %v90, 0.2
  %v155 = vmul.f32 %v91, 0.2
  %v156 = vmul.f32 %v92, 0.2
  %v157 = vmax.f32 %v29, %v93
  %v158 = vmax.f32 %v30, %v94
  %v159 = vmax.f32 %v31, %v95
  %v160 = vmax.f32 %v32, %v96
  %v161 = vmax.f32 %v33, %v97
  %v162 = vmax.f32 %v34, %v98
  %v163 = vmax.f32 %v35, %v99
  %v164 = vmax.f32 %v36, %v100
  %v165 = vmax.f32 %v37, %v101
  %v166 = vmax.f32 %v38, %v102
  %v167 = vmax.f32 %v39, %v103
  %v168 = vmax.f32 %v40, %v104
  %v169 = vmax.f32 %v41, %v105
  %v170 = vmax.f32 %v42, %v106
  %v171 = vmax.f32 %v43, %v107
  %v172 = vmax.f32 %v44, %v108
  %v173 = vmax.f32 %v45, %v109
  %v174 = vmax.f32 %v46, %v110
  %v175 = vmax.f32 %v47, %v111
  %v176 = vmax.f32 %v48, %v112
  %v177 = vmax.f32 %v49, %v113
  %v178 = vmax.f32 %v50, %v114
  %v179 = vmax.f32 %v51, %v115
  %v180 = vmax.f32 %v52, %v116
  %v181 = vmax.f32 %v53, %v117
  %v182 = vmax.f32 %v54, %v118
  %v183 = vmax.f32 %v55, %v119
  %v184 = vmax.f32 %v56, %v120
  %v185 = vmax.f32 %v57, %v121
  %v186 = vmax.f32 %v58, %v122
  %v187 = vmax.f32 %v59, %v123
  %v188 = vmax.f32 %v60, %v124
  %v189 = vmax.f32 %v61, %v125
  %v190 = vmax.f32 %v62, %v126
  %v191 = vmax.f32 %v63, %v127
  %v192 = vmax.f32 %v64, %v128
  %v193 = vmax.f32 %v65, %v129
  %v194 = vmax.f32 %v66, %v130
  %v195 = vmax.f32 %v67, %v131
  %v196 = vmax.f32 %v68, %v132
  %v197 = vmax.f32 %v69, %v133
  %v198 = vmax.f32 %v70, %v134
  %v199 = vmax.f32 %v71, %v135
  %v200 = vmax.f32 %v72, %v136
  %v201 = vmax.f32 %v73, %v137
  %v202 = vmax.f32 %v74, %v138
  %v203 = vmax.f32 %v75, %v139
  %v204 = vmax.f32 %v76, %v140
  %v205 = vmax.f32 %v77, %v141
  %v206 = vmax.f32 %v78, %v142
  %v207 = vmax.f32 %v79, %v143
  %v208 = vmax.f32 %v80, %v144
  %v209 = vmax.f32 %v81, %v145
  %v210 = vmax.f32 %v82, %v146
  %v211 = vmax.f32 %v83, %v147
  %v212 = vmax.f32 %v84, %v148
  %v213 = vmax.f32 %v85, %v149
  %v214 = vmax.f32 %v86, %v150
  %v215 = vmax.f32 %v87, %v151
  %v216 = vmax.f32 %v88, %v152
  %v217 = vmax.f32 %v89, %v153
  %v218 = vmax.f32 %v90, %v154
  %v219 = vmax.f32 %v91, %v155
  %v220 = vmax.f32 %v92, %v156
  %v221 = vld [vmem:[%s1] sm:$0xff]
  %v222 = vld [vmem:[%s1 + $0x8] sm:$0xff]
  %v223 = vld [vmem:[%s2] sm:$0x1]
  %v225 = vlaneseq
  %v226 = vshrl.u32 %v225, 7
  %v227 = vsub.s32 0, %v226
  %v228 = vrot.slane %v223, %v227
  %vm230 = vcmask 130048
  %v232 = vsel %vm230, %v157, 0
  %v235 = vsel %vm230, %v158, 0
  %v238 = vsel %vm230, %v159, 0
  %v241 = vsel %vm230, %v160, 0
  %v244 = vsel %vm230, %v161, 0
  %v247 = vsel %vm230, %v162, 0
  %v250 = vsel %vm230, %v163, 0
  %v253 = vsel %vm230, %v164, 0
  %v256 = vsel %vm230, %v165, 0
  %v259 = vsel %vm230, %v166, 0
  %v262 = vsel %vm230, %v167, 0
  %v265 = vsel %vm230, %v168, 0
  %v268 = vsel %vm230, %v169, 0
  %v271 = vsel %vm230, %v170, 0
  %v274 = vsel %vm230, %v171, 0
  %v277 = vsel %vm230, %v172, 0
  %v280 = vsel %vm230, %v173, 0
  %v283 = vsel %vm230, %v174, 0
  %v286 = vsel %vm230, %v175, 0
  %v289 = vsel %vm230, %v176, 0
  %v292 = vsel %vm230, %v177, 0
  %v295 = vsel %vm230, %v178, 0
  %v298 = vsel %vm230, %v179, 0
  %v301 = vsel %vm230, %v180, 0
  %v304 = vsel %vm230, %v181, 0
  %v307 = vsel %vm230, %v182, 0
  %v310 = vsel %vm230, %v183, 0
  %v313 = vsel %vm230, %v184, 0
  %v316 = vsel %vm230, %v185, 0
  %v319 = vsel %vm230, %v186, 0
  %v322 = vsel %vm230, %v187, 0
  %v325 = vsel %vm230, %v188, 0
  %v328 = vsel %vm230, %v189, 0
  %v331 = vsel %vm230, %v190, 0
  %v334 = vsel %vm230, %v191, 0
  %v337 = vsel %vm230, %v192, 0
  %v340 = vsel %vm230, %v193, 0
  %v343 = vsel %vm230, %v194, 0
  %v346 = vsel %vm230, %v195, 0
  %v349 = vsel %vm230, %v196, 0
  %v352 = vsel %vm230, %v197, 0
  %v355 = vsel %vm230, %v198, 0
  %v358 = vsel %vm230, %v199, 0
  %v361 = vsel %vm230, %v200, 0
  %v364 = vsel %vm230, %v201, 0
  %v367 = vsel %vm230, %v202, 0
  %v370 = vsel %vm230, %v203, 0
  %v373 = vsel %vm230, %v204, 0
  %v376 = vsel %vm230, %v205, 0
  %v379 = vsel %vm230, %v206, 0
  %v382 = vsel %vm230, %v207, 0
  %v385 = vsel %vm230, %v208, 0
  %v388 = vsel %vm230, %v209, 0
  %v391 = vsel %vm230, %v210, 0
  %v394 = vsel %vm230, %v211, 0
  %v397 = vsel %vm230, %v212, 0
  %v400 = vsel %vm230, %v213, 0
  %v403 = vsel %vm230, %v214, 0
  %v406 = vsel %vm230, %v215, 0
  %v409 = vsel %vm230, %v216, 0
  %v412 = vsel %vm230, %v217, 0
  %v415 = vsel %vm230, %v218, 0
  %v418 = vsel %vm230, %v219, 0
  %v421 = vsel %vm230, %v220, 0
  %423 = vmatprep.subr.mxu0 0.0
  %424 = vmatpush1.msra.mxu0 %v221
  %425 = vmatprep.subr.mxu0 0.0
  %426 = vmatpush1.msra.mxu0 %v222
  %427 = vmatprep.subr.mxu0 0.0
  %428 = vmatpush1.msra.mxu0 0.0
  %429 = vmatprep.subr.mxu0 0.0
  %430 = vmatpush1.msra.mxu0 0.0
  %431 = vmatprep.subr.mxu0 0.0
  %432 = vmatpush1.msra.mxu0 0.0
  %433 = vmatprep.subr.mxu0 0.0
  %434 = vmatpush1.msra.mxu0 0.0
  %435 = vmatprep.subr.mxu0 0.0
  %436 = vmatpush1.msra.mxu0 0.0
  %437 = vmatprep.subr.mxu0 0.0
  %438 = vmatpush1.msra.mxu0 0.0
  %439 = vmatprep.subr.mxu0 0.0
  %440 = vmatpush1.msra.mxu0 0.0
  %441 = vmatprep.subr.mxu0 0.0
  %442 = vmatpush1.msra.mxu0 0.0
  %443 = vmatprep.subr.mxu0 0.0
  %444 = vmatpush1.msra.mxu0 0.0
  %445 = vmatprep.subr.mxu0 0.0
  %446 = vmatpush1.msra.mxu0 0.0
  %447 = vmatprep.subr.mxu0 0.0
  %448 = vmatpush1.msra.mxu0 0.0
  %449 = vmatprep.subr.mxu0 0.0
  %450 = vmatpush1.msra.mxu0 0.0
  %451 = vmatprep.subr.mxu0 0.0
  %452 = vmatpush1.msra.mxu0 0.0
  %453 = vmatprep.subr.mxu0 0.0
  %454 = vmatpush1.msra.mxu0 0.0
  %455 = vmatprep.subr.mxu0 0.0
  %456 = vmatpush1.msra.mxu0 0.0
  %457 = vmatprep.subr.mxu0 0.0
  %458 = vmatpush1.msra.mxu0 0.0
  %459 = vmatprep.subr.mxu0 0.0
  %460 = vmatpush1.msra.mxu0 0.0
  %461 = vmatprep.subr.mxu0 0.0
  %462 = vmatpush1.msra.mxu0 0.0
  %463 = vmatprep.subr.mxu0 0.0
  %464 = vmatpush1.msra.mxu0 0.0
  %465 = vmatprep.subr.mxu0 0.0
  %466 = vmatpush1.msra.mxu0 0.0
  %467 = vmatprep.subr.mxu0 0.0
  %468 = vmatpush1.msra.mxu0 0.0
  %469 = vmatprep.subr.mxu0 0.0
  %470 = vmatpush1.msra.mxu0 0.0
  %471 = vmatprep.subr.mxu0 0.0
  %472 = vmatpush1.msra.mxu0 0.0
  %473 = vmatprep.subr.mxu0 0.0
  %474 = vmatpush1.msra.mxu0 0.0
  %475 = vmatprep.subr.mxu0 0.0
  %476 = vmatpush1.msra.mxu0 0.0
  %477 = vmatprep.subr.mxu0 0.0
  %478 = vmatpush1.msra.mxu0 0.0
  %479 = vmatprep.subr.mxu0 0.0
  %480 = vmatpush1.msra.mxu0 0.0
  %481 = vmatprep.subr.mxu0 0.0
  %482 = vmatpush1.msra.mxu0 0.0
  %483 = vmatprep.subr.mxu0 0.0
  %484 = vmatpush1.msra.mxu0 0.0
  %485 = vmatprep.subr.mxu0 0.0
  %486 = vmatpush1.msra.mxu0 0.0
  %487 = vmatprep.mubr.f32.mxu0 0.0
  %488 = vmatmul.mubr.f32.gmra.mrb[0].mxu0 %v232
  %v489 = vpop.f32.mrb[0].mxu0
  %v490 = vadd.f32 %v228, %v489
  %v491 = vpop.f32.mrb[0].mxu0
  %492 = vmatprep.mubr.f32.mxu0 0.0
  %493 = vmatmul.mubr.f32.gmra.mrb[0].mxu0 %v235
  %v494 = vpop.f32.mrb[0].mxu0
  %v495 = vadd.f32 %v228, %v494
  %v496 = vpop.f32.mrb[0].mxu0
  %497 = vmatprep.mubr.f32.mxu0 0.0
  %498 = vmatmul.mubr.f32.gmra.mrb[0].mxu0 %v238
  %v499 = vpop.f32.mrb[0].mxu0
  %v500 = vadd.f32 %v228, %v499
  %v501 = vpop.f32.mrb[0].mxu0
  %502 = vmatprep.mubr.f32.mxu0 0.0
  %503 = vmatmul.mubr.f32.gmra.mrb[0].mxu0 %v241
  %v504 = vpop.f32.mrb[0].mxu0
  %v505 = vadd.f32 %v228, %v504
  %v506 = vpop.f32.mrb[0].mxu0
  %507 = vmatprep.mubr.f32.mxu0 0.0
  %508 = vmatmul.mubr.f32.gmra.mrb[0].mxu0 %v244
  %v509 = vpop.f32.mrb[0].mxu0
  %v510 = vadd.f32 %v228, %v509
  %v511 = vpop.f32.mrb[0].mxu0
  %512 = vmatprep.mubr.f32.mxu0 0.0
  %513 = vmatmul.mubr.f32.gmra.mrb[0].mxu0 %v247
  %v514 = vpop.f32.mrb[0].mxu0
  %v515 = vadd.f32 %v228, %v514
  %v516 = vpop.f32.mrb[0].mxu0
  %517 = vmatprep.mubr.f32.mxu0 0.0
  %518 = vmatmul.mubr.f32.gmra.mrb[0].mxu0 %v250
  %v519 = vpop.f32.mrb[0].mxu0
  %v520 = vadd.f32 %v228, %v519
  %v521 = vpop.f32.mrb[0].mxu0
  %522 = vmatprep.mubr.f32.mxu0 0.0
  %523 = vmatmul.mubr.f32.gmra.mrb[0].mxu0 %v253
  %v524 = vpop.f32.mrb[0].mxu0
  %v525 = vadd.f32 %v228, %v524
  %v526 = vpop.f32.mrb[0].mxu0
  %527 = vmatprep.mubr.f32.mxu0 0.0
  %528 = vmatmul.mubr.f32.gmra.mrb[0].mxu0 %v256
  %v529 = vpop.f32.mrb[0].mxu0
  %v530 = vadd.f32 %v228, %v529
  %v531 = vpop.f32.mrb[0].mxu0
  %532 = vmatprep.mubr.f32.mxu0 0.0
  %533 = vmatmul.mubr.f32.gmra.mrb[0].mxu0 %v259
  %v534 = vpop.f32.mrb[0].mxu0
  %v535 = vadd.f32 %v228, %v534
  %v536 = vpop.f32.mrb[0].mxu0
  %537 = vmatprep.mubr.f32.mxu0 0.0
  %538 = vmatmul.mubr.f32.gmra.mrb[0].mxu0 %v262
  %v539 = vpop.f32.mrb[0].mxu0
  %v540 = vadd.f32 %v228, %v539
  %v541 = vpop.f32.mrb[0].mxu0
  %542 = vmatprep.mubr.f32.mxu0 0.0
  %543 = vmatmul.mubr.f32.gmra.mrb[0].mxu0 %v265
  %v544 = vpop.f32.mrb[0].mxu0
  %v545 = vadd.f32 %v228, %v544
  %v546 = vpop.f32.mrb[0].mxu0
  %547 = vmatprep.mubr.f32.mxu0 0.0
  %548 = vmatmul.mubr.f32.gmra.mrb[0].mxu0 %v268
  %v549 = vpop.f32.mrb[0].mxu0
  %v550 = vadd.f32 %v228, %v549
  %v551 = vpop.f32.mrb[0].mxu0
  %552 = vmatprep.mubr.f32.mxu0 0.0
  %553 = vmatmul.mubr.f32.gmra.mrb[0].mxu0 %v271
  %v554 = vpop.f32.mrb[0].mxu0
  %v555 = vadd.f32 %v228, %v554
  %v556 = vpop.f32.mrb[0].mxu0
  %557 = vmatprep.mubr.f32.mxu0 0.0
  %558 = vmatmul.mubr.f32.gmra.mrb[0].mxu0 %v274
  %v559 = vpop.f32.mrb[0].mxu0
  %v560 = vadd.f32 %v228, %v559
  %v561 = vpop.f32.mrb[0].mxu0
  %562 = vmatprep.mubr.f32.mxu0 0.0
  %563 = vmatmul.mubr.f32.gmra.mrb[0].mxu0 %v277
  %v564 = vpop.f32.mrb[0].mxu0
  %v565 = vadd.f32 %v228, %v564
  %v566 = vpop.f32.mrb[0].mxu0
  %567 = vmatprep.mubr.f32.mxu0 0.0
  %568 = vmatmul.mubr.f32.gmra.mrb[0].mxu0 %v280
  %v569 = vpop.f32.mrb[0].mxu0
  %v570 = vadd.f32 %v228, %v569
  %v571 = vpop.f32.mrb[0].mxu0
  %572 = vmatprep.mubr.f32.mxu0 0.0
  %573 = vmatmul.mubr.f32.gmra.mrb[0].mxu0 %v283
  %v574 = vpop.f32.mrb[0].mxu0
  %v575 = vadd.f32 %v228, %v574
  %v576 = vpop.f32.mrb[0].mxu0
  %577 = vmatprep.mubr.f32.mxu0 0.0
  %578 = vmatmul.mubr.f32.gmra.mrb[0].mxu0 %v286
  %v579 = vpop.f32.mrb[0].mxu0
  %v580 = vadd.f32 %v228, %v579
  %v581 = vpop.f32.mrb[0].mxu0
  %582 = vmatprep.mubr.f32.mxu0 0.0
  %583 = vmatmul.mubr.f32.gmra.mrb[0].mxu0 %v289
  %v584 = vpop.f32.mrb[0].mxu0
  %v585 = vadd.f32 %v228, %v584
  %v586 = vpop.f32.mrb[0].mxu0
  %587 = vmatprep.mubr.f32.mxu0 0.0
  %588 = vmatmul.mubr.f32.gmra.mrb[0].mxu0 %v292
  %v589 = vpop.f32.mrb[0].mxu0
  %v590 = vadd.f32 %v228, %v589
  %v591 = vpop.f32.mrb[0].mxu0
  %592 = vmatprep.mubr.f32.mxu0 0.0
  %593 = vmatmul.mubr.f32.gmra.mrb[0].mxu0 %v295
  %v594 = vpop.f32.mrb[0].mxu0
  %v595 = vadd.f32 %v228, %v594
  %v596 = vpop.f32.mrb[0].mxu0
  %597 = vmatprep.mubr.f32.mxu0 0.0
  %598 = vmatmul.mubr.f32.gmra.mrb[0].mxu0 %v298
  %v599 = vpop.f32.mrb[0].mxu0
  %v600 = vadd.f32 %v228, %v599
  %v601 = vpop.f32.mrb[0].mxu0
  %602 = vmatprep.mubr.f32.mxu0 0.0
  %603 = vmatmul.mubr.f32.gmra.mrb[0].mxu0 %v301
  %v604 = vpop.f32.mrb[0].mxu0
  %v605 = vadd.f32 %v228, %v604
  %v606 = vpop.f32.mrb[0].mxu0
  %607 = vmatprep.mubr.f32.mxu0 0.0
  %608 = vmatmul.mubr.f32.gmra.mrb[0].mxu0 %v304
  %v609 = vpop.f32.mrb[0].mxu0
  %v610 = vadd.f32 %v228, %v609
  %v611 = vpop.f32.mrb[0].mxu0
  %612 = vmatprep.mubr.f32.mxu0 0.0
  %613 = vmatmul.mubr.f32.gmra.mrb[0].mxu0 %v307
  %v614 = vpop.f32.mrb[0].mxu0
  %v615 = vadd.f32 %v228, %v614
  %v616 = vpop.f32.mrb[0].mxu0
  %617 = vmatprep.mubr.f32.mxu0 0.0
  %618 = vmatmul.mubr.f32.gmra.mrb[0].mxu0 %v310
  %v619 = vpop.f32.mrb[0].mxu0
  %v620 = vadd.f32 %v228, %v619
  %v621 = vpop.f32.mrb[0].mxu0
  %622 = vmatprep.mubr.f32.mxu0 0.0
  %623 = vmatmul.mubr.f32.gmra.mrb[0].mxu0 %v313
  %v624 = vpop.f32.mrb[0].mxu0
  %v625 = vadd.f32 %v228, %v624
  %v626 = vpop.f32.mrb[0].mxu0
  %627 = vmatprep.mubr.f32.mxu0 0.0
  %628 = vmatmul.mubr.f32.gmra.mrb[0].mxu0 %v316
  %v629 = vpop.f32.mrb[0].mxu0
  %v630 = vadd.f32 %v228, %v629
  %v631 = vpop.f32.mrb[0].mxu0
  %632 = vmatprep.mubr.f32.mxu0 0.0
  %633 = vmatmul.mubr.f32.gmra.mrb[0].mxu0 %v319
  %v634 = vpop.f32.mrb[0].mxu0
  %v635 = vadd.f32 %v228, %v634
  %v636 = vpop.f32.mrb[0].mxu0
  %637 = vmatprep.mubr.f32.mxu0 0.0
  %638 = vmatmul.mubr.f32.gmra.mrb[0].mxu0 %v322
  %v639 = vpop.f32.mrb[0].mxu0
  %v640 = vadd.f32 %v228, %v639
  %v641 = vpop.f32.mrb[0].mxu0
  %642 = vmatprep.mubr.f32.mxu0 0.0
  %643 = vmatmul.mubr.f32.gmra.mrb[0].mxu0 %v325
  %v644 = vpop.f32.mrb[0].mxu0
  %v645 = vadd.f32 %v228, %v644
  %v646 = vpop.f32.mrb[0].mxu0
  %647 = vmatprep.mubr.f32.mxu0 0.0
  %648 = vmatmul.mubr.f32.gmra.mrb[0].mxu0 %v328
  %v649 = vpop.f32.mrb[0].mxu0
  %v650 = vadd.f32 %v228, %v649
  %v651 = vpop.f32.mrb[0].mxu0
  %652 = vmatprep.mubr.f32.mxu0 0.0
  %653 = vmatmul.mubr.f32.gmra.mrb[0].mxu0 %v331
  %v654 = vpop.f32.mrb[0].mxu0
  %v655 = vadd.f32 %v228, %v654
  %v656 = vpop.f32.mrb[0].mxu0
  %657 = vmatprep.mubr.f32.mxu0 0.0
  %658 = vmatmul.mubr.f32.gmra.mrb[0].mxu0 %v334
  %v659 = vpop.f32.mrb[0].mxu0
  %v660 = vadd.f32 %v228, %v659
  %v661 = vpop.f32.mrb[0].mxu0
  %662 = vmatprep.mubr.f32.mxu0 0.0
  %663 = vmatmul.mubr.f32.gmra.mrb[0].mxu0 %v337
  %v664 = vpop.f32.mrb[0].mxu0
  %v665 = vadd.f32 %v228, %v664
  %v666 = vpop.f32.mrb[0].mxu0
  %667 = vmatprep.mubr.f32.mxu0 0.0
  %668 = vmatmul.mubr.f32.gmra.mrb[0].mxu0 %v340
  %v669 = vpop.f32.mrb[0].mxu0
  %v670 = vadd.f32 %v228, %v669
  %v671 = vpop.f32.mrb[0].mxu0
  %672 = vmatprep.mubr.f32.mxu0 0.0
  %673 = vmatmul.mubr.f32.gmra.mrb[0].mxu0 %v343
  %v674 = vpop.f32.mrb[0].mxu0
  %v675 = vadd.f32 %v228, %v674
  %v676 = vpop.f32.mrb[0].mxu0
  %677 = vmatprep.mubr.f32.mxu0 0.0
  %678 = vmatmul.mubr.f32.gmra.mrb[0].mxu0 %v346
  %v679 = vpop.f32.mrb[0].mxu0
  %v680 = vadd.f32 %v228, %v679
  %v681 = vpop.f32.mrb[0].mxu0
  %682 = vmatprep.mubr.f32.mxu0 0.0
  %683 = vmatmul.mubr.f32.gmra.mrb[0].mxu0 %v349
  %v684 = vpop.f32.mrb[0].mxu0
  %v685 = vadd.f32 %v228, %v684
  %v686 = vpop.f32.mrb[0].mxu0
  %687 = vmatprep.mubr.f32.mxu0 0.0
  %688 = vmatmul.mubr.f32.gmra.mrb[0].mxu0 %v352
  %v689 = vpop.f32.mrb[0].mxu0
  %v690 = vadd.f32 %v228, %v689
  %v691 = vpop.f32.mrb[0].mxu0
  %692 = vmatprep.mubr.f32.mxu0 0.0
  %693 = vmatmul.mubr.f32.gmra.mrb[0].mxu0 %v355
  %v694 = vpop.f32.mrb[0].mxu0
  %v695 = vadd.f32 %v228, %v694
  %v696 = vpop.f32.mrb[0].mxu0
  %697 = vmatprep.mubr.f32.mxu0 0.0
  %698 = vmatmul.mubr.f32.gmra.mrb[0].mxu0 %v358
  %v699 = vpop.f32.mrb[0].mxu0
  %v700 = vadd.f32 %v228, %v699
  %v701 = vpop.f32.mrb[0].mxu0
  %702 = vmatprep.mubr.f32.mxu0 0.0
  %703 = vmatmul.mubr.f32.gmra.mrb[0].mxu0 %v361
  %v704 = vpop.f32.mrb[0].mxu0
  %v705 = vadd.f32 %v228, %v704
  %v706 = vpop.f32.mrb[0].mxu0
  %707 = vmatprep.mubr.f32.mxu0 0.0
  %708 = vmatmul.mubr.f32.gmra.mrb[0].mxu0 %v364
  %v709 = vpop.f32.mrb[0].mxu0
  %v710 = vadd.f32 %v228, %v709
  %v711 = vpop.f32.mrb[0].mxu0
  %712 = vmatprep.mubr.f32.mxu0 0.0
  %713 = vmatmul.mubr.f32.gmra.mrb[0].mxu0 %v367
  %v714 = vpop.f32.mrb[0].mxu0
  %v715 = vadd.f32 %v228, %v714
  %v716 = vpop.f32.mrb[0].mxu0
  %717 = vmatprep.mubr.f32.mxu0 0.0
  %718 = vmatmul.mubr.f32.gmra.mrb[0].mxu0 %v370
  %v719 = vpop.f32.mrb[0].mxu0
  %v720 = vadd.f32 %v228, %v719
  %v721 = vpop.f32.mrb[0].mxu0
  %722 = vmatprep.mubr.f32.mxu0 0.0
  %723 = vmatmul.mubr.f32.gmra.mrb[0].mxu0 %v373
  %v724 = vpop.f32.mrb[0].mxu0
  %v725 = vadd.f32 %v228, %v724
  %v726 = vpop.f32.mrb[0].mxu0
  %727 = vmatprep.mubr.f32.mxu0 0.0
  %728 = vmatmul.mubr.f32.gmra.mrb[0].mxu0 %v376
  %v729 = vpop.f32.mrb[0].mxu0
  %v730 = vadd.f32 %v228, %v729
  %v731 = vpop.f32.mrb[0].mxu0
  %732 = vmatprep.mubr.f32.mxu0 0.0
  %733 = vmatmul.mubr.f32.gmra.mrb[0].mxu0 %v379
  %v734 = vpop.f32.mrb[0].mxu0
  %v735 = vadd.f32 %v228, %v734
  %v736 = vpop.f32.mrb[0].mxu0
  %737 = vmatprep.mubr.f32.mxu0 0.0
  %738 = vmatmul.mubr.f32.gmra.mrb[0].mxu0 %v382
  %v739 = vpop.f32.mrb[0].mxu0
  %v740 = vadd.f32 %v228, %v739
  %v741 = vpop.f32.mrb[0].mxu0
  %742 = vmatprep.mubr.f32.mxu0 0.0
  %743 = vmatmul.mubr.f32.gmra.mrb[0].mxu0 %v385
  %v744 = vpop.f32.mrb[0].mxu0
  %v745 = vadd.f32 %v228, %v744
  %v746 = vpop.f32.mrb[0].mxu0
  %747 = vmatprep.mubr.f32.mxu0 0.0
  %748 = vmatmul.mubr.f32.gmra.mrb[0].mxu0 %v388
  %v749 = vpop.f32.mrb[0].mxu0
  %v750 = vadd.f32 %v228, %v749
  %v751 = vpop.f32.mrb[0].mxu0
  %752 = vmatprep.mubr.f32.mxu0 0.0
  %753 = vmatmul.mubr.f32.gmra.mrb[0].mxu0 %v391
  %v754 = vpop.f32.mrb[0].mxu0
  %v755 = vadd.f32 %v228, %v754
  %v756 = vpop.f32.mrb[0].mxu0
  %757 = vmatprep.mubr.f32.mxu0 0.0
  %758 = vmatmul.mubr.f32.gmra.mrb[0].mxu0 %v394
  %v759 = vpop.f32.mrb[0].mxu0
  %v760 = vadd.f32 %v228, %v759
  %v761 = vpop.f32.mrb[0].mxu0
  %762 = vmatprep.mubr.f32.mxu0 0.0
  %763 = vmatmul.mubr.f32.gmra.mrb[0].mxu0 %v397
  %v764 = vpop.f32.mrb[0].mxu0
  %v765 = vadd.f32 %v228, %v764
  %v766 = vpop.f32.mrb[0].mxu0
  %767 = vmatprep.mubr.f32.mxu0 0.0
  %768 = vmatmul.mubr.f32.gmra.mrb[0].mxu0 %v400
  %v769 = vpop.f32.mrb[0].mxu0
  %v770 = vadd.f32 %v228, %v769
  %v771 = vpop.f32.mrb[0].mxu0
  %772 = vmatprep.mubr.f32.mxu0 0.0
  %773 = vmatmul.mubr.f32.gmra.mrb[0].mxu0 %v403
  %v774 = vpop.f32.mrb[0].mxu0
  %v775 = vadd.f32 %v228, %v774
  %v776 = vpop.f32.mrb[0].mxu0
  %777 = vmatprep.mubr.f32.mxu0 0.0
  %778 = vmatmul.mubr.f32.gmra.mrb[0].mxu0 %v406
  %v779 = vpop.f32.mrb[0].mxu0
  %v780 = vadd.f32 %v228, %v779
  %v781 = vpop.f32.mrb[0].mxu0
  %782 = vmatprep.mubr.f32.mxu0 0.0
  %783 = vmatmul.mubr.f32.gmra.mrb[0].mxu0 %v409
  %v784 = vpop.f32.mrb[0].mxu0
  %v785 = vadd.f32 %v228, %v784
  %v786 = vpop.f32.mrb[0].mxu0
  %787 = vmatprep.mubr.f32.mxu0 0.0
  %788 = vmatmul.mubr.f32.gmra.mrb[0].mxu0 %v412
  %v789 = vpop.f32.mrb[0].mxu0
  %v790 = vadd.f32 %v228, %v789
  %v791 = vpop.f32.mrb[0].mxu0
  %792 = vmatprep.mubr.f32.mxu0 0.0
  %793 = vmatmul.mubr.f32.gmra.mrb[0].mxu0 %v415
  %v794 = vpop.f32.mrb[0].mxu0
  %v795 = vadd.f32 %v228, %v794
  %v796 = vpop.f32.mrb[0].mxu0
  %797 = vmatprep.mubr.f32.mxu0 0.0
  %798 = vmatmul.mubr.f32.gmra.mrb[0].mxu0 %v418
  %v799 = vpop.f32.mrb[0].mxu0
  %v800 = vadd.f32 %v228, %v799
  %v801 = vpop.f32.mrb[0].mxu0
  %802 = vmatprep.mubr.f32.mxu0 0.0
  %803 = vmatmul.mubr.f32.gmra.mrb[0].mxu0 %v421
  %v804 = vpop.f32.mrb[0].mxu0
  %v805 = vadd.f32 %v228, %v804
  %v806 = vpop.f32.mrb[0].mxu0
  %807 = vdwg.mxu0
  %v808 = vmul.f32 %v490, 0.2
  %v809 = vmul.f32 %v495, 0.2
  %v810 = vmul.f32 %v500, 0.2
  %v811 = vmul.f32 %v505, 0.2
  %v812 = vmul.f32 %v510, 0.2
  %v813 = vmul.f32 %v515, 0.2
  %v814 = vmul.f32 %v520, 0.2
  %v815 = vmul.f32 %v525, 0.2
  %v816 = vmul.f32 %v530, 0.2
  %v817 = vmul.f32 %v535, 0.2
  %v818 = vmul.f32 %v540, 0.2
  %v819 = vmul.f32 %v545, 0.2
  %v820 = vmul.f32 %v550, 0.2
  %v821 = vmul.f32 %v555, 0.2
  %v822 = vmul.f32 %v560, 0.2
  %v823 = vmul.f32 %v565, 0.2
  %v824 = vmul.f32 %v570, 0.2
  %v825 = vmul.f32 %v575, 0.2
  %v826 = vmul.f32 %v580, 0.2
  %v827 = vmul.f32 %v585, 0.2
  %v828 = vmul.f32 %v590, 0.2
  %v829 = vmul.f32 %v595, 0.2
  %v830 = vmul.f32 %v600, 0.2
  %v831 = vmul.f32 %v605, 0.2
  %v832 = vmul.f32 %v610, 0.2
  %v833 = vmul.f32 %v615, 0.2
  %v834 = vmul.f32 %v620, 0.2
  %v835 = vmul.f32 %v625, 0.2
  %v836 = vmul.f32 %v630, 0.2
  %v837 = vmul.f32 %v635, 0.2
  %v838 = vmul.f32 %v640, 0.2
  %v839 = vmul.f32 %v645, 0.2
  %v840 = vmul.f32 %v650, 0.2
  %v841 = vmul.f32 %v655, 0.2
  %v842 = vmul.f32 %v660, 0.2
  %v843 = vmul.f32 %v665, 0.2
  %v844 = vmul.f32 %v670, 0.2
  %v845 = vmul.f32 %v675, 0.2
  %v846 = vmul.f32 %v680, 0.2
  %v847 = vmul.f32 %v685, 0.2
  %v848 = vmul.f32 %v690, 0.2
  %v849 = vmul.f32 %v695, 0.2
  %v850 = vmul.f32 %v700, 0.2
  %v851 = vmul.f32 %v705, 0.2
  %v852 = vmul.f32 %v710, 0.2
  %v853 = vmul.f32 %v715, 0.2
  %v854 = vmul.f32 %v720, 0.2
  %v855 = vmul.f32 %v725, 0.2
  %v856 = vmul.f32 %v730, 0.2
  %v857 = vmul.f32 %v735, 0.2
  %v858 = vmul.f32 %v740, 0.2
  %v859 = vmul.f32 %v745, 0.2
  %v860 = vmul.f32 %v750, 0.2
  %v861 = vmul.f32 %v755, 0.2
  %v862 = vmul.f32 %v760, 0.2
  %v863 = vmul.f32 %v765, 0.2
  %v864 = vmul.f32 %v770, 0.2
  %v865 = vmul.f32 %v775, 0.2
  %v866 = vmul.f32 %v780, 0.2
  %v867 = vmul.f32 %v785, 0.2
  %v868 = vmul.f32 %v790, 0.2
  %v869 = vmul.f32 %v795, 0.2
  %v870 = vmul.f32 %v800, 0.2
  %v871 = vmul.f32 %v805, 0.2
  %v872 = vmax.f32 %v490, %v808
  %v873 = vmax.f32 %v495, %v809
  %v874 = vmax.f32 %v500, %v810
  %v875 = vmax.f32 %v505, %v811
  %v876 = vmax.f32 %v510, %v812
  %v877 = vmax.f32 %v515, %v813
  %v878 = vmax.f32 %v520, %v814
  %v879 = vmax.f32 %v525, %v815
  %v880 = vmax.f32 %v530, %v816
  %v881 = vmax.f32 %v535, %v817
  %v882 = vmax.f32 %v540, %v818
  %v883 = vmax.f32 %v545, %v819
  %v884 = vmax.f32 %v550, %v820
  %v885 = vmax.f32 %v555, %v821
  %v886 = vmax.f32 %v560, %v822
  %v887 = vmax.f32 %v565, %v823
  %v888 = vmax.f32 %v570, %v824
  %v889 = vmax.f32 %v575, %v825
  %v890 = vmax.f32 %v580, %v826
  %v891 = vmax.f32 %v585, %v827
  %v892 = vmax.f32 %v590, %v828
  %v893 = vmax.f32 %v595, %v829
  %v894 = vmax.f32 %v600, %v830
  %v895 = vmax.f32 %v605, %v831
  %v896 = vmax.f32 %v610, %v832
  %v897 = vmax.f32 %v615, %v833
  %v898 = vmax.f32 %v620, %v834
  %v899 = vmax.f32 %v625, %v835
  %v900 = vmax.f32 %v630, %v836
  %v901 = vmax.f32 %v635, %v837
  %v902 = vmax.f32 %v640, %v838
  %v903 = vmax.f32 %v645, %v839
  %v904 = vmax.f32 %v650, %v840
  %v905 = vmax.f32 %v655, %v841
  %v906 = vmax.f32 %v660, %v842
  %v907 = vmax.f32 %v665, %v843
  %v908 = vmax.f32 %v670, %v844
  %v909 = vmax.f32 %v675, %v845
  %v910 = vmax.f32 %v680, %v846
  %v911 = vmax.f32 %v685, %v847
  %v912 = vmax.f32 %v690, %v848
  %v913 = vmax.f32 %v695, %v849
  %v914 = vmax.f32 %v700, %v850
  %v915 = vmax.f32 %v705, %v851
  %v916 = vmax.f32 %v710, %v852
  %v917 = vmax.f32 %v715, %v853
  %v918 = vmax.f32 %v720, %v854
  %v919 = vmax.f32 %v725, %v855
  %v920 = vmax.f32 %v730, %v856
  %v921 = vmax.f32 %v735, %v857
  %v922 = vmax.f32 %v740, %v858
  %v923 = vmax.f32 %v745, %v859
  %v924 = vmax.f32 %v750, %v860
  %v925 = vmax.f32 %v755, %v861
  %v926 = vmax.f32 %v760, %v862
  %v927 = vmax.f32 %v765, %v863
  %v928 = vmax.f32 %v770, %v864
  %v929 = vmax.f32 %v775, %v865
  %v930 = vmax.f32 %v780, %v866
  %v931 = vmax.f32 %v785, %v867
  %v932 = vmax.f32 %v790, %v868
  %v933 = vmax.f32 %v795, %v869
  %v934 = vmax.f32 %v800, %v870
  %v935 = vmax.f32 %v805, %v871
  %936 = vst.msk [vmem:[#allocation2] sm:$0xff] %vm230, 0.0
  %937 = vst.msk [vmem:[#allocation2 + $0x8] sm:$0xff] %vm230, 0.0
  %938 = vst.msk [vmem:[#allocation2 + $0x10] sm:$0xff] %vm230, 0.0
  %939 = vst.msk [vmem:[#allocation2 + $0x18] sm:$0xff] %vm230, 0.0
  %940 = vst.msk [vmem:[#allocation2 + $0x240] sm:$0xff] %vm230, 0.0
  %941 = vst.msk [vmem:[#allocation2 + $0x248] sm:$0xff] %vm230, 0.0
  %942 = vst.msk [vmem:[#allocation2 + $0x250] sm:$0xff] %vm230, 0.0
  %943 = vst.msk [vmem:[#allocation2 + $0x258] sm:$0xff] %vm230, 0.0
  %s944 = scalar_lea.vmem [#allocation2], 544
  %945 = vst.msk [vmem:[%s944] sm:$0xff] %vm230, 0.0
  %946 = vst.msk [vmem:[%s944 + $0x8] sm:$0xff] %vm230, 0.0
  %947 = vst.msk [vmem:[%s944 + $0x10] sm:$0xff] %vm230, 0.0
  %948 = vst.msk [vmem:[%s944 + $0x18] sm:$0xff] %vm230, 0.0
  %949 = vst.msk [vmem:[%s944 + $0x240] sm:$0xff] %vm230, 0.0
  %950 = vst.msk [vmem:[%s944 + $0x248] sm:$0xff] %vm230, 0.0
  %951 = vst.msk [vmem:[%s944 + $0x250] sm:$0xff] %vm230, 0.0
  %952 = vst.msk [vmem:[%s944 + $0x258] sm:$0xff] %vm230, 0.0
  %953 = vst.msk [vmem:[#allocation2] sm:$0xff] %vm230, 0.0
  %954 = vst.msk [vmem:[#allocation2 + $0x20] sm:$0xff] %vm230, 0.0
  %955 = vst.msk [vmem:[#allocation2 + $0x40] sm:$0xff] %vm230, 0.0
  %956 = vst.msk [vmem:[#allocation2 + $0x60] sm:$0xff] %vm230, 0.0
  %957 = vst.msk [vmem:[#allocation2 + $0x80] sm:$0xff] %vm230, 0.0
  %958 = vst.msk [vmem:[#allocation2 + $0xa0] sm:$0xff] %vm230, 0.0
  %959 = vst.msk [vmem:[#allocation2 + $0xc0] sm:$0xff] %vm230, 0.0
  %960 = vst.msk [vmem:[#allocation2 + $0xe0] sm:$0xff] %vm230, 0.0
  %961 = vst.msk [vmem:[#allocation2 + $0x100] sm:$0xff] %vm230, 0.0
  %962 = vst.msk [vmem:[#allocation2 + $0x120] sm:$0xff] %vm230, 0.0
  %963 = vst.msk [vmem:[#allocation2 + $0x140] sm:$0xff] %vm230, 0.0
  %964 = vst.msk [vmem:[#allocation2 + $0x160] sm:$0xff] %vm230, 0.0
  %965 = vst.msk [vmem:[#allocation2 + $0x180] sm:$0xff] %vm230, 0.0
  %966 = vst.msk [vmem:[#allocation2 + $0x1a0] sm:$0xff] %vm230, 0.0
  %967 = vst.msk [vmem:[#allocation2 + $0x1c0] sm:$0xff] %vm230, 0.0
  %968 = vst.msk [vmem:[#allocation2 + $0x1e0] sm:$0xff] %vm230, 0.0
  %969 = vst.msk [vmem:[#allocation2 + $0x200] sm:$0xff] %vm230, 0.0
  %970 = vst.msk [vmem:[#allocation2 + $0x220] sm:$0xff] %vm230, 0.0
  %971 = vst.msk [vmem:[#allocation2 + $0x240] sm:$0xff] %vm230, 0.0
  %972 = vst.msk [vmem:[#allocation2 + $0x260] sm:$0xff] %vm230, 0.0
  %973 = vst.msk [vmem:[#allocation2 + $0x280] sm:$0xff] %vm230, 0.0
  %974 = vst.msk [vmem:[#allocation2 + $0x2a0] sm:$0xff] %vm230, 0.0
  %975 = vst.msk [vmem:[#allocation2 + $0x2c0] sm:$0xff] %vm230, 0.0
  %976 = vst.msk [vmem:[#allocation2 + $0x2e0] sm:$0xff] %vm230, 0.0
  %977 = vst.msk [vmem:[#allocation2 + $0x300] sm:$0xff] %vm230, 0.0
  %978 = vst.msk [vmem:[#allocation2 + $0x320] sm:$0xff] %vm230, 0.0
  %979 = vst.msk [vmem:[#allocation2 + $0x340] sm:$0xff] %vm230, 0.0
  %980 = vst.msk [vmem:[#allocation2 + $0x360] sm:$0xff] %vm230, 0.0
  %981 = vst.msk [vmem:[#allocation2 + $0x380] sm:$0xff] %vm230, 0.0
  %982 = vst.msk [vmem:[#allocation2 + $0x3a0] sm:$0xff] %vm230, 0.0
  %983 = vst.msk [vmem:[#allocation2 + $0x3c0] sm:$0xff] %vm230, 0.0
  %984 = vst.msk [vmem:[#allocation2 + $0x3e0] sm:$0xff] %vm230, 0.0
  %985 = vst.msk [vmem:[#allocation2 + $0x400] sm:$0xff] %vm230, 0.0
  %986 = vst.msk [vmem:[#allocation2 + $0x420] sm:$0xff] %vm230, 0.0
  %987 = vst.msk [vmem:[#allocation2 + $0x440] sm:$0xff] %vm230, 0.0
  %988 = vst.msk [vmem:[#allocation2 + $0x460] sm:$0xff] %vm230, 0.0
  %989 = vst.msk [vmem:[#allocation2 + $0x18] sm:$0xff] %vm230, 0.0
  %990 = vst.msk [vmem:[#allocation2 + $0x38] sm:$0xff] %vm230, 0.0
  %991 = vst.msk [vmem:[#allocation2 + $0x58] sm:$0xff] %vm230, 0.0
  %992 = vst.msk [vmem:[#allocation2 + $0x78] sm:$0xff] %vm230, 0.0
  %993 = vst.msk [vmem:[#allocation2 + $0x98] sm:$0xff] %vm230, 0.0
  %994 = vst.msk [vmem:[#allocation2 + $0xb8] sm:$0xff] %vm230, 0.0
  %995 = vst.msk [vmem:[#allocation2 + $0xd8] sm:$0xff] %vm230, 0.0
  %996 = vst.msk [vmem:[#allocation2 + $0xf8] sm:$0xff] %vm230, 0.0
  %997 = vst.msk [vmem:[#allocation2 + $0x118] sm:$0xff] %vm230, 0.0
  %998 = vst.msk [vmem:[#allocation2 + $0x138] sm:$0xff] %vm230, 0.0
  %999 = vst.msk [vmem:[#allocation2 + $0x158] sm:$0xff] %vm230, 0.0
  %1000 = vst.msk [vmem:[#allocation2 + $0x178] sm:$0xff] %vm230, 0.0
  %1001 = vst.msk [vmem:[#allocation2 + $0x198] sm:$0xff] %vm230, 0.0
  %1002 = vst.msk [vmem:[#allocation2 + $0x1b8] sm:$0xff] %vm230, 0.0
  %1003 = vst.msk [vmem:[#allocation2 + $0x1d8] sm:$0xff] %vm230, 0.0
  %1004 = vst.msk [vmem:[#allocation2 + $0x1f8] sm:$0xff] %vm230, 0.0
  %1005 = vst.msk [vmem:[#allocation2 + $0x218] sm:$0xff] %vm230, 0.0
  %1006 = vst.msk [vmem:[#allocation2 + $0x238] sm:$0xff] %vm230, 0.0
  %1007 = vst.msk [vmem:[#allocation2 + $0x258] sm:$0xff] %vm230, 0.0
  %1008 = vst.msk [vmem:[#allocation2 + $0x278] sm:$0xff] %vm230, 0.0
  %1009 = vst.msk [vmem:[#allocation2 + $0x298] sm:$0xff] %vm230, 0.0
  %1010 = vst.msk [vmem:[#allocation2 + $0x2b8] sm:$0xff] %vm230, 0.0
  %1011 = vst.msk [vmem:[#allocation2 + $0x2d8] sm:$0xff] %vm230, 0.0
  %1012 = vst.msk [vmem:[#allocation2 + $0x2f8] sm:$0xff] %vm230, 0.0
  %1013 = vst.msk [vmem:[#allocation2 + $0x318] sm:$0xff] %vm230, 0.0
  %1014 = vst.msk [vmem:[#allocation2 + $0x338] sm:$0xff] %vm230, 0.0
  %1015 = vst.msk [vmem:[#allocation2 + $0x358] sm:$0xff] %vm230, 0.0
  %1016 = vst.msk [vmem:[#allocation2 + $0x378] sm:$0xff] %vm230, 0.0
  %1017 = vst.msk [vmem:[#allocation2 + $0x398] sm:$0xff] %vm230, 0.0
  %1018 = vst.msk [vmem:[#allocation2 + $0x3b8] sm:$0xff] %vm230, 0.0
  %1019 = vst.msk [vmem:[#allocation2 + $0x3d8] sm:$0xff] %vm230, 0.0
  %1020 = vst.msk [vmem:[#allocation2 + $0x3f8] sm:$0xff] %vm230, 0.0
  %1021 = vst.msk [vmem:[#allocation2 + $0x418] sm:$0xff] %vm230, 0.0
  %1022 = vst.msk [vmem:[#allocation2 + $0x438] sm:$0xff] %vm230, 0.0
  %1023 = vst.msk [vmem:[#allocation2 + $0x458] sm:$0xff] %vm230, 0.0
  %1024 = vst.msk [vmem:[#allocation2 + $0x478] sm:$0xff] %vm230, 0.0
  %s1025 = scalar_lea.vmem [#allocation2], 32
  %1026 = vst.msk [vmem:[%s1025 + $0x8] sm:$0xff] %vm230, %v872
  %1027 = vst.msk [vmem:[%s1025 + $0x10] sm:$0xff] %vm230, %v873
  %1028 = vst.msk [vmem:[%s1025 + $0x28] sm:$0xff] %vm230, %v874
  %1029 = vst.msk [vmem:[%s1025 + $0x30] sm:$0xff] %vm230, %v875
  %1030 = vst.msk [vmem:[%s1025 + $0x48] sm:$0xff] %vm230, %v876
  %1031 = vst.msk [vmem:[%s1025 + $0x50] sm:$0xff] %vm230, %v877
  %1032 = vst.msk [vmem:[%s1025 + $0x68] sm:$0xff] %vm230, %v878
  %1033 = vst.msk [vmem:[%s1025 + $0x70] sm:$0xff] %vm230, %v879
  %1034 = vst.msk [vmem:[%s1025 + $0x88] sm:$0xff] %vm230, %v880
  %1035 = vst.msk [vmem:[%s1025 + $0x90] sm:$0xff] %vm230, %v881
  %1036 = vst.msk [vmem:[%s1025 + $0xa8] sm:$0xff] %vm230, %v882
  %1037 = vst.msk [vmem:[%s1025 + $0xb0] sm:$0xff] %vm230, %v883
  %1038 = vst.msk [vmem:[%s1025 + $0xc8] sm:$0xff] %vm230, %v884
  %1039 = vst.msk [vmem:[%s1025 + $0xd0] sm:$0xff] %vm230, %v885
  %1040 = vst.msk [vmem:[%s1025 + $0xe8] sm:$0xff] %vm230, %v886
  %1041 = vst.msk [vmem:[%s1025 + $0xf0] sm:$0xff] %vm230, %v887
  %1042 = vst.msk [vmem:[%s1025 + $0x108] sm:$0xff] %vm230, %v888
  %1043 = vst.msk [vmem:[%s1025 + $0x110] sm:$0xff] %vm230, %v889
  %1044 = vst.msk [vmem:[%s1025 + $0x128] sm:$0xff] %vm230, %v890
  %1045 = vst.msk [vmem:[%s1025 + $0x130] sm:$0xff] %vm230, %v891
  %1046 = vst.msk [vmem:[%s1025 + $0x148] sm:$0xff] %vm230, %v892
  %1047 = vst.msk [vmem:[%s1025 + $0x150] sm:$0xff] %vm230, %v893
  %1048 = vst.msk [vmem:[%s1025 + $0x168] sm:$0xff] %vm230, %v894
  %1049 = vst.msk [vmem:[%s1025 + $0x170] sm:$0xff] %vm230, %v895
  %1050 = vst.msk [vmem:[%s1025 + $0x188] sm:$0xff] %vm230, %v896
  %1051 = vst.msk [vmem:[%s1025 + $0x190] sm:$0xff] %vm230, %v897
  %1052 = vst.msk [vmem:[%s1025 + $0x1a8] sm:$0xff] %vm230, %v898
  %1053 = vst.msk [vmem:[%s1025 + $0x1b0] sm:$0xff] %vm230, %v899
  %1054 = vst.msk [vmem:[%s1025 + $0x1c8] sm:$0xff] %vm230, %v900
  %1055 = vst.msk [vmem:[%s1025 + $0x1d0] sm:$0xff] %vm230, %v901
  %1056 = vst.msk [vmem:[%s1025 + $0x1e8] sm:$0xff] %vm230, %v902
  %1057 = vst.msk [vmem:[%s1025 + $0x1f0] sm:$0xff] %vm230, %v903
  %1058 = vst.msk [vmem:[%s1025 + $0x248] sm:$0xff] %vm230, %v904
  %1059 = vst.msk [vmem:[%s1025 + $0x250] sm:$0xff] %vm230, %v905
  %1060 = vst.msk [vmem:[%s1025 + $0x268] sm:$0xff] %vm230, %v906
  %1061 = vst.msk [vmem:[%s1025 + $0x270] sm:$0xff] %vm230, %v907
  %1062 = vst.msk [vmem:[%s1025 + $0x288] sm:$0xff] %vm230, %v908
  %1063 = vst.msk [vmem:[%s1025 + $0x290] sm:$0xff] %vm230, %v909
  %1064 = vst.msk [vmem:[%s1025 + $0x2a8] sm:$0xff] %vm230, %v910
  %1065 = vst.msk [vmem:[%s1025 + $0x2b0] sm:$0xff] %vm230, %v911
  %1066 = vst.msk [vmem:[%s1025 + $0x2c8] sm:$0xff] %vm230, %v912
  %1067 = vst.msk [vmem:[%s1025 + $0x2d0] sm:$0xff] %vm230, %v913
  %1068 = vst.msk [vmem:[%s1025 + $0x2e8] sm:$0xff] %vm230, %v914
  %1069 = vst.msk [vmem:[%s1025 + $0x2f0] sm:$0xff] %vm230, %v915
  %1070 = vst.msk [vmem:[%s1025 + $0x308] sm:$0xff] %vm230, %v916
  %1071 = vst.msk [vmem:[%s1025 + $0x310] sm:$0xff] %vm230, %v917
  %1072 = vst.msk [vmem:[%s1025 + $0x328] sm:$0xff] %vm230, %v918
  %1073 = vst.msk [vmem:[%s1025 + $0x330] sm:$0xff] %vm230, %v919
  %1074 = vst.msk [vmem:[%s1025 + $0x348] sm:$0xff] %vm230, %v920
  %1075 = vst.msk [vmem:[%s1025 + $0x350] sm:$0xff] %vm230, %v921
  %1076 = vst.msk [vmem:[%s1025 + $0x368] sm:$0xff] %vm230, %v922
  %1077 = vst.msk [vmem:[%s1025 + $0x370] sm:$0xff] %vm230, %v923
  %1078 = vst.msk [vmem:[%s1025 + $0x388] sm:$0xff] %vm230, %v924
  %1079 = vst.msk [vmem:[%s1025 + $0x390] sm:$0xff] %vm230, %v925
  %1080 = vst.msk [vmem:[%s1025 + $0x3a8] sm:$0xff] %vm230, %v926
  %1081 = vst.msk [vmem:[%s1025 + $0x3b0] sm:$0xff] %vm230, %v927
  %1082 = vst.msk [vmem:[%s1025 + $0x3c8] sm:$0xff] %vm230, %v928
  %1083 = vst.msk [vmem:[%s1025 + $0x3d0] sm:$0xff] %vm230, %v929
  %1084 = vst.msk [vmem:[%s1025 + $0x3e8] sm:$0xff] %vm230, %v930
  %1085 = vst.msk [vmem:[%s1025 + $0x3f0] sm:$0xff] %vm230, %v931
  %1086 = vst.msk [vmem:[%s1025 + $0x408] sm:$0xff] %vm230, %v932
  %1087 = vst.msk [vmem:[%s1025 + $0x410] sm:$0xff] %vm230, %v933
  %1088 = vst.msk [vmem:[%s1025 + $0x428] sm:$0xff] %vm230, %v934
  %1089 = vst.msk [vmem:[%s1025 + $0x430] sm:$0xff] %vm230, %v935
  %v1090 = vld [vmem:[#allocation2 + $0x7] sm:$0xff]
  %v1091 = vld [vmem:[#allocation2 + $0xf] sm:$0xff]
  %v1092 = vld [vmem:[#allocation2 + $0x27] sm:$0xff]
  %v1093 = vld [vmem:[#allocation2 + $0x2f] sm:$0xff]
  %v1094 = vld [vmem:[#allocation2 + $0x47] sm:$0xff]
  %v1095 = vld [vmem:[#allocation2 + $0x4f] sm:$0xff]
  %v1096 = vld [vmem:[#allocation2 + $0x67] sm:$0xff]
  %v1097 = vld [vmem:[#allocation2 + $0x6f] sm:$0xff]
  %v1098 = vld [vmem:[#allocation2 + $0x87] sm:$0xff]
  %v1099 = vld [vmem:[#allocation2 + $0x8f] sm:$0xff]
  %v1100 = vld [vmem:[#allocation2 + $0xa7] sm:$0xff]
  %v1101 = vld [vmem:[#allocation2 + $0xaf] sm:$0xff]
  %v1102 = vld [vmem:[#allocation2 + $0xc7] sm:$0xff]
  %v1103 = vld [vmem:[#allocation2 + $0xcf] sm:$0xff]
  %v1104 = vld [vmem:[#allocation2 + $0xe7] sm:$0xff]
  %v1105 = vld [vmem:[#allocation2 + $0xef] sm:$0xff]
  %v1106 = vld [vmem:[#allocation2 + $0x107] sm:$0xff]
  %v1107 = vld [vmem:[#allocation2 + $0x10f] sm:$0xff]
  %v1108 = vld [vmem:[#allocation2 + $0x127] sm:$0xff]
  %v1109 = vld [vmem:[#allocation2 + $0x12f] sm:$0xff]
  %v1110 = vld [vmem:[#allocation2 + $0x147] sm:$0xff]
  %v1111 = vld [vmem:[#allocation2 + $0x14f] sm:$0xff]
  %v1112 = vld [vmem:[#allocation2 + $0x167] sm:$0xff]
  %v1113 = vld [vmem:[#allocation2 + $0x16f] sm:$0xff]
  %v1114 = vld [vmem:[#allocation2 + $0x187] sm:$0xff]
  %v1115 = vld [vmem:[#allocation2 + $0x18f] sm:$0xff]
  %v1116 = vld [vmem:[#allocation2 + $0x1a7] sm:$0xff]
  %v1117 = vld [vmem:[#allocation2 + $0x1af] sm:$0xff]
  %v1118 = vld [vmem:[#allocation2 + $0x1c7] sm:$0xff]
  %v1119 = vld [vmem:[#allocation2 + $0x1cf] sm:$0xff]
  %v1120 = vld [vmem:[#allocation2 + $0x1e7] sm:$0xff]
  %v1121 = vld [vmem:[#allocation2 + $0x1ef] sm:$0xff]
  %v1122 = vld [vmem:[#allocation2 + $0x207] sm:$0xff]
  %v1123 = vld [vmem:[#allocation2 + $0x20f] sm:$0xff]
  %v1124 = vld [vmem:[#allocation2 + $0x227] sm:$0xff]
  %v1125 = vld [vmem:[#allocation2 + $0x22f] sm:$0xff]
  %v1126 = vld [vmem:[#allocation2 + $0x247] sm:$0xff]
  %v1127 = vld [vmem:[#allocation2 + $0x24f] sm:$0xff]
  %v1128 = vld [vmem:[#allocation2 + $0x267] sm:$0xff]
  %v1129 = vld [vmem:[#allocation2 + $0x26f] sm:$0xff]
  %v1130 = vld [vmem:[#allocation2 + $0x287] sm:$0xff]
  %v1131 = vld [vmem:[#allocation2 + $0x28f] sm:$0xff]
  %v1132 = vld [vmem:[#allocation2 + $0x2a7] sm:$0xff]
  %v1133 = vld [vmem:[#allocation2 + $0x2af] sm:$0xff]
  %v1134 = vld [vmem:[#allocation2 + $0x2c7] sm:$0xff]
  %v1135 = vld [vmem:[#allocation2 + $0x2cf] sm:$0xff]
  %v1136 = vld [vmem:[#allocation2 + $0x2e7] sm:$0xff]
  %v1137 = vld [vmem:[#allocation2 + $0x2ef] sm:$0xff]
  %v1138 = vld [vmem:[#allocation2 + $0x307] sm:$0xff]
  %v1139 = vld [vmem:[#allocation2 + $0x30f] sm:$0xff]
  %v1140 = vld [vmem:[#allocation2 + $0x327] sm:$0xff]
  %v1141 = vld [vmem:[#allocation2 + $0x32f] sm:$0xff]
  %v1142 = vld [vmem:[#allocation2 + $0x347] sm:$0xff]
  %v1143 = vld [vmem:[#allocation2 + $0x34f] sm:$0xff]
  %v1144 = vld [vmem:[#allocation2 + $0x367] sm:$0xff]
  %v1145 = vld [vmem:[#allocation2 + $0x36f] sm:$0xff]
  %v1146 = vld [vmem:[#allocation2 + $0x387] sm:$0xff]
  %v1147 = vld [vmem:[#allocation2 + $0x38f] sm:$0xff]
  %v1148 = vld [vmem:[#allocation2 + $0x3a7] sm:$0xff]
  %v1149 = vld [vmem:[#allocation2 + $0x3af] sm:$0xff]
  %v1150 = vld [vmem:[#allocation2 + $0x3c7] sm:$0xff]
  %v1151 = vld [vmem:[#allocation2 + $0x3cf] sm:$0xff]
  %v1152 = vld [vmem:[#allocation2 + $0x3e7] sm:$0xff]
  %v1153 = vld [vmem:[#allocation2 + $0x3ef] sm:$0xff]
  %v1154 = vld [vmem:[#allocation2 + $0x407] sm:$0xff]
  %v1155 = vld [vmem:[#allocation2 + $0x40f] sm:$0xff]
  %v1156 = vld [vmem:[#allocation2 + $0x427] sm:$0xff]
  %v1157 = vld [vmem:[#allocation2 + $0x42f] sm:$0xff]
  %v1158 = vld [vmem:[#allocation2 + $0x447] sm:$0xff]
  %v1159 = vld [vmem:[#allocation2 + $0x44f] sm:$0xff]
  %v1160 = vld [vmem:[#allocation2 + $0x467] sm:$0xff]
  %v1161 = vld [vmem:[#allocation2 + $0x46f] sm:$0xff]
  %v1162 = vld [vmem:[#allocation2 + $0x8] sm:$0xff]
  %v1163 = vld [vmem:[#allocation2 + $0x10] sm:$0xff]
  %v1164 = vld [vmem:[#allocation2 + $0x28] sm:$0xff]
  %v1165 = vld [vmem:[#allocation2 + $0x30] sm:$0xff]
  %v1166 = vld [vmem:[#allocation2 + $0x48] sm:$0xff]
  %v1167 = vld [vmem:[#allocation2 + $0x50] sm:$0xff]
  %v1168 = vld [vmem:[#allocation2 + $0x68] sm:$0xff]
  %v1169 = vld [vmem:[#allocation2 + $0x70] sm:$0xff]
  %v1170 = vld [vmem:[#allocation2 + $0x88] sm:$0xff]
  %v1171 = vld [vmem:[#allocation2 + $0x90] sm:$0xff]
  %v1172 = vld [vmem:[#allocation2 + $0xa8] sm:$0xff]
  %v1173 = vld [vmem:[#allocation2 + $0xb0] sm:$0xff]
  %v1174 = vld [vmem:[#allocation2 + $0xc8] sm:$0xff]
  %v1175 = vld [vmem:[#allocation2 + $0xd0] sm:$0xff]
  %v1176 = vld [vmem:[#allocation2 + $0xe8] sm:$0xff]
  %v1177 = vld [vmem:[#allocation2 + $0xf0] sm:$0xff]
  %v1178 = vld [vmem:[#allocation2 + $0x108] sm:$0xff]
  %v1179 = vld [vmem:[#allocation2 + $0x110] sm:$0xff]
  %v1180 = vld [vmem:[#allocation2 + $0x128] sm:$0xff]
  %v1181 = vld [vmem:[#allocation2 + $0x130] sm:$0xff]
  %v1182 = vld [vmem:[#allocation2 + $0x148] sm:$0xff]
  %v1183 = vld [vmem:[#allocation2 + $0x150] sm:$0xff]
  %v1184 = vld [vmem:[#allocation2 + $0x168] sm:$0xff]
  %v1185 = vld [vmem:[#allocation2 + $0x170] sm:$0xff]
  %v1186 = vld [vmem:[#allocation2 + $0x188] sm:$0xff]
  %v1187 = vld [vmem:[#allocation2 + $0x190] sm:$0xff]
  %v1188 = vld [vmem:[#allocation2 + $0x1a8] sm:$0xff]
  %v1189 = vld [vmem:[#allocation2 + $0x1b0] sm:$0xff]
  %v1190 = vld [vmem:[#allocation2 + $0x1c8] sm:$0xff]
  %v1191 = vld [vmem:[#allocation2 + $0x1d0] sm:$0xff]
  %v1192 = vld [vmem:[#allocation2 + $0x1e8] sm:$0xff]
  %v1193 = vld [vmem:[#allocation2 + $0x1f0] sm:$0xff]
  %v1194 = vld [vmem:[#allocation2 + $0x208] sm:$0xff]
  %v1195 = vld [vmem:[#allocation2 + $0x210] sm:$0xff]
  %v1196 = vld [vmem:[#allocation2 + $0x228] sm:$0xff]
  %v1197 = vld [vmem:[#allocation2 + $0x230] sm:$0xff]
  %v1198 = vld [vmem:[#allocation2 + $0x248] sm:$0xff]
  %v1199 = vld [vmem:[#allocation2 + $0x250] sm:$0xff]
  %v1200 = vld [vmem:[#allocation2 + $0x268] sm:$0xff]
  %v1201 = vld [vmem:[#allocation2 + $0x270] sm:$0xff]
  %v1202 = vld [vmem:[#allocation2 + $0x288] sm:$0xff]
  %v1203 = vld [vmem:[#allocation2 + $0x290] sm:$0xff]
  %v1204 = vld [vmem:[#allocation2 + $0x2a8] sm:$0xff]
  %v1205 = vld [vmem:[#allocation2 + $0x2b0] sm:$0xff]
  %v1206 = vld [vmem:[#allocation2 + $0x2c8] sm:$0xff]
  %v1207 = vld [vmem:[#allocation2 + $0x2d0] sm:$0xff]
  %v1208 = vld [vmem:[#allocation2 + $0x2e8] sm:$0xff]
  %v1209 = vld [vmem:[#allocation2 + $0x2f0] sm:$0xff]
  %v1210 = vld [vmem:[#allocation2 + $0x308] sm:$0xff]
  %v1211 = vld [vmem:[#allocation2 + $0x310] sm:$0xff]
  %v1212 = vld [vmem:[#allocation2 + $0x328] sm:$0xff]
  %v1213 = vld [vmem:[#allocation2 + $0x330] sm:$0xff]
  %v1214 = vld [vmem:[#allocation2 + $0x348] sm:$0xff]
  %v1215 = vld [vmem:[#allocation2 + $0x350] sm:$0xff]
  %v1216 = vld [vmem:[#allocation2 + $0x368] sm:$0xff]
  %v1217 = vld [vmem:[#allocation2 + $0x370] sm:$0xff]
  %v1218 = vld [vmem:[#allocation2 + $0x388] sm:$0xff]
  %v1219 = vld [vmem:[#allocation2 + $0x390] sm:$0xff]
  %v1220 = vld [vmem:[#allocation2 + $0x3a8] sm:$0xff]
  %v1221 = vld [vmem:[#allocation2 + $0x3b0] sm:$0xff]
  %v1222 = vld [vmem:[#allocation2 + $0x3c8] sm:$0xff]
  %v1223 = vld [vmem:[#allocation2 + $0x3d0] sm:$0xff]
  %v1224 = vld [vmem:[#allocation2 + $0x3e8] sm:$0xff]
  %v1225 = vld [vmem:[#allocation2 + $0x3f0] sm:$0xff]
  %v1226 = vld [vmem:[#allocation2 + $0x408] sm:$0xff]
  %v1227 = vld [vmem:[#allocation2 + $0x410] sm:$0xff]
  %v1228 = vld [vmem:[#allocation2 + $0x428] sm:$0xff]
  %v1229 = vld [vmem:[#allocation2 + $0x430] sm:$0xff]
  %v1230 = vld [vmem:[#allocation2 + $0x448] sm:$0xff]
  %v1231 = vld [vmem:[#allocation2 + $0x450] sm:$0xff]
  %v1232 = vld [vmem:[#allocation2 + $0x468] sm:$0xff]
  %v1233 = vld [vmem:[#allocation2 + $0x470] sm:$0xff]
  %v1234 = vld [vmem:[#allocation2 + $0x9] sm:$0xff]
  %v1235 = vld [vmem:[#allocation2 + $0x11] sm:$0xff]
  %v1236 = vld [vmem:[#allocation2 + $0x29] sm:$0xff]
  %v1237 = vld [vmem:[#allocation2 + $0x31] sm:$0xff]
  %v1238 = vld [vmem:[#allocation2 + $0x49] sm:$0xff]
  %v1239 = vld [vmem:[#allocation2 + $0x51] sm:$0xff]
  %v1240 = vld [vmem:[#allocation2 + $0x69] sm:$0xff]
  %v1241 = vld [vmem:[#allocation2 + $0x71] sm:$0xff]
  %v1242 = vld [vmem:[#allocation2 + $0x89] sm:$0xff]
  %v1243 = vld [vmem:[#allocation2 + $0x91] sm:$0xff]
  %v1244 = vld [vmem:[#allocation2 + $0xa9] sm:$0xff]
  %v1245 = vld [vmem:[#allocation2 + $0xb1] sm:$0xff]
  %v1246 = vld [vmem:[#allocation2 + $0xc9] sm:$0xff]
  %v1247 = vld [vmem:[#allocation2 + $0xd1] sm:$0xff]
  %v1248 = vld [vmem:[#allocation2 + $0xe9] sm:$0xff]
  %v1249 = vld [vmem:[#allocation2 + $0xf1] sm:$0xff]
  %v1250 = vld [vmem:[#allocation2 + $0x109] sm:$0xff]
  %v1251 = vld [vmem:[#allocation2 + $0x111] sm:$0xff]
  %v1252 = vld [vmem:[#allocation2 + $0x129] sm:$0xff]
  %v1253 = vld [vmem:[#allocation2 + $0x131] sm:$0xff]
  %v1254 = vld [vmem:[#allocation2 + $0x149] sm:$0xff]
  %v1255 = vld [vmem:[#allocation2 + $0x151] sm:$0xff]
  %v1256 = vld [vmem:[#allocation2 + $0x169] sm:$0xff]
  %v1257 = vld [vmem:[#allocation2 + $0x171] sm:$0xff]
  %v1258 = vld [vmem:[#allocation2 + $0x189] sm:$0xff]
  %v1259 = vld [vmem:[#allocation2 + $0x191] sm:$0xff]
  %v1260 = vld [vmem:[#allocation2 + $0x1a9] sm:$0xff]
  %v1261 = vld [vmem:[#allocation2 + $0x1b1] sm:$0xff]
  %v1262 = vld [vmem:[#allocation2 + $0x1c9] sm:$0xff]
  %v1263 = vld [vmem:[#allocation2 + $0x1d1] sm:$0xff]
  %v1264 = vld [vmem:[#allocation2 + $0x1e9] sm:$0xff]
  %v1265 = vld [vmem:[#allocation2 + $0x1f1] sm:$0xff]
  %v1266 = vld [vmem:[#allocation2 + $0x209] sm:$0xff]
  %v1267 = vld [vmem:[#allocation2 + $0x211] sm:$0xff]
  %v1268 = vld [vmem:[#allocation2 + $0x229] sm:$0xff]
  %v1269 = vld [vmem:[#allocation2 + $0x231] sm:$0xff]
  %v1270 = vld [vmem:[#allocation2 + $0x249] sm:$0xff]
  %v1271 = vld [vmem:[#allocation2 + $0x251] sm:$0xff]
  %v1272 = vld [vmem:[#allocation2 + $0x269] sm:$0xff]
  %v1273 = vld [vmem:[#allocation2 + $0x271] sm:$0xff]
  %v1274 = vld [vmem:[#allocation2 + $0x289] sm:$0xff]
  %v1275 = vld [vmem:[#allocation2 + $0x291] sm:$0xff]
  %v1276 = vld [vmem:[#allocation2 + $0x2a9] sm:$0xff]
  %v1277 = vld [vmem:[#allocation2 + $0x2b1] sm:$0xff]
  %v1278 = vld [vmem:[#allocation2 + $0x2c9] sm:$0xff]
  %v1279 = vld [vmem:[#allocation2 + $0x2d1] sm:$0xff]
  %v1280 = vld [vmem:[#allocation2 + $0x2e9] sm:$0xff]
  %v1281 = vld [vmem:[#allocation2 + $0x2f1] sm:$0xff]
  %v1282 = vld [vmem:[#allocation2 + $0x309] sm:$0xff]
  %v1283 = vld [vmem:[#allocation2 + $0x311] sm:$0xff]
  %v1284 = vld [vmem:[#allocation2 + $0x329] sm:$0xff]
  %v1285 = vld [vmem:[#allocation2 + $0x331] sm:$0xff]
  %v1286 = vld [vmem:[#allocation2 + $0x349] sm:$0xff]
  %v1287 = vld [vmem:[#allocation2 + $0x351] sm:$0xff]
  %v1288 = vld [vmem:[#allocation2 + $0x369] sm:$0xff]
  %v1289 = vld [vmem:[#allocation2 + $0x371] sm:$0xff]
  %v1290 = vld [vmem:[#allocation2 + $0x389] sm:$0xff]
  %v1291 = vld [vmem:[#allocation2 + $0x391] sm:$0xff]
  %v1292 = vld [vmem:[#allocation2 + $0x3a9] sm:$0xff]
  %v1293 = vld [vmem:[#allocation2 + $0x3b1] sm:$0xff]
  %v1294 = vld [vmem:[#allocation2 + $0x3c9] sm:$0xff]
  %v1295 = vld [vmem:[#allocation2 + $0x3d1] sm:$0xff]
  %v1296 = vld [vmem:[#allocation2 + $0x3e9] sm:$0xff]
  %v1297 = vld [vmem:[#allocation2 + $0x3f1] sm:$0xff]
  %v1298 = vld [vmem:[#allocation2 + $0x409] sm:$0xff]
  %v1299 = vld [vmem:[#allocation2 + $0x411] sm:$0xff]
  %v1300 = vld [vmem:[#allocation2 + $0x429] sm:$0xff]
  %v1301 = vld [vmem:[#allocation2 + $0x431] sm:$0xff]
  %v1302 = vld [vmem:[#allocation2 + $0x449] sm:$0xff]
  %v1303 = vld [vmem:[#allocation2 + $0x451] sm:$0xff]
  %v1304 = vld [vmem:[#allocation2 + $0x469] sm:$0xff]
  %v1305 = vld [vmem:[#allocation2 + $0x471] sm:$0xff]
  %v1306 = vld [vmem:[%s3] sm:$0xff]
  %v1307 = vld [vmem:[%s3 + $0x8] sm:$0xff]
  %s1308 = scalar_lea.vmem %s3, 16
  %v1309 = vld [vmem:[%s1308] sm:$0xff]
  %v1310 = vld [vmem:[%s1308 + $0x8] sm:$0xff]
  %v1312 = vsel %vm230, %v1162, 0
  %v1315 = vsel %vm230, %v1163, 0
  %v1318 = vsel %vm230, %v1164, 0
  %v1321 = vsel %vm230, %v1165, 0
  %v1324 = vsel %vm230, %v1166, 0
  %v1327 = vsel %vm230, %v1167, 0
  %v1330 = vsel %vm230, %v1168, 0
  %v1333 = vsel %vm230, %v1169, 0
  %v1336 = vsel %vm230, %v1170, 0
  %v1339 = vsel %vm230, %v1171, 0
  %v1342 = vsel %vm230, %v1172, 0
  %v1345 = vsel %vm230, %v1173, 0
  %v1348 = vsel %vm230, %v1174, 0
  %v1351 = vsel %vm230, %v1175, 0
  %v1354 = vsel %vm230, %v1176, 0
  %v1357 = vsel %vm230, %v1177, 0
  %v1360 = vsel %vm230, %v1178, 0
  %v1363 = vsel %vm230, %v1179, 0
  %v1366 = vsel %vm230, %v1180, 0
  %v1369 = vsel %vm230, %v1181, 0
  %v1372 = vsel %vm230, %v1182, 0
  %v1375 = vsel %vm230, %v1183, 0
  %v1378 = vsel %vm230, %v1184, 0
  %v1381 = vsel %vm230, %v1185, 0
  %v1384 = vsel %vm230, %v1186, 0
  %v1387 = vsel %vm230, %v1187, 0
  %v1390 = vsel %vm230, %v1188, 0
  %v1393 = vsel %vm230, %v1189, 0
  %v1396 = vsel %vm230, %v1190, 0
  %v1399 = vsel %vm230, %v1191, 0
  %v1402 = vsel %vm230, %v1192, 0
  %v1405 = vsel %vm230, %v1193, 0
  %v1408 = vsel %vm230, %v1198, 0
  %v1411 = vsel %vm230, %v1199, 0
  %v1414 = vsel %vm230, %v1200, 0
  %v1417 = vsel %vm230, %v1201, 0
  %v1420 = vsel %vm230, %v1202, 0
  %v1423 = vsel %vm230, %v1203, 0
  %v1426 = vsel %vm230, %v1204, 0
  %v1429 = vsel %vm230, %v1205, 0
  %v1432 = vsel %vm230, %v1206, 0
  %v1435 = vsel %vm230, %v1207, 0
  %v1438 = vsel %vm230, %v1208, 0
  %v1441 = vsel %vm230, %v1209, 0
  %v1444 = vsel %vm230, %v1210, 0
  %v1447 = vsel %vm230, %v1211, 0
  %v1450 = vsel %vm230, %v1212, 0
  %v1453 = vsel %vm230, %v1213, 0
  %v1456 = vsel %vm230, %v1214, 0
  %v1459 = vsel %vm230, %v1215, 0
  %v1462 = vsel %vm230, %v1216, 0
  %v1465 = vsel %vm230, %v1217, 0
  %v1468 = vsel %vm230, %v1218, 0
  %v1471 = vsel %vm230, %v1219, 0
  %v1474 = vsel %vm230, %v1220, 0
  %v1477 = vsel %vm230, %v1221, 0
  %v1480 = vsel %vm230, %v1222, 0
  %v1483 = vsel %vm230, %v1223, 0
  %v1486 = vsel %vm230, %v1224, 0
  %v1489 = vsel %vm230, %v1225, 0
  %v1492 = vsel %vm230, %v1226, 0
  %v1495 = vsel %vm230, %v1227, 0
  %v1498 = vsel %vm230, %v1228, 0
  %v1501 = vsel %vm230, %v1229, 0
  %1503 = vmatprep.subr.mxu0 0.0
  %1504 = vmatpush1.msra.mxu0 %v1309
  %1505 = vmatprep.subr.mxu0 0.0
  %1506 = vmatpush1.msra.mxu0 %v1310
  %1507 = vmatprep.subr.mxu0 0.0
  %1508 = vmatpush1.msra.mxu0 0.0
  %1509 = vmatprep.subr.mxu0 0.0
  %1510 = vmatpush1.msra.mxu0 0.0
  %1511 = vmatprep.subr.mxu0 0.0
  %1512 = vmatpush1.msra.mxu0 0.0
  %1513 = vmatprep.subr.mxu0 0.0
  %1514 = vmatpush1.msra.mxu0 0.0
  %1515 = vmatprep.subr.mxu0 0.0
  %1516 = vmatpush1.msra.mxu0 0.0
  %1517 = vmatprep.subr.mxu0 0.0
  %1518 = vmatpush1.msra.mxu0 0.0
  %1519 = vmatprep.subr.mxu0 0.0
  %1520 = vmatpush1.msra.mxu0 0.0
  %1521 = vmatprep.subr.mxu0 0.0
  %1522 = vmatpush1.msra.mxu0 0.0
  %1523 = vmatprep.subr.mxu0 0.0
  %1524 = vmatpush1.msra.mxu0 0.0
  %1525 = vmatprep.subr.mxu0 0.0
  %1526 = vmatpush1.msra.mxu0 0.0
  %1527 = vmatprep.subr.mxu0 0.0
  %1528 = vmatpush1.msra.mxu0 0.0
  %1529 = vmatprep.subr.mxu0 0.0
  %1530 = vmatpush1.msra.mxu0 0.0
  %1531 = vmatprep.subr.mxu0 0.0
  %1532 = vmatpush1.msra.mxu0 0.0
  %1533 = vmatprep.subr.mxu0 0.0
  %1534 = vmatpush1.msra.mxu0 0.0
  %1535 = vmatprep.subr.mxu0 0.0
  %1536 = vmatpush1.msra.mxu0 0.0
  %1537 = vmatprep.subr.mxu0 0.0
  %1538 = vmatpush1.msra.mxu0 0.0
  %1539 = vmatprep.subr.mxu0 0.0
  %1540 = vmatpush1.msra.mxu0 0.0
  %1541 = vmatprep.subr.mxu0 0.0
  %1542 = vmatpush1.msra.mxu0 0.0
  %1543 = vmatprep.subr.mxu0 0.0
  %1544 = vmatpush1.msra.mxu0 0.0
  %1545 = vmatprep.subr.mxu0 0.0
  %1546 = vmatpush1.msra.mxu0 0.0
  %1547 = vmatprep.subr.mxu0 0.0
  %1548 = vmatpush1.msra.mxu0 0.0
  %1549 = vmatprep.subr.mxu0 0.0
  %1550 = vmatpush1.msra.mxu0 0.0
  %1551 = vmatprep.subr.mxu0 0.0
  %1552 = vmatpush1.msra.mxu0 0.0
  %1553 = vmatprep.subr.mxu0 0.0
  %1554 = vmatpush1.msra.mxu0 0.0
  %1555 = vmatprep.subr.mxu0 0.0
  %1556 = vmatpush1.msra.mxu0 0.0
  %1557 = vmatprep.subr.mxu0 0.0
  %1558 = vmatpush1.msra.mxu0 0.0
  %1559 = vmatprep.subr.mxu0 0.0
  %1560 = vmatpush1.msra.mxu0 0.0
  %1561 = vmatprep.subr.mxu0 0.0
  %1562 = vmatpush1.msra.mxu0 0.0
  %1563 = vmatprep.subr.mxu0 0.0
  %1564 = vmatpush1.msra.mxu0 0.0
  %1565 = vmatprep.subr.mxu0 0.0
  %1566 = vmatpush1.msra.mxu0 0.0
  %1567 = vmatprep.mubr.f32.mxu0 0.0
  %1568 = vmatmul.mubr.f32.gmra.mrb[0].mxu0 %v1312
  %v1569 = vpop.f32.mrb[0].mxu0
  %v1570 = vadd.f32 0.0, %v1569
  %v1571 = vpop.f32.mrb[0].mxu0
  %1572 = vmatprep.mubr.f32.mxu0 0.0
  %1573 = vmatmul.mubr.f32.gmra.mrb[0].mxu0 %v1315
  %v1574 = vpop.f32.mrb[0].mxu0
  %v1575 = vadd.f32 0.0, %v1574
  %v1576 = vpop.f32.mrb[0].mxu0
  %1577 = vmatprep.mubr.f32.mxu0 0.0
  %1578 = vmatmul.mubr.f32.gmra.mrb[0].mxu0 %v1318
  %v1579 = vpop.f32.mrb[0].mxu0
  %v1580 = vadd.f32 0.0, %v1579
  %v1581 = vpop.f32.mrb[0].mxu0
  %1582 = vmatprep.mubr.f32.mxu0 0.0
  %1583 = vmatmul.mubr.f32.gmra.mrb[0].mxu0 %v1321
  %v1584 = vpop.f32.mrb[0].mxu0
  %v1585 = vadd.f32 0.0, %v1584
  %v1586 = vpop.f32.mrb[0].mxu0
  %1587 = vmatprep.mubr.f32.mxu0 0.0
  %1588 = vmatmul.mubr.f32.gmra.mrb[0].mxu0 %v1324
  %v1589 = vpop.f32.mrb[0].mxu0
  %v1590 = vadd.f32 0.0, %v1589
  %v1591 = vpop.f32.mrb[0].mxu0
  %1592 = vmatprep.mubr.f32.mxu0 0.0
  %1593 = vmatmul.mubr.f32.gmra.mrb[0].mxu0 %v1327
  %v1594 = vpop.f32.mrb[0].mxu0
  %v1595 = vadd.f32 0.0, %v1594
  %v1596 = vpop.f32.mrb[0].mxu0
  %1597 = vmatprep.mubr.f32.mxu0 0.0
  %1598 = vmatmul.mubr.f32.gmra.mrb[0].mxu0 %v1330
  %v1599 = vpop.f32.mrb[0].mxu0
  %v1600 = vadd.f32 0.0, %v1599
  %v1601 = vpop.f32.mrb[0].mxu0
  %1602 = vmatprep.mubr.f32.mxu0 0.0
  %1603 = vmatmul.mubr.f32.gmra.mrb[0].mxu0 %v1333
  %v1604 = vpop.f32.mrb[0].mxu0
  %v1605 = vadd.f32 0.0, %v1604
  %v1606 = vpop.f32.mrb[0].mxu0
  %1607 = vmatprep.mubr.f32.mxu0 0.0
  %1608 = vmatmul.mubr.f32.gmra.mrb[0].mxu0 %v1336
  %v1609 = vpop.f32.mrb[0].mxu0
  %v1610 = vadd.f32 0.0, %v1609
  %v1611 = vpop.f32.mrb[0].mxu0
  %1612 = vmatprep.mubr.f32.mxu0 0.0
  %1613 = vmatmul.mubr.f32.gmra.mrb[0].mxu0 %v1339
  %v1614 = vpop.f32.mrb[0].mxu0
  %v1615 = vadd.f32 0.0, %v1614
  %v1616 = vpop.f32.mrb[0].mxu0
  %1617 = vmatprep.mubr.f32.mxu0 0.0
  %1618 = vmatmul.mubr.f32.gmra.mrb[0].mxu0 %v1342
  %v1619 = vpop.f32.mrb[0].mxu0
  %v1620 = vadd.f32 0.0, %v1619
  %v1621 = vpop.f32.mrb[0].mxu0
  %1622 = vmatprep.mubr.f32.mxu0 0.0
  %1623 = vmatmul.mubr.f32.gmra.mrb[0].mxu0 %v1345
  %v1624 = vpop.f32.mrb[0].mxu0
  %v1625 = vadd.f32 0.0, %v1624
  %v1626 = vpop.f32.mrb[0].mxu0
  %1627 = vmatprep.mubr.f32.mxu0 0.0
  %1628 = vmatmul.mubr.f32.gmra.mrb[0].mxu0 %v1348
  %v1629 = vpop.f32.mrb[0].mxu0
  %v1630 = vadd.f32 0.0, %v1629
  %v1631 = vpop.f32.mrb[0].mxu0
  %1632 = vmatprep.mubr.f32.mxu0 0.0
  %1633 = vmatmul.mubr.f32.gmra.mrb[0].mxu0 %v1351
  %v1634 = vpop.f32.mrb[0].mxu0
  %v1635 = vadd.f32 0.0, %v1634
  %v1636 = vpop.f32.mrb[0].mxu0
  %1637 = vmatprep.mubr.f32.mxu0 0.0
  %1638 = vmatmul.mubr.f32.gmra.mrb[0].mxu0 %v1354
  %v1639 = vpop.f32.mrb[0].mxu0
  %v1640 = vadd.f32 0.0, %v1639
  %v1641 = vpop.f32.mrb[0].mxu0
  %1642 = vmatprep.mubr.f32.mxu0 0.0
  %1643 = vmatmul.mubr.f32.gmra.mrb[0].mxu0 %v1357
  %v1644 = vpop.f32.mrb[0].mxu0
  %v1645 = vadd.f32 0.0, %v1644
  %v1646 = vpop.f32.mrb[0].mxu0
  %1647 = vmatprep.mubr.f32.mxu0 0.0
  %1648 = vmatmul.mubr.f32.gmra.mrb[0].mxu0 %v1360
  %v1649 = vpop.f32.mrb[0].mxu0
  %v1650 = vadd.f32 0.0, %v1649
  %v1651 = vpop.f32.mrb[0].mxu0
  %1652 = vmatprep.mubr.f32.mxu0 0.0
  %1653 = vmatmul.mubr.f32.gmra.mrb[0].mxu0 %v1363
  %v1654 = vpop.f32.mrb[0].mxu0
  %v1655 = vadd.f32 0.0, %v1654
  %v1656 = vpop.f32.mrb[0].mxu0
  %1657 = vmatprep.mubr.f32.mxu0 0.0
  %1658 = vmatmul.mubr.f32.gmra.mrb[0].mxu0 %v1366
  %v1659 = vpop.f32.mrb[0].mxu0
  %v1660 = vadd.f32 0.0, %v1659
  %v1661 = vpop.f32.mrb[0].mxu0
  %1662 = vmatprep.mubr.f32.mxu0 0.0
  %1663 = vmatmul.mubr.f32.gmra.mrb[0].mxu0 %v1369
  %v1664 = vpop.f32.mrb[0].mxu0
  %v1665 = vadd.f32 0.0, %v1664
  %v1666 = vpop.f32.mrb[0].mxu0
  %1667 = vmatprep.mubr.f32.mxu0 0.0
  %1668 = vmatmul.mubr.f32.gmra.mrb[0].mxu0 %v1372
  %v1669 = vpop.f32.mrb[0].mxu0
  %v1670 = vadd.f32 0.0, %v1669
  %v1671 = vpop.f32.mrb[0].mxu0
  %1672 = vmatprep.mubr.f32.mxu0 0.0
  %1673 = vmatmul.mubr.f32.gmra.mrb[0].mxu0 %v1375
  %v1674 = vpop.f32.mrb[0].mxu0
  %v1675 = vadd.f32 0.0, %v1674
  %v1676 = vpop.f32.mrb[0].mxu0
  %1677 = vmatprep.mubr.f32.mxu0 0.0
  %1678 = vmatmul.mubr.f32.gmra.mrb[0].mxu0 %v1378
  %v1679 = vpop.f32.mrb[0].mxu0
  %v1680 = vadd.f32 0.0, %v1679
  %v1681 = vpop.f32.mrb[0].mxu0
  %1682 = vmatprep.mubr.f32.mxu0 0.0
  %1683 = vmatmul.mubr.f32.gmra.mrb[0].mxu0 %v1381
  %v1684 = vpop.f32.mrb[0].mxu0
  %v1685 = vadd.f32 0.0, %v1684
  %v1686 = vpop.f32.mrb[0].mxu0
  %1687 = vmatprep.mubr.f32.mxu0 0.0
  %1688 = vmatmul.mubr.f32.gmra.mrb[0].mxu0 %v1384
  %v1689 = vpop.f32.mrb[0].mxu0
  %v1690 = vadd.f32 0.0, %v1689
  %v1691 = vpop.f32.mrb[0].mxu0
  %1692 = vmatprep.mubr.f32.mxu0 0.0
  %1693 = vmatmul.mubr.f32.gmra.mrb[0].mxu0 %v1387
  %v1694 = vpop.f32.mrb[0].mxu0
  %v1695 = vadd.f32 0.0, %v1694
  %v1696 = vpop.f32.mrb[0].mxu0
  %1697 = vmatprep.mubr.f32.mxu0 0.0
  %1698 = vmatmul.mubr.f32.gmra.mrb[0].mxu0 %v1390
  %v1699 = vpop.f32.mrb[0].mxu0
  %v1700 = vadd.f32 0.0, %v1699
  %v1701 = vpop.f32.mrb[0].mxu0
  %1702 = vmatprep.mubr.f32.mxu0 0.0
  %1703 = vmatmul.mubr.f32.gmra.mrb[0].mxu0 %v1393
  %v1704 = vpop.f32.mrb[0].mxu0
  %v1705 = vadd.f32 0.0, %v1704
  %v1706 = vpop.f32.mrb[0].mxu0
  %1707 = vmatprep.mubr.f32.mxu0 0.0
  %1708 = vmatmul.mubr.f32.gmra.mrb[0].mxu0 %v1396
  %v1709 = vpop.f32.mrb[0].mxu0
  %v1710 = vadd.f32 0.0, %v1709
  %v1711 = vpop.f32.mrb[0].mxu0
  %1712 = vmatprep.mubr.f32.mxu0 0.0
  %1713 = vmatmul.mubr.f32.gmra.mrb[0].mxu0 %v1399
  %v1714 = vpop.f32.mrb[0].mxu0
  %v1715 = vadd.f32 0.0, %v1714
  %v1716 = vpop.f32.mrb[0].mxu0
  %1717 = vmatprep.mubr.f32.mxu0 0.0
  %1718 = vmatmul.mubr.f32.gmra.mrb[0].mxu0 %v1402
  %v1719 = vpop.f32.mrb[0].mxu0
  %v1720 = vadd.f32 0.0, %v1719
  %v1721 = vpop.f32.mrb[0].mxu0
  %1722 = vmatprep.mubr.f32.mxu0 0.0
  %1723 = vmatmul.mubr.f32.gmra.mrb[0].mxu0 %v1405
  %v1724 = vpop.f32.mrb[0].mxu0
  %v1725 = vadd.f32 0.0, %v1724
  %v1726 = vpop.f32.mrb[0].mxu0
  %1727 = vmatprep.mubr.f32.mxu0 0.0
  %1728 = vmatmul.mubr.f32.gmra.mrb[0].mxu0 %v1408
  %v1729 = vpop.f32.mrb[0].mxu0
  %v1730 = vadd.f32 0.0, %v1729
  %v1731 = vpop.f32.mrb[0].mxu0
  %1732 = vmatprep.mubr.f32.mxu0 0.0
  %1733 = vmatmul.mubr.f32.gmra.mrb[0].mxu0 %v1411
  %v1734 = vpop.f32.mrb[0].mxu0
  %v1735 = vadd.f32 0.0, %v1734
  %v1736 = vpop.f32.mrb[0].mxu0
  %1737 = vmatprep.mubr.f32.mxu0 0.0
  %1738 = vmatmul.mubr.f32.gmra.mrb[0].mxu0 %v1414
  %v1739 = vpop.f32.mrb[0].mxu0
  %v1740 = vadd.f32 0.0, %v1739
  %v1741 = vpop.f32.mrb[0].mxu0
  %1742 = vmatprep.mubr.f32.mxu0 0.0
  %1743 = vmatmul.mubr.f32.gmra.mrb[0].mxu0 %v1417
  %v1744 = vpop.f32.mrb[0].mxu0
  %v1745 = vadd.f32 0.0, %v1744
  %v1746 = vpop.f32.mrb[0].mxu0
  %1747 = vmatprep.mubr.f32.mxu0 0.0
  %1748 = vmatmul.mubr.f32.gmra.mrb[0].mxu0 %v1420
  %v1749 = vpop.f32.mrb[0].mxu0
  %v1750 = vadd.f32 0.0, %v1749
  %v1751 = vpop.f32.mrb[0].mxu0
  %1752 = vmatprep.mubr.f32.mxu0 0.0
  %1753 = vmatmul.mubr.f32.gmra.mrb[0].mxu0 %v1423
  %v1754 = vpop.f32.mrb[0].mxu0
  %v1755 = vadd.f32 0.0, %v1754
  %v1756 = vpop.f32.mrb[0].mxu0
  %1757 = vmatprep.mubr.f32.mxu0 0.0
  %1758 = vmatmul.mubr.f32.gmra.mrb[0].mxu0 %v1426
  %v1759 = vpop.f32.mrb[0].mxu0
  %v1760 = vadd.f32 0.0, %v1759
  %v1761 = vpop.f32.mrb[0].mxu0
  %1762 = vmatprep.mubr.f32.mxu0 0.0
  %1763 = vmatmul.mubr.f32.gmra.mrb[0].mxu0 %v1429
  %v1764 = vpop.f32.mrb[0].mxu0
  %v1765 = vadd.f32 0.0, %v1764
  %v1766 = vpop.f32.mrb[0].mxu0
  %1767 = vmatprep.mubr.f32.mxu0 0.0
  %1768 = vmatmul.mubr.f32.gmra.mrb[0].mxu0 %v1432
  %v1769 = vpop.f32.mrb[0].mxu0
  %v1770 = vadd.f32 0.0, %v1769
  %v1771 = vpop.f32.mrb[0].mxu0
  %1772 = vmatprep.mubr.f32.mxu0 0.0
  %1773 = vmatmul.mubr.f32.gmra.mrb[0].mxu0 %v1435
  %v1774 = vpop.f32.mrb[0].mxu0
  %v1775 = vadd.f32 0.0, %v1774
  %v1776 = vpop.f32.mrb[0].mxu0
  %1777 = vmatprep.mubr.f32.mxu0 0.0
  %1778 = vmatmul.mubr.f32.gmra.mrb[0].mxu0 %v1438
  %v1779 = vpop.f32.mrb[0].mxu0
  %v1780 = vadd.f32 0.0, %v1779
  %v1781 = vpop.f32.mrb[0].mxu0
  %1782 = vmatprep.mubr.f32.mxu0 0.0
  %1783 = vmatmul.mubr.f32.gmra.mrb[0].mxu0 %v1441
  %v1784 = vpop.f32.mrb[0].mxu0
  %v1785 = vadd.f32 0.0, %v1784
  %v1786 = vpop.f32.mrb[0].mxu0
  %1787 = vmatprep.mubr.f32.mxu0 0.0
  %1788 = vmatmul.mubr.f32.gmra.mrb[0].mxu0 %v1444
  %v1789 = vpop.f32.mrb[0].mxu0
  %v1790 = vadd.f32 0.0, %v1789
  %v1791 = vpop.f32.mrb[0].mxu0
  %1792 = vmatprep.mubr.f32.mxu0 0.0
  %1793 = vmatmul.mubr.f32.gmra.mrb[0].mxu0 %v1447
  %v1794 = vpop.f32.mrb[0].mxu0
  %v1795 = vadd.f32 0.0, %v1794
  %v1796 = vpop.f32.mrb[0].mxu0
  %1797 = vmatprep.mubr.f32.mxu0 0.0
  %1798 = vmatmul.mubr.f32.gmra.mrb[0].mxu0 %v1450
  %v1799 = vpop.f32.mrb[0].mxu0
  %v1800 = vadd.f32 0.0, %v1799
  %v1801 = vpop.f32.mrb[0].mxu0
  %1802 = vmatprep.mubr.f32.mxu0 0.0
  %1803 = vmatmul.mubr.f32.gmra.mrb[0].mxu0 %v1453
  %v1804 = vpop.f32.mrb[0].mxu0
  %v1805 = vadd.f32 0.0, %v1804
  %v1806 = vpop.f32.mrb[0].mxu0
  %1807 = vmatprep.mubr.f32.mxu0 0.0
  %1808 = vmatmul.mubr.f32.gmra.mrb[0].mxu0 %v1456
  %v1809 = vpop.f32.mrb[0].mxu0
  %v1810 = vadd.f32 0.0, %v1809
  %v1811 = vpop.f32.mrb[0].mxu0
  %1812 = vmatprep.mubr.f32.mxu0 0.0
  %1813 = vmatmul.mubr.f32.gmra.mrb[0].mxu0 %v1459
  %v1814 = vpop.f32.mrb[0].mxu0
  %v1815 = vadd.f32 0.0, %v1814
  %v1816 = vpop.f32.mrb[0].mxu0
  %1817 = vmatprep.mubr.f32.mxu0 0.0
  %1818 = vmatmul.mubr.f32.gmra.mrb[0].mxu0 %v1462
  %v1819 = vpop.f32.mrb[0].mxu0
  %v1820 = vadd.f32 0.0, %v1819
  %v1821 = vpop.f32.mrb[0].mxu0
  %1822 = vmatprep.mubr.f32.mxu0 0.0
  %1823 = vmatmul.mubr.f32.gmra.mrb[0].mxu0 %v1465
  %v1824 = vpop.f32.mrb[0].mxu0
  %v1825 = vadd.f32 0.0, %v1824
  %v1826 = vpop.f32.mrb[0].mxu0
  %1827 = vmatprep.mubr.f32.mxu0 0.0
  %1828 = vmatmul.mubr.f32.gmra.mrb[0].mxu0 %v1468
  %v1829 = vpop.f32.mrb[0].mxu0
  %v1830 = vadd.f32 0.0, %v1829
  %v1831 = vpop.f32.mrb[0].mxu0
  %1832 = vmatprep.mubr.f32.mxu0 0.0
  %1833 = vmatmul.mubr.f32.gmra.mrb[0].mxu0 %v1471
  %v1834 = vpop.f32.mrb[0].mxu0
  %v1835 = vadd.f32 0.0, %v1834
  %v1836 = vpop.f32.mrb[0].mxu0
  %1837 = vmatprep.mubr.f32.mxu0 0.0
  %1838 = vmatmul.mubr.f32.gmra.mrb[0].mxu0 %v1474
  %v1839 = vpop.f32.mrb[0].mxu0
  %v1840 = vadd.f32 0.0, %v1839
  %v1841 = vpop.f32.mrb[0].mxu0
  %1842 = vmatprep.mubr.f32.mxu0 0.0
  %1843 = vmatmul.mubr.f32.gmra.mrb[0].mxu0 %v1477
  %v1844 = vpop.f32.mrb[0].mxu0
  %v1845 = vadd.f32 0.0, %v1844
  %v1846 = vpop.f32.mrb[0].mxu0
  %1847 = vmatprep.mubr.f32.mxu0 0.0
  %1848 = vmatmul.mubr.f32.gmra.mrb[0].mxu0 %v1480
  %v1849 = vpop.f32.mrb[0].mxu0
  %v1850 = vadd.f32 0.0, %v1849
  %v1851 = vpop.f32.mrb[0].mxu0
  %1852 = vmatprep.mubr.f32.mxu0 0.0
  %1853 = vmatmul.mubr.f32.gmra.mrb[0].mxu0 %v1483
  %v1854 = vpop.f32.mrb[0].mxu0
  %v1855 = vadd.f32 0.0, %v1854
  %v1856 = vpop.f32.mrb[0].mxu0
  %1857 = vmatprep.mubr.f32.mxu0 0.0
  %1858 = vmatmul.mubr.f32.gmra.mrb[0].mxu0 %v1486
  %v1859 = vpop.f32.mrb[0].mxu0
  %v1860 = vadd.f32 0.0, %v1859
  %v1861 = vpop.f32.mrb[0].mxu0
  %1862 = vmatprep.mubr.f32.mxu0 0.0
  %1863 = vmatmul.mubr.f32.gmra.mrb[0].mxu0 %v1489
  %v1864 = vpop.f32.mrb[0].mxu0
  %v1865 = vadd.f32 0.0, %v1864
  %v1866 = vpop.f32.mrb[0].mxu0
  %1867 = vmatprep.mubr.f32.mxu0 0.0
  %1868 = vmatmul.mubr.f32.gmra.mrb[0].mxu0 %v1492
  %v1869 = vpop.f32.mrb[0].mxu0
  %v1870 = vadd.f32 0.0, %v1869
  %v1871 = vpop.f32.mrb[0].mxu0
  %1872 = vmatprep.mubr.f32.mxu0 0.0
  %1873 = vmatmul.mubr.f32.gmra.mrb[0].mxu0 %v1495
  %v1874 = vpop.f32.mrb[0].mxu0
  %v1875 = vadd.f32 0.0, %v1874
  %v1876 = vpop.f32.mrb[0].mxu0
  %1877 = vmatprep.mubr.f32.mxu0 0.0
  %1878 = vmatmul.mubr.f32.gmra.mrb[0].mxu0 %v1498
  %v1879 = vpop.f32.mrb[0].mxu0
  %v1880 = vadd.f32 0.0, %v1879
  %v1881 = vpop.f32.mrb[0].mxu0
  %1882 = vmatprep.mubr.f32.mxu0 0.0
  %1883 = vmatmul.mubr.f32.gmra.mrb[0].mxu0 %v1501
  %v1884 = vpop.f32.mrb[0].mxu0
  %v1885 = vadd.f32 0.0, %v1884
  %v1886 = vpop.f32.mrb[0].mxu0
  %1887 = vdwg.mxu0
  %v1889 = vsel %vm230, %v1090, 0
  %v1892 = vsel %vm230, %v1091, 0
  %v1895 = vsel %vm230, %v1092, 0
  %v1898 = vsel %vm230, %v1093, 0
  %v1901 = vsel %vm230, %v1094, 0
  %v1904 = vsel %vm230, %v1095, 0
  %v1907 = vsel %vm230, %v1096, 0
  %v1910 = vsel %vm230, %v1097, 0
  %v1913 = vsel %vm230, %v1098, 0
  %v1916 = vsel %vm230, %v1099, 0
  %v1919 = vsel %vm230, %v1100, 0
  %v1922 = vsel %vm230, %v1101, 0
  %v1925 = vsel %vm230, %v1102, 0
  %v1928 = vsel %vm230, %v1103, 0
  %v1931 = vsel %vm230, %v1104, 0
  %v1934 = vsel %vm230, %v1105, 0
  %v1937 = vsel %vm230, %v1106, 0
  %v1940 = vsel %vm230, %v1107, 0
  %v1943 = vsel %vm230, %v1108, 0
  %v1946 = vsel %vm230, %v1109, 0
  %v1949 = vsel %vm230, %v1110, 0
  %v1952 = vsel %vm230, %v1111, 0
  %v1955 = vsel %vm230, %v1112, 0
  %v1958 = vsel %vm230, %v1113, 0
  %v1961 = vsel %vm230, %v1114, 0
  %v1964 = vsel %vm230, %v1115, 0
  %v1967 = vsel %vm230, %v1116, 0
  %v1970 = vsel %vm230, %v1117, 0
  %v1973 = vsel %vm230, %v1118, 0
  %v1976 = vsel %vm230, %v1119, 0
  %v1979 = vsel %vm230, %v1120, 0
  %v1982 = vsel %vm230, %v1121, 0
  %v1985 = vsel %vm230, %v1126, 0
  %v1988 = vsel %vm230, %v1127, 0
  %v1991 = vsel %vm230, %v1128, 0
  %v1994 = vsel %vm230, %v1129, 0
  %v1997 = vsel %vm230, %v1130, 0
  %v2000 = vsel %vm230, %v1131, 0
  %v2003 = vsel %vm230, %v1132, 0
  %v2006 = vsel %vm230, %v1133, 0
  %v2009 = vsel %vm230, %v1134, 0
  %v2012 = vsel %vm230, %v1135, 0
  %v2015 = vsel %vm230, %v1136, 0
  %v2018 = vsel %vm230, %v1137, 0
  %v2021 = vsel %vm230, %v1138, 0
  %v2024 = vsel %vm230, %v1139, 0
  %v2027 = vsel %vm230, %v1140, 0
  %v2030 = vsel %vm230, %v1141, 0
  %v2033 = vsel %vm230, %v1142, 0
  %v2036 = vsel %vm230, %v1143, 0
  %v2039 = vsel %vm230, %v1144, 0
  %v2042 = vsel %vm230, %v1145, 0
  %v2045 = vsel %vm230, %v1146, 0
  %v2048 = vsel %vm230, %v1147, 0
  %v2051 = vsel %vm230, %v1148, 0
  %v2054 = vsel %vm230, %v1149, 0
  %v2057 = vsel %vm230, %v1150, 0
  %v2060 = vsel %vm230, %v1151, 0
  %v2063 = vsel %vm230, %v1152, 0
  %v2066 = vsel %vm230, %v1153, 0
  %v2069 = vsel %vm230, %v1154, 0
  %v2072 = vsel %vm230, %v1155, 0
  %v2075 = vsel %vm230, %v1156, 0
  %v2078 = vsel %vm230, %v1157, 0
  %2080 = vmatprep.subr.mxu0 0.0
  %2081 = vmatpush1.msra.mxu0 %v1306
  %2082 = vmatprep.subr.mxu0 0.0
  %2083 = vmatpush1.msra.mxu0 %v1307
  %2084 = vmatprep.subr.mxu0 0.0
  %2085 = vmatpush1.msra.mxu0 0.0
  %2086 = vmatprep.subr.mxu0 0.0
  %2087 = vmatpush1.msra.mxu0 0.0
  %2088 = vmatprep.subr.mxu0 0.0
  %2089 = vmatpush1.msra.mxu0 0.0
  %2090 = vmatprep.subr.mxu0 0.0
  %2091 = vmatpush1.msra.mxu0 0.0
  %2092 = vmatprep.subr.mxu0 0.0
  %2093 = vmatpush1.msra.mxu0 0.0
  %2094 = vmatprep.subr.mxu0 0.0
  %2095 = vmatpush1.msra.mxu0 0.0
  %2096 = vmatprep.subr.mxu0 0.0
  %2097 = vmatpush1.msra.mxu0 0.0
  %2098 = vmatprep.subr.mxu0 0.0
  %2099 = vmatpush1.msra.mxu0 0.0
  %2100 = vmatprep.subr.mxu0 0.0
  %2101 = vmatpush1.msra.mxu0 0.0
  %2102 = vmatprep.subr.mxu0 0.0
  %2103 = vmatpush1.msra.mxu0 0.0
  %2104 = vmatprep.subr.mxu0 0.0
  %2105 = vmatpush1.msra.mxu0 0.0
  %2106 = vmatprep.subr.mxu0 0.0
  %2107 = vmatpush1.msra.mxu0 0.0
  %2108 = vmatprep.subr.mxu0 0.0
  %2109 = vmatpush1.msra.mxu0 0.0
  %2110 = vmatprep.subr.mxu0 0.0
  %2111 = vmatpush1.msra.mxu0 0.0
  %2112 = vmatprep.subr.mxu0 0.0
  %2113 = vmatpush1.msra.mxu0 0.0
  %2114 = vmatprep.subr.mxu0 0.0
  %2115 = vmatpush1.msra.mxu0 0.0
  %2116 = vmatprep.subr.mxu0 0.0
  %2117 = vmatpush1.msra.mxu0 0.0
  %2118 = vmatprep.subr.mxu0 0.0
  %2119 = vmatpush1.msra.mxu0 0.0
  %2120 = vmatprep.subr.mxu0 0.0
  %2121 = vmatpush1.msra.mxu0 0.0
  %2122 = vmatprep.subr.mxu0 0.0
  %2123 = vmatpush1.msra.mxu0 0.0
  %2124 = vmatprep.subr.mxu0 0.0
  %2125 = vmatpush1.msra.mxu0 0.0
  %2126 = vmatprep.subr.mxu0 0.0
  %2127 = vmatpush1.msra.mxu0 0.0
  %2128 = vmatprep.subr.mxu0 0.0
  %2129 = vmatpush1.msra.mxu0 0.0
  %2130 = vmatprep.subr.mxu0 0.0
  %2131 = vmatpush1.msra.mxu0 0.0
  %2132 = vmatprep.subr.mxu0 0.0
  %2133 = vmatpush1.msra.mxu0 0.0
  %2134 = vmatprep.subr.mxu0 0.0
  %2135 = vmatpush1.msra.mxu0 0.0
  %2136 = vmatprep.subr.mxu0 0.0
  %2137 = vmatpush1.msra.mxu0 0.0
  %2138 = vmatprep.subr.mxu0 0.0
  %2139 = vmatpush1.msra.mxu0 0.0
  %2140 = vmatprep.subr.mxu0 0.0
  %2141 = vmatpush1.msra.mxu0 0.0
  %2142 = vmatprep.subr.mxu0 0.0
  %2143 = vmatpush1.msra.mxu0 0.0
  %2144 = vmatprep.mubr.f32.mxu0 0.0
  %2145 = vmatmul.mubr.f32.gmra.mrb[0].mxu0 %v1889
  %v2146 = vpop.f32.mrb[0].mxu0
  %v2147 = vadd.f32 %v1570, %v2146
  %v2148 = vpop.f32.mrb[0].mxu0
  %2149 = vmatprep.mubr.f32.mxu0 0.0
  %2150 = vmatmul.mubr.f32.gmra.mrb[0].mxu0 %v1892
  %v2151 = vpop.f32.mrb[0].mxu0
  %v2152 = vadd.f32 %v1575, %v2151
  %v2153 = vpop.f32.mrb[0].mxu0
  %2154 = vmatprep.mubr.f32.mxu0 0.0
  %2155 = vmatmul.mubr.f32.gmra.mrb[0].mxu0 %v1895
  %v2156 = vpop.f32.mrb[0].mxu0
  %v2157 = vadd.f32 %v1580, %v2156
  %v2158 = vpop.f32.mrb[0].mxu0
  %2159 = vmatprep.mubr.f32.mxu0 0.0
  %2160 = vmatmul.mubr.f32.gmra.mrb[0].mxu0 %v1898
  %v2161 = vpop.f32.mrb[0].mxu0
  %v2162 = vadd.f32 %v1585, %v2161
  %v2163 = vpop.f32.mrb[0].mxu0
  %2164 = vmatprep.mubr.f32.mxu0 0.0
  %2165 = vmatmul.mubr.f32.gmra.mrb[0].mxu0 %v1901
  %v2166 = vpop.f32.mrb[0].mxu0
  %v2167 = vadd.f32 %v1590, %v2166
  %v2168 = vpop.f32.mrb[0].mxu0
  %2169 = vmatprep.mubr.f32.mxu0 0.0
  %2170 = vmatmul.mubr.f32.gmra.mrb[0].mxu0 %v1904
  %v2171 = vpop.f32.mrb[0].mxu0
  %v2172 = vadd.f32 %v1595, %v2171
  %v2173 = vpop.f32.mrb[0].mxu0
  %2174 = vmatprep.mubr.f32.mxu0 0.0
  %2175 = vmatmul.mubr.f32.gmra.mrb[0].mxu0 %v1907
  %v2176 = vpop.f32.mrb[0].mxu0
  %v2177 = vadd.f32 %v1600, %v2176
  %v2178 = vpop.f32.mrb[0].mxu0
  %2179 = vmatprep.mubr.f32.mxu0 0.0
  %2180 = vmatmul.mubr.f32.gmra.mrb[0].mxu0 %v1910
  %v2181 = vpop.f32.mrb[0].mxu0
  %v2182 = vadd.f32 %v1605, %v2181
  %v2183 = vpop.f32.mrb[0].mxu0
  %2184 = vmatprep.mubr.f32.mxu0 0.0
  %2185 = vmatmul.mubr.f32.gmra.mrb[0].mxu0 %v1913
  %v2186 = vpop.f32.mrb[0].mxu0
  %v2187 = vadd.f32 %v1610, %v2186
  %v2188 = vpop.f32.mrb[0].mxu0
  %2189 = vmatprep.mubr.f32.mxu0 0.0
  %2190 = vmatmul.mubr.f32.gmra.mrb[0].mxu0 %v1916
  %v2191 = vpop.f32.mrb[0].mxu0
  %v2192 = vadd.f32 %v1615, %v2191
  %v2193 = vpop.f32.mrb[0].mxu0
  %2194 = vmatprep.mubr.f32.mxu0 0.0
  %2195 = vmatmul.mubr.f32.gmra.mrb[0].mxu0 %v1919
  %v2196 = vpop.f32.mrb[0].mxu0
  %v2197 = vadd.f32 %v1620, %v2196
  %v2198 = vpop.f32.mrb[0].mxu0
  %2199 = vmatprep.mubr.f32.mxu0 0.0
  %2200 = vmatmul.mubr.f32.gmra.mrb[0].mxu0 %v1922
  %v2201 = vpop.f32.mrb[0].mxu0
  %v2202 = vadd.f32 %v1625, %v2201
  %v2203 = vpop.f32.mrb[0].mxu0
  %2204 = vmatprep.mubr.f32.mxu0 0.0
  %2205 = vmatmul.mubr.f32.gmra.mrb[0].mxu0 %v1925
  %v2206 = vpop.f32.mrb[0].mxu0
  %v2207 = vadd.f32 %v1630, %v2206
  %v2208 = vpop.f32.mrb[0].mxu0
  %2209 = vmatprep.mubr.f32.mxu0 0.0
  %2210 = vmatmul.mubr.f32.gmra.mrb[0].mxu0 %v1928
  %v2211 = vpop.f32.mrb[0].mxu0
  %v2212 = vadd.f32 %v1635, %v2211
  %v2213 = vpop.f32.mrb[0].mxu0
  %2214 = vmatprep.mubr.f32.mxu0 0.0
  %2215 = vmatmul.mubr.f32.gmra.mrb[0].mxu0 %v1931
  %v2216 = vpop.f32.mrb[0].mxu0
  %v2217 = vadd.f32 %v1640, %v2216
  %v2218 = vpop.f32.mrb[0].mxu0
  %2219 = vmatprep.mubr.f32.mxu0 0.0
  %2220 = vmatmul.mubr.f32.gmra.mrb[0].mxu0 %v1934
  %v2221 = vpop.f32.mrb[0].mxu0
  %v2222 = vadd.f32 %v1645, %v2221
  %v2223 = vpop.f32.mrb[0].mxu0
  %2224 = vmatprep.mubr.f32.mxu0 0.0
  %2225 = vmatmul.mubr.f32.gmra.mrb[0].mxu0 %v1937
  %v2226 = vpop.f32.mrb[0].mxu0
  %v2227 = vadd.f32 %v1650, %v2226
  %v2228 = vpop.f32.mrb[0].mxu0
  %2229 = vmatprep.mubr.f32.mxu0 0.0
  %2230 = vmatmul.mubr.f32.gmra.mrb[0].mxu0 %v1940
  %v2231 = vpop.f32.mrb[0].mxu0
  %v2232 = vadd.f32 %v1655, %v2231
  %v2233 = vpop.f32.mrb[0].mxu0
  %2234 = vmatprep.mubr.f32.mxu0 0.0
  %2235 = vmatmul.mubr.f32.gmra.mrb[0].mxu0 %v1943
  %v2236 = vpop.f32.mrb[0].mxu0
  %v2237 = vadd.f32 %v1660, %v2236
  %v2238 = vpop.f32.mrb[0].mxu0
  %2239 = vmatprep.mubr.f32.mxu0 0.0
  %2240 = vmatmul.mubr.f32.gmra.mrb[0].mxu0 %v1946
  %v2241 = vpop.f32.mrb[0].mxu0
  %v2242 = vadd.f32 %v1665, %v2241
  %v2243 = vpop.f32.mrb[0].mxu0
  %2244 = vmatprep.mubr.f32.mxu0 0.0
  %2245 = vmatmul.mubr.f32.gmra.mrb[0].mxu0 %v1949
  %v2246 = vpop.f32.mrb[0].mxu0
  %v2247 = vadd.f32 %v1670, %v2246
  %v2248 = vpop.f32.mrb[0].mxu0
  %2249 = vmatprep.mubr.f32.mxu0 0.0
  %2250 = vmatmul.mubr.f32.gmra.mrb[0].mxu0 %v1952
  %v2251 = vpop.f32.mrb[0].mxu0
  %v2252 = vadd.f32 %v1675, %v2251
  %v2253 = vpop.f32.mrb[0].mxu0
  %2254 = vmatprep.mubr.f32.mxu0 0.0
  %2255 = vmatmul.mubr.f32.gmra.mrb[0].mxu0 %v1955
  %v2256 = vpop.f32.mrb[0].mxu0
  %v2257 = vadd.f32 %v1680, %v2256
  %v2258 = vpop.f32.mrb[0].mxu0
  %2259 = vmatprep.mubr.f32.mxu0 0.0
  %2260 = vmatmul.mubr.f32.gmra.mrb[0].mxu0 %v1958
  %v2261 = vpop.f32.mrb[0].mxu0
  %v2262 = vadd.f32 %v1685, %v2261
  %v2263 = vpop.f32.mrb[0].mxu0
  %2264 = vmatprep.mubr.f32.mxu0 0.0
  %2265 = vmatmul.mubr.f32.gmra.mrb[0].mxu0 %v1961
  %v2266 = vpop.f32.mrb[0].mxu0
  %v2267 = vadd.f32 %v1690, %v2266
  %v2268 = vpop.f32.mrb[0].mxu0
  %2269 = vmatprep.mubr.f32.mxu0 0.0
  %2270 = vmatmul.mubr.f32.gmra.mrb[0].mxu0 %v1964
  %v2271 = vpop.f32.mrb[0].mxu0
  %v2272 = vadd.f32 %v1695, %v2271
  %v2273 = vpop.f32.mrb[0].mxu0
  %2274 = vmatprep.mubr.f32.mxu0 0.0
  %2275 = vmatmul.mubr.f32.gmra.mrb[0].mxu0 %v1967
  %v2276 = vpop.f32.mrb[0].mxu0
  %v2277 = vadd.f32 %v1700, %v2276
  %v2278 = vpop.f32.mrb[0].mxu0
  %2279 = vmatprep.mubr.f32.mxu0 0.0
  %2280 = vmatmul.mubr.f32.gmra.mrb[0].mxu0 %v1970
  %v2281 = vpop.f32.mrb[0].mxu0
  %v2282 = vadd.f32 %v1705, %v2281
  %v2283 = vpop.f32.mrb[0].mxu0
  %2284 = vmatprep.mubr.f32.mxu0 0.0
  %2285 = vmatmul.mubr.f32.gmra.mrb[0].mxu0 %v1973
  %v2286 = vpop.f32.mrb[0].mxu0
  %v2287 = vadd.f32 %v1710, %v2286
  %v2288 = vpop.f32.mrb[0].mxu0
  %2289 = vmatprep.mubr.f32.mxu0 0.0
  %2290 = vmatmul.mubr.f32.gmra.mrb[0].mxu0 %v1976
  %v2291 = vpop.f32.mrb[0].mxu0
  %v2292 = vadd.f32 %v1715, %v2291
  %v2293 = vpop.f32.mrb[0].mxu0
  %2294 = vmatprep.mubr.f32.mxu0 0.0
  %2295 = vmatmul.mubr.f32.gmra.mrb[0].mxu0 %v1979
  %v2296 = vpop.f32.mrb[0].mxu0
  %v2297 = vadd.f32 %v1720, %v2296
  %v2298 = vpop.f32.mrb[0].mxu0
  %2299 = vmatprep.mubr.f32.mxu0 0.0
  %2300 = vmatmul.mubr.f32.gmra.mrb[0].mxu0 %v1982
  %v2301 = vpop.f32.mrb[0].mxu0
  %v2302 = vadd.f32 %v1725, %v2301
  %v2303 = vpop.f32.mrb[0].mxu0
  %2304 = vmatprep.mubr.f32.mxu0 0.0
  %2305 = vmatmul.mubr.f32.gmra.mrb[0].mxu0 %v1985
  %v2306 = vpop.f32.mrb[0].mxu0
  %v2307 = vadd.f32 %v1730, %v2306
  %v2308 = vpop.f32.mrb[0].mxu0
  %2309 = vmatprep.mubr.f32.mxu0 0.0
  %2310 = vmatmul.mubr.f32.gmra.mrb[0].mxu0 %v1988
  %v2311 = vpop.f32.mrb[0].mxu0
  %v2312 = vadd.f32 %v1735, %v2311
  %v2313 = vpop.f32.mrb[0].mxu0
  %2314 = vmatprep.mubr.f32.mxu0 0.0
  %2315 = vmatmul.mubr.f32.gmra.mrb[0].mxu0 %v1991
  %v2316 = vpop.f32.mrb[0].mxu0
  %v2317 = vadd.f32 %v1740, %v2316
  %v2318 = vpop.f32.mrb[0].mxu0
  %2319 = vmatprep.mubr.f32.mxu0 0.0
  %2320 = vmatmul.mubr.f32.gmra.mrb[0].mxu0 %v1994
  %v2321 = vpop.f32.mrb[0].mxu0
  %v2322 = vadd.f32 %v1745, %v2321
  %v2323 = vpop.f32.mrb[0].mxu0
  %2324 = vmatprep.mubr.f32.mxu0 0.0
  %2325 = vmatmul.mubr.f32.gmra.mrb[0].mxu0 %v1997
  %v2326 = vpop.f32.mrb[0].mxu0
  %v2327 = vadd.f32 %v1750, %v2326
  %v2328 = vpop.f32.mrb[0].mxu0
  %2329 = vmatprep.mubr.f32.mxu0 0.0
  %2330 = vmatmul.mubr.f32.gmra.mrb[0].mxu0 %v2000
  %v2331 = vpop.f32.mrb[0].mxu0
  %v2332 = vadd.f32 %v1755, %v2331
  %v2333 = vpop.f32.mrb[0].mxu0
  %2334 = vmatprep.mubr.f32.mxu0 0.0
  %2335 = vmatmul.mubr.f32.gmra.mrb[0].mxu0 %v2003
  %v2336 = vpop.f32.mrb[0].mxu0
  %v2337 = vadd.f32 %v1760, %v2336
  %v2338 = vpop.f32.mrb[0].mxu0
  %2339 = vmatprep.mubr.f32.mxu0 0.0
  %2340 = vmatmul.mubr.f32.gmra.mrb[0].mxu0 %v2006
  %v2341 = vpop.f32.mrb[0].mxu0
  %v2342 = vadd.f32 %v1765, %v2341
  %v2343 = vpop.f32.mrb[0].mxu0
  %2344 = vmatprep.mubr.f32.mxu0 0.0
  %2345 = vmatmul.mubr.f32.gmra.mrb[0].mxu0 %v2009
  %v2346 = vpop.f32.mrb[0].mxu0
  %v2347 = vadd.f32 %v1770, %v2346
  %v2348 = vpop.f32.mrb[0].mxu0
  %2349 = vmatprep.mubr.f32.mxu0 0.0
  %2350 = vmatmul.mubr.f32.gmra.mrb[0].mxu0 %v2012
  %v2351 = vpop.f32.mrb[0].mxu0
  %v2352 = vadd.f32 %v1775, %v2351
  %v2353 = vpop.f32.mrb[0].mxu0
  %2354 = vmatprep.mubr.f32.mxu0 0.0
  %2355 = vmatmul.mubr.f32.gmra.mrb[0].mxu0 %v2015
  %v2356 = vpop.f32.mrb[0].mxu0
  %v2357 = vadd.f32 %v1780, %v2356
  %v2358 = vpop.f32.mrb[0].mxu0
  %2359 = vmatprep.mubr.f32.mxu0 0.0
  %2360 = vmatmul.mubr.f32.gmra.mrb[0].mxu0 %v2018
  %v2361 = vpop.f32.mrb[0].mxu0
  %v2362 = vadd.f32 %v1785, %v2361
  %v2363 = vpop.f32.mrb[0].mxu0
  %2364 = vmatprep.mubr.f32.mxu0 0.0
  %2365 = vmatmul.mubr.f32.gmra.mrb[0].mxu0 %v2021
  %v2366 = vpop.f32.mrb[0].mxu0
  %v2367 = vadd.f32 %v1790, %v2366
  %v2368 = vpop.f32.mrb[0].mxu0
  %2369 = vmatprep.mubr.f32.mxu0 0.0
  %2370 = vmatmul.mubr.f32.gmra.mrb[0].mxu0 %v2024
  %v2371 = vpop.f32.mrb[0].mxu0
  %v2372 = vadd.f32 %v1795, %v2371
  %v2373 = vpop.f32.mrb[0].mxu0
  %2374 = vmatprep.mubr.f32.mxu0 0.0
  %2375 = vmatmul.mubr.f32.gmra.mrb[0].mxu0 %v2027
  %v2376 = vpop.f32.mrb[0].mxu0
  %v2377 = vadd.f32 %v1800, %v2376
  %v2378 = vpop.f32.mrb[0].mxu0
  %2379 = vmatprep.mubr.f32.mxu0 0.0
  %2380 = vmatmul.mubr.f32.gmra.mrb[0].mxu0 %v2030
  %v2381 = vpop.f32.mrb[0].mxu0
  %v2382 = vadd.f32 %v1805, %v2381
  %v2383 = vpop.f32.mrb[0].mxu0
  %2384 = vmatprep.mubr.f32.mxu0 0.0
  %2385 = vmatmul.mubr.f32.gmra.mrb[0].mxu0 %v2033
  %v2386 = vpop.f32.mrb[0].mxu0
  %v2387 = vadd.f32 %v1810, %v2386
  %v2388 = vpop.f32.mrb[0].mxu0
  %2389 = vmatprep.mubr.f32.mxu0 0.0
  %2390 = vmatmul.mubr.f32.gmra.mrb[0].mxu0 %v2036
  %v2391 = vpop.f32.mrb[0].mxu0
  %v2392 = vadd.f32 %v1815, %v2391
  %v2393 = vpop.f32.mrb[0].mxu0
  %2394 = vmatprep.mubr.f32.mxu0 0.0
  %2395 = vmatmul.mubr.f32.gmra.mrb[0].mxu0 %v2039
  %v2396 = vpop.f32.mrb[0].mxu0
  %v2397 = vadd.f32 %v1820, %v2396
  %v2398 = vpop.f32.mrb[0].mxu0
  %2399 = vmatprep.mubr.f32.mxu0 0.0
  %2400 = vmatmul.mubr.f32.gmra.mrb[0].mxu0 %v2042
  %v2401 = vpop.f32.mrb[0].mxu0
  %v2402 = vadd.f32 %v1825, %v2401
  %v2403 = vpop.f32.mrb[0].mxu0
  %2404 = vmatprep.mubr.f32.mxu0 0.0
  %2405 = vmatmul.mubr.f32.gmra.mrb[0].mxu0 %v2045
  %v2406 = vpop.f32.mrb[0].mxu0
  %v2407 = vadd.f32 %v1830, %v2406
  %v2408 = vpop.f32.mrb[0].mxu0
  %2409 = vmatprep.mubr.f32.mxu0 0.0
  %2410 = vmatmul.mubr.f32.gmra.mrb[0].mxu0 %v2048
  %v2411 = vpop.f32.mrb[0].mxu0
  %v2412 = vadd.f32 %v1835, %v2411
  %v2413 = vpop.f32.mrb[0].mxu0
  %2414 = vmatprep.mubr.f32.mxu0 0.0
  %2415 = vmatmul.mubr.f32.gmra.mrb[0].mxu0 %v2051
  %v2416 = vpop.f32.mrb[0].mxu0
  %v2417 = vadd.f32 %v1840, %v2416
  %v2418 = vpop.f32.mrb[0].mxu0
  %2419 = vmatprep.mubr.f32.mxu0 0.0
  %2420 = vmatmul.mubr.f32.gmra.mrb[0].mxu0 %v2054
  %v2421 = vpop.f32.mrb[0].mxu0
  %v2422 = vadd.f32 %v1845, %v2421
  %v2423 = vpop.f32.mrb[0].mxu0
  %2424 = vmatprep.mubr.f32.mxu0 0.0
  %2425 = vmatmul.mubr.f32.gmra.mrb[0].mxu0 %v2057
  %v2426 = vpop.f32.mrb[0].mxu0
  %v2427 = vadd.f32 %v1850, %v2426
  %v2428 = vpop.f32.mrb[0].mxu0
  %2429 = vmatprep.mubr.f32.mxu0 0.0
  %2430 = vmatmul.mubr.f32.gmra.mrb[0].mxu0 %v2060
  %v2431 = vpop.f32.mrb[0].mxu0
  %v2432 = vadd.f32 %v1855, %v2431
  %v2433 = vpop.f32.mrb[0].mxu0
  %2434 = vmatprep.mubr.f32.mxu0 0.0
  %2435 = vmatmul.mubr.f32.gmra.mrb[0].mxu0 %v2063
  %v2436 = vpop.f32.mrb[0].mxu0
  %v2437 = vadd.f32 %v1860, %v2436
  %v2438 = vpop.f32.mrb[0].mxu0
  %2439 = vmatprep.mubr.f32.mxu0 0.0
  %2440 = vmatmul.mubr.f32.gmra.mrb[0].mxu0 %v2066
  %v2441 = vpop.f32.mrb[0].mxu0
  %v2442 = vadd.f32 %v1865, %v2441
  %v2443 = vpop.f32.mrb[0].mxu0
  %2444 = vmatprep.mubr.f32.mxu0 0.0
  %2445 = vmatmul.mubr.f32.gmra.mrb[0].mxu0 %v2069
  %v2446 = vpop.f32.mrb[0].mxu0
  %v2447 = vadd.f32 %v1870, %v2446
  %v2448 = vpop.f32.mrb[0].mxu0
  %2449 = vmatprep.mubr.f32.mxu0 0.0
  %2450 = vmatmul.mubr.f32.gmra.mrb[0].mxu0 %v2072
  %v2451 = vpop.f32.mrb[0].mxu0
  %v2452 = vadd.f32 %v1875, %v2451
  %v2453 = vpop.f32.mrb[0].mxu0
  %2454 = vmatprep.mubr.f32.mxu0 0.0
  %2455 = vmatmul.mubr.f32.gmra.mrb[0].mxu0 %v2075
  %v2456 = vpop.f32.mrb[0].mxu0
  %v2457 = vadd.f32 %v1880, %v2456
  %v2458 = vpop.f32.mrb[0].mxu0
  %2459 = vmatprep.mubr.f32.mxu0 0.0
  %2460 = vmatmul.mubr.f32.gmra.mrb[0].mxu0 %v2078
  %v2461 = vpop.f32.mrb[0].mxu0
  %v2462 = vadd.f32 %v1885, %v2461
  %v2463 = vpop.f32.mrb[0].mxu0
  %2464 = vdwg.mxu0
  %s2465 = scalar_lea.vmem %s3, 32
  %v2466 = vld [vmem:[%s2465] sm:$0xff]
  %v2467 = vld [vmem:[%s2465 + $0x8] sm:$0xff]
  %v2469 = vsel %vm230, %v1234, 0
  %v2472 = vsel %vm230, %v1235, 0
  %v2475 = vsel %vm230, %v1236, 0
  %v2478 = vsel %vm230, %v1237, 0
  %v2481 = vsel %vm230, %v1238, 0
  %v2484 = vsel %vm230, %v1239, 0
  %v2487 = vsel %vm230, %v1240, 0
  %v2490 = vsel %vm230, %v1241, 0
  %v2493 = vsel %vm230, %v1242, 0
  %v2496 = vsel %vm230, %v1243, 0
  %v2499 = vsel %vm230, %v1244, 0
  %v2502 = vsel %vm230, %v1245, 0
  %v2505 = vsel %vm230, %v1246, 0
  %v2508 = vsel %vm230, %v1247, 0
  %v2511 = vsel %vm230, %v1248, 0
  %v2514 = vsel %vm230, %v1249, 0
  %v2517 = vsel %vm230, %v1250, 0
  %v2520 = vsel %vm230, %v1251, 0
  %v2523 = vsel %vm230, %v1252, 0
  %v2526 = vsel %vm230, %v1253, 0
  %v2529 = vsel %vm230, %v1254, 0
  %v2532 = vsel %vm230, %v1255, 0
  %v2535 = vsel %vm230, %v1256, 0
  %v2538 = vsel %vm230, %v1257, 0
  %v2541 = vsel %vm230, %v1258, 0
  %v2544 = vsel %vm230, %v1259, 0
  %v2547 = vsel %vm230, %v1260, 0
  %v2550 = vsel %vm230, %v1261, 0
  %v2553 = vsel %vm230, %v1262, 0
  %v2556 = vsel %vm230, %v1263, 0
  %v2559 = vsel %vm230, %v1264, 0
  %v2562 = vsel %vm230, %v1265, 0
  %v2565 = vsel %vm230, %v1270, 0
  %v2568 = vsel %vm230, %v1271, 0
  %v2571 = vsel %vm230, %v1272, 0
  %v2574 = vsel %vm230, %v1273, 0
  %v2577 = vsel %vm230, %v1274, 0
  %v2580 = vsel %vm230, %v1275, 0
  %v2583 = vsel %vm230, %v1276, 0
  %v2586 = vsel %vm230, %v1277, 0
  %v2589 = vsel %vm230, %v1278, 0
  %v2592 = vsel %vm230, %v1279, 0
  %v2595 = vsel %vm230, %v1280, 0
  %v2598 = vsel %vm230, %v1281, 0
  %v2601 = vsel %vm230, %v1282, 0
  %v2604 = vsel %vm230, %v1283, 0
  %v2607 = vsel %vm230, %v1284, 0
  %v2610 = vsel %vm230, %v1285, 0
  %v2613 = vsel %vm230, %v1286, 0
  %v2616 = vsel %vm230, %v1287, 0
  %v2619 = vsel %vm230, %v1288, 0
  %v2622 = vsel %vm230, %v1289, 0
  %v2625 = vsel %vm230, %v1290, 0
  %v2628 = vsel %vm230, %v1291, 0
  %v2631 = vsel %vm230, %v1292, 0
  %v2634 = vsel %vm230, %v1293, 0
  %v2637 = vsel %vm230, %v1294, 0
  %v2640 = vsel %vm230, %v1295, 0
  %v2643 = vsel %vm230, %v1296, 0
  %v2646 = vsel %vm230, %v1297, 0
  %v2649 = vsel %vm230, %v1298, 0
  %v2652 = vsel %vm230, %v1299, 0
  %v2655 = vsel %vm230, %v1300, 0
  %v2658 = vsel %vm230, %v1301, 0
  %2660 = vmatprep.subr.mxu0 0.0
  %2661 = vmatpush1.msra.mxu0 %v2466
  %2662 = vmatprep.subr.mxu0 0.0
  %2663 = vmatpush1.msra.mxu0 %v2467
  %2664 = vmatprep.subr.mxu0 0.0
  %2665 = vmatpush1.msra.mxu0 0.0
  %2666 = vmatprep.subr.mxu0 0.0
  %2667 = vmatpush1.msra.mxu0 0.0
  %2668 = vmatprep.subr.mxu0 0.0
  %2669 = vmatpush1.msra.mxu0 0.0
  %2670 = vmatprep.subr.mxu0 0.0
  %2671 = vmatpush1.msra.mxu0 0.0
  %2672 = vmatprep.subr.mxu0 0.0
  %2673 = vmatpush1.msra.mxu0 0.0
  %2674 = vmatprep.subr.mxu0 0.0
  %2675 = vmatpush1.msra.mxu0 0.0
  %2676 = vmatprep.subr.mxu0 0.0
  %2677 = vmatpush1.msra.mxu0 0.0
  %2678 = vmatprep.subr.mxu0 0.0
  %2679 = vmatpush1.msra.mxu0 0.0
  %2680 = vmatprep.subr.mxu0 0.0
  %2681 = vmatpush1.msra.mxu0 0.0
  %2682 = vmatprep.subr.mxu0 0.0
  %2683 = vmatpush1.msra.mxu0 0.0
  %2684 = vmatprep.subr.mxu0 0.0
  %2685 = vmatpush1.msra.mxu0 0.0
  %2686 = vmatprep.subr.mxu0 0.0
  %2687 = vmatpush1.msra.mxu0 0.0
  %2688 = vmatprep.subr.mxu0 0.0
  %2689 = vmatpush1.msra.mxu0 0.0
  %2690 = vmatprep.subr.mxu0 0.0
  %2691 = vmatpush1.msra.mxu0 0.0
  %2692 = vmatprep.subr.mxu0 0.0
  %2693 = vmatpush1.msra.mxu0 0.0
  %2694 = vmatprep.subr.mxu0 0.0
  %2695 = vmatpush1.msra.mxu0 0.0
  %2696 = vmatprep.subr.mxu0 0.0
  %2697 = vmatpush1.msra.mxu0 0.0
  %2698 = vmatprep.subr.mxu0 0.0
  %2699 = vmatpush1.msra.mxu0 0.0
  %2700 = vmatprep.subr.mxu0 0.0
  %2701 = vmatpush1.msra.mxu0 0.0
  %2702 = vmatprep.subr.mxu0 0.0
  %2703 = vmatpush1.msra.mxu0 0.0
  %2704 = vmatprep.subr.mxu0 0.0
  %2705 = vmatpush1.msra.mxu0 0.0
  %2706 = vmatprep.subr.mxu0 0.0
  %2707 = vmatpush1.msra.mxu0 0.0
  %2708 = vmatprep.subr.mxu0 0.0
  %2709 = vmatpush1.msra.mxu0 0.0
  %2710 = vmatprep.subr.mxu0 0.0
  %2711 = vmatpush1.msra.mxu0 0.0
  %2712 = vmatprep.subr.mxu0 0.0
  %2713 = vmatpush1.msra.mxu0 0.0
  %2714 = vmatprep.subr.mxu0 0.0
  %2715 = vmatpush1.msra.mxu0 0.0
  %2716 = vmatprep.subr.mxu0 0.0
  %2717 = vmatpush1.msra.mxu0 0.0
  %2718 = vmatprep.subr.mxu0 0.0
  %2719 = vmatpush1.msra.mxu0 0.0
  %2720 = vmatprep.subr.mxu0 0.0
  %2721 = vmatpush1.msra.mxu0 0.0
  %2722 = vmatprep.subr.mxu0 0.0
  %2723 = vmatpush1.msra.mxu0 0.0
  %2724 = vmatprep.mubr.f32.mxu0 0.0
  %2725 = vmatmul.mubr.f32.gmra.mrb[0].mxu0 %v2469
  %v2726 = vpop.f32.mrb[0].mxu0
  %v2727 = vadd.f32 0.0, %v2726
  %v2728 = vpop.f32.mrb[0].mxu0
  %2729 = vmatprep.mubr.f32.mxu0 0.0
  %2730 = vmatmul.mubr.f32.gmra.mrb[0].mxu0 %v2472
  %v2731 = vpop.f32.mrb[0].mxu0
  %v2732 = vadd.f32 0.0, %v2731
  %v2733 = vpop.f32.mrb[0].mxu0
  %2734 = vmatprep.mubr.f32.mxu0 0.0
  %2735 = vmatmul.mubr.f32.gmra.mrb[0].mxu0 %v2475
  %v2736 = vpop.f32.mrb[0].mxu0
  %v2737 = vadd.f32 0.0, %v2736
  %v2738 = vpop.f32.mrb[0].mxu0
  %2739 = vmatprep.mubr.f32.mxu0 0.0
  %2740 = vmatmul.mubr.f32.gmra.mrb[0].mxu0 %v2478
  %v2741 = vpop.f32.mrb[0].mxu0
  %v2742 = vadd.f32 0.0, %v2741
  %v2743 = vpop.f32.mrb[0].mxu0
  %2744 = vmatprep.mubr.f32.mxu0 0.0
  %2745 = vmatmul.mubr.f32.gmra.mrb[0].mxu0 %v2481
  %v2746 = vpop.f32.mrb[0].mxu0
  %v2747 = vadd.f32 0.0, %v2746
  %v2748 = vpop.f32.mrb[0].mxu0
  %2749 = vmatprep.mubr.f32.mxu0 0.0
  %2750 = vmatmul.mubr.f32.gmra.mrb[0].mxu0 %v2484
  %v2751 = vpop.f32.mrb[0].mxu0
  %v2752 = vadd.f32 0.0, %v2751
  %v2753 = vpop.f32.mrb[0].mxu0
  %2754 = vmatprep.mubr.f32.mxu0 0.0
  %2755 = vmatmul.mubr.f32.gmra.mrb[0].mxu0 %v2487
  %v2756 = vpop.f32.mrb[0].mxu0
  %v2757 = vadd.f32 0.0, %v2756
  %v2758 = vpop.f32.mrb[0].mxu0
  %2759 = vmatprep.mubr.f32.mxu0 0.0
  %2760 = vmatmul.mubr.f32.gmra.mrb[0].mxu0 %v2490
  %v2761 = vpop.f32.mrb[0].mxu0
  %v2762 = vadd.f32 0.0, %v2761
  %v2763 = vpop.f32.mrb[0].mxu0
  %2764 = vmatprep.mubr.f32.mxu0 0.0
  %2765 = vmatmul.mubr.f32.gmra.mrb[0].mxu0 %v2493
  %v2766 = vpop.f32.mrb[0].mxu0
  %v2767 = vadd.f32 0.0, %v2766
  %v2768 = vpop.f32.mrb[0].mxu0
  %2769 = vmatprep.mubr.f32.mxu0 0.0
  %2770 = vmatmul.mubr.f32.gmra.mrb[0].mxu0 %v2496
  %v2771 = vpop.f32.mrb[0].mxu0
  %v2772 = vadd.f32 0.0, %v2771
  %v2773 = vpop.f32.mrb[0].mxu0
  %2774 = vmatprep.mubr.f32.mxu0 0.0
  %2775 = vmatmul.mubr.f32.gmra.mrb[0].mxu0 %v2499
  %v2776 = vpop.f32.mrb[0].mxu0
  %v2777 = vadd.f32 0.0, %v2776
  %v2778 = vpop.f32.mrb[0].mxu0
  %2779 = vmatprep.mubr.f32.mxu0 0.0
  %2780 = vmatmul.mubr.f32.gmra.mrb[0].mxu0 %v2502
  %v2781 = vpop.f32.mrb[0].mxu0
  %v2782 = vadd.f32 0.0, %v2781
  %v2783 = vpop.f32.mrb[0].mxu0
  %2784 = vmatprep.mubr.f32.mxu0 0.0
  %2785 = vmatmul.mubr.f32.gmra.mrb[0].mxu0 %v2505
  %v2786 = vpop.f32.mrb[0].mxu0
  %v2787 = vadd.f32 0.0, %v2786
  %v2788 = vpop.f32.mrb[0].mxu0
  %2789 = vmatprep.mubr.f32.mxu0 0.0
  %2790 = vmatmul.mubr.f32.gmra.mrb[0].mxu0 %v2508
  %v2791 = vpop.f32.mrb[0].mxu0
  %v2792 = vadd.f32 0.0, %v2791
  %v2793 = vpop.f32.mrb[0].mxu0
  %2794 = vmatprep.mubr.f32.mxu0 0.0
  %2795 = vmatmul.mubr.f32.gmra.mrb[0].mxu0 %v2511
  %v2796 = vpop.f32.mrb[0].mxu0
  %v2797 = vadd.f32 0.0, %v2796
  %v2798 = vpop.f32.mrb[0].mxu0
  %2799 = vmatprep.mubr.f32.mxu0 0.0
  %2800 = vmatmul.mubr.f32.gmra.mrb[0].mxu0 %v2514
  %v2801 = vpop.f32.mrb[0].mxu0
  %v2802 = vadd.f32 0.0, %v2801
  %v2803 = vpop.f32.mrb[0].mxu0
  %2804 = vmatprep.mubr.f32.mxu0 0.0
  %2805 = vmatmul.mubr.f32.gmra.mrb[0].mxu0 %v2517
  %v2806 = vpop.f32.mrb[0].mxu0
  %v2807 = vadd.f32 0.0, %v2806
  %v2808 = vpop.f32.mrb[0].mxu0
  %2809 = vmatprep.mubr.f32.mxu0 0.0
  %2810 = vmatmul.mubr.f32.gmra.mrb[0].mxu0 %v2520
  %v2811 = vpop.f32.mrb[0].mxu0
  %v2812 = vadd.f32 0.0, %v2811
  %v2813 = vpop.f32.mrb[0].mxu0
  %2814 = vmatprep.mubr.f32.mxu0 0.0
  %2815 = vmatmul.mubr.f32.gmra.mrb[0].mxu0 %v2523
  %v2816 = vpop.f32.mrb[0].mxu0
  %v2817 = vadd.f32 0.0, %v2816
  %v2818 = vpop.f32.mrb[0].mxu0
  %2819 = vmatprep.mubr.f32.mxu0 0.0
  %2820 = vmatmul.mubr.f32.gmra.mrb[0].mxu0 %v2526
  %v2821 = vpop.f32.mrb[0].mxu0
  %v2822 = vadd.f32 0.0, %v2821
  %v2823 = vpop.f32.mrb[0].mxu0
  %2824 = vmatprep.mubr.f32.mxu0 0.0
  %2825 = vmatmul.mubr.f32.gmra.mrb[0].mxu0 %v2529
  %v2826 = vpop.f32.mrb[0].mxu0
  %v2827 = vadd.f32 0.0, %v2826
  %v2828 = vpop.f32.mrb[0].mxu0
  %2829 = vmatprep.mubr.f32.mxu0 0.0
  %2830 = vmatmul.mubr.f32.gmra.mrb[0].mxu0 %v2532
  %v2831 = vpop.f32.mrb[0].mxu0
  %v2832 = vadd.f32 0.0, %v2831
  %v2833 = vpop.f32.mrb[0].mxu0
  %2834 = vmatprep.mubr.f32.mxu0 0.0
  %2835 = vmatmul.mubr.f32.gmra.mrb[0].mxu0 %v2535
  %v2836 = vpop.f32.mrb[0].mxu0
  %v2837 = vadd.f32 0.0, %v2836
  %v2838 = vpop.f32.mrb[0].mxu0
  %2839 = vmatprep.mubr.f32.mxu0 0.0
  %2840 = vmatmul.mubr.f32.gmra.mrb[0].mxu0 %v2538
  %v2841 = vpop.f32.mrb[0].mxu0
  %v2842 = vadd.f32 0.0, %v2841
  %v2843 = vpop.f32.mrb[0].mxu0
  %2844 = vmatprep.mubr.f32.mxu0 0.0
  %2845 = vmatmul.mubr.f32.gmra.mrb[0].mxu0 %v2541
  %v2846 = vpop.f32.mrb[0].mxu0
  %v2847 = vadd.f32 0.0, %v2846
  %v2848 = vpop.f32.mrb[0].mxu0
  %2849 = vmatprep.mubr.f32.mxu0 0.0
  %2850 = vmatmul.mubr.f32.gmra.mrb[0].mxu0 %v2544
  %v2851 = vpop.f32.mrb[0].mxu0
  %v2852 = vadd.f32 0.0, %v2851
  %v2853 = vpop.f32.mrb[0].mxu0
  %2854 = vmatprep.mubr.f32.mxu0 0.0
  %2855 = vmatmul.mubr.f32.gmra.mrb[0].mxu0 %v2547
  %v2856 = vpop.f32.mrb[0].mxu0
  %v2857 = vadd.f32 0.0, %v2856
  %v2858 = vpop.f32.mrb[0].mxu0
  %2859 = vmatprep.mubr.f32.mxu0 0.0
  %2860 = vmatmul.mubr.f32.gmra.mrb[0].mxu0 %v2550
  %v2861 = vpop.f32.mrb[0].mxu0
  %v2862 = vadd.f32 0.0, %v2861
  %v2863 = vpop.f32.mrb[0].mxu0
  %2864 = vmatprep.mubr.f32.mxu0 0.0
  %2865 = vmatmul.mubr.f32.gmra.mrb[0].mxu0 %v2553
  %v2866 = vpop.f32.mrb[0].mxu0
  %v2867 = vadd.f32 0.0, %v2866
  %v2868 = vpop.f32.mrb[0].mxu0
  %2869 = vmatprep.mubr.f32.mxu0 0.0
  %2870 = vmatmul.mubr.f32.gmra.mrb[0].mxu0 %v2556
  %v2871 = vpop.f32.mrb[0].mxu0
  %v2872 = vadd.f32 0.0, %v2871
  %v2873 = vpop.f32.mrb[0].mxu0
  %2874 = vmatprep.mubr.f32.mxu0 0.0
  %2875 = vmatmul.mubr.f32.gmra.mrb[0].mxu0 %v2559
  %v2876 = vpop.f32.mrb[0].mxu0
  %v2877 = vadd.f32 0.0, %v2876
  %v2878 = vpop.f32.mrb[0].mxu0
  %2879 = vmatprep.mubr.f32.mxu0 0.0
  %2880 = vmatmul.mubr.f32.gmra.mrb[0].mxu0 %v2562
  %v2881 = vpop.f32.mrb[0].mxu0
  %v2882 = vadd.f32 0.0, %v2881
  %v2883 = vpop.f32.mrb[0].mxu0
  %2884 = vmatprep.mubr.f32.mxu0 0.0
  %2885 = vmatmul.mubr.f32.gmra.mrb[0].mxu0 %v2565
  %v2886 = vpop.f32.mrb[0].mxu0
  %v2887 = vadd.f32 0.0, %v2886
  %v2888 = vpop.f32.mrb[0].mxu0
  %2889 = vmatprep.mubr.f32.mxu0 0.0
  %2890 = vmatmul.mubr.f32.gmra.mrb[0].mxu0 %v2568
  %v2891 = vpop.f32.mrb[0].mxu0
  %v2892 = vadd.f32 0.0, %v2891
  %v2893 = vpop.f32.mrb[0].mxu0
  %2894 = vmatprep.mubr.f32.mxu0 0.0
  %2895 = vmatmul.mubr.f32.gmra.mrb[0].mxu0 %v2571
  %v2896 = vpop.f32.mrb[0].mxu0
  %v2897 = vadd.f32 0.0, %v2896
  %v2898 = vpop.f32.mrb[0].mxu0
  %2899 = vmatprep.mubr.f32.mxu0 0.0
  %2900 = vmatmul.mubr.f32.gmra.mrb[0].mxu0 %v2574
  %v2901 = vpop.f32.mrb[0].mxu0
  %v2902 = vadd.f32 0.0, %v2901
  %v2903 = vpop.f32.mrb[0].mxu0
  %2904 = vmatprep.mubr.f32.mxu0 0.0
  %2905 = vmatmul.mubr.f32.gmra.mrb[0].mxu0 %v2577
  %v2906 = vpop.f32.mrb[0].mxu0
  %v2907 = vadd.f32 0.0, %v2906
  %v2908 = vpop.f32.mrb[0].mxu0
  %2909 = vmatprep.mubr.f32.mxu0 0.0
  %2910 = vmatmul.mubr.f32.gmra.mrb[0].mxu0 %v2580
  %v2911 = vpop.f32.mrb[0].mxu0
  %v2912 = vadd.f32 0.0, %v2911
  %v2913 = vpop.f32.mrb[0].mxu0
  %2914 = vmatprep.mubr.f32.mxu0 0.0
  %2915 = vmatmul.mubr.f32.gmra.mrb[0].mxu0 %v2583
  %v2916 = vpop.f32.mrb[0].mxu0
  %v2917 = vadd.f32 0.0, %v2916
  %v2918 = vpop.f32.mrb[0].mxu0
  %2919 = vmatprep.mubr.f32.mxu0 0.0
  %2920 = vmatmul.mubr.f32.gmra.mrb[0].mxu0 %v2586
  %v2921 = vpop.f32.mrb[0].mxu0
  %v2922 = vadd.f32 0.0, %v2921
  %v2923 = vpop.f32.mrb[0].mxu0
  %2924 = vmatprep.mubr.f32.mxu0 0.0
  %2925 = vmatmul.mubr.f32.gmra.mrb[0].mxu0 %v2589
  %v2926 = vpop.f32.mrb[0].mxu0
  %v2927 = vadd.f32 0.0, %v2926
  %v2928 = vpop.f32.mrb[0].mxu0
  %2929 = vmatprep.mubr.f32.mxu0 0.0
  %2930 = vmatmul.mubr.f32.gmra.mrb[0].mxu0 %v2592
  %v2931 = vpop.f32.mrb[0].mxu0
  %v2932 = vadd.f32 0.0, %v2931
  %v2933 = vpop.f32.mrb[0].mxu0
  %2934 = vmatprep.mubr.f32.mxu0 0.0
  %2935 = vmatmul.mubr.f32.gmra.mrb[0].mxu0 %v2595
  %v2936 = vpop.f32.mrb[0].mxu0
  %v2937 = vadd.f32 0.0, %v2936
  %v2938 = vpop.f32.mrb[0].mxu0
  %2939 = vmatprep.mubr.f32.mxu0 0.0
  %2940 = vmatmul.mubr.f32.gmra.mrb[0].mxu0 %v2598
  %v2941 = vpop.f32.mrb[0].mxu0
  %v2942 = vadd.f32 0.0, %v2941
  %v2943 = vpop.f32.mrb[0].mxu0
  %2944 = vmatprep.mubr.f32.mxu0 0.0
  %2945 = vmatmul.mubr.f32.gmra.mrb[0].mxu0 %v2601
  %v2946 = vpop.f32.mrb[0].mxu0
  %v2947 = vadd.f32 0.0, %v2946
  %v2948 = vpop.f32.mrb[0].mxu0
  %2949 = vmatprep.mubr.f32.mxu0 0.0
  %2950 = vmatmul.mubr.f32.gmra.mrb[0].mxu0 %v2604
  %v2951 = vpop.f32.mrb[0].mxu0
  %v2952 = vadd.f32 0.0, %v2951
  %v2953 = vpop.f32.mrb[0].mxu0
  %2954 = vmatprep.mubr.f32.mxu0 0.0
  %2955 = vmatmul.mubr.f32.gmra.mrb[0].mxu0 %v2607
  %v2956 = vpop.f32.mrb[0].mxu0
  %v2957 = vadd.f32 0.0, %v2956
  %v2958 = vpop.f32.mrb[0].mxu0
  %2959 = vmatprep.mubr.f32.mxu0 0.0
  %2960 = vmatmul.mubr.f32.gmra.mrb[0].mxu0 %v2610
  %v2961 = vpop.f32.mrb[0].mxu0
  %v2962 = vadd.f32 0.0, %v2961
  %v2963 = vpop.f32.mrb[0].mxu0
  %2964 = vmatprep.mubr.f32.mxu0 0.0
  %2965 = vmatmul.mubr.f32.gmra.mrb[0].mxu0 %v2613
  %v2966 = vpop.f32.mrb[0].mxu0
  %v2967 = vadd.f32 0.0, %v2966
  %v2968 = vpop.f32.mrb[0].mxu0
  %2969 = vmatprep.mubr.f32.mxu0 0.0
  %2970 = vmatmul.mubr.f32.gmra.mrb[0].mxu0 %v2616
  %v2971 = vpop.f32.mrb[0].mxu0
  %v2972 = vadd.f32 0.0, %v2971
  %v2973 = vpop.f32.mrb[0].mxu0
  %2974 = vmatprep.mubr.f32.mxu0 0.0
  %2975 = vmatmul.mubr.f32.gmra.mrb[0].mxu0 %v2619
  %v2976 = vpop.f32.mrb[0].mxu0
  %v2977 = vadd.f32 0.0, %v2976
  %v2978 = vpop.f32.mrb[0].mxu0
  %2979 = vmatprep.mubr.f32.mxu0 0.0
  %2980 = vmatmul.mubr.f32.gmra.mrb[0].mxu0 %v2622
  %v2981 = vpop.f32.mrb[0].mxu0
  %v2982 = vadd.f32 0.0, %v2981
  %v2983 = vpop.f32.mrb[0].mxu0
  %2984 = vmatprep.mubr.f32.mxu0 0.0
  %2985 = vmatmul.mubr.f32.gmra.mrb[0].mxu0 %v2625
  %v2986 = vpop.f32.mrb[0].mxu0
  %v2987 = vadd.f32 0.0, %v2986
  %v2988 = vpop.f32.mrb[0].mxu0
  %2989 = vmatprep.mubr.f32.mxu0 0.0
  %2990 = vmatmul.mubr.f32.gmra.mrb[0].mxu0 %v2628
  %v2991 = vpop.f32.mrb[0].mxu0
  %v2992 = vadd.f32 0.0, %v2991
  %v2993 = vpop.f32.mrb[0].mxu0
  %2994 = vmatprep.mubr.f32.mxu0 0.0
  %2995 = vmatmul.mubr.f32.gmra.mrb[0].mxu0 %v2631
  %v2996 = vpop.f32.mrb[0].mxu0
  %v2997 = vadd.f32 0.0, %v2996
  %v2998 = vpop.f32.mrb[0].mxu0
  %2999 = vmatprep.mubr.f32.mxu0 0.0
  %3000 = vmatmul.mubr.f32.gmra.mrb[0].mxu0 %v2634
  %v3001 = vpop.f32.mrb[0].mxu0
  %v3002 = vadd.f32 0.0, %v3001
  %v3003 = vpop.f32.mrb[0].mxu0
  %3004 = vmatprep.mubr.f32.mxu0 0.0
  %3005 = vmatmul.mubr.f32.gmra.mrb[0].mxu0 %v2637
  %v3006 = vpop.f32.mrb[0].mxu0
  %v3007 = vadd.f32 0.0, %v3006
  %v3008 = vpop.f32.mrb[0].mxu0
  %3009 = vmatprep.mubr.f32.mxu0 0.0
  %3010 = vmatmul.mubr.f32.gmra.mrb[0].mxu0 %v2640
  %v3011 = vpop.f32.mrb[0].mxu0
  %v3012 = vadd.f32 0.0, %v3011
  %v3013 = vpop.f32.mrb[0].mxu0
  %3014 = vmatprep.mubr.f32.mxu0 0.0
  %3015 = vmatmul.mubr.f32.gmra.mrb[0].mxu0 %v2643
  %v3016 = vpop.f32.mrb[0].mxu0
  %v3017 = vadd.f32 0.0, %v3016
  %v3018 = vpop.f32.mrb[0].mxu0
  %3019 = vmatprep.mubr.f32.mxu0 0.0
  %3020 = vmatmul.mubr.f32.gmra.mrb[0].mxu0 %v2646
  %v3021 = vpop.f32.mrb[0].mxu0
  %v3022 = vadd.f32 0.0, %v3021
  %v3023 = vpop.f32.mrb[0].mxu0
  %3024 = vmatprep.mubr.f32.mxu0 0.0
  %3025 = vmatmul.mubr.f32.gmra.mrb[0].mxu0 %v2649
  %v3026 = vpop.f32.mrb[0].mxu0
  %v3027 = vadd.f32 0.0, %v3026
  %v3028 = vpop.f32.mrb[0].mxu0
  %3029 = vmatprep.mubr.f32.mxu0 0.0
  %3030 = vmatmul.mubr.f32.gmra.mrb[0].mxu0 %v2652
  %v3031 = vpop.f32.mrb[0].mxu0
  %v3032 = vadd.f32 0.0, %v3031
  %v3033 = vpop.f32.mrb[0].mxu0
  %3034 = vmatprep.mubr.f32.mxu0 0.0
  %3035 = vmatmul.mubr.f32.gmra.mrb[0].mxu0 %v2655
  %v3036 = vpop.f32.mrb[0].mxu0
  %v3037 = vadd.f32 0.0, %v3036
  %v3038 = vpop.f32.mrb[0].mxu0
  %3039 = vmatprep.mubr.f32.mxu0 0.0
  %3040 = vmatmul.mubr.f32.gmra.mrb[0].mxu0 %v2658
  %v3041 = vpop.f32.mrb[0].mxu0
  %v3042 = vadd.f32 0.0, %v3041
  %v3043 = vpop.f32.mrb[0].mxu0
  %3044 = vdwg.mxu0
  %v3045 = vadd.f32 %v2147, %v2727
  %v3046 = vadd.f32 %v2152, %v2732
  %v3047 = vadd.f32 %v2157, %v2737
  %v3048 = vadd.f32 %v2162, %v2742
  %v3049 = vadd.f32 %v2167, %v2747
  %v3050 = vadd.f32 %v2172, %v2752
  %v3051 = vadd.f32 %v2177, %v2757
  %v3052 = vadd.f32 %v2182, %v2762
  %v3053 = vadd.f32 %v2187, %v2767
  %v3054 = vadd.f32 %v2192, %v2772
  %v3055 = vadd.f32 %v2197, %v2777
  %v3056 = vadd.f32 %v2202, %v2782
  %v3057 = vadd.f32 %v2207, %v2787
  %v3058 = vadd.f32 %v2212, %v2792
  %v3059 = vadd.f32 %v2217, %v2797
  %v3060 = vadd.f32 %v2222, %v2802
  %v3061 = vadd.f32 %v2227, %v2807
  %v3062 = vadd.f32 %v2232, %v2812
  %v3063 = vadd.f32 %v2237, %v2817
  %v3064 = vadd.f32 %v2242, %v2822
  %v3065 = vadd.f32 %v2247, %v2827
  %v3066 = vadd.f32 %v2252, %v2832
  %v3067 = vadd.f32 %v2257, %v2837
  %v3068 = vadd.f32 %v2262, %v2842
  %v3069 = vadd.f32 %v2267, %v2847
  %v3070 = vadd.f32 %v2272, %v2852
  %v3071 = vadd.f32 %v2277, %v2857
  %v3072 = vadd.f32 %v2282, %v2862
  %v3073 = vadd.f32 %v2287, %v2867
  %v3074 = vadd.f32 %v2292, %v2872
  %v3075 = vadd.f32 %v2297, %v2877
  %v3076 = vadd.f32 %v2302, %v2882
  %v3077 = vadd.f32 %v2307, %v2887
  %v3078 = vadd.f32 %v2312, %v2892
  %v3079 = vadd.f32 %v2317, %v2897
  %v3080 = vadd.f32 %v2322, %v2902
  %v3081 = vadd.f32 %v2327, %v2907
  %v3082 = vadd.f32 %v2332, %v2912
  %v3083 = vadd.f32 %v2337, %v2917
  %v3084 = vadd.f32 %v2342, %v2922
  %v3085 = vadd.f32 %v2347, %v2927
  %v3086 = vadd.f32 %v2352, %v2932
  %v3087 = vadd.f32 %v2357, %v2937
  %v3088 = vadd.f32 %v2362, %v2942
  %v3089 = vadd.f32 %v2367, %v2947
  %v3090 = vadd.f32 %v2372, %v2952
  %v3091 = vadd.f32 %v2377, %v2957
  %v3092 = vadd.f32 %v2382, %v2962
  %v3093 = vadd.f32 %v2387, %v2967
  %v3094 = vadd.f32 %v2392, %v2972
  %v3095 = vadd.f32 %v2397, %v2977
  %v3096 = vadd.f32 %v2402, %v2982
  %v3097 = vadd.f32 %v2407, %v2987
  %v3098 = vadd.f32 %v2412, %v2992
  %v3099 = vadd.f32 %v2417, %v2997
  %v3100 = vadd.f32 %v2422, %v3002
  %v3101 = vadd.f32 %v2427, %v3007
  %v3102 = vadd.f32 %v2432, %v3012
  %v3103 = vadd.f32 %v2437, %v3017
  %v3104 = vadd.f32 %v2442, %v3022
  %v3105 = vadd.f32 %v2447, %v3027
  %v3106 = vadd.f32 %v2452, %v3032
  %v3107 = vadd.f32 %v2457, %v3037
  %v3108 = vadd.f32 %v2462, %v3042
  %s3109 = scalar_lea.vmem %s3, 48
  %v3110 = vld [vmem:[%s3109] sm:$0xff]
  %v3111 = vld [vmem:[%s3109 + $0x8] sm:$0xff]
  %v3113 = vsel %vm230, %v1122, 0
  %v3116 = vsel %vm230, %v1123, 0
  %v3119 = vsel %vm230, %v1158, 0
  %v3122 = vsel %vm230, %v1159, 0
  %3124 = vmatprep.subr.mxu0 0.0
  %3125 = vmatpush1.msra.mxu0 %v3110
  %3126 = vmatprep.subr.mxu0 0.0
  %3127 = vmatpush1.msra.mxu0 %v3111
  %3128 = vmatprep.subr.mxu0 0.0
  %3129 = vmatpush1.msra.mxu0 0.0
  %3130 = vmatprep.subr.mxu0 0.0
  %3131 = vmatpush1.msra.mxu0 0.0
  %3132 = vmatprep.subr.mxu0 0.0
  %3133 = vmatpush1.msra.mxu0 0.0
  %3134 = vmatprep.subr.mxu0 0.0
  %3135 = vmatpush1.msra.mxu0 0.0
  %3136 = vmatprep.subr.mxu0 0.0
  %3137 = vmatpush1.msra.mxu0 0.0
  %3138 = vmatprep.subr.mxu0 0.0
  %3139 = vmatpush1.msra.mxu0 0.0
  %3140 = vmatprep.subr.mxu0 0.0
  %3141 = vmatpush1.msra.mxu0 0.0
  %3142 = vmatprep.subr.mxu0 0.0
  %3143 = vmatpush1.msra.mxu0 0.0
  %3144 = vmatprep.subr.mxu0 0.0
  %3145 = vmatpush1.msra.mxu0 0.0
  %3146 = vmatprep.subr.mxu0 0.0
  %3147 = vmatpush1.msra.mxu0 0.0
  %3148 = vmatprep.subr.mxu0 0.0
  %3149 = vmatpush1.msra.mxu0 0.0
  %3150 = vmatprep.subr.mxu0 0.0
  %3151 = vmatpush1.msra.mxu0 0.0
  %3152 = vmatprep.subr.mxu0 0.0
  %3153 = vmatpush1.msra.mxu0 0.0
  %3154 = vmatprep.subr.mxu0 0.0
  %3155 = vmatpush1.msra.mxu0 0.0
  %3156 = vmatprep.subr.mxu0 0.0
  %3157 = vmatpush1.msra.mxu0 0.0
  %3158 = vmatprep.subr.mxu0 0.0
  %3159 = vmatpush1.msra.mxu0 0.0
  %3160 = vmatprep.subr.mxu0 0.0
  %3161 = vmatpush1.msra.mxu0 0.0
  %3162 = vmatprep.subr.mxu0 0.0
  %3163 = vmatpush1.msra.mxu0 0.0
  %3164 = vmatprep.subr.mxu0 0.0
  %3165 = vmatpush1.msra.mxu0 0.0
  %3166 = vmatprep.subr.mxu0 0.0
  %3167 = vmatpush1.msra.mxu0 0.0
  %3168 = vmatprep.subr.mxu0 0.0
  %3169 = vmatpush1.msra.mxu0 0.0
  %3170 = vmatprep.subr.mxu0 0.0
  %3171 = vmatpush1.msra.mxu0 0.0
  %3172 = vmatprep.subr.mxu0 0.0
  %3173 = vmatpush1.msra.mxu0 0.0
  %3174 = vmatprep.subr.mxu0 0.0
  %3175 = vmatpush1.msra.mxu0 0.0
  %3176 = vmatprep.subr.mxu0 0.0
  %3177 = vmatpush1.msra.mxu0 0.0
  %3178 = vmatprep.subr.mxu0 0.0
  %3179 = vmatpush1.msra.mxu0 0.0
  %3180 = vmatprep.subr.mxu0 0.0
  %3181 = vmatpush1.msra.mxu0 0.0
  %3182 = vmatprep.subr.mxu0 0.0
  %3183 = vmatpush1.msra.mxu0 0.0
  %3184 = vmatprep.subr.mxu0 0.0
  %3185 = vmatpush1.msra.mxu0 0.0
  %3186 = vmatprep.subr.mxu0 0.0
  %3187 = vmatpush1.msra.mxu0 0.0
  %3188 = vmatprep.mubr.f32.mxu0 0.0
  %3189 = vmatmul.mubr.f32.gmra.mrb[0].mxu0 %v1895
  %v3190 = vpop.f32.mrb[0].mxu0
  %v3191 = vadd.f32 0.0, %v3190
  %v3192 = vpop.f32.mrb[0].mxu0
  %3193 = vmatprep.mubr.f32.mxu0 0.0
  %3194 = vmatmul.mubr.f32.gmra.mrb[0].mxu0 %v1898
  %v3195 = vpop.f32.mrb[0].mxu0
  %v3196 = vadd.f32 0.0, %v3195
  %v3197 = vpop.f32.mrb[0].mxu0
  %3198 = vmatprep.mubr.f32.mxu0 0.0
  %3199 = vmatmul.mubr.f32.gmra.mrb[0].mxu0 %v1901
  %v3200 = vpop.f32.mrb[0].mxu0
  %v3201 = vadd.f32 0.0, %v3200
  %v3202 = vpop.f32.mrb[0].mxu0
  %3203 = vmatprep.mubr.f32.mxu0 0.0
  %3204 = vmatmul.mubr.f32.gmra.mrb[0].mxu0 %v1904
  %v3205 = vpop.f32.mrb[0].mxu0
  %v3206 = vadd.f32 0.0, %v3205
  %v3207 = vpop.f32.mrb[0].mxu0
  %3208 = vmatprep.mubr.f32.mxu0 0.0
  %3209 = vmatmul.mubr.f32.gmra.mrb[0].mxu0 %v1907
  %v3210 = vpop.f32.mrb[0].mxu0
  %v3211 = vadd.f32 0.0, %v3210
  %v3212 = vpop.f32.mrb[0].mxu0
  %3213 = vmatprep.mubr.f32.mxu0 0.0
  %3214 = vmatmul.mubr.f32.gmra.mrb[0].mxu0 %v1910
  %v3215 = vpop.f32.mrb[0].mxu0
  %v3216 = vadd.f32 0.0, %v3215
  %v3217 = vpop.f32.mrb[0].mxu0
  %3218 = vmatprep.mubr.f32.mxu0 0.0
  %3219 = vmatmul.mubr.f32.gmra.mrb[0].mxu0 %v1913
  %v3220 = vpop.f32.mrb[0].mxu0
  %v3221 = vadd.f32 0.0, %v3220
  %v3222 = vpop.f32.mrb[0].mxu0
  %3223 = vmatprep.mubr.f32.mxu0 0.0
  %3224 = vmatmul.mubr.f32.gmra.mrb[0].mxu0 %v1916
  %v3225 = vpop.f32.mrb[0].mxu0
  %v3226 = vadd.f32 0.0, %v3225
  %v3227 = vpop.f32.mrb[0].mxu0
  %3228 = vmatprep.mubr.f32.mxu0 0.0
  %3229 = vmatmul.mubr.f32.gmra.mrb[0].mxu0 %v1919
  %v3230 = vpop.f32.mrb[0].mxu0
  %v3231 = vadd.f32 0.0, %v3230
  %v3232 = vpop.f32.mrb[0].mxu0
  %3233 = vmatprep.mubr.f32.mxu0 0.0
  %3234 = vmatmul.mubr.f32.gmra.mrb[0].mxu0 %v1922
  %v3235 = vpop.f32.mrb[0].mxu0
  %v3236 = vadd.f32 0.0, %v3235
  %v3237 = vpop.f32.mrb[0].mxu0
  %3238 = vmatprep.mubr.f32.mxu0 0.0
  %3239 = vmatmul.mubr.f32.gmra.mrb[0].mxu0 %v1925
  %v3240 = vpop.f32.mrb[0].mxu0
  %v3241 = vadd.f32 0.0, %v3240
  %v3242 = vpop.f32.mrb[0].mxu0
  %3243 = vmatprep.mubr.f32.mxu0 0.0
  %3244 = vmatmul.mubr.f32.gmra.mrb[0].mxu0 %v1928
  %v3245 = vpop.f32.mrb[0].mxu0
  %v3246 = vadd.f32 0.0, %v3245
  %v3247 = vpop.f32.mrb[0].mxu0
  %3248 = vmatprep.mubr.f32.mxu0 0.0
  %3249 = vmatmul.mubr.f32.gmra.mrb[0].mxu0 %v1931
  %v3250 = vpop.f32.mrb[0].mxu0
  %v3251 = vadd.f32 0.0, %v3250
  %v3252 = vpop.f32.mrb[0].mxu0
  %3253 = vmatprep.mubr.f32.mxu0 0.0
  %3254 = vmatmul.mubr.f32.gmra.mrb[0].mxu0 %v1934
  %v3255 = vpop.f32.mrb[0].mxu0
  %v3256 = vadd.f32 0.0, %v3255
  %v3257 = vpop.f32.mrb[0].mxu0
  %3258 = vmatprep.mubr.f32.mxu0 0.0
  %3259 = vmatmul.mubr.f32.gmra.mrb[0].mxu0 %v1937
  %v3260 = vpop.f32.mrb[0].mxu0
  %v3261 = vadd.f32 0.0, %v3260
  %v3262 = vpop.f32.mrb[0].mxu0
  %3263 = vmatprep.mubr.f32.mxu0 0.0
  %3264 = vmatmul.mubr.f32.gmra.mrb[0].mxu0 %v1940
  %v3265 = vpop.f32.mrb[0].mxu0
  %v3266 = vadd.f32 0.0, %v3265
  %v3267 = vpop.f32.mrb[0].mxu0
  %3268 = vmatprep.mubr.f32.mxu0 0.0
  %3269 = vmatmul.mubr.f32.gmra.mrb[0].mxu0 %v1943
  %v3270 = vpop.f32.mrb[0].mxu0
  %v3271 = vadd.f32 0.0, %v3270
  %v3272 = vpop.f32.mrb[0].mxu0
  %3273 = vmatprep.mubr.f32.mxu0 0.0
  %3274 = vmatmul.mubr.f32.gmra.mrb[0].mxu0 %v1946
  %v3275 = vpop.f32.mrb[0].mxu0
  %v3276 = vadd.f32 0.0, %v3275
  %v3277 = vpop.f32.mrb[0].mxu0
  %3278 = vmatprep.mubr.f32.mxu0 0.0
  %3279 = vmatmul.mubr.f32.gmra.mrb[0].mxu0 %v1949
  %v3280 = vpop.f32.mrb[0].mxu0
  %v3281 = vadd.f32 0.0, %v3280
  %v3282 = vpop.f32.mrb[0].mxu0
  %3283 = vmatprep.mubr.f32.mxu0 0.0
  %3284 = vmatmul.mubr.f32.gmra.mrb[0].mxu0 %v1952
  %v3285 = vpop.f32.mrb[0].mxu0
  %v3286 = vadd.f32 0.0, %v3285
  %v3287 = vpop.f32.mrb[0].mxu0
  %3288 = vmatprep.mubr.f32.mxu0 0.0
  %3289 = vmatmul.mubr.f32.gmra.mrb[0].mxu0 %v1955
  %v3290 = vpop.f32.mrb[0].mxu0
  %v3291 = vadd.f32 0.0, %v3290
  %v3292 = vpop.f32.mrb[0].mxu0
  %3293 = vmatprep.mubr.f32.mxu0 0.0
  %3294 = vmatmul.mubr.f32.gmra.mrb[0].mxu0 %v1958
  %v3295 = vpop.f32.mrb[0].mxu0
  %v3296 = vadd.f32 0.0, %v3295
  %v3297 = vpop.f32.mrb[0].mxu0
  %3298 = vmatprep.mubr.f32.mxu0 0.0
  %3299 = vmatmul.mubr.f32.gmra.mrb[0].mxu0 %v1961
  %v3300 = vpop.f32.mrb[0].mxu0
  %v3301 = vadd.f32 0.0, %v3300
  %v3302 = vpop.f32.mrb[0].mxu0
  %3303 = vmatprep.mubr.f32.mxu0 0.0
  %3304 = vmatmul.mubr.f32.gmra.mrb[0].mxu0 %v1964
  %v3305 = vpop.f32.mrb[0].mxu0
  %v3306 = vadd.f32 0.0, %v3305
  %v3307 = vpop.f32.mrb[0].mxu0
  %3308 = vmatprep.mubr.f32.mxu0 0.0
  %3309 = vmatmul.mubr.f32.gmra.mrb[0].mxu0 %v1967
  %v3310 = vpop.f32.mrb[0].mxu0
  %v3311 = vadd.f32 0.0, %v3310
  %v3312 = vpop.f32.mrb[0].mxu0
  %3313 = vmatprep.mubr.f32.mxu0 0.0
  %3314 = vmatmul.mubr.f32.gmra.mrb[0].mxu0 %v1970
  %v3315 = vpop.f32.mrb[0].mxu0
  %v3316 = vadd.f32 0.0, %v3315
  %v3317 = vpop.f32.mrb[0].mxu0
  %3318 = vmatprep.mubr.f32.mxu0 0.0
  %3319 = vmatmul.mubr.f32.gmra.mrb[0].mxu0 %v1973
  %v3320 = vpop.f32.mrb[0].mxu0
  %v3321 = vadd.f32 0.0, %v3320
  %v3322 = vpop.f32.mrb[0].mxu0
  %3323 = vmatprep.mubr.f32.mxu0 0.0
  %3324 = vmatmul.mubr.f32.gmra.mrb[0].mxu0 %v1976
  %v3325 = vpop.f32.mrb[0].mxu0
  %v3326 = vadd.f32 0.0, %v3325
  %v3327 = vpop.f32.mrb[0].mxu0
  %3328 = vmatprep.mubr.f32.mxu0 0.0
  %3329 = vmatmul.mubr.f32.gmra.mrb[0].mxu0 %v1979
  %v3330 = vpop.f32.mrb[0].mxu0
  %v3331 = vadd.f32 0.0, %v3330
  %v3332 = vpop.f32.mrb[0].mxu0
  %3333 = vmatprep.mubr.f32.mxu0 0.0
  %3334 = vmatmul.mubr.f32.gmra.mrb[0].mxu0 %v1982
  %v3335 = vpop.f32.mrb[0].mxu0
  %v3336 = vadd.f32 0.0, %v3335
  %v3337 = vpop.f32.mrb[0].mxu0
  %3338 = vmatprep.mubr.f32.mxu0 0.0
  %3339 = vmatmul.mubr.f32.gmra.mrb[0].mxu0 %v3113
  %v3340 = vpop.f32.mrb[0].mxu0
  %v3341 = vadd.f32 0.0, %v3340
  %v3342 = vpop.f32.mrb[0].mxu0
  %3343 = vmatprep.mubr.f32.mxu0 0.0
  %3344 = vmatmul.mubr.f32.gmra.mrb[0].mxu0 %v3116
  %v3345 = vpop.f32.mrb[0].mxu0
  %v3346 = vadd.f32 0.0, %v3345
  %v3347 = vpop.f32.mrb[0].mxu0
  %3348 = vmatprep.mubr.f32.mxu0 0.0
  %3349 = vmatmul.mubr.f32.gmra.mrb[0].mxu0 %v1991
  %v3350 = vpop.f32.mrb[0].mxu0
  %v3351 = vadd.f32 0.0, %v3350
  %v3352 = vpop.f32.mrb[0].mxu0
  %3353 = vmatprep.mubr.f32.mxu0 0.0
  %3354 = vmatmul.mubr.f32.gmra.mrb[0].mxu0 %v1994
  %v3355 = vpop.f32.mrb[0].mxu0
  %v3356 = vadd.f32 0.0, %v3355
  %v3357 = vpop.f32.mrb[0].mxu0
  %3358 = vmatprep.mubr.f32.mxu0 0.0
  %3359 = vmatmul.mubr.f32.gmra.mrb[0].mxu0 %v1997
  %v3360 = vpop.f32.mrb[0].mxu0
  %v3361 = vadd.f32 0.0, %v3360
  %v3362 = vpop.f32.mrb[0].mxu0
  %3363 = vmatprep.mubr.f32.mxu0 0.0
  %3364 = vmatmul.mubr.f32.gmra.mrb[0].mxu0 %v2000
  %v3365 = vpop.f32.mrb[0].mxu0
  %v3366 = vadd.f32 0.0, %v3365
  %v3367 = vpop.f32.mrb[0].mxu0
  %3368 = vmatprep.mubr.f32.mxu0 0.0
  %3369 = vmatmul.mubr.f32.gmra.mrb[0].mxu0 %v2003
  %v3370 = vpop.f32.mrb[0].mxu0
  %v3371 = vadd.f32 0.0, %v3370
  %v3372 = vpop.f32.mrb[0].mxu0
  %3373 = vmatprep.mubr.f32.mxu0 0.0
  %3374 = vmatmul.mubr.f32.gmra.mrb[0].mxu0 %v2006
  %v3375 = vpop.f32.mrb[0].mxu0
  %v3376 = vadd.f32 0.0, %v3375
  %v3377 = vpop.f32.mrb[0].mxu0
  %3378 = vmatprep.mubr.f32.mxu0 0.0
  %3379 = vmatmul.mubr.f32.gmra.mrb[0].mxu0 %v2009
  %v3380 = vpop.f32.mrb[0].mxu0
  %v3381 = vadd.f32 0.0, %v3380
  %v3382 = vpop.f32.mrb[0].mxu0
  %3383 = vmatprep.mubr.f32.mxu0 0.0
  %3384 = vmatmul.mubr.f32.gmra.mrb[0].mxu0 %v2012
  %v3385 = vpop.f32.mrb[0].mxu0
  %v3386 = vadd.f32 0.0, %v3385
  %v3387 = vpop.f32.mrb[0].mxu0
  %3388 = vmatprep.mubr.f32.mxu0 0.0
  %3389 = vmatmul.mubr.f32.gmra.mrb[0].mxu0 %v2015
  %v3390 = vpop.f32.mrb[0].mxu0
  %v3391 = vadd.f32 0.0, %v3390
  %v3392 = vpop.f32.mrb[0].mxu0
  %3393 = vmatprep.mubr.f32.mxu0 0.0
  %3394 = vmatmul.mubr.f32.gmra.mrb[0].mxu0 %v2018
  %v3395 = vpop.f32.mrb[0].mxu0
  %v3396 = vadd.f32 0.0, %v3395
  %v3397 = vpop.f32.mrb[0].mxu0
  %3398 = vmatprep.mubr.f32.mxu0 0.0
  %3399 = vmatmul.mubr.f32.gmra.mrb[0].mxu0 %v2021
  %v3400 = vpop.f32.mrb[0].mxu0
  %v3401 = vadd.f32 0.0, %v3400
  %v3402 = vpop.f32.mrb[0].mxu0
  %3403 = vmatprep.mubr.f32.mxu0 0.0
  %3404 = vmatmul.mubr.f32.gmra.mrb[0].mxu0 %v2024
  %v3405 = vpop.f32.mrb[0].mxu0
  %v3406 = vadd.f32 0.0, %v3405
  %v3407 = vpop.f32.mrb[0].mxu0
  %3408 = vmatprep.mubr.f32.mxu0 0.0
  %3409 = vmatmul.mubr.f32.gmra.mrb[0].mxu0 %v2027
  %v3410 = vpop.f32.mrb[0].mxu0
  %v3411 = vadd.f32 0.0, %v3410
  %v3412 = vpop.f32.mrb[0].mxu0
  %3413 = vmatprep.mubr.f32.mxu0 0.0
  %3414 = vmatmul.mubr.f32.gmra.mrb[0].mxu0 %v2030
  %v3415 = vpop.f32.mrb[0].mxu0
  %v3416 = vadd.f32 0.0, %v3415
  %v3417 = vpop.f32.mrb[0].mxu0
  %3418 = vmatprep.mubr.f32.mxu0 0.0
  %3419 = vmatmul.mubr.f32.gmra.mrb[0].mxu0 %v2033
  %v3420 = vpop.f32.mrb[0].mxu0
  %v3421 = vadd.f32 0.0, %v3420
  %v3422 = vpop.f32.mrb[0].mxu0
  %3423 = vmatprep.mubr.f32.mxu0 0.0
  %3424 = vmatmul.mubr.f32.gmra.mrb[0].mxu0 %v2036
  %v3425 = vpop.f32.mrb[0].mxu0
  %v3426 = vadd.f32 0.0, %v3425
  %v3427 = vpop.f32.mrb[0].mxu0
  %3428 = vmatprep.mubr.f32.mxu0 0.0
  %3429 = vmatmul.mubr.f32.gmra.mrb[0].mxu0 %v2039
  %v3430 = vpop.f32.mrb[0].mxu0
  %v3431 = vadd.f32 0.0, %v3430
  %v3432 = vpop.f32.mrb[0].mxu0
  %3433 = vmatprep.mubr.f32.mxu0 0.0
  %3434 = vmatmul.mubr.f32.gmra.mrb[0].mxu0 %v2042
  %v3435 = vpop.f32.mrb[0].mxu0
  %v3436 = vadd.f32 0.0, %v3435
  %v3437 = vpop.f32.mrb[0].mxu0
  %3438 = vmatprep.mubr.f32.mxu0 0.0
  %3439 = vmatmul.mubr.f32.gmra.mrb[0].mxu0 %v2045
  %v3440 = vpop.f32.mrb[0].mxu0
  %v3441 = vadd.f32 0.0, %v3440
  %v3442 = vpop.f32.mrb[0].mxu0
  %3443 = vmatprep.mubr.f32.mxu0 0.0
  %3444 = vmatmul.mubr.f32.gmra.mrb[0].mxu0 %v2048
  %v3445 = vpop.f32.mrb[0].mxu0
  %v3446 = vadd.f32 0.0, %v3445
  %v3447 = vpop.f32.mrb[0].mxu0
  %3448 = vmatprep.mubr.f32.mxu0 0.0
  %3449 = vmatmul.mubr.f32.gmra.mrb[0].mxu0 %v2051
  %v3450 = vpop.f32.mrb[0].mxu0
  %v3451 = vadd.f32 0.0, %v3450
  %v3452 = vpop.f32.mrb[0].mxu0
  %3453 = vmatprep.mubr.f32.mxu0 0.0
  %3454 = vmatmul.mubr.f32.gmra.mrb[0].mxu0 %v2054
  %v3455 = vpop.f32.mrb[0].mxu0
  %v3456 = vadd.f32 0.0, %v3455
  %v3457 = vpop.f32.mrb[0].mxu0
  %3458 = vmatprep.mubr.f32.mxu0 0.0
  %3459 = vmatmul.mubr.f32.gmra.mrb[0].mxu0 %v2057
  %v3460 = vpop.f32.mrb[0].mxu0
  %v3461 = vadd.f32 0.0, %v3460
  %v3462 = vpop.f32.mrb[0].mxu0
  %3463 = vmatprep.mubr.f32.mxu0 0.0
  %3464 = vmatmul.mubr.f32.gmra.mrb[0].mxu0 %v2060
  %v3465 = vpop.f32.mrb[0].mxu0
  %v3466 = vadd.f32 0.0, %v3465
  %v3467 = vpop.f32.mrb[0].mxu0
  %3468 = vmatprep.mubr.f32.mxu0 0.0
  %3469 = vmatmul.mubr.f32.gmra.mrb[0].mxu0 %v2063
  %v3470 = vpop.f32.mrb[0].mxu0
  %v3471 = vadd.f32 0.0, %v3470
  %v3472 = vpop.f32.mrb[0].mxu0
  %3473 = vmatprep.mubr.f32.mxu0 0.0
  %3474 = vmatmul.mubr.f32.gmra.mrb[0].mxu0 %v2066
  %v3475 = vpop.f32.mrb[0].mxu0
  %v3476 = vadd.f32 0.0, %v3475
  %v3477 = vpop.f32.mrb[0].mxu0
  %3478 = vmatprep.mubr.f32.mxu0 0.0
  %3479 = vmatmul.mubr.f32.gmra.mrb[0].mxu0 %v2069
  %v3480 = vpop.f32.mrb[0].mxu0
  %v3481 = vadd.f32 0.0, %v3480
  %v3482 = vpop.f32.mrb[0].mxu0
  %3483 = vmatprep.mubr.f32.mxu0 0.0
  %3484 = vmatmul.mubr.f32.gmra.mrb[0].mxu0 %v2072
  %v3485 = vpop.f32.mrb[0].mxu0
  %v3486 = vadd.f32 0.0, %v3485
  %v3487 = vpop.f32.mrb[0].mxu0
  %3488 = vmatprep.mubr.f32.mxu0 0.0
  %3489 = vmatmul.mubr.f32.gmra.mrb[0].mxu0 %v2075
  %v3490 = vpop.f32.mrb[0].mxu0
  %v3491 = vadd.f32 0.0, %v3490
  %v3492 = vpop.f32.mrb[0].mxu0
  %3493 = vmatprep.mubr.f32.mxu0 0.0
  %3494 = vmatmul.mubr.f32.gmra.mrb[0].mxu0 %v2078
  %v3495 = vpop.f32.mrb[0].mxu0
  %v3496 = vadd.f32 0.0, %v3495
  %v3497 = vpop.f32.mrb[0].mxu0
  %3498 = vmatprep.mubr.f32.mxu0 0.0
  %3499 = vmatmul.mubr.f32.gmra.mrb[0].mxu0 %v3119
  %v3500 = vpop.f32.mrb[0].mxu0
  %v3501 = vadd.f32 0.0, %v3500
  %v3502 = vpop.f32.mrb[0].mxu0
  %3503 = vmatprep.mubr.f32.mxu0 0.0
  %3504 = vmatmul.mubr.f32.gmra.mrb[0].mxu0 %v3122
  %v3505 = vpop.f32.mrb[0].mxu0
  %v3506 = vadd.f32 0.0, %v3505
  %v3507 = vpop.f32.mrb[0].mxu0
  %3508 = vdwg.mxu0
  %v3509 = vadd.f32 %v3045, %v3191
  %v3510 = vadd.f32 %v3046, %v3196
  %v3511 = vadd.f32 %v3047, %v3201
  %v3512 = vadd.f32 %v3048, %v3206
  %v3513 = vadd.f32 %v3049, %v3211
  %v3514 = vadd.f32 %v3050, %v3216
  %v3515 = vadd.f32 %v3051, %v3221
  %v3516 = vadd.f32 %v3052, %v3226
  %v3517 = vadd.f32 %v3053, %v3231
  %v3518 = vadd.f32 %v3054, %v3236
  %v3519 = vadd.f32 %v3055, %v3241
  %v3520 = vadd.f32 %v3056, %v3246
  %v3521 = vadd.f32 %v3057, %v3251
  %v3522 = vadd.f32 %v3058, %v3256
  %v3523 = vadd.f32 %v3059, %v3261
  %v3524 = vadd.f32 %v3060, %v3266
  %v3525 = vadd.f32 %v3061, %v3271
  %v3526 = vadd.f32 %v3062, %v3276
  %v3527 = vadd.f32 %v3063, %v3281
  %v3528 = vadd.f32 %v3064, %v3286
  %v3529 = vadd.f32 %v3065, %v3291
  %v3530 = vadd.f32 %v3066, %v3296
  %v3531 = vadd.f32 %v3067, %v3301
  %v3532 = vadd.f32 %v3068, %v3306
  %v3533 = vadd.f32 %v3069, %v3311
  %v3534 = vadd.f32 %v3070, %v3316
  %v3535 = vadd.f32 %v3071, %v3321
  %v3536 = vadd.f32 %v3072, %v3326
  %v3537 = vadd.f32 %v3073, %v3331
  %v3538 = vadd.f32 %v3074, %v3336
  %v3539 = vadd.f32 %v3075, %v3341
  %v3540 = vadd.f32 %v3076, %v3346
  %v3541 = vadd.f32 %v3077, %v3351
  %v3542 = vadd.f32 %v3078, %v3356
  %v3543 = vadd.f32 %v3079, %v3361
  %v3544 = vadd.f32 %v3080, %v3366
  %v3545 = vadd.f32 %v3081, %v3371
  %v3546 = vadd.f32 %v3082, %v3376
  %v3547 = vadd.f32 %v3083, %v3381
  %v3548 = vadd.f32 %v3084, %v3386
  %v3549 = vadd.f32 %v3085, %v3391
  %v3550 = vadd.f32 %v3086, %v3396
  %v3551 = vadd.f32 %v3087, %v3401
  %v3552 = vadd.f32 %v3088, %v3406
  %v3553 = vadd.f32 %v3089, %v3411
  %v3554 = vadd.f32 %v3090, %v3416
  %v3555 = vadd.f32 %v3091, %v3421
  %v3556 = vadd.f32 %v3092, %v3426
  %v3557 = vadd.f32 %v3093, %v3431
  %v3558 = vadd.f32 %v3094, %v3436
  %v3559 = vadd.f32 %v3095, %v3441
  %v3560 = vadd.f32 %v3096, %v3446
  %v3561 = vadd.f32 %v3097, %v3451
  %v3562 = vadd.f32 %v3098, %v3456
  %v3563 = vadd.f32 %v3099, %v3461
  %v3564 = vadd.f32 %v3100, %v3466
  %v3565 = vadd.f32 %v3101, %v3471
  %v3566 = vadd.f32 %v3102, %v3476
  %v3567 = vadd.f32 %v3103, %v3481
  %v3568 = vadd.f32 %v3104, %v3486
  %v3569 = vadd.f32 %v3105, %v3491
  %v3570 = vadd.f32 %v3106, %v3496
  %v3571 = vadd.f32 %v3107, %v3501
  %v3572 = vadd.f32 %v3108, %v3506
  %s3573 = scalar_lea.vmem %s3, 64
  %v3574 = vld [vmem:[%s3573] sm:$0xff]
  %v3575 = vld [vmem:[%s3573 + $0x8] sm:$0xff]
  %v3577 = vsel %vm230, %v1194, 0
  %v3580 = vsel %vm230, %v1195, 0
  %v3583 = vsel %vm230, %v1230, 0
  %v3586 = vsel %vm230, %v1231, 0
  %3588 = vmatprep.subr.mxu0 0.0
  %3589 = vmatpush1.msra.mxu0 %v3574
  %3590 = vmatprep.subr.mxu0 0.0
  %3591 = vmatpush1.msra.mxu0 %v3575
  %3592 = vmatprep.subr.mxu0 0.0
  %3593 = vmatpush1.msra.mxu0 0.0
  %3594 = vmatprep.subr.mxu0 0.0
  %3595 = vmatpush1.msra.mxu0 0.0
  %3596 = vmatprep.subr.mxu0 0.0
  %3597 = vmatpush1.msra.mxu0 0.0
  %3598 = vmatprep.subr.mxu0 0.0
  %3599 = vmatpush1.msra.mxu0 0.0
  %3600 = vmatprep.subr.mxu0 0.0
  %3601 = vmatpush1.msra.mxu0 0.0
  %3602 = vmatprep.subr.mxu0 0.0
  %3603 = vmatpush1.msra.mxu0 0.0
  %3604 = vmatprep.subr.mxu0 0.0
  %3605 = vmatpush1.msra.mxu0 0.0
  %3606 = vmatprep.subr.mxu0 0.0
  %3607 = vmatpush1.msra.mxu0 0.0
  %3608 = vmatprep.subr.mxu0 0.0
  %3609 = vmatpush1.msra.mxu0 0.0
  %3610 = vmatprep.subr.mxu0 0.0
  %3611 = vmatpush1.msra.mxu0 0.0
  %3612 = vmatprep.subr.mxu0 0.0
  %3613 = vmatpush1.msra.mxu0 0.0
  %3614 = vmatprep.subr.mxu0 0.0
  %3615 = vmatpush1.msra.mxu0 0.0
  %3616 = vmatprep.subr.mxu0 0.0
  %3617 = vmatpush1.msra.mxu0 0.0
  %3618 = vmatprep.subr.mxu0 0.0
  %3619 = vmatpush1.msra.mxu0 0.0
  %3620 = vmatprep.subr.mxu0 0.0
  %3621 = vmatpush1.msra.mxu0 0.0
  %3622 = vmatprep.subr.mxu0 0.0
  %3623 = vmatpush1.msra.mxu0 0.0
  %3624 = vmatprep.subr.mxu0 0.0
  %3625 = vmatpush1.msra.mxu0 0.0
  %3626 = vmatprep.subr.mxu0 0.0
  %3627 = vmatpush1.msra.mxu0 0.0
  %3628 = vmatprep.subr.mxu0 0.0
  %3629 = vmatpush1.msra.mxu0 0.0
  %3630 = vmatprep.subr.mxu0 0.0
  %3631 = vmatpush1.msra.mxu0 0.0
  %3632 = vmatprep.subr.mxu0 0.0
  %3633 = vmatpush1.msra.mxu0 0.0
  %3634 = vmatprep.subr.mxu0 0.0
  %3635 = vmatpush1.msra.mxu0 0.0
  %3636 = vmatprep.subr.mxu0 0.0
  %3637 = vmatpush1.msra.mxu0 0.0
  %3638 = vmatprep.subr.mxu0 0.0
  %3639 = vmatpush1.msra.mxu0 0.0
  %3640 = vmatprep.subr.mxu0 0.0
  %3641 = vmatpush1.msra.mxu0 0.0
  %3642 = vmatprep.subr.mxu0 0.0
  %3643 = vmatpush1.msra.mxu0 0.0
  %3644 = vmatprep.subr.mxu0 0.0
  %3645 = vmatpush1.msra.mxu0 0.0
  %3646 = vmatprep.subr.mxu0 0.0
  %3647 = vmatpush1.msra.mxu0 0.0
  %3648 = vmatprep.subr.mxu0 0.0
  %3649 = vmatpush1.msra.mxu0 0.0
  %3650 = vmatprep.subr.mxu0 0.0
  %3651 = vmatpush1.msra.mxu0 0.0
  %3652 = vmatprep.mubr.f32.mxu0 0.0
  %3653 = vmatmul.mubr.f32.gmra.mrb[0].mxu0 %v1318
  %v3654 = vpop.f32.mrb[0].mxu0
  %v3655 = vadd.f32 0.0, %v3654
  %v3656 = vpop.f32.mrb[0].mxu0
  %3657 = vmatprep.mubr.f32.mxu0 0.0
  %3658 = vmatmul.mubr.f32.gmra.mrb[0].mxu0 %v1321
  %v3659 = vpop.f32.mrb[0].mxu0
  %v3660 = vadd.f32 0.0, %v3659
  %v3661 = vpop.f32.mrb[0].mxu0
  %3662 = vmatprep.mubr.f32.mxu0 0.0
  %3663 = vmatmul.mubr.f32.gmra.mrb[0].mxu0 %v1324
  %v3664 = vpop.f32.mrb[0].mxu0
  %v3665 = vadd.f32 0.0, %v3664
  %v3666 = vpop.f32.mrb[0].mxu0
  %3667 = vmatprep.mubr.f32.mxu0 0.0
  %3668 = vmatmul.mubr.f32.gmra.mrb[0].mxu0 %v1327
  %v3669 = vpop.f32.mrb[0].mxu0
  %v3670 = vadd.f32 0.0, %v3669
  %v3671 = vpop.f32.mrb[0].mxu0
  %3672 = vmatprep.mubr.f32.mxu0 0.0
  %3673 = vmatmul.mubr.f32.gmra.mrb[0].mxu0 %v1330
  %v3674 = vpop.f32.mrb[0].mxu0
  %v3675 = vadd.f32 0.0, %v3674
  %v3676 = vpop.f32.mrb[0].mxu0
  %3677 = vmatprep.mubr.f32.mxu0 0.0
  %3678 = vmatmul.mubr.f32.gmra.mrb[0].mxu0 %v1333
  %v3679 = vpop.f32.mrb[0].mxu0
  %v3680 = vadd.f32 0.0, %v3679
  %v3681 = vpop.f32.mrb[0].mxu0
  %3682 = vmatprep.mubr.f32.mxu0 0.0
  %3683 = vmatmul.mubr.f32.gmra.mrb[0].mxu0 %v1336
  %v3684 = vpop.f32.mrb[0].mxu0
  %v3685 = vadd.f32 0.0, %v3684
  %v3686 = vpop.f32.mrb[0].mxu0
  %3687 = vmatprep.mubr.f32.mxu0 0.0
  %3688 = vmatmul.mubr.f32.gmra.mrb[0].mxu0 %v1339
  %v3689 = vpop.f32.mrb[0].mxu0
  %v3690 = vadd.f32 0.0, %v3689
  %v3691 = vpop.f32.mrb[0].mxu0
  %3692 = vmatprep.mubr.f32.mxu0 0.0
  %3693 = vmatmul.mubr.f32.gmra.mrb[0].mxu0 %v1342
  %v3694 = vpop.f32.mrb[0].mxu0
  %v3695 = vadd.f32 0.0, %v3694
  %v3696 = vpop.f32.mrb[0].mxu0
  %3697 = vmatprep.mubr.f32.mxu0 0.0
  %3698 = vmatmul.mubr.f32.gmra.mrb[0].mxu0 %v1345
  %v3699 = vpop.f32.mrb[0].mxu0
  %v3700 = vadd.f32 0.0, %v3699
  %v3701 = vpop.f32.mrb[0].mxu0
  %3702 = vmatprep.mubr.f32.mxu0 0.0
  %3703 = vmatmul.mubr.f32.gmra.mrb[0].mxu0 %v1348
  %v3704 = vpop.f32.mrb[0].mxu0
  %v3705 = vadd.f32 0.0, %v3704
  %v3706 = vpop.f32.mrb[0].mxu0
  %3707 = vmatprep.mubr.f32.mxu0 0.0
  %3708 = vmatmul.mubr.f32.gmra.mrb[0].mxu0 %v1351
  %v3709 = vpop.f32.mrb[0].mxu0
  %v3710 = vadd.f32 0.0, %v3709
  %v3711 = vpop.f32.mrb[0].mxu0
  %3712 = vmatprep.mubr.f32.mxu0 0.0
  %3713 = vmatmul.mubr.f32.gmra.mrb[0].mxu0 %v1354
  %v3714 = vpop.f32.mrb[0].mxu0
  %v3715 = vadd.f32 0.0, %v3714
  %v3716 = vpop.f32.mrb[0].mxu0
  %3717 = vmatprep.mubr.f32.mxu0 0.0
  %3718 = vmatmul.mubr.f32.gmra.mrb[0].mxu0 %v1357
  %v3719 = vpop.f32.mrb[0].mxu0
  %v3720 = vadd.f32 0.0, %v3719
  %v3721 = vpop.f32.mrb[0].mxu0
  %3722 = vmatprep.mubr.f32.mxu0 0.0
  %3723 = vmatmul.mubr.f32.gmra.mrb[0].mxu0 %v1360
  %v3724 = vpop.f32.mrb[0].mxu0
  %v3725 = vadd.f32 0.0, %v3724
  %v3726 = vpop.f32.mrb[0].mxu0
  %3727 = vmatprep.mubr.f32.mxu0 0.0
  %3728 = vmatmul.mubr.f32.gmra.mrb[0].mxu0 %v1363
  %v3729 = vpop.f32.mrb[0].mxu0
  %v3730 = vadd.f32 0.0, %v3729
  %v3731 = vpop.f32.mrb[0].mxu0
  %3732 = vmatprep.mubr.f32.mxu0 0.0
  %3733 = vmatmul.mubr.f32.gmra.mrb[0].mxu0 %v1366
  %v3734 = vpop.f32.mrb[0].mxu0
  %v3735 = vadd.f32 0.0, %v3734
  %v3736 = vpop.f32.mrb[0].mxu0
  %3737 = vmatprep.mubr.f32.mxu0 0.0
  %3738 = vmatmul.mubr.f32.gmra.mrb[0].mxu0 %v1369
  %v3739 = vpop.f32.mrb[0].mxu0
  %v3740 = vadd.f32 0.0, %v3739
  %v3741 = vpop.f32.mrb[0].mxu0
  %3742 = vmatprep.mubr.f32.mxu0 0.0
  %3743 = vmatmul.mubr.f32.gmra.mrb[0].mxu0 %v1372
  %v3744 = vpop.f32.mrb[0].mxu0
  %v3745 = vadd.f32 0.0, %v3744
  %v3746 = vpop.f32.mrb[0].mxu0
  %3747 = vmatprep.mubr.f32.mxu0 0.0
  %3748 = vmatmul.mubr.f32.gmra.mrb[0].mxu0 %v1375
  %v3749 = vpop.f32.mrb[0].mxu0
  %v3750 = vadd.f32 0.0, %v3749
  %v3751 = vpop.f32.mrb[0].mxu0
  %3752 = vmatprep.mubr.f32.mxu0 0.0
  %3753 = vmatmul.mubr.f32.gmra.mrb[0].mxu0 %v1378
  %v3754 = vpop.f32.mrb[0].mxu0
  %v3755 = vadd.f32 0.0, %v3754
  %v3756 = vpop.f32.mrb[0].mxu0
  %3757 = vmatprep.mubr.f32.mxu0 0.0
  %3758 = vmatmul.mubr.f32.gmra.mrb[0].mxu0 %v1381
  %v3759 = vpop.f32.mrb[0].mxu0
  %v3760 = vadd.f32 0.0, %v3759
  %v3761 = vpop.f32.mrb[0].mxu0
  %3762 = vmatprep.mubr.f32.mxu0 0.0
  %3763 = vmatmul.mubr.f32.gmra.mrb[0].mxu0 %v1384
  %v3764 = vpop.f32.mrb[0].mxu0
  %v3765 = vadd.f32 0.0, %v3764
  %v3766 = vpop.f32.mrb[0].mxu0
  %3767 = vmatprep.mubr.f32.mxu0 0.0
  %3768 = vmatmul.mubr.f32.gmra.mrb[0].mxu0 %v1387
  %v3769 = vpop.f32.mrb[0].mxu0
  %v3770 = vadd.f32 0.0, %v3769
  %v3771 = vpop.f32.mrb[0].mxu0
  %3772 = vmatprep.mubr.f32.mxu0 0.0
  %3773 = vmatmul.mubr.f32.gmra.mrb[0].mxu0 %v1390
  %v3774 = vpop.f32.mrb[0].mxu0
  %v3775 = vadd.f32 0.0, %v3774
  %v3776 = vpop.f32.mrb[0].mxu0
  %3777 = vmatprep.mubr.f32.mxu0 0.0
  %3778 = vmatmul.mubr.f32.gmra.mrb[0].mxu0 %v1393
  %v3779 = vpop.f32.mrb[0].mxu0
  %v3780 = vadd.f32 0.0, %v3779
  %v3781 = vpop.f32.mrb[0].mxu0
  %3782 = vmatprep.mubr.f32.mxu0 0.0
  %3783 = vmatmul.mubr.f32.gmra.mrb[0].mxu0 %v1396
  %v3784 = vpop.f32.mrb[0].mxu0
  %v3785 = vadd.f32 0.0, %v3784
  %v3786 = vpop.f32.mrb[0].mxu0
  %3787 = vmatprep.mubr.f32.mxu0 0.0
  %3788 = vmatmul.mubr.f32.gmra.mrb[0].mxu0 %v1399
  %v3789 = vpop.f32.mrb[0].mxu0
  %v3790 = vadd.f32 0.0, %v3789
  %v3791 = vpop.f32.mrb[0].mxu0
  %3792 = vmatprep.mubr.f32.mxu0 0.0
  %3793 = vmatmul.mubr.f32.gmra.mrb[0].mxu0 %v1402
  %v3794 = vpop.f32.mrb[0].mxu0
  %v3795 = vadd.f32 0.0, %v3794
  %v3796 = vpop.f32.mrb[0].mxu0
  %3797 = vmatprep.mubr.f32.mxu0 0.0
  %3798 = vmatmul.mubr.f32.gmra.mrb[0].mxu0 %v1405
  %v3799 = vpop.f32.mrb[0].mxu0
  %v3800 = vadd.f32 0.0, %v3799
  %v3801 = vpop.f32.mrb[0].mxu0
  %3802 = vmatprep.mubr.f32.mxu0 0.0
  %3803 = vmatmul.mubr.f32.gmra.mrb[0].mxu0 %v3577
  %v3804 = vpop.f32.mrb[0].mxu0
  %v3805 = vadd.f32 0.0, %v3804
  %v3806 = vpop.f32.mrb[0].mxu0
  %3807 = vmatprep.mubr.f32.mxu0 0.0
  %3808 = vmatmul.mubr.f32.gmra.mrb[0].mxu0 %v3580
  %v3809 = vpop.f32.mrb[0].mxu0
  %v3810 = vadd.f32 0.0, %v3809
  %v3811 = vpop.f32.mrb[0].mxu0
  %3812 = vmatprep.mubr.f32.mxu0 0.0
  %3813 = vmatmul.mubr.f32.gmra.mrb[0].mxu0 %v1414
  %v3814 = vpop.f32.mrb[0].mxu0
  %v3815 = vadd.f32 0.0, %v3814
  %v3816 = vpop.f32.mrb[0].mxu0
  %3817 = vmatprep.mubr.f32.mxu0 0.0
  %3818 = vmatmul.mubr.f32.gmra.mrb[0].mxu0 %v1417
  %v3819 = vpop.f32.mrb[0].mxu0
  %v3820 = vadd.f32 0.0, %v3819
  %v3821 = vpop.f32.mrb[0].mxu0
  %3822 = vmatprep.mubr.f32.mxu0 0.0
  %3823 = vmatmul.mubr.f32.gmra.mrb[0].mxu0 %v1420
  %v3824 = vpop.f32.mrb[0].mxu0
  %v3825 = vadd.f32 0.0, %v3824
  %v3826 = vpop.f32.mrb[0].mxu0
  %3827 = vmatprep.mubr.f32.mxu0 0.0
  %3828 = vmatmul.mubr.f32.gmra.mrb[0].mxu0 %v1423
  %v3829 = vpop.f32.mrb[0].mxu0
  %v3830 = vadd.f32 0.0, %v3829
  %v3831 = vpop.f32.mrb[0].mxu0
  %3832 = vmatprep.mubr.f32.mxu0 0.0
  %3833 = vmatmul.mubr.f32.gmra.mrb[0].mxu0 %v1426
  %v3834 = vpop.f32.mrb[0].mxu0
  %v3835 = vadd.f32 0.0, %v3834
  %v3836 = vpop.f32.mrb[0].mxu0
  %3837 = vmatprep.mubr.f32.mxu0 0.0
  %3838 = vmatmul.mubr.f32.gmra.mrb[0].mxu0 %v1429
  %v3839 = vpop.f32.mrb[0].mxu0
  %v3840 = vadd.f32 0.0, %v3839
  %v3841 = vpop.f32.mrb[0].mxu0
  %3842 = vmatprep.mubr.f32.mxu0 0.0
  %3843 = vmatmul.mubr.f32.gmra.mrb[0].mxu0 %v1432
  %v3844 = vpop.f32.mrb[0].mxu0
  %v3845 = vadd.f32 0.0, %v3844
  %v3846 = vpop.f32.mrb[0].mxu0
  %3847 = vmatprep.mubr.f32.mxu0 0.0
  %3848 = vmatmul.mubr.f32.gmra.mrb[0].mxu0 %v1435
  %v3849 = vpop.f32.mrb[0].mxu0
  %v3850 = vadd.f32 0.0, %v3849
  %v3851 = vpop.f32.mrb[0].mxu0
  %3852 = vmatprep.mubr.f32.mxu0 0.0
  %3853 = vmatmul.mubr.f32.gmra.mrb[0].mxu0 %v1438
  %v3854 = vpop.f32.mrb[0].mxu0
  %v3855 = vadd.f32 0.0, %v3854
  %v3856 = vpop.f32.mrb[0].mxu0
  %3857 = vmatprep.mubr.f32.mxu0 0.0
  %3858 = vmatmul.mubr.f32.gmra.mrb[0].mxu0 %v1441
  %v3859 = vpop.f32.mrb[0].mxu0
  %v3860 = vadd.f32 0.0, %v3859
  %v3861 = vpop.f32.mrb[0].mxu0
  %3862 = vmatprep.mubr.f32.mxu0 0.0
  %3863 = vmatmul.mubr.f32.gmra.mrb[0].mxu0 %v1444
  %v3864 = vpop.f32.mrb[0].mxu0
  %v3865 = vadd.f32 0.0, %v3864
  %v3866 = vpop.f32.mrb[0].mxu0
  %3867 = vmatprep.mubr.f32.mxu0 0.0
  %3868 = vmatmul.mubr.f32.gmra.mrb[0].mxu0 %v1447
  %v3869 = vpop.f32.mrb[0].mxu0
  %v3870 = vadd.f32 0.0, %v3869
  %v3871 = vpop.f32.mrb[0].mxu0
  %3872 = vmatprep.mubr.f32.mxu0 0.0
  %3873 = vmatmul.mubr.f32.gmra.mrb[0].mxu0 %v1450
  %v3874 = vpop.f32.mrb[0].mxu0
  %v3875 = vadd.f32 0.0, %v3874
  %v3876 = vpop.f32.mrb[0].mxu0
  %3877 = vmatprep.mubr.f32.mxu0 0.0
  %3878 = vmatmul.mubr.f32.gmra.mrb[0].mxu0 %v1453
  %v3879 = vpop.f32.mrb[0].mxu0
  %v3880 = vadd.f32 0.0, %v3879
  %v3881 = vpop.f32.mrb[0].mxu0
  %3882 = vmatprep.mubr.f32.mxu0 0.0
  %3883 = vmatmul.mubr.f32.gmra.mrb[0].mxu0 %v1456
  %v3884 = vpop.f32.mrb[0].mxu0
  %v3885 = vadd.f32 0.0, %v3884
  %v3886 = vpop.f32.mrb[0].mxu0
  %3887 = vmatprep.mubr.f32.mxu0 0.0
  %3888 = vmatmul.mubr.f32.gmra.mrb[0].mxu0 %v1459
  %v3889 = vpop.f32.mrb[0].mxu0
  %v3890 = vadd.f32 0.0, %v3889
  %v3891 = vpop.f32.mrb[0].mxu0
  %3892 = vmatprep.mubr.f32.mxu0 0.0
  %3893 = vmatmul.mubr.f32.gmra.mrb[0].mxu0 %v1462
  %v3894 = vpop.f32.mrb[0].mxu0
  %v3895 = vadd.f32 0.0, %v3894
  %v3896 = vpop.f32.mrb[0].mxu0
  %3897 = vmatprep.mubr.f32.mxu0 0.0
  %3898 = vmatmul.mubr.f32.gmra.mrb[0].mxu0 %v1465
  %v3899 = vpop.f32.mrb[0].mxu0
  %v3900 = vadd.f32 0.0, %v3899
  %v3901 = vpop.f32.mrb[0].mxu0
  %3902 = vmatprep.mubr.f32.mxu0 0.0
  %3903 = vmatmul.mubr.f32.gmra.mrb[0].mxu0 %v1468
  %v3904 = vpop.f32.mrb[0].mxu0
  %v3905 = vadd.f32 0.0, %v3904
  %v3906 = vpop.f32.mrb[0].mxu0
  %3907 = vmatprep.mubr.f32.mxu0 0.0
  %3908 = vmatmul.mubr.f32.gmra.mrb[0].mxu0 %v1471
  %v3909 = vpop.f32.mrb[0].mxu0
  %v3910 = vadd.f32 0.0, %v3909
  %v3911 = vpop.f32.mrb[0].mxu0
  %3912 = vmatprep.mubr.f32.mxu0 0.0
  %3913 = vmatmul.mubr.f32.gmra.mrb[0].mxu0 %v1474
  %v3914 = vpop.f32.mrb[0].mxu0
  %v3915 = vadd.f32 0.0, %v3914
  %v3916 = vpop.f32.mrb[0].mxu0
  %3917 = vmatprep.mubr.f32.mxu0 0.0
  %3918 = vmatmul.mubr.f32.gmra.mrb[0].mxu0 %v1477
  %v3919 = vpop.f32.mrb[0].mxu0
  %v3920 = vadd.f32 0.0, %v3919
  %v3921 = vpop.f32.mrb[0].mxu0
  %3922 = vmatprep.mubr.f32.mxu0 0.0
  %3923 = vmatmul.mubr.f32.gmra.mrb[0].mxu0 %v1480
  %v3924 = vpop.f32.mrb[0].mxu0
  %v3925 = vadd.f32 0.0, %v3924
  %v3926 = vpop.f32.mrb[0].mxu0
  %3927 = vmatprep.mubr.f32.mxu0 0.0
  %3928 = vmatmul.mubr.f32.gmra.mrb[0].mxu0 %v1483
  %v3929 = vpop.f32.mrb[0].mxu0
  %v3930 = vadd.f32 0.0, %v3929
  %v3931 = vpop.f32.mrb[0].mxu0
  %3932 = vmatprep.mubr.f32.mxu0 0.0
  %3933 = vmatmul.mubr.f32.gmra.mrb[0].mxu0 %v1486
  %v3934 = vpop.f32.mrb[0].mxu0
  %v3935 = vadd.f32 0.0, %v3934
  %v3936 = vpop.f32.mrb[0].mxu0
  %3937 = vmatprep.mubr.f32.mxu0 0.0
  %3938 = vmatmul.mubr.f32.gmra.mrb[0].mxu0 %v1489
  %v3939 = vpop.f32.mrb[0].mxu0
  %v3940 = vadd.f32 0.0, %v3939
  %v3941 = vpop.f32.mrb[0].mxu0
  %3942 = vmatprep.mubr.f32.mxu0 0.0
  %3943 = vmatmul.mubr.f32.gmra.mrb[0].mxu0 %v1492
  %v3944 = vpop.f32.mrb[0].mxu0
  %v3945 = vadd.f32 0.0, %v3944
  %v3946 = vpop.f32.mrb[0].mxu0
  %3947 = vmatprep.mubr.f32.mxu0 0.0
  %3948 = vmatmul.mubr.f32.gmra.mrb[0].mxu0 %v1495
  %v3949 = vpop.f32.mrb[0].mxu0
  %v3950 = vadd.f32 0.0, %v3949
  %v3951 = vpop.f32.mrb[0].mxu0
  %3952 = vmatprep.mubr.f32.mxu0 0.0
  %3953 = vmatmul.mubr.f32.gmra.mrb[0].mxu0 %v1498
  %v3954 = vpop.f32.mrb[0].mxu0
  %v3955 = vadd.f32 0.0, %v3954
  %v3956 = vpop.f32.mrb[0].mxu0
  %3957 = vmatprep.mubr.f32.mxu0 0.0
  %3958 = vmatmul.mubr.f32.gmra.mrb[0].mxu0 %v1501
  %v3959 = vpop.f32.mrb[0].mxu0
  %v3960 = vadd.f32 0.0, %v3959
  %v3961 = vpop.f32.mrb[0].mxu0
  %3962 = vmatprep.mubr.f32.mxu0 0.0
  %3963 = vmatmul.mubr.f32.gmra.mrb[0].mxu0 %v3583
  %v3964 = vpop.f32.mrb[0].mxu0
  %v3965 = vadd.f32 0.0, %v3964
  %v3966 = vpop.f32.mrb[0].mxu0
  %3967 = vmatprep.mubr.f32.mxu0 0.0
  %3968 = vmatmul.mubr.f32.gmra.mrb[0].mxu0 %v3586
  %v3969 = vpop.f32.mrb[0].mxu0
  %v3970 = vadd.f32 0.0, %v3969
  %v3971 = vpop.f32.mrb[0].mxu0
  %3972 = vdwg.mxu0
  %v3973 = vadd.f32 %v3509, %v3655
  %v3974 = vadd.f32 %v3510, %v3660
  %v3975 = vadd.f32 %v3511, %v3665
  %v3976 = vadd.f32 %v3512, %v3670
  %v3977 = vadd.f32 %v3513, %v3675
  %v3978 = vadd.f32 %v3514, %v3680
  %v3979 = vadd.f32 %v3515, %v3685
  %v3980 = vadd.f32 %v3516, %v3690
  %v3981 = vadd.f32 %v3517, %v3695
  %v3982 = vadd.f32 %v3518, %v3700
  %v3983 = vadd.f32 %v3519, %v3705
  %v3984 = vadd.f32 %v3520, %v3710
  %v3985 = vadd.f32 %v3521, %v3715
  %v3986 = vadd.f32 %v3522, %v3720
  %v3987 = vadd.f32 %v3523, %v3725
  %v3988 = vadd.f32 %v3524, %v3730
  %v3989 = vadd.f32 %v3525, %v3735
  %v3990 = vadd.f32 %v3526, %v3740
  %v3991 = vadd.f32 %v3527, %v3745
  %v3992 = vadd.f32 %v3528, %v3750
  %v3993 = vadd.f32 %v3529, %v3755
  %v3994 = vadd.f32 %v3530, %v3760
  %v3995 = vadd.f32 %v3531, %v3765
  %v3996 = vadd.f32 %v3532, %v3770
  %v3997 = vadd.f32 %v3533, %v3775
  %v3998 = vadd.f32 %v3534, %v3780
  %v3999 = vadd.f32 %v3535, %v3785
  %v4000 = vadd.f32 %v3536, %v3790
  %v4001 = vadd.f32 %v3537, %v3795
  %v4002 = vadd.f32 %v3538, %v3800
  %v4003 = vadd.f32 %v3539, %v3805
  %v4004 = vadd.f32 %v3540, %v3810
  %v4005 = vadd.f32 %v3541, %v3815
  %v4006 = vadd.f32 %v3542, %v3820
  %v4007 = vadd.f32 %v3543, %v3825
  %v4008 = vadd.f32 %v3544, %v3830
  %v4009 = vadd.f32 %v3545, %v3835
  %v4010 = vadd.f32 %v3546, %v3840
  %v4011 = vadd.f32 %v3547, %v3845
  %v4012 = vadd.f32 %v3548, %v3850
  %v4013 = vadd.f32 %v3549, %v3855
  %v4014 = vadd.f32 %v3550, %v3860
  %v4015 = vadd.f32 %v3551, %v3865
  %v4016 = vadd.f32 %v3552, %v3870
  %v4017 = vadd.f32 %v3553, %v3875
  %v4018 = vadd.f32 %v3554, %v3880
  %v4019 = vadd.f32 %v3555, %v3885
  %v4020 = vadd.f32 %v3556, %v3890
  %v4021 = vadd.f32 %v3557, %v3895
  %v4022 = vadd.f32 %v3558, %v3900
  %v4023 = vadd.f32 %v3559, %v3905
  %v4024 = vadd.f32 %v3560, %v3910
  %v4025 = vadd.f32 %v3561, %v3915
  %v4026 = vadd.f32 %v3562, %v3920
  %v4027 = vadd.f32 %v3563, %v3925
  %v4028 = vadd.f32 %v3564, %v3930
  %v4029 = vadd.f32 %v3565, %v3935
  %v4030 = vadd.f32 %v3566, %v3940
  %v4031 = vadd.f32 %v3567, %v3945
  %v4032 = vadd.f32 %v3568, %v3950
  %v4033 = vadd.f32 %v3569, %v3955
  %v4034 = vadd.f32 %v3570, %v3960
  %v4035 = vadd.f32 %v3571, %v3965
  %v4036 = vadd.f32 %v3572, %v3970
  %s4037 = scalar_lea.vmem %s3, 80
  %v4038 = vld [vmem:[%s4037] sm:$0xff]
  %v4039 = vld [vmem:[%s4037 + $0x8] sm:$0xff]
  %v4041 = vsel %vm230, %v1266, 0
  %v4044 = vsel %vm230, %v1267, 0
  %v4047 = vsel %vm230, %v1302, 0
  %v4050 = vsel %vm230, %v1303, 0
  %4052 = vmatprep.subr.mxu0 0.0
  %4053 = vmatpush1.msra.mxu0 %v4038
  %4054 = vmatprep.subr.mxu0 0.0
  %4055 = vmatpush1.msra.mxu0 %v4039
  %4056 = vmatprep.subr.mxu0 0.0
  %4057 = vmatpush1.msra.mxu0 0.0
  %4058 = vmatprep.subr.mxu0 0.0
  %4059 = vmatpush1.msra.mxu0 0.0
  %4060 = vmatprep.subr.mxu0 0.0
  %4061 = vmatpush1.msra.mxu0 0.0
  %4062 = vmatprep.subr.mxu0 0.0
  %4063 = vmatpush1.msra.mxu0 0.0
  %4064 = vmatprep.subr.mxu0 0.0
  %4065 = vmatpush1.msra.mxu0 0.0
  %4066 = vmatprep.subr.mxu0 0.0
  %4067 = vmatpush1.msra.mxu0 0.0
  %4068 = vmatprep.subr.mxu0 0.0
  %4069 = vmatpush1.msra.mxu0 0.0
  %4070 = vmatprep.subr.mxu0 0.0
  %4071 = vmatpush1.msra.mxu0 0.0
  %4072 = vmatprep.subr.mxu0 0.0
  %4073 = vmatpush1.msra.mxu0 0.0
  %4074 = vmatprep.subr.mxu0 0.0
  %4075 = vmatpush1.msra.mxu0 0.0
  %4076 = vmatprep.subr.mxu0 0.0
  %4077 = vmatpush1.msra.mxu0 0.0
  %4078 = vmatprep.subr.mxu0 0.0
  %4079 = vmatpush1.msra.mxu0 0.0
  %4080 = vmatprep.subr.mxu0 0.0
  %4081 = vmatpush1.msra.mxu0 0.0
  %4082 = vmatprep.subr.mxu0 0.0
  %4083 = vmatpush1.msra.mxu0 0.0
  %4084 = vmatprep.subr.mxu0 0.0
  %4085 = vmatpush1.msra.mxu0 0.0
  %4086 = vmatprep.subr.mxu0 0.0
  %4087 = vmatpush1.msra.mxu0 0.0
  %4088 = vmatprep.subr.mxu0 0.0
  %4089 = vmatpush1.msra.mxu0 0.0
  %4090 = vmatprep.subr.mxu0 0.0
  %4091 = vmatpush1.msra.mxu0 0.0
  %4092 = vmatprep.subr.mxu0 0.0
  %4093 = vmatpush1.msra.mxu0 0.0
  %4094 = vmatprep.subr.mxu0 0.0
  %4095 = vmatpush1.msra.mxu0 0.0
  %4096 = vmatprep.subr.mxu0 0.0
  %4097 = vmatpush1.msra.mxu0 0.0
  %4098 = vmatprep.subr.mxu0 0.0
  %4099 = vmatpush1.msra.mxu0 0.0
  %4100 = vmatprep.subr.mxu0 0.0
  %4101 = vmatpush1.msra.mxu0 0.0
  %4102 = vmatprep.subr.mxu0 0.0
  %4103 = vmatpush1.msra.mxu0 0.0
  %4104 = vmatprep.subr.mxu0 0.0
  %4105 = vmatpush1.msra.mxu0 0.0
  %4106 = vmatprep.subr.mxu0 0.0
  %4107 = vmatpush1.msra.mxu0 0.0
  %4108 = vmatprep.subr.mxu0 0.0
  %4109 = vmatpush1.msra.mxu0 0.0
  %4110 = vmatprep.subr.mxu0 0.0
  %4111 = vmatpush1.msra.mxu0 0.0
  %4112 = vmatprep.subr.mxu0 0.0
  %4113 = vmatpush1.msra.mxu0 0.0
  %4114 = vmatprep.subr.mxu0 0.0
  %4115 = vmatpush1.msra.mxu0 0.0
  %4116 = vmatprep.mubr.f32.mxu0 0.0
  %4117 = vmatmul.mubr.f32.gmra.mrb[0].mxu0 %v2475
  %v4118 = vpop.f32.mrb[0].mxu0
  %v4119 = vadd.f32 0.0, %v4118
  %v4120 = vpop.f32.mrb[0].mxu0
  %4121 = vmatprep.mubr.f32.mxu0 0.0
  %4122 = vmatmul.mubr.f32.gmra.mrb[0].mxu0 %v2478
  %v4123 = vpop.f32.mrb[0].mxu0
  %v4124 = vadd.f32 0.0, %v4123
  %v4125 = vpop.f32.mrb[0].mxu0
  %4126 = vmatprep.mubr.f32.mxu0 0.0
  %4127 = vmatmul.mubr.f32.gmra.mrb[0].mxu0 %v2481
  %v4128 = vpop.f32.mrb[0].mxu0
  %v4129 = vadd.f32 0.0, %v4128
  %v4130 = vpop.f32.mrb[0].mxu0
  %4131 = vmatprep.mubr.f32.mxu0 0.0
  %4132 = vmatmul.mubr.f32.gmra.mrb[0].mxu0 %v2484
  %v4133 = vpop.f32.mrb[0].mxu0
  %v4134 = vadd.f32 0.0, %v4133
  %v4135 = vpop.f32.mrb[0].mxu0
  %4136 = vmatprep.mubr.f32.mxu0 0.0
  %4137 = vmatmul.mubr.f32.gmra.mrb[0].mxu0 %v2487
  %v4138 = vpop.f32.mrb[0].mxu0
  %v4139 = vadd.f32 0.0, %v4138
  %v4140 = vpop.f32.mrb[0].mxu0
  %4141 = vmatprep.mubr.f32.mxu0 0.0
  %4142 = vmatmul.mubr.f32.gmra.mrb[0].mxu0 %v2490
  %v4143 = vpop.f32.mrb[0].mxu0
  %v4144 = vadd.f32 0.0, %v4143
  %v4145 = vpop.f32.mrb[0].mxu0
  %4146 = vmatprep.mubr.f32.mxu0 0.0
  %4147 = vmatmul.mubr.f32.gmra.mrb[0].mxu0 %v2493
  %v4148 = vpop.f32.mrb[0].mxu0
  %v4149 = vadd.f32 0.0, %v4148
  %v4150 = vpop.f32.mrb[0].mxu0
  %4151 = vmatprep.mubr.f32.mxu0 0.0
  %4152 = vmatmul.mubr.f32.gmra.mrb[0].mxu0 %v2496
  %v4153 = vpop.f32.mrb[0].mxu0
  %v4154 = vadd.f32 0.0, %v4153
  %v4155 = vpop.f32.mrb[0].mxu0
  %4156 = vmatprep.mubr.f32.mxu0 0.0
  %4157 = vmatmul.mubr.f32.gmra.mrb[0].mxu0 %v2499
  %v4158 = vpop.f32.mrb[0].mxu0
  %v4159 = vadd.f32 0.0, %v4158
  %v4160 = vpop.f32.mrb[0].mxu0
  %4161 = vmatprep.mubr.f32.mxu0 0.0
  %4162 = vmatmul.mubr.f32.gmra.mrb[0].mxu0 %v2502
  %v4163 = vpop.f32.mrb[0].mxu0
  %v4164 = vadd.f32 0.0, %v4163
  %v4165 = vpop.f32.mrb[0].mxu0
  %4166 = vmatprep.mubr.f32.mxu0 0.0
  %4167 = vmatmul.mubr.f32.gmra.mrb[0].mxu0 %v2505
  %v4168 = vpop.f32.mrb[0].mxu0
  %v4169 = vadd.f32 0.0, %v4168
  %v4170 = vpop.f32.mrb[0].mxu0
  %4171 = vmatprep.mubr.f32.mxu0 0.0
  %4172 = vmatmul.mubr.f32.gmra.mrb[0].mxu0 %v2508
  %v4173 = vpop.f32.mrb[0].mxu0
  %v4174 = vadd.f32 0.0, %v4173
  %v4175 = vpop.f32.mrb[0].mxu0
  %4176 = vmatprep.mubr.f32.mxu0 0.0
  %4177 = vmatmul.mubr.f32.gmra.mrb[0].mxu0 %v2511
  %v4178 = vpop.f32.mrb[0].mxu0
  %v4179 = vadd.f32 0.0, %v4178
  %v4180 = vpop.f32.mrb[0].mxu0
  %4181 = vmatprep.mubr.f32.mxu0 0.0
  %4182 = vmatmul.mubr.f32.gmra.mrb[0].mxu0 %v2514
  %v4183 = vpop.f32.mrb[0].mxu0
  %v4184 = vadd.f32 0.0, %v4183
  %v4185 = vpop.f32.mrb[0].mxu0
  %4186 = vmatprep.mubr.f32.mxu0 0.0
  %4187 = vmatmul.mubr.f32.gmra.mrb[0].mxu0 %v2517
  %v4188 = vpop.f32.mrb[0].mxu0
  %v4189 = vadd.f32 0.0, %v4188
  %v4190 = vpop.f32.mrb[0].mxu0
  %4191 = vmatprep.mubr.f32.mxu0 0.0
  %4192 = vmatmul.mubr.f32.gmra.mrb[0].mxu0 %v2520
  %v4193 = vpop.f32.mrb[0].mxu0
  %v4194 = vadd.f32 0.0, %v4193
  %v4195 = vpop.f32.mrb[0].mxu0
  %4196 = vmatprep.mubr.f32.mxu0 0.0
  %4197 = vmatmul.mubr.f32.gmra.mrb[0].mxu0 %v2523
  %v4198 = vpop.f32.mrb[0].mxu0
  %v4199 = vadd.f32 0.0, %v4198
  %v4200 = vpop.f32.mrb[0].mxu0
  %4201 = vmatprep.mubr.f32.mxu0 0.0
  %4202 = vmatmul.mubr.f32.gmra.mrb[0].mxu0 %v2526
  %v4203 = vpop.f32.mrb[0].mxu0
  %v4204 = vadd.f32 0.0, %v4203
  %v4205 = vpop.f32.mrb[0].mxu0
  %4206 = vmatprep.mubr.f32.mxu0 0.0
  %4207 = vmatmul.mubr.f32.gmra.mrb[0].mxu0 %v2529
  %v4208 = vpop.f32.mrb[0].mxu0
  %v4209 = vadd.f32 0.0, %v4208
  %v4210 = vpop.f32.mrb[0].mxu0
  %4211 = vmatprep.mubr.f32.mxu0 0.0
  %4212 = vmatmul.mubr.f32.gmra.mrb[0].mxu0 %v2532
  %v4213 = vpop.f32.mrb[0].mxu0
  %v4214 = vadd.f32 0.0, %v4213
  %v4215 = vpop.f32.mrb[0].mxu0
  %4216 = vmatprep.mubr.f32.mxu0 0.0
  %4217 = vmatmul.mubr.f32.gmra.mrb[0].mxu0 %v2535
  %v4218 = vpop.f32.mrb[0].mxu0
  %v4219 = vadd.f32 0.0, %v4218
  %v4220 = vpop.f32.mrb[0].mxu0
  %4221 = vmatprep.mubr.f32.mxu0 0.0
  %4222 = vmatmul.mubr.f32.gmra.mrb[0].mxu0 %v2538
  %v4223 = vpop.f32.mrb[0].mxu0
  %v4224 = vadd.f32 0.0, %v4223
  %v4225 = vpop.f32.mrb[0].mxu0
  %4226 = vmatprep.mubr.f32.mxu0 0.0
  %4227 = vmatmul.mubr.f32.gmra.mrb[0].mxu0 %v2541
  %v4228 = vpop.f32.mrb[0].mxu0
  %v4229 = vadd.f32 0.0, %v4228
  %v4230 = vpop.f32.mrb[0].mxu0
  %4231 = vmatprep.mubr.f32.mxu0 0.0
  %4232 = vmatmul.mubr.f32.gmra.mrb[0].mxu0 %v2544
  %v4233 = vpop.f32.mrb[0].mxu0
  %v4234 = vadd.f32 0.0, %v4233
  %v4235 = vpop.f32.mrb[0].mxu0
  %4236 = vmatprep.mubr.f32.mxu0 0.0
  %4237 = vmatmul.mubr.f32.gmra.mrb[0].mxu0 %v2547
  %v4238 = vpop.f32.mrb[0].mxu0
  %v4239 = vadd.f32 0.0, %v4238
  %v4240 = vpop.f32.mrb[0].mxu0
  %4241 = vmatprep.mubr.f32.mxu0 0.0
  %4242 = vmatmul.mubr.f32.gmra.mrb[0].mxu0 %v2550
  %v4243 = vpop.f32.mrb[0].mxu0
  %v4244 = vadd.f32 0.0, %v4243
  %v4245 = vpop.f32.mrb[0].mxu0
  %4246 = vmatprep.mubr.f32.mxu0 0.0
  %4247 = vmatmul.mubr.f32.gmra.mrb[0].mxu0 %v2553
  %v4248 = vpop.f32.mrb[0].mxu0
  %v4249 = vadd.f32 0.0, %v4248
  %v4250 = vpop.f32.mrb[0].mxu0
  %4251 = vmatprep.mubr.f32.mxu0 0.0
  %4252 = vmatmul.mubr.f32.gmra.mrb[0].mxu0 %v2556
  %v4253 = vpop.f32.mrb[0].mxu0
  %v4254 = vadd.f32 0.0, %v4253
  %v4255 = vpop.f32.mrb[0].mxu0
  %4256 = vmatprep.mubr.f32.mxu0 0.0
  %4257 = vmatmul.mubr.f32.gmra.mrb[0].mxu0 %v2559
  %v4258 = vpop.f32.mrb[0].mxu0
  %v4259 = vadd.f32 0.0, %v4258
  %v4260 = vpop.f32.mrb[0].mxu0
  %4261 = vmatprep.mubr.f32.mxu0 0.0
  %4262 = vmatmul.mubr.f32.gmra.mrb[0].mxu0 %v2562
  %v4263 = vpop.f32.mrb[0].mxu0
  %v4264 = vadd.f32 0.0, %v4263
  %v4265 = vpop.f32.mrb[0].mxu0
  %4266 = vmatprep.mubr.f32.mxu0 0.0
  %4267 = vmatmul.mubr.f32.gmra.mrb[0].mxu0 %v4041
  %v4268 = vpop.f32.mrb[0].mxu0
  %v4269 = vadd.f32 0.0, %v4268
  %v4270 = vpop.f32.mrb[0].mxu0
  %4271 = vmatprep.mubr.f32.mxu0 0.0
  %4272 = vmatmul.mubr.f32.gmra.mrb[0].mxu0 %v4044
  %v4273 = vpop.f32.mrb[0].mxu0
  %v4274 = vadd.f32 0.0, %v4273
  %v4275 = vpop.f32.mrb[0].mxu0
  %4276 = vmatprep.mubr.f32.mxu0 0.0
  %4277 = vmatmul.mubr.f32.gmra.mrb[0].mxu0 %v2571
  %v4278 = vpop.f32.mrb[0].mxu0
  %v4279 = vadd.f32 0.0, %v4278
  %v4280 = vpop.f32.mrb[0].mxu0
  %4281 = vmatprep.mubr.f32.mxu0 0.0
  %4282 = vmatmul.mubr.f32.gmra.mrb[0].mxu0 %v2574
  %v4283 = vpop.f32.mrb[0].mxu0
  %v4284 = vadd.f32 0.0, %v4283
  %v4285 = vpop.f32.mrb[0].mxu0
  %4286 = vmatprep.mubr.f32.mxu0 0.0
  %4287 = vmatmul.mubr.f32.gmra.mrb[0].mxu0 %v2577
  %v4288 = vpop.f32.mrb[0].mxu0
  %v4289 = vadd.f32 0.0, %v4288
  %v4290 = vpop.f32.mrb[0].mxu0
  %4291 = vmatprep.mubr.f32.mxu0 0.0
  %4292 = vmatmul.mubr.f32.gmra.mrb[0].mxu0 %v2580
  %v4293 = vpop.f32.mrb[0].mxu0
  %v4294 = vadd.f32 0.0, %v4293
  %v4295 = vpop.f32.mrb[0].mxu0
  %4296 = vmatprep.mubr.f32.mxu0 0.0
  %4297 = vmatmul.mubr.f32.gmra.mrb[0].mxu0 %v2583
  %v4298 = vpop.f32.mrb[0].mxu0
  %v4299 = vadd.f32 0.0, %v4298
  %v4300 = vpop.f32.mrb[0].mxu0
  %4301 = vmatprep.mubr.f32.mxu0 0.0
  %4302 = vmatmul.mubr.f32.gmra.mrb[0].mxu0 %v2586
  %v4303 = vpop.f32.mrb[0].mxu0
  %v4304 = vadd.f32 0.0, %v4303
  %v4305 = vpop.f32.mrb[0].mxu0
  %4306 = vmatprep.mubr.f32.mxu0 0.0
  %4307 = vmatmul.mubr.f32.gmra.mrb[0].mxu0 %v2589
  %v4308 = vpop.f32.mrb[0].mxu0
  %v4309 = vadd.f32 0.0, %v4308
  %v4310 = vpop.f32.mrb[0].mxu0
  %4311 = vmatprep.mubr.f32.mxu0 0.0
  %4312 = vmatmul.mubr.f32.gmra.mrb[0].mxu0 %v2592
  %v4313 = vpop.f32.mrb[0].mxu0
  %v4314 = vadd.f32 0.0, %v4313
  %v4315 = vpop.f32.mrb[0].mxu0
  %4316 = vmatprep.mubr.f32.mxu0 0.0
  %4317 = vmatmul.mubr.f32.gmra.mrb[0].mxu0 %v2595
  %v4318 = vpop.f32.mrb[0].mxu0
  %v4319 = vadd.f32 0.0, %v4318
  %v4320 = vpop.f32.mrb[0].mxu0
  %4321 = vmatprep.mubr.f32.mxu0 0.0
  %4322 = vmatmul.mubr.f32.gmra.mrb[0].mxu0 %v2598
  %v4323 = vpop.f32.mrb[0].mxu0
  %v4324 = vadd.f32 0.0, %v4323
  %v4325 = vpop.f32.mrb[0].mxu0
  %4326 = vmatprep.mubr.f32.mxu0 0.0
  %4327 = vmatmul.mubr.f32.gmra.mrb[0].mxu0 %v2601
  %v4328 = vpop.f32.mrb[0].mxu0
  %v4329 = vadd.f32 0.0, %v4328
  %v4330 = vpop.f32.mrb[0].mxu0
  %4331 = vmatprep.mubr.f32.mxu0 0.0
  %4332 = vmatmul.mubr.f32.gmra.mrb[0].mxu0 %v2604
  %v4333 = vpop.f32.mrb[0].mxu0
  %v4334 = vadd.f32 0.0, %v4333
  %v4335 = vpop.f32.mrb[0].mxu0
  %4336 = vmatprep.mubr.f32.mxu0 0.0
  %4337 = vmatmul.mubr.f32.gmra.mrb[0].mxu0 %v2607
  %v4338 = vpop.f32.mrb[0].mxu0
  %v4339 = vadd.f32 0.0, %v4338
  %v4340 = vpop.f32.mrb[0].mxu0
  %4341 = vmatprep.mubr.f32.mxu0 0.0
  %4342 = vmatmul.mubr.f32.gmra.mrb[0].mxu0 %v2610
  %v4343 = vpop.f32.mrb[0].mxu0
  %v4344 = vadd.f32 0.0, %v4343
  %v4345 = vpop.f32.mrb[0].mxu0
  %4346 = vmatprep.mubr.f32.mxu0 0.0
  %4347 = vmatmul.mubr.f32.gmra.mrb[0].mxu0 %v2613
  %v4348 = vpop.f32.mrb[0].mxu0
  %v4349 = vadd.f32 0.0, %v4348
  %v4350 = vpop.f32.mrb[0].mxu0
  %4351 = vmatprep.mubr.f32.mxu0 0.0
  %4352 = vmatmul.mubr.f32.gmra.mrb[0].mxu0 %v2616
  %v4353 = vpop.f32.mrb[0].mxu0
  %v4354 = vadd.f32 0.0, %v4353
  %v4355 = vpop.f32.mrb[0].mxu0
  %4356 = vmatprep.mubr.f32.mxu0 0.0
  %4357 = vmatmul.mubr.f32.gmra.mrb[0].mxu0 %v2619
  %v4358 = vpop.f32.mrb[0].mxu0
  %v4359 = vadd.f32 0.0, %v4358
  %v4360 = vpop.f32.mrb[0].mxu0
  %4361 = vmatprep.mubr.f32.mxu0 0.0
  %4362 = vmatmul.mubr.f32.gmra.mrb[0].mxu0 %v2622
  %v4363 = vpop.f32.mrb[0].mxu0
  %v4364 = vadd.f32 0.0, %v4363
  %v4365 = vpop.f32.mrb[0].mxu0
  %4366 = vmatprep.mubr.f32.mxu0 0.0
  %4367 = vmatmul.mubr.f32.gmra.mrb[0].mxu0 %v2625
  %v4368 = vpop.f32.mrb[0].mxu0
  %v4369 = vadd.f32 0.0, %v4368
  %v4370 = vpop.f32.mrb[0].mxu0
  %4371 = vmatprep.mubr.f32.mxu0 0.0
  %4372 = vmatmul.mubr.f32.gmra.mrb[0].mxu0 %v2628
  %v4373 = vpop.f32.mrb[0].mxu0
  %v4374 = vadd.f32 0.0, %v4373
  %v4375 = vpop.f32.mrb[0].mxu0
  %4376 = vmatprep.mubr.f32.mxu0 0.0
  %4377 = vmatmul.mubr.f32.gmra.mrb[0].mxu0 %v2631
  %v4378 = vpop.f32.mrb[0].mxu0
  %v4379 = vadd.f32 0.0, %v4378
  %v4380 = vpop.f32.mrb[0].mxu0
  %4381 = vmatprep.mubr.f32.mxu0 0.0
  %4382 = vmatmul.mubr.f32.gmra.mrb[0].mxu0 %v2634
  %v4383 = vpop.f32.mrb[0].mxu0
  %v4384 = vadd.f32 0.0, %v4383
  %v4385 = vpop.f32.mrb[0].mxu0
  %4386 = vmatprep.mubr.f32.mxu0 0.0
  %4387 = vmatmul.mubr.f32.gmra.mrb[0].mxu0 %v2637
  %v4388 = vpop.f32.mrb[0].mxu0
  %v4389 = vadd.f32 0.0, %v4388
  %v4390 = vpop.f32.mrb[0].mxu0
  %4391 = vmatprep.mubr.f32.mxu0 0.0
  %4392 = vmatmul.mubr.f32.gmra.mrb[0].mxu0 %v2640
  %v4393 = vpop.f32.mrb[0].mxu0
  %v4394 = vadd.f32 0.0, %v4393
  %v4395 = vpop.f32.mrb[0].mxu0
  %4396 = vmatprep.mubr.f32.mxu0 0.0
  %4397 = vmatmul.mubr.f32.gmra.mrb[0].mxu0 %v2643
  %v4398 = vpop.f32.mrb[0].mxu0
  %v4399 = vadd.f32 0.0, %v4398
  %v4400 = vpop.f32.mrb[0].mxu0
  %4401 = vmatprep.mubr.f32.mxu0 0.0
  %4402 = vmatmul.mubr.f32.gmra.mrb[0].mxu0 %v2646
  %v4403 = vpop.f32.mrb[0].mxu0
  %v4404 = vadd.f32 0.0, %v4403
  %v4405 = vpop.f32.mrb[0].mxu0
  %4406 = vmatprep.mubr.f32.mxu0 0.0
  %4407 = vmatmul.mubr.f32.gmra.mrb[0].mxu0 %v2649
  %v4408 = vpop.f32.mrb[0].mxu0
  %v4409 = vadd.f32 0.0, %v4408
  %v4410 = vpop.f32.mrb[0].mxu0
  %4411 = vmatprep.mubr.f32.mxu0 0.0
  %4412 = vmatmul.mubr.f32.gmra.mrb[0].mxu0 %v2652
  %v4413 = vpop.f32.mrb[0].mxu0
  %v4414 = vadd.f32 0.0, %v4413
  %v4415 = vpop.f32.mrb[0].mxu0
  %4416 = vmatprep.mubr.f32.mxu0 0.0
  %4417 = vmatmul.mubr.f32.gmra.mrb[0].mxu0 %v2655
  %v4418 = vpop.f32.mrb[0].mxu0
  %v4419 = vadd.f32 0.0, %v4418
  %v4420 = vpop.f32.mrb[0].mxu0
  %4421 = vmatprep.mubr.f32.mxu0 0.0
  %4422 = vmatmul.mubr.f32.gmra.mrb[0].mxu0 %v2658
  %v4423 = vpop.f32.mrb[0].mxu0
  %v4424 = vadd.f32 0.0, %v4423
  %v4425 = vpop.f32.mrb[0].mxu0
  %4426 = vmatprep.mubr.f32.mxu0 0.0
  %4427 = vmatmul.mubr.f32.gmra.mrb[0].mxu0 %v4047
  %v4428 = vpop.f32.mrb[0].mxu0
  %v4429 = vadd.f32 0.0, %v4428
  %v4430 = vpop.f32.mrb[0].mxu0
  %4431 = vmatprep.mubr.f32.mxu0 0.0
  %4432 = vmatmul.mubr.f32.gmra.mrb[0].mxu0 %v4050
  %v4433 = vpop.f32.mrb[0].mxu0
  %v4434 = vadd.f32 0.0, %v4433
  %v4435 = vpop.f32.mrb[0].mxu0
  %4436 = vdwg.mxu0
  %v4437 = vadd.f32 %v3973, %v4119
  %v4438 = vadd.f32 %v3974, %v4124
  %v4439 = vadd.f32 %v3975, %v4129
  %v4440 = vadd.f32 %v3976, %v4134
  %v4441 = vadd.f32 %v3977, %v4139
  %v4442 = vadd.f32 %v3978, %v4144
  %v4443 = vadd.f32 %v3979, %v4149
  %v4444 = vadd.f32 %v3980, %v4154
  %v4445 = vadd.f32 %v3981, %v4159
  %v4446 = vadd.f32 %v3982, %v4164
  %v4447 = vadd.f32 %v3983, %v4169
  %v4448 = vadd.f32 %v3984, %v4174
  %v4449 = vadd.f32 %v3985, %v4179
  %v4450 = vadd.f32 %v3986, %v4184
  %v4451 = vadd.f32 %v3987, %v4189
  %v4452 = vadd.f32 %v3988, %v4194
  %v4453 = vadd.f32 %v3989, %v4199
  %v4454 = vadd.f32 %v3990, %v4204
  %v4455 = vadd.f32 %v3991, %v4209
  %v4456 = vadd.f32 %v3992, %v4214
  %v4457 = vadd.f32 %v3993, %v4219
  %v4458 = vadd.f32 %v3994, %v4224
  %v4459 = vadd.f32 %v3995, %v4229
  %v4460 = vadd.f32 %v3996, %v4234
  %v4461 = vadd.f32 %v3997, %v4239
  %v4462 = vadd.f32 %v3998, %v4244
  %v4463 = vadd.f32 %v3999, %v4249
  %v4464 = vadd.f32 %v4000, %v4254
  %v4465 = vadd.f32 %v4001, %v4259
  %v4466 = vadd.f32 %v4002, %v4264
  %v4467 = vadd.f32 %v4003, %v4269
  %v4468 = vadd.f32 %v4004, %v4274
  %v4469 = vadd.f32 %v4005, %v4279
  %v4470 = vadd.f32 %v4006, %v4284
  %v4471 = vadd.f32 %v4007, %v4289
  %v4472 = vadd.f32 %v4008, %v4294
  %v4473 = vadd.f32 %v4009, %v4299
  %v4474 = vadd.f32 %v4010, %v4304
  %v4475 = vadd.f32 %v4011, %v4309
  %v4476 = vadd.f32 %v4012, %v4314
  %v4477 = vadd.f32 %v4013, %v4319
  %v4478 = vadd.f32 %v4014, %v4324
  %v4479 = vadd.f32 %v4015, %v4329
  %v4480 = vadd.f32 %v4016, %v4334
  %v4481 = vadd.f32 %v4017, %v4339
  %v4482 = vadd.f32 %v4018, %v4344
  %v4483 = vadd.f32 %v4019, %v4349
  %v4484 = vadd.f32 %v4020, %v4354
  %v4485 = vadd.f32 %v4021, %v4359
  %v4486 = vadd.f32 %v4022, %v4364
  %v4487 = vadd.f32 %v4023, %v4369
  %v4488 = vadd.f32 %v4024, %v4374
  %v4489 = vadd.f32 %v4025, %v4379
  %v4490 = vadd.f32 %v4026, %v4384
  %v4491 = vadd.f32 %v4027, %v4389
  %v4492 = vadd.f32 %v4028, %v4394
  %v4493 = vadd.f32 %v4029, %v4399
  %v4494 = vadd.f32 %v4030, %v4404
  %v4495 = vadd.f32 %v4031, %v4409
  %v4496 = vadd.f32 %v4032, %v4414
  %v4497 = vadd.f32 %v4033, %v4419
  %v4498 = vadd.f32 %v4034, %v4424
  %v4499 = vadd.f32 %v4035, %v4429
  %v4500 = vadd.f32 %v4036, %v4434
  %s4501 = scalar_lea.vmem %s3, 96
  %v4502 = vld [vmem:[%s4501] sm:$0xff]
  %v4503 = vld [vmem:[%s4501 + $0x8] sm:$0xff]
  %v4505 = vsel %vm230, %v1124, 0
  %v4508 = vsel %vm230, %v1125, 0
  %v4511 = vsel %vm230, %v1160, 0
  %v4514 = vsel %vm230, %v1161, 0
  %4516 = vmatprep.subr.mxu0 0.0
  %4517 = vmatpush1.msra.mxu0 %v4502
  %4518 = vmatprep.subr.mxu0 0.0
  %4519 = vmatpush1.msra.mxu0 %v4503
  %4520 = vmatprep.subr.mxu0 0.0
  %4521 = vmatpush1.msra.mxu0 0.0
  %4522 = vmatprep.subr.mxu0 0.0
  %4523 = vmatpush1.msra.mxu0 0.0
  %4524 = vmatprep.subr.mxu0 0.0
  %4525 = vmatpush1.msra.mxu0 0.0
  %4526 = vmatprep.subr.mxu0 0.0
  %4527 = vmatpush1.msra.mxu0 0.0
  %4528 = vmatprep.subr.mxu0 0.0
  %4529 = vmatpush1.msra.mxu0 0.0
  %4530 = vmatprep.subr.mxu0 0.0
  %4531 = vmatpush1.msra.mxu0 0.0
  %4532 = vmatprep.subr.mxu0 0.0
  %4533 = vmatpush1.msra.mxu0 0.0
  %4534 = vmatprep.subr.mxu0 0.0
  %4535 = vmatpush1.msra.mxu0 0.0
  %4536 = vmatprep.subr.mxu0 0.0
  %4537 = vmatpush1.msra.mxu0 0.0
  %4538 = vmatprep.subr.mxu0 0.0
  %4539 = vmatpush1.msra.mxu0 0.0
  %4540 = vmatprep.subr.mxu0 0.0
  %4541 = vmatpush1.msra.mxu0 0.0
  %4542 = vmatprep.subr.mxu0 0.0
  %4543 = vmatpush1.msra.mxu0 0.0
  %4544 = vmatprep.subr.mxu0 0.0
  %4545 = vmatpush1.msra.mxu0 0.0
  %4546 = vmatprep.subr.mxu0 0.0
  %4547 = vmatpush1.msra.mxu0 0.0
  %4548 = vmatprep.subr.mxu0 0.0
  %4549 = vmatpush1.msra.mxu0 0.0
  %4550 = vmatprep.subr.mxu0 0.0
  %4551 = vmatpush1.msra.mxu0 0.0
  %4552 = vmatprep.subr.mxu0 0.0
  %4553 = vmatpush1.msra.mxu0 0.0
  %4554 = vmatprep.subr.mxu0 0.0
  %4555 = vmatpush1.msra.mxu0 0.0
  %4556 = vmatprep.subr.mxu0 0.0
  %4557 = vmatpush1.msra.mxu0 0.0
  %4558 = vmatprep.subr.mxu0 0.0
  %4559 = vmatpush1.msra.mxu0 0.0
  %4560 = vmatprep.subr.mxu0 0.0
  %4561 = vmatpush1.msra.mxu0 0.0
  %4562 = vmatprep.subr.mxu0 0.0
  %4563 = vmatpush1.msra.mxu0 0.0
  %4564 = vmatprep.subr.mxu0 0.0
  %4565 = vmatpush1.msra.mxu0 0.0
  %4566 = vmatprep.subr.mxu0 0.0
  %4567 = vmatpush1.msra.mxu0 0.0
  %4568 = vmatprep.subr.mxu0 0.0
  %4569 = vmatpush1.msra.mxu0 0.0
  %4570 = vmatprep.subr.mxu0 0.0
  %4571 = vmatpush1.msra.mxu0 0.0
  %4572 = vmatprep.subr.mxu0 0.0
  %4573 = vmatpush1.msra.mxu0 0.0
  %4574 = vmatprep.subr.mxu0 0.0
  %4575 = vmatpush1.msra.mxu0 0.0
  %4576 = vmatprep.subr.mxu0 0.0
  %4577 = vmatpush1.msra.mxu0 0.0
  %4578 = vmatprep.subr.mxu0 0.0
  %4579 = vmatpush1.msra.mxu0 0.0
  %4580 = vmatprep.mubr.f32.mxu0 0.0
  %4581 = vmatmul.mubr.f32.gmra.mrb[0].mxu0 %v1901
  %v4582 = vpop.f32.mrb[0].mxu0
  %v4583 = vadd.f32 0.0, %v4582
  %v4584 = vpop.f32.mrb[0].mxu0
  %4585 = vmatprep.mubr.f32.mxu0 0.0
  %4586 = vmatmul.mubr.f32.gmra.mrb[0].mxu0 %v1904
  %v4587 = vpop.f32.mrb[0].mxu0
  %v4588 = vadd.f32 0.0, %v4587
  %v4589 = vpop.f32.mrb[0].mxu0
  %4590 = vmatprep.mubr.f32.mxu0 0.0
  %4591 = vmatmul.mubr.f32.gmra.mrb[0].mxu0 %v1907
  %v4592 = vpop.f32.mrb[0].mxu0
  %v4593 = vadd.f32 0.0, %v4592
  %v4594 = vpop.f32.mrb[0].mxu0
  %4595 = vmatprep.mubr.f32.mxu0 0.0
  %4596 = vmatmul.mubr.f32.gmra.mrb[0].mxu0 %v1910
  %v4597 = vpop.f32.mrb[0].mxu0
  %v4598 = vadd.f32 0.0, %v4597
  %v4599 = vpop.f32.mrb[0].mxu0
  %4600 = vmatprep.mubr.f32.mxu0 0.0
  %4601 = vmatmul.mubr.f32.gmra.mrb[0].mxu0 %v1913
  %v4602 = vpop.f32.mrb[0].mxu0
  %v4603 = vadd.f32 0.0, %v4602
  %v4604 = vpop.f32.mrb[0].mxu0
  %4605 = vmatprep.mubr.f32.mxu0 0.0
  %4606 = vmatmul.mubr.f32.gmra.mrb[0].mxu0 %v1916
  %v4607 = vpop.f32.mrb[0].mxu0
  %v4608 = vadd.f32 0.0, %v4607
  %v4609 = vpop.f32.mrb[0].mxu0
  %4610 = vmatprep.mubr.f32.mxu0 0.0
  %4611 = vmatmul.mubr.f32.gmra.mrb[0].mxu0 %v1919
  %v4612 = vpop.f32.mrb[0].mxu0
  %v4613 = vadd.f32 0.0, %v4612
  %v4614 = vpop.f32.mrb[0].mxu0
  %4615 = vmatprep.mubr.f32.mxu0 0.0
  %4616 = vmatmul.mubr.f32.gmra.mrb[0].mxu0 %v1922
  %v4617 = vpop.f32.mrb[0].mxu0
  %v4618 = vadd.f32 0.0, %v4617
  %v4619 = vpop.f32.mrb[0].mxu0
  %4620 = vmatprep.mubr.f32.mxu0 0.0
  %4621 = vmatmul.mubr.f32.gmra.mrb[0].mxu0 %v1925
  %v4622 = vpop.f32.mrb[0].mxu0
  %v4623 = vadd.f32 0.0, %v4622
  %v4624 = vpop.f32.mrb[0].mxu0
  %4625 = vmatprep.mubr.f32.mxu0 0.0
  %4626 = vmatmul.mubr.f32.gmra.mrb[0].mxu0 %v1928
  %v4627 = vpop.f32.mrb[0].mxu0
  %v4628 = vadd.f32 0.0, %v4627
  %v4629 = vpop.f32.mrb[0].mxu0
  %4630 = vmatprep.mubr.f32.mxu0 0.0
  %4631 = vmatmul.mubr.f32.gmra.mrb[0].mxu0 %v1931
  %v4632 = vpop.f32.mrb[0].mxu0
  %v4633 = vadd.f32 0.0, %v4632
  %v4634 = vpop.f32.mrb[0].mxu0
  %4635 = vmatprep.mubr.f32.mxu0 0.0
  %4636 = vmatmul.mubr.f32.gmra.mrb[0].mxu0 %v1934
  %v4637 = vpop.f32.mrb[0].mxu0
  %v4638 = vadd.f32 0.0, %v4637
  %v4639 = vpop.f32.mrb[0].mxu0
  %4640 = vmatprep.mubr.f32.mxu0 0.0
  %4641 = vmatmul.mubr.f32.gmra.mrb[0].mxu0 %v1937
  %v4642 = vpop.f32.mrb[0].mxu0
  %v4643 = vadd.f32 0.0, %v4642
  %v4644 = vpop.f32.mrb[0].mxu0
  %4645 = vmatprep.mubr.f32.mxu0 0.0
  %4646 = vmatmul.mubr.f32.gmra.mrb[0].mxu0 %v1940
  %v4647 = vpop.f32.mrb[0].mxu0
  %v4648 = vadd.f32 0.0, %v4647
  %v4649 = vpop.f32.mrb[0].mxu0
  %4650 = vmatprep.mubr.f32.mxu0 0.0
  %4651 = vmatmul.mubr.f32.gmra.mrb[0].mxu0 %v1943
  %v4652 = vpop.f32.mrb[0].mxu0
  %v4653 = vadd.f32 0.0, %v4652
  %v4654 = vpop.f32.mrb[0].mxu0
  %4655 = vmatprep.mubr.f32.mxu0 0.0
  %4656 = vmatmul.mubr.f32.gmra.mrb[0].mxu0 %v1946
  %v4657 = vpop.f32.mrb[0].mxu0
  %v4658 = vadd.f32 0.0, %v4657
  %v4659 = vpop.f32.mrb[0].mxu0
  %4660 = vmatprep.mubr.f32.mxu0 0.0
  %4661 = vmatmul.mubr.f32.gmra.mrb[0].mxu0 %v1949
  %v4662 = vpop.f32.mrb[0].mxu0
  %v4663 = vadd.f32 0.0, %v4662
  %v4664 = vpop.f32.mrb[0].mxu0
  %4665 = vmatprep.mubr.f32.mxu0 0.0
  %4666 = vmatmul.mubr.f32.gmra.mrb[0].mxu0 %v1952
  %v4667 = vpop.f32.mrb[0].mxu0
  %v4668 = vadd.f32 0.0, %v4667
  %v4669 = vpop.f32.mrb[0].mxu0
  %4670 = vmatprep.mubr.f32.mxu0 0.0
  %4671 = vmatmul.mubr.f32.gmra.mrb[0].mxu0 %v1955
  %v4672 = vpop.f32.mrb[0].mxu0
  %v4673 = vadd.f32 0.0, %v4672
  %v4674 = vpop.f32.mrb[0].mxu0
  %4675 = vmatprep.mubr.f32.mxu0 0.0
  %4676 = vmatmul.mubr.f32.gmra.mrb[0].mxu0 %v1958
  %v4677 = vpop.f32.mrb[0].mxu0
  %v4678 = vadd.f32 0.0, %v4677
  %v4679 = vpop.f32.mrb[0].mxu0
  %4680 = vmatprep.mubr.f32.mxu0 0.0
  %4681 = vmatmul.mubr.f32.gmra.mrb[0].mxu0 %v1961
  %v4682 = vpop.f32.mrb[0].mxu0
  %v4683 = vadd.f32 0.0, %v4682
  %v4684 = vpop.f32.mrb[0].mxu0
  %4685 = vmatprep.mubr.f32.mxu0 0.0
  %4686 = vmatmul.mubr.f32.gmra.mrb[0].mxu0 %v1964
  %v4687 = vpop.f32.mrb[0].mxu0
  %v4688 = vadd.f32 0.0, %v4687
  %v4689 = vpop.f32.mrb[0].mxu0
  %4690 = vmatprep.mubr.f32.mxu0 0.0
  %4691 = vmatmul.mubr.f32.gmra.mrb[0].mxu0 %v1967
  %v4692 = vpop.f32.mrb[0].mxu0
  %v4693 = vadd.f32 0.0, %v4692
  %v4694 = vpop.f32.mrb[0].mxu0
  %4695 = vmatprep.mubr.f32.mxu0 0.0
  %4696 = vmatmul.mubr.f32.gmra.mrb[0].mxu0 %v1970
  %v4697 = vpop.f32.mrb[0].mxu0
  %v4698 = vadd.f32 0.0, %v4697
  %v4699 = vpop.f32.mrb[0].mxu0
  %4700 = vmatprep.mubr.f32.mxu0 0.0
  %4701 = vmatmul.mubr.f32.gmra.mrb[0].mxu0 %v1973
  %v4702 = vpop.f32.mrb[0].mxu0
  %v4703 = vadd.f32 0.0, %v4702
  %v4704 = vpop.f32.mrb[0].mxu0
  %4705 = vmatprep.mubr.f32.mxu0 0.0
  %4706 = vmatmul.mubr.f32.gmra.mrb[0].mxu0 %v1976
  %v4707 = vpop.f32.mrb[0].mxu0
  %v4708 = vadd.f32 0.0, %v4707
  %v4709 = vpop.f32.mrb[0].mxu0
  %4710 = vmatprep.mubr.f32.mxu0 0.0
  %4711 = vmatmul.mubr.f32.gmra.mrb[0].mxu0 %v1979
  %v4712 = vpop.f32.mrb[0].mxu0
  %v4713 = vadd.f32 0.0, %v4712
  %v4714 = vpop.f32.mrb[0].mxu0
  %4715 = vmatprep.mubr.f32.mxu0 0.0
  %4716 = vmatmul.mubr.f32.gmra.mrb[0].mxu0 %v1982
  %v4717 = vpop.f32.mrb[0].mxu0
  %v4718 = vadd.f32 0.0, %v4717
  %v4719 = vpop.f32.mrb[0].mxu0
  %4720 = vmatprep.mubr.f32.mxu0 0.0
  %4721 = vmatmul.mubr.f32.gmra.mrb[0].mxu0 %v3113
  %v4722 = vpop.f32.mrb[0].mxu0
  %v4723 = vadd.f32 0.0, %v4722
  %v4724 = vpop.f32.mrb[0].mxu0
  %4725 = vmatprep.mubr.f32.mxu0 0.0
  %4726 = vmatmul.mubr.f32.gmra.mrb[0].mxu0 %v3116
  %v4727 = vpop.f32.mrb[0].mxu0
  %v4728 = vadd.f32 0.0, %v4727
  %v4729 = vpop.f32.mrb[0].mxu0
  %4730 = vmatprep.mubr.f32.mxu0 0.0
  %4731 = vmatmul.mubr.f32.gmra.mrb[0].mxu0 %v4505
  %v4732 = vpop.f32.mrb[0].mxu0
  %v4733 = vadd.f32 0.0, %v4732
  %v4734 = vpop.f32.mrb[0].mxu0
  %4735 = vmatprep.mubr.f32.mxu0 0.0
  %4736 = vmatmul.mubr.f32.gmra.mrb[0].mxu0 %v4508
  %v4737 = vpop.f32.mrb[0].mxu0
  %v4738 = vadd.f32 0.0, %v4737
  %v4739 = vpop.f32.mrb[0].mxu0
  %4740 = vmatprep.mubr.f32.mxu0 0.0
  %4741 = vmatmul.mubr.f32.gmra.mrb[0].mxu0 %v1997
  %v4742 = vpop.f32.mrb[0].mxu0
  %v4743 = vadd.f32 0.0, %v4742
  %v4744 = vpop.f32.mrb[0].mxu0
  %4745 = vmatprep.mubr.f32.mxu0 0.0
  %4746 = vmatmul.mubr.f32.gmra.mrb[0].mxu0 %v2000
  %v4747 = vpop.f32.mrb[0].mxu0
  %v4748 = vadd.f32 0.0, %v4747
  %v4749 = vpop.f32.mrb[0].mxu0
  %4750 = vmatprep.mubr.f32.mxu0 0.0
  %4751 = vmatmul.mubr.f32.gmra.mrb[0].mxu0 %v2003
  %v4752 = vpop.f32.mrb[0].mxu0
  %v4753 = vadd.f32 0.0, %v4752
  %v4754 = vpop.f32.mrb[0].mxu0
  %4755 = vmatprep.mubr.f32.mxu0 0.0
  %4756 = vmatmul.mubr.f32.gmra.mrb[0].mxu0 %v2006
  %v4757 = vpop.f32.mrb[0].mxu0
  %v4758 = vadd.f32 0.0, %v4757
  %v4759 = vpop.f32.mrb[0].mxu0
  %4760 = vmatprep.mubr.f32.mxu0 0.0
  %4761 = vmatmul.mubr.f32.gmra.mrb[0].mxu0 %v2009
  %v4762 = vpop.f32.mrb[0].mxu0
  %v4763 = vadd.f32 0.0, %v4762
  %v4764 = vpop.f32.mrb[0].mxu0
  %4765 = vmatprep.mubr.f32.mxu0 0.0
  %4766 = vmatmul.mubr.f32.gmra.mrb[0].mxu0 %v2012
  %v4767 = vpop.f32.mrb[0].mxu0
  %v4768 = vadd.f32 0.0, %v4767
  %v4769 = vpop.f32.mrb[0].mxu0
  %4770 = vmatprep.mubr.f32.mxu0 0.0
  %4771 = vmatmul.mubr.f32.gmra.mrb[0].mxu0 %v2015
  %v4772 = vpop.f32.mrb[0].mxu0
  %v4773 = vadd.f32 0.0, %v4772
  %v4774 = vpop.f32.mrb[0].mxu0
  %4775 = vmatprep.mubr.f32.mxu0 0.0
  %4776 = vmatmul.mubr.f32.gmra.mrb[0].mxu0 %v2018
  %v4777 = vpop.f32.mrb[0].mxu0
  %v4778 = vadd.f32 0.0, %v4777
  %v4779 = vpop.f32.mrb[0].mxu0
  %4780 = vmatprep.mubr.f32.mxu0 0.0
  %4781 = vmatmul.mubr.f32.gmra.mrb[0].mxu0 %v2021
  %v4782 = vpop.f32.mrb[0].mxu0
  %v4783 = vadd.f32 0.0, %v4782
  %v4784 = vpop.f32.mrb[0].mxu0
  %4785 = vmatprep.mubr.f32.mxu0 0.0
  %4786 = vmatmul.mubr.f32.gmra.mrb[0].mxu0 %v2024
  %v4787 = vpop.f32.mrb[0].mxu0
  %v4788 = vadd.f32 0.0, %v4787
  %v4789 = vpop.f32.mrb[0].mxu0
  %4790 = vmatprep.mubr.f32.mxu0 0.0
  %4791 = vmatmul.mubr.f32.gmra.mrb[0].mxu0 %v2027
  %v4792 = vpop.f32.mrb[0].mxu0
  %v4793 = vadd.f32 0.0, %v4792
  %v4794 = vpop.f32.mrb[0].mxu0
  %4795 = vmatprep.mubr.f32.mxu0 0.0
  %4796 = vmatmul.mubr.f32.gmra.mrb[0].mxu0 %v2030
  %v4797 = vpop.f32.mrb[0].mxu0
  %v4798 = vadd.f32 0.0, %v4797
  %v4799 = vpop.f32.mrb[0].mxu0
  %4800 = vmatprep.mubr.f32.mxu0 0.0
  %4801 = vmatmul.mubr.f32.gmra.mrb[0].mxu0 %v2033
  %v4802 = vpop.f32.mrb[0].mxu0
  %v4803 = vadd.f32 0.0, %v4802
  %v4804 = vpop.f32.mrb[0].mxu0
  %4805 = vmatprep.mubr.f32.mxu0 0.0
  %4806 = vmatmul.mubr.f32.gmra.mrb[0].mxu0 %v2036
  %v4807 = vpop.f32.mrb[0].mxu0
  %v4808 = vadd.f32 0.0, %v4807
  %v4809 = vpop.f32.mrb[0].mxu0
  %4810 = vmatprep.mubr.f32.mxu0 0.0
  %4811 = vmatmul.mubr.f32.gmra.mrb[0].mxu0 %v2039
  %v4812 = vpop.f32.mrb[0].mxu0
  %v4813 = vadd.f32 0.0, %v4812
  %v4814 = vpop.f32.mrb[0].mxu0
  %4815 = vmatprep.mubr.f32.mxu0 0.0
  %4816 = vmatmul.mubr.f32.gmra.mrb[0].mxu0 %v2042
  %v4817 = vpop.f32.mrb[0].mxu0
  %v4818 = vadd.f32 0.0, %v4817
  %v4819 = vpop.f32.mrb[0].mxu0
  %4820 = vmatprep.mubr.f32.mxu0 0.0
  %4821 = vmatmul.mubr.f32.gmra.mrb[0].mxu0 %v2045
  %v4822 = vpop.f32.mrb[0].mxu0
  %v4823 = vadd.f32 0.0, %v4822
  %v4824 = vpop.f32.mrb[0].mxu0
  %4825 = vmatprep.mubr.f32.mxu0 0.0
  %4826 = vmatmul.mubr.f32.gmra.mrb[0].mxu0 %v2048
  %v4827 = vpop.f32.mrb[0].mxu0
  %v4828 = vadd.f32 0.0, %v4827
  %v4829 = vpop.f32.mrb[0].mxu0
  %4830 = vmatprep.mubr.f32.mxu0 0.0
  %4831 = vmatmul.mubr.f32.gmra.mrb[0].mxu0 %v2051
  %v4832 = vpop.f32.mrb[0].mxu0
  %v4833 = vadd.f32 0.0, %v4832
  %v4834 = vpop.f32.mrb[0].mxu0
  %4835 = vmatprep.mubr.f32.mxu0 0.0
  %4836 = vmatmul.mubr.f32.gmra.mrb[0].mxu0 %v2054
  %v4837 = vpop.f32.mrb[0].mxu0
  %v4838 = vadd.f32 0.0, %v4837
  %v4839 = vpop.f32.mrb[0].mxu0
  %4840 = vmatprep.mubr.f32.mxu0 0.0
  %4841 = vmatmul.mubr.f32.gmra.mrb[0].mxu0 %v2057
  %v4842 = vpop.f32.mrb[0].mxu0
  %v4843 = vadd.f32 0.0, %v4842
  %v4844 = vpop.f32.mrb[0].mxu0
  %4845 = vmatprep.mubr.f32.mxu0 0.0
  %4846 = vmatmul.mubr.f32.gmra.mrb[0].mxu0 %v2060
  %v4847 = vpop.f32.mrb[0].mxu0
  %v4848 = vadd.f32 0.0, %v4847
  %v4849 = vpop.f32.mrb[0].mxu0
  %4850 = vmatprep.mubr.f32.mxu0 0.0
  %4851 = vmatmul.mubr.f32.gmra.mrb[0].mxu0 %v2063
  %v4852 = vpop.f32.mrb[0].mxu0
  %v4853 = vadd.f32 0.0, %v4852
  %v4854 = vpop.f32.mrb[0].mxu0
  %4855 = vmatprep.mubr.f32.mxu0 0.0
  %4856 = vmatmul.mubr.f32.gmra.mrb[0].mxu0 %v2066
  %v4857 = vpop.f32.mrb[0].mxu0
  %v4858 = vadd.f32 0.0, %v4857
  %v4859 = vpop.f32.mrb[0].mxu0
  %4860 = vmatprep.mubr.f32.mxu0 0.0
  %4861 = vmatmul.mubr.f32.gmra.mrb[0].mxu0 %v2069
  %v4862 = vpop.f32.mrb[0].mxu0
  %v4863 = vadd.f32 0.0, %v4862
  %v4864 = vpop.f32.mrb[0].mxu0
  %4865 = vmatprep.mubr.f32.mxu0 0.0
  %4866 = vmatmul.mubr.f32.gmra.mrb[0].mxu0 %v2072
  %v4867 = vpop.f32.mrb[0].mxu0
  %v4868 = vadd.f32 0.0, %v4867
  %v4869 = vpop.f32.mrb[0].mxu0
  %4870 = vmatprep.mubr.f32.mxu0 0.0
  %4871 = vmatmul.mubr.f32.gmra.mrb[0].mxu0 %v2075
  %v4872 = vpop.f32.mrb[0].mxu0
  %v4873 = vadd.f32 0.0, %v4872
  %v4874 = vpop.f32.mrb[0].mxu0
  %4875 = vmatprep.mubr.f32.mxu0 0.0
  %4876 = vmatmul.mubr.f32.gmra.mrb[0].mxu0 %v2078
  %v4877 = vpop.f32.mrb[0].mxu0
  %v4878 = vadd.f32 0.0, %v4877
  %v4879 = vpop.f32.mrb[0].mxu0
  %4880 = vmatprep.mubr.f32.mxu0 0.0
  %4881 = vmatmul.mubr.f32.gmra.mrb[0].mxu0 %v3119
  %v4882 = vpop.f32.mrb[0].mxu0
  %v4883 = vadd.f32 0.0, %v4882
  %v4884 = vpop.f32.mrb[0].mxu0
  %4885 = vmatprep.mubr.f32.mxu0 0.0
  %4886 = vmatmul.mubr.f32.gmra.mrb[0].mxu0 %v3122
  %v4887 = vpop.f32.mrb[0].mxu0
  %v4888 = vadd.f32 0.0, %v4887
  %v4889 = vpop.f32.mrb[0].mxu0
  %4890 = vmatprep.mubr.f32.mxu0 0.0
  %4891 = vmatmul.mubr.f32.gmra.mrb[0].mxu0 %v4511
  %v4892 = vpop.f32.mrb[0].mxu0
  %v4893 = vadd.f32 0.0, %v4892
  %v4894 = vpop.f32.mrb[0].mxu0
  %4895 = vmatprep.mubr.f32.mxu0 0.0
  %4896 = vmatmul.mubr.f32.gmra.mrb[0].mxu0 %v4514
  %v4897 = vpop.f32.mrb[0].mxu0
  %v4898 = vadd.f32 0.0, %v4897
  %v4899 = vpop.f32.mrb[0].mxu0
  %4900 = vdwg.mxu0
  %v4901 = vadd.f32 %v4437, %v4583
  %v4902 = vadd.f32 %v4438, %v4588
  %v4903 = vadd.f32 %v4439, %v4593
  %v4904 = vadd.f32 %v4440, %v4598
  %v4905 = vadd.f32 %v4441, %v4603
  %v4906 = vadd.f32 %v4442, %v4608
  %v4907 = vadd.f32 %v4443, %v4613
  %v4908 = vadd.f32 %v4444, %v4618
  %v4909 = vadd.f32 %v4445, %v4623
  %v4910 = vadd.f32 %v4446, %v4628
  %v4911 = vadd.f32 %v4447, %v4633
  %v4912 = vadd.f32 %v4448, %v4638
  %v4913 = vadd.f32 %v4449, %v4643
  %v4914 = vadd.f32 %v4450, %v4648
  %v4915 = vadd.f32 %v4451, %v4653
  %v4916 = vadd.f32 %v4452, %v4658
  %v4917 = vadd.f32 %v4453, %v4663
  %v4918 = vadd.f32 %v4454, %v4668
  %v4919 = vadd.f32 %v4455, %v4673
  %v4920 = vadd.f32 %v4456, %v4678
  %v4921 = vadd.f32 %v4457, %v4683
  %v4922 = vadd.f32 %v4458, %v4688
  %v4923 = vadd.f32 %v4459, %v4693
  %v4924 = vadd.f32 %v4460, %v4698
  %v4925 = vadd.f32 %v4461, %v4703
  %v4926 = vadd.f32 %v4462, %v4708
  %v4927 = vadd.f32 %v4463, %v4713
  %v4928 = vadd.f32 %v4464, %v4718
  %v4929 = vadd.f32 %v4465, %v4723
  %v4930 = vadd.f32 %v4466, %v4728
  %v4931 = vadd.f32 %v4467, %v4733
  %v4932 = vadd.f32 %v4468, %v4738
  %v4933 = vadd.f32 %v4469, %v4743
  %v4934 = vadd.f32 %v4470, %v4748
  %v4935 = vadd.f32 %v4471, %v4753
  %v4936 = vadd.f32 %v4472, %v4758
  %v4937 = vadd.f32 %v4473, %v4763
  %v4938 = vadd.f32 %v4474, %v4768
  %v4939 = vadd.f32 %v4475, %v4773
  %v4940 = vadd.f32 %v4476, %v4778
  %v4941 = vadd.f32 %v4477, %v4783
  %v4942 = vadd.f32 %v4478, %v4788
  %v4943 = vadd.f32 %v4479, %v4793
  %v4944 = vadd.f32 %v4480, %v4798
  %v4945 = vadd.f32 %v4481, %v4803
  %v4946 = vadd.f32 %v4482, %v4808
  %v4947 = vadd.f32 %v4483, %v4813
  %v4948 = vadd.f32 %v4484, %v4818
  %v4949 = vadd.f32 %v4485, %v4823
  %v4950 = vadd.f32 %v4486, %v4828
  %v4951 = vadd.f32 %v4487, %v4833
  %v4952 = vadd.f32 %v4488, %v4838
  %v4953 = vadd.f32 %v4489, %v4843
  %v4954 = vadd.f32 %v4490, %v4848
  %v4955 = vadd.f32 %v4491, %v4853
  %v4956 = vadd.f32 %v4492, %v4858
  %v4957 = vadd.f32 %v4493, %v4863
  %v4958 = vadd.f32 %v4494, %v4868
  %v4959 = vadd.f32 %v4495, %v4873
  %v4960 = vadd.f32 %v4496, %v4878
  %v4961 = vadd.f32 %v4497, %v4883
  %v4962 = vadd.f32 %v4498, %v4888
  %v4963 = vadd.f32 %v4499, %v4893
  %v4964 = vadd.f32 %v4500, %v4898
  %s4965 = scalar_lea.vmem %s3, 112
  %v4966 = vld [vmem:[%s4965] sm:$0xff]
  %v4967 = vld [vmem:[%s4965 + $0x8] sm:$0xff]
  %v4969 = vsel %vm230, %v1196, 0
  %v4972 = vsel %vm230, %v1197, 0
  %v4975 = vsel %vm230, %v1232, 0
  %v4978 = vsel %vm230, %v1233, 0
  %4980 = vmatprep.subr.mxu0 0.0
  %4981 = vmatpush1.msra.mxu0 %v4966
  %4982 = vmatprep.subr.mxu0 0.0
  %4983 = vmatpush1.msra.mxu0 %v4967
  %4984 = vmatprep.subr.mxu0 0.0
  %4985 = vmatpush1.msra.mxu0 0.0
  %4986 = vmatprep.subr.mxu0 0.0
  %4987 = vmatpush1.msra.mxu0 0.0
  %4988 = vmatprep.subr.mxu0 0.0
  %4989 = vmatpush1.msra.mxu0 0.0
  %4990 = vmatprep.subr.mxu0 0.0
  %4991 = vmatpush1.msra.mxu0 0.0
  %4992 = vmatprep.subr.mxu0 0.0
  %4993 = vmatpush1.msra.mxu0 0.0
  %4994 = vmatprep.subr.mxu0 0.0
  %4995 = vmatpush1.msra.mxu0 0.0
  %4996 = vmatprep.subr.mxu0 0.0
  %4997 = vmatpush1.msra.mxu0 0.0
  %4998 = vmatprep.subr.mxu0 0.0
  %4999 = vmatpush1.msra.mxu0 0.0
  %5000 = vmatprep.subr.mxu0 0.0
  %5001 = vmatpush1.msra.mxu0 0.0
  %5002 = vmatprep.subr.mxu0 0.0
  %5003 = vmatpush1.msra.mxu0 0.0
  %5004 = vmatprep.subr.mxu0 0.0
  %5005 = vmatpush1.msra.mxu0 0.0
  %5006 = vmatprep.subr.mxu0 0.0
  %5007 = vmatpush1.msra.mxu0 0.0
  %5008 = vmatprep.subr.mxu0 0.0
  %5009 = vmatpush1.msra.mxu0 0.0
  %5010 = vmatprep.subr.mxu0 0.0
  %5011 = vmatpush1.msra.mxu0 0.0
  %5012 = vmatprep.subr.mxu0 0.0
  %5013 = vmatpush1.msra.mxu0 0.0
  %5014 = vmatprep.subr.mxu0 0.0
  %5015 = vmatpush1.msra.mxu0 0.0
  %5016 = vmatprep.subr.mxu0 0.0
  %5017 = vmatpush1.msra.mxu0 0.0
  %5018 = vmatprep.subr.mxu0 0.0
  %5019 = vmatpush1.msra.mxu0 0.0
  %5020 = vmatprep.subr.mxu0 0.0
  %5021 = vmatpush1.msra.mxu0 0.0
  %5022 = vmatprep.subr.mxu0 0.0
  %5023 = vmatpush1.msra.mxu0 0.0
  %5024 = vmatprep.subr.mxu0 0.0
  %5025 = vmatpush1.msra.mxu0 0.0
  %5026 = vmatprep.subr.mxu0 0.0
  %5027 = vmatpush1.msra.mxu0 0.0
  %5028 = vmatprep.subr.mxu0 0.0
  %5029 = vmatpush1.msra.mxu0 0.0
  %5030 = vmatprep.subr.mxu0 0.0
  %5031 = vmatpush1.msra.mxu0 0.0
  %5032 = vmatprep.subr.mxu0 0.0
  %5033 = vmatpush1.msra.mxu0 0.0
  %5034 = vmatprep.subr.mxu0 0.0
  %5035 = vmatpush1.msra.mxu0 0.0
  %5036 = vmatprep.subr.mxu0 0.0
  %5037 = vmatpush1.msra.mxu0 0.0
  %5038 = vmatprep.subr.mxu0 0.0
  %5039 = vmatpush1.msra.mxu0 0.0
  %5040 = vmatprep.subr.mxu0 0.0
  %5041 = vmatpush1.msra.mxu0 0.0
  %5042 = vmatprep.subr.mxu0 0.0
  %5043 = vmatpush1.msra.mxu0 0.0
  %5044 = vmatprep.mubr.f32.mxu0 0.0
  %5045 = vmatmul.mubr.f32.gmra.mrb[0].mxu0 %v1324
  %v5046 = vpop.f32.mrb[0].mxu0
  %v5047 = vadd.f32 0.0, %v5046
  %v5048 = vpop.f32.mrb[0].mxu0
  %5049 = vmatprep.mubr.f32.mxu0 0.0
  %5050 = vmatmul.mubr.f32.gmra.mrb[0].mxu0 %v1327
  %v5051 = vpop.f32.mrb[0].mxu0
  %v5052 = vadd.f32 0.0, %v5051
  %v5053 = vpop.f32.mrb[0].mxu0
  %5054 = vmatprep.mubr.f32.mxu0 0.0
  %5055 = vmatmul.mubr.f32.gmra.mrb[0].mxu0 %v1330
  %v5056 = vpop.f32.mrb[0].mxu0
  %v5057 = vadd.f32 0.0, %v5056
  %v5058 = vpop.f32.mrb[0].mxu0
  %5059 = vmatprep.mubr.f32.mxu0 0.0
  %5060 = vmatmul.mubr.f32.gmra.mrb[0].mxu0 %v1333
  %v5061 = vpop.f32.mrb[0].mxu0
  %v5062 = vadd.f32 0.0, %v5061
  %v5063 = vpop.f32.mrb[0].mxu0
  %5064 = vmatprep.mubr.f32.mxu0 0.0
  %5065 = vmatmul.mubr.f32.gmra.mrb[0].mxu0 %v1336
  %v5066 = vpop.f32.mrb[0].mxu0
  %v5067 = vadd.f32 0.0, %v5066
  %v5068 = vpop.f32.mrb[0].mxu0
  %5069 = vmatprep.mubr.f32.mxu0 0.0
  %5070 = vmatmul.mubr.f32.gmra.mrb[0].mxu0 %v1339
  %v5071 = vpop.f32.mrb[0].mxu0
  %v5072 = vadd.f32 0.0, %v5071
  %v5073 = vpop.f32.mrb[0].mxu0
  %5074 = vmatprep.mubr.f32.mxu0 0.0
  %5075 = vmatmul.mubr.f32.gmra.mrb[0].mxu0 %v1342
  %v5076 = vpop.f32.mrb[0].mxu0
  %v5077 = vadd.f32 0.0, %v5076
  %v5078 = vpop.f32.mrb[0].mxu0
  %5079 = vmatprep.mubr.f32.mxu0 0.0
  %5080 = vmatmul.mubr.f32.gmra.mrb[0].mxu0 %v1345
  %v5081 = vpop.f32.mrb[0].mxu0
  %v5082 = vadd.f32 0.0, %v5081
  %v5083 = vpop.f32.mrb[0].mxu0
  %5084 = vmatprep.mubr.f32.mxu0 0.0
  %5085 = vmatmul.mubr.f32.gmra.mrb[0].mxu0 %v1348
  %v5086 = vpop.f32.mrb[0].mxu0
  %v5087 = vadd.f32 0.0, %v5086
  %v5088 = vpop.f32.mrb[0].mxu0
  %5089 = vmatprep.mubr.f32.mxu0 0.0
  %5090 = vmatmul.mubr.f32.gmra.mrb[0].mxu0 %v1351
  %v5091 = vpop.f32.mrb[0].mxu0
  %v5092 = vadd.f32 0.0, %v5091
  %v5093 = vpop.f32.mrb[0].mxu0
  %5094 = vmatprep.mubr.f32.mxu0 0.0
  %5095 = vmatmul.mubr.f32.gmra.mrb[0].mxu0 %v1354
  %v5096 = vpop.f32.mrb[0].mxu0
  %v5097 = vadd.f32 0.0, %v5096
  %v5098 = vpop.f32.mrb[0].mxu0
  %5099 = vmatprep.mubr.f32.mxu0 0.0
  %5100 = vmatmul.mubr.f32.gmra.mrb[0].mxu0 %v1357
  %v5101 = vpop.f32.mrb[0].mxu0
  %v5102 = vadd.f32 0.0, %v5101
  %v5103 = vpop.f32.mrb[0].mxu0
  %5104 = vmatprep.mubr.f32.mxu0 0.0
  %5105 = vmatmul.mubr.f32.gmra.mrb[0].mxu0 %v1360
  %v5106 = vpop.f32.mrb[0].mxu0
  %v5107 = vadd.f32 0.0, %v5106
  %v5108 = vpop.f32.mrb[0].mxu0
  %5109 = vmatprep.mubr.f32.mxu0 0.0
  %5110 = vmatmul.mubr.f32.gmra.mrb[0].mxu0 %v1363
  %v5111 = vpop.f32.mrb[0].mxu0
  %v5112 = vadd.f32 0.0, %v5111
  %v5113 = vpop.f32.mrb[0].mxu0
  %5114 = vmatprep.mubr.f32.mxu0 0.0
  %5115 = vmatmul.mubr.f32.gmra.mrb[0].mxu0 %v1366
  %v5116 = vpop.f32.mrb[0].mxu0
  %v5117 = vadd.f32 0.0, %v5116
  %v5118 = vpop.f32.mrb[0].mxu0
  %5119 = vmatprep.mubr.f32.mxu0 0.0
  %5120 = vmatmul.mubr.f32.gmra.mrb[0].mxu0 %v1369
  %v5121 = vpop.f32.mrb[0].mxu0
  %v5122 = vadd.f32 0.0, %v5121
  %v5123 = vpop.f32.mrb[0].mxu0
  %5124 = vmatprep.mubr.f32.mxu0 0.0
  %5125 = vmatmul.mubr.f32.gmra.mrb[0].mxu0 %v1372
  %v5126 = vpop.f32.mrb[0].mxu0
  %v5127 = vadd.f32 0.0, %v5126
  %v5128 = vpop.f32.mrb[0].mxu0
  %5129 = vmatprep.mubr.f32.mxu0 0.0
  %5130 = vmatmul.mubr.f32.gmra.mrb[0].mxu0 %v1375
  %v5131 = vpop.f32.mrb[0].mxu0
  %v5132 = vadd.f32 0.0, %v5131
  %v5133 = vpop.f32.mrb[0].mxu0
  %5134 = vmatprep.mubr.f32.mxu0 0.0
  %5135 = vmatmul.mubr.f32.gmra.mrb[0].mxu0 %v1378
  %v5136 = vpop.f32.mrb[0].mxu0
  %v5137 = vadd.f32 0.0, %v5136
  %v5138 = vpop.f32.mrb[0].mxu0
  %5139 = vmatprep.mubr.f32.mxu0 0.0
  %5140 = vmatmul.mubr.f32.gmra.mrb[0].mxu0 %v1381
  %v5141 = vpop.f32.mrb[0].mxu0
  %v5142 = vadd.f32 0.0, %v5141
  %v5143 = vpop.f32.mrb[0].mxu0
  %5144 = vmatprep.mubr.f32.mxu0 0.0
  %5145 = vmatmul.mubr.f32.gmra.mrb[0].mxu0 %v1384
  %v5146 = vpop.f32.mrb[0].mxu0
  %v5147 = vadd.f32 0.0, %v5146
  %v5148 = vpop.f32.mrb[0].mxu0
  %5149 = vmatprep.mubr.f32.mxu0 0.0
  %5150 = vmatmul.mubr.f32.gmra.mrb[0].mxu0 %v1387
  %v5151 = vpop.f32.mrb[0].mxu0
  %v5152 = vadd.f32 0.0, %v5151
  %v5153 = vpop.f32.mrb[0].mxu0
  %5154 = vmatprep.mubr.f32.mxu0 0.0
  %5155 = vmatmul.mubr.f32.gmra.mrb[0].mxu0 %v1390
  %v5156 = vpop.f32.mrb[0].mxu0
  %v5157 = vadd.f32 0.0, %v5156
  %v5158 = vpop.f32.mrb[0].mxu0
  %5159 = vmatprep.mubr.f32.mxu0 0.0
  %5160 = vmatmul.mubr.f32.gmra.mrb[0].mxu0 %v1393
  %v5161 = vpop.f32.mrb[0].mxu0
  %v5162 = vadd.f32 0.0, %v5161
  %v5163 = vpop.f32.mrb[0].mxu0
  %5164 = vmatprep.mubr.f32.mxu0 0.0
  %5165 = vmatmul.mubr.f32.gmra.mrb[0].mxu0 %v1396
  %v5166 = vpop.f32.mrb[0].mxu0
  %v5167 = vadd.f32 0.0, %v5166
  %v5168 = vpop.f32.mrb[0].mxu0
  %5169 = vmatprep.mubr.f32.mxu0 0.0
  %5170 = vmatmul.mubr.f32.gmra.mrb[0].mxu0 %v1399
  %v5171 = vpop.f32.mrb[0].mxu0
  %v5172 = vadd.f32 0.0, %v5171
  %v5173 = vpop.f32.mrb[0].mxu0
  %5174 = vmatprep.mubr.f32.mxu0 0.0
  %5175 = vmatmul.mubr.f32.gmra.mrb[0].mxu0 %v1402
  %v5176 = vpop.f32.mrb[0].mxu0
  %v5177 = vadd.f32 0.0, %v5176
  %v5178 = vpop.f32.mrb[0].mxu0
  %5179 = vmatprep.mubr.f32.mxu0 0.0
  %5180 = vmatmul.mubr.f32.gmra.mrb[0].mxu0 %v1405
  %v5181 = vpop.f32.mrb[0].mxu0
  %v5182 = vadd.f32 0.0, %v5181
  %v5183 = vpop.f32.mrb[0].mxu0
  %5184 = vmatprep.mubr.f32.mxu0 0.0
  %5185 = vmatmul.mubr.f32.gmra.mrb[0].mxu0 %v3577
  %v5186 = vpop.f32.mrb[0].mxu0
  %v5187 = vadd.f32 0.0, %v5186
  %v5188 = vpop.f32.mrb[0].mxu0
  %5189 = vmatprep.mubr.f32.mxu0 0.0
  %5190 = vmatmul.mubr.f32.gmra.mrb[0].mxu0 %v3580
  %v5191 = vpop.f32.mrb[0].mxu0
  %v5192 = vadd.f32 0.0, %v5191
  %v5193 = vpop.f32.mrb[0].mxu0
  %5194 = vmatprep.mubr.f32.mxu0 0.0
  %5195 = vmatmul.mubr.f32.gmra.mrb[0].mxu0 %v4969
  %v5196 = vpop.f32.mrb[0].mxu0
  %v5197 = vadd.f32 0.0, %v5196
  %v5198 = vpop.f32.mrb[0].mxu0
  %5199 = vmatprep.mubr.f32.mxu0 0.0
  %5200 = vmatmul.mubr.f32.gmra.mrb[0].mxu0 %v4972
  %v5201 = vpop.f32.mrb[0].mxu0
  %v5202 = vadd.f32 0.0, %v5201
  %v5203 = vpop.f32.mrb[0].mxu0
  %5204 = vmatprep.mubr.f32.mxu0 0.0
  %5205 = vmatmul.mubr.f32.gmra.mrb[0].mxu0 %v1420
  %v5206 = vpop.f32.mrb[0].mxu0
  %v5207 = vadd.f32 0.0, %v5206
  %v5208 = vpop.f32.mrb[0].mxu0
  %5209 = vmatprep.mubr.f32.mxu0 0.0
  %5210 = vmatmul.mubr.f32.gmra.mrb[0].mxu0 %v1423
  %v5211 = vpop.f32.mrb[0].mxu0
  %v5212 = vadd.f32 0.0, %v5211
  %v5213 = vpop.f32.mrb[0].mxu0
  %5214 = vmatprep.mubr.f32.mxu0 0.0
  %5215 = vmatmul.mubr.f32.gmra.mrb[0].mxu0 %v1426
  %v5216 = vpop.f32.mrb[0].mxu0
  %v5217 = vadd.f32 0.0, %v5216
  %v5218 = vpop.f32.mrb[0].mxu0
  %5219 = vmatprep.mubr.f32.mxu0 0.0
  %5220 = vmatmul.mubr.f32.gmra.mrb[0].mxu0 %v1429
  %v5221 = vpop.f32.mrb[0].mxu0
  %v5222 = vadd.f32 0.0, %v5221
  %v5223 = vpop.f32.mrb[0].mxu0
  %5224 = vmatprep.mubr.f32.mxu0 0.0
  %5225 = vmatmul.mubr.f32.gmra.mrb[0].mxu0 %v1432
  %v5226 = vpop.f32.mrb[0].mxu0
  %v5227 = vadd.f32 0.0, %v5226
  %v5228 = vpop.f32.mrb[0].mxu0
  %5229 = vmatprep.mubr.f32.mxu0 0.0
  %5230 = vmatmul.mubr.f32.gmra.mrb[0].mxu0 %v1435
  %v5231 = vpop.f32.mrb[0].mxu0
  %v5232 = vadd.f32 0.0, %v5231
  %v5233 = vpop.f32.mrb[0].mxu0
  %5234 = vmatprep.mubr.f32.mxu0 0.0
  %5235 = vmatmul.mubr.f32.gmra.mrb[0].mxu0 %v1438
  %v5236 = vpop.f32.mrb[0].mxu0
  %v5237 = vadd.f32 0.0, %v5236
  %v5238 = vpop.f32.mrb[0].mxu0
  %5239 = vmatprep.mubr.f32.mxu0 0.0
  %5240 = vmatmul.mubr.f32.gmra.mrb[0].mxu0 %v1441
  %v5241 = vpop.f32.mrb[0].mxu0
  %v5242 = vadd.f32 0.0, %v5241
  %v5243 = vpop.f32.mrb[0].mxu0
  %5244 = vmatprep.mubr.f32.mxu0 0.0
  %5245 = vmatmul.mubr.f32.gmra.mrb[0].mxu0 %v1444
  %v5246 = vpop.f32.mrb[0].mxu0
  %v5247 = vadd.f32 0.0, %v5246
  %v5248 = vpop.f32.mrb[0].mxu0
  %5249 = vmatprep.mubr.f32.mxu0 0.0
  %5250 = vmatmul.mubr.f32.gmra.mrb[0].mxu0 %v1447
  %v5251 = vpop.f32.mrb[0].mxu0
  %v5252 = vadd.f32 0.0, %v5251
  %v5253 = vpop.f32.mrb[0].mxu0
  %5254 = vmatprep.mubr.f32.mxu0 0.0
  %5255 = vmatmul.mubr.f32.gmra.mrb[0].mxu0 %v1450
  %v5256 = vpop.f32.mrb[0].mxu0
  %v5257 = vadd.f32 0.0, %v5256
  %v5258 = vpop.f32.mrb[0].mxu0
  %5259 = vmatprep.mubr.f32.mxu0 0.0
  %5260 = vmatmul.mubr.f32.gmra.mrb[0].mxu0 %v1453
  %v5261 = vpop.f32.mrb[0].mxu0
  %v5262 = vadd.f32 0.0, %v5261
  %v5263 = vpop.f32.mrb[0].mxu0
  %5264 = vmatprep.mubr.f32.mxu0 0.0
  %5265 = vmatmul.mubr.f32.gmra.mrb[0].mxu0 %v1456
  %v5266 = vpop.f32.mrb[0].mxu0
  %v5267 = vadd.f32 0.0, %v5266
  %v5268 = vpop.f32.mrb[0].mxu0
  %5269 = vmatprep.mubr.f32.mxu0 0.0
  %5270 = vmatmul.mubr.f32.gmra.mrb[0].mxu0 %v1459
  %v5271 = vpop.f32.mrb[0].mxu0
  %v5272 = vadd.f32 0.0, %v5271
  %v5273 = vpop.f32.mrb[0].mxu0
  %5274 = vmatprep.mubr.f32.mxu0 0.0
  %5275 = vmatmul.mubr.f32.gmra.mrb[0].mxu0 %v1462
  %v5276 = vpop.f32.mrb[0].mxu0
  %v5277 = vadd.f32 0.0, %v5276
  %v5278 = vpop.f32.mrb[0].mxu0
  %5279 = vmatprep.mubr.f32.mxu0 0.0
  %5280 = vmatmul.mubr.f32.gmra.mrb[0].mxu0 %v1465
  %v5281 = vpop.f32.mrb[0].mxu0
  %v5282 = vadd.f32 0.0, %v5281
  %v5283 = vpop.f32.mrb[0].mxu0
  %5284 = vmatprep.mubr.f32.mxu0 0.0
  %5285 = vmatmul.mubr.f32.gmra.mrb[0].mxu0 %v1468
  %v5286 = vpop.f32.mrb[0].mxu0
  %v5287 = vadd.f32 0.0, %v5286
  %v5288 = vpop.f32.mrb[0].mxu0
  %5289 = vmatprep.mubr.f32.mxu0 0.0
  %5290 = vmatmul.mubr.f32.gmra.mrb[0].mxu0 %v1471
  %v5291 = vpop.f32.mrb[0].mxu0
  %v5292 = vadd.f32 0.0, %v5291
  %v5293 = vpop.f32.mrb[0].mxu0
  %5294 = vmatprep.mubr.f32.mxu0 0.0
  %5295 = vmatmul.mubr.f32.gmra.mrb[0].mxu0 %v1474
  %v5296 = vpop.f32.mrb[0].mxu0
  %v5297 = vadd.f32 0.0, %v5296
  %v5298 = vpop.f32.mrb[0].mxu0
  %5299 = vmatprep.mubr.f32.mxu0 0.0
  %5300 = vmatmul.mubr.f32.gmra.mrb[0].mxu0 %v1477
  %v5301 = vpop.f32.mrb[0].mxu0
  %v5302 = vadd.f32 0.0, %v5301
  %v5303 = vpop.f32.mrb[0].mxu0
  %5304 = vmatprep.mubr.f32.mxu0 0.0
  %5305 = vmatmul.mubr.f32.gmra.mrb[0].mxu0 %v1480
  %v5306 = vpop.f32.mrb[0].mxu0
  %v5307 = vadd.f32 0.0, %v5306
  %v5308 = vpop.f32.mrb[0].mxu0
  %5309 = vmatprep.mubr.f32.mxu0 0.0
  %5310 = vmatmul.mubr.f32.gmra.mrb[0].mxu0 %v1483
  %v5311 = vpop.f32.mrb[0].mxu0
  %v5312 = vadd.f32 0.0, %v5311
  %v5313 = vpop.f32.mrb[0].mxu0
  %5314 = vmatprep.mubr.f32.mxu0 0.0
  %5315 = vmatmul.mubr.f32.gmra.mrb[0].mxu0 %v1486
  %v5316 = vpop.f32.mrb[0].mxu0
  %v5317 = vadd.f32 0.0, %v5316
  %v5318 = vpop.f32.mrb[0].mxu0
  %5319 = vmatprep.mubr.f32.mxu0 0.0
  %5320 = vmatmul.mubr.f32.gmra.mrb[0].mxu0 %v1489
  %v5321 = vpop.f32.mrb[0].mxu0
  %v5322 = vadd.f32 0.0, %v5321
  %v5323 = vpop.f32.mrb[0].mxu0
  %5324 = vmatprep.mubr.f32.mxu0 0.0
  %5325 = vmatmul.mubr.f32.gmra.mrb[0].mxu0 %v1492
  %v5326 = vpop.f32.mrb[0].mxu0
  %v5327 = vadd.f32 0.0, %v5326
  %v5328 = vpop.f32.mrb[0].mxu0
  %5329 = vmatprep.mubr.f32.mxu0 0.0
  %5330 = vmatmul.mubr.f32.gmra.mrb[0].mxu0 %v1495
  %v5331 = vpop.f32.mrb[0].mxu0
  %v5332 = vadd.f32 0.0, %v5331
  %v5333 = vpop.f32.mrb[0].mxu0
  %5334 = vmatprep.mubr.f32.mxu0 0.0
  %5335 = vmatmul.mubr.f32.gmra.mrb[0].mxu0 %v1498
  %v5336 = vpop.f32.mrb[0].mxu0
  %v5337 = vadd.f32 0.0, %v5336
  %v5338 = vpop.f32.mrb[0].mxu0
  %5339 = vmatprep.mubr.f32.mxu0 0.0
  %5340 = vmatmul.mubr.f32.gmra.mrb[0].mxu0 %v1501
  %v5341 = vpop.f32.mrb[0].mxu0
  %v5342 = vadd.f32 0.0, %v5341
  %v5343 = vpop.f32.mrb[0].mxu0
  %5344 = vmatprep.mubr.f32.mxu0 0.0
  %5345 = vmatmul.mubr.f32.gmra.mrb[0].mxu0 %v3583
  %v5346 = vpop.f32.mrb[0].mxu0
  %v5347 = vadd.f32 0.0, %v5346
  %v5348 = vpop.f32.mrb[0].mxu0
  %5349 = vmatprep.mubr.f32.mxu0 0.0
  %5350 = vmatmul.mubr.f32.gmra.mrb[0].mxu0 %v3586
  %v5351 = vpop.f32.mrb[0].mxu0
  %v5352 = vadd.f32 0.0, %v5351
  %v5353 = vpop.f32.mrb[0].mxu0
  %5354 = vmatprep.mubr.f32.mxu0 0.0
  %5355 = vmatmul.mubr.f32.gmra.mrb[0].mxu0 %v4975
  %v5356 = vpop.f32.mrb[0].mxu0
  %v5357 = vadd.f32 0.0, %v5356
  %v5358 = vpop.f32.mrb[0].mxu0
  %5359 = vmatprep.mubr.f32.mxu0 0.0
  %5360 = vmatmul.mubr.f32.gmra.mrb[0].mxu0 %v4978
  %v5361 = vpop.f32.mrb[0].mxu0
  %v5362 = vadd.f32 0.0, %v5361
  %v5363 = vpop.f32.mrb[0].mxu0
  %5364 = vdwg.mxu0
  %v5365 = vadd.f32 %v4901, %v5047
  %v5366 = vadd.f32 %v4902, %v5052
  %v5367 = vadd.f32 %v4903, %v5057
  %v5368 = vadd.f32 %v4904, %v5062
  %v5369 = vadd.f32 %v4905, %v5067
  %v5370 = vadd.f32 %v4906, %v5072
  %v5371 = vadd.f32 %v4907, %v5077
  %v5372 = vadd.f32 %v4908, %v5082
  %v5373 = vadd.f32 %v4909, %v5087
  %v5374 = vadd.f32 %v4910, %v5092
  %v5375 = vadd.f32 %v4911, %v5097
  %v5376 = vadd.f32 %v4912, %v5102
  %v5377 = vadd.f32 %v4913, %v5107
  %v5378 = vadd.f32 %v4914, %v5112
  %v5379 = vadd.f32 %v4915, %v5117
  %v5380 = vadd.f32 %v4916, %v5122
  %v5381 = vadd.f32 %v4917, %v5127
  %v5382 = vadd.f32 %v4918, %v5132
  %v5383 = vadd.f32 %v4919, %v5137
  %v5384 = vadd.f32 %v4920, %v5142
  %v5385 = vadd.f32 %v4921, %v5147
  %v5386 = vadd.f32 %v4922, %v5152
  %v5387 = vadd.f32 %v4923, %v5157
  %v5388 = vadd.f32 %v4924, %v5162
  %v5389 = vadd.f32 %v4925, %v5167
  %v5390 = vadd.f32 %v4926, %v5172
  %v5391 = vadd.f32 %v4927, %v5177
  %v5392 = vadd.f32 %v4928, %v5182
  %v5393 = vadd.f32 %v4929, %v5187
  %v5394 = vadd.f32 %v4930, %v5192
  %v5395 = vadd.f32 %v4931, %v5197
  %v5396 = vadd.f32 %v4932, %v5202
  %v5397 = vadd.f32 %v4933, %v5207
  %v5398 = vadd.f32 %v4934, %v5212
  %v5399 = vadd.f32 %v4935, %v5217
  %v5400 = vadd.f32 %v4936, %v5222
  %v5401 = vadd.f32 %v4937, %v5227
  %v5402 = vadd.f32 %v4938, %v5232
  %v5403 = vadd.f32 %v4939, %v5237
  %v5404 = vadd.f32 %v4940, %v5242
  %v5405 = vadd.f32 %v4941, %v5247
  %v5406 = vadd.f32 %v4942, %v5252
  %v5407 = vadd.f32 %v4943, %v5257
  %v5408 = vadd.f32 %v4944, %v5262
  %v5409 = vadd.f32 %v4945, %v5267
  %v5410 = vadd.f32 %v4946, %v5272
  %v5411 = vadd.f32 %v4947, %v5277
  %v5412 = vadd.f32 %v4948, %v5282
  %v5413 = vadd.f32 %v4949, %v5287
  %v5414 = vadd.f32 %v4950, %v5292
  %v5415 = vadd.f32 %v4951, %v5297
  %v5416 = vadd.f32 %v4952, %v5302
  %v5417 = vadd.f32 %v4953, %v5307
  %v5418 = vadd.f32 %v4954, %v5312
  %v5419 = vadd.f32 %v4955, %v5317
  %v5420 = vadd.f32 %v4956, %v5322
  %v5421 = vadd.f32 %v4957, %v5327
  %v5422 = vadd.f32 %v4958, %v5332
  %v5423 = vadd.f32 %v4959, %v5337
  %v5424 = vadd.f32 %v4960, %v5342
  %v5425 = vadd.f32 %v4961, %v5347
  %v5426 = vadd.f32 %v4962, %v5352
  %v5427 = vadd.f32 %v4963, %v5357
  %v5428 = vadd.f32 %v4964, %v5362
  %s5429 = scalar_lea.vmem %s3, 128
  %v5430 = vld [vmem:[%s5429] sm:$0xff]
  %v5431 = vld [vmem:[%s5429 + $0x8] sm:$0xff]
  %v5433 = vsel %vm230, %v1268, 0
  %v5436 = vsel %vm230, %v1269, 0
  %v5439 = vsel %vm230, %v1304, 0
  %v5442 = vsel %vm230, %v1305, 0
  %5444 = vmatprep.subr.mxu0 0.0
  %5445 = vmatpush1.msra.mxu0 %v5430
  %5446 = vmatprep.subr.mxu0 0.0
  %5447 = vmatpush1.msra.mxu0 %v5431
  %5448 = vmatprep.subr.mxu0 0.0
  %5449 = vmatpush1.msra.mxu0 0.0
  %5450 = vmatprep.subr.mxu0 0.0
  %5451 = vmatpush1.msra.mxu0 0.0
  %5452 = vmatprep.subr.mxu0 0.0
  %5453 = vmatpush1.msra.mxu0 0.0
  %5454 = vmatprep.subr.mxu0 0.0
  %5455 = vmatpush1.msra.mxu0 0.0
  %5456 = vmatprep.subr.mxu0 0.0
  %5457 = vmatpush1.msra.mxu0 0.0
  %5458 = vmatprep.subr.mxu0 0.0
  %5459 = vmatpush1.msra.mxu0 0.0
  %5460 = vmatprep.subr.mxu0 0.0
  %5461 = vmatpush1.msra.mxu0 0.0
  %5462 = vmatprep.subr.mxu0 0.0
  %5463 = vmatpush1.msra.mxu0 0.0
  %5464 = vmatprep.subr.mxu0 0.0
  %5465 = vmatpush1.msra.mxu0 0.0
  %5466 = vmatprep.subr.mxu0 0.0
  %5467 = vmatpush1.msra.mxu0 0.0
  %5468 = vmatprep.subr.mxu0 0.0
  %5469 = vmatpush1.msra.mxu0 0.0
  %5470 = vmatprep.subr.mxu0 0.0
  %5471 = vmatpush1.msra.mxu0 0.0
  %5472 = vmatprep.subr.mxu0 0.0
  %5473 = vmatpush1.msra.mxu0 0.0
  %5474 = vmatprep.subr.mxu0 0.0
  %5475 = vmatpush1.msra.mxu0 0.0
  %5476 = vmatprep.subr.mxu0 0.0
  %5477 = vmatpush1.msra.mxu0 0.0
  %5478 = vmatprep.subr.mxu0 0.0
  %5479 = vmatpush1.msra.mxu0 0.0
  %5480 = vmatprep.subr.mxu0 0.0
  %5481 = vmatpush1.msra.mxu0 0.0
  %5482 = vmatprep.subr.mxu0 0.0
  %5483 = vmatpush1.msra.mxu0 0.0
  %5484 = vmatprep.subr.mxu0 0.0
  %5485 = vmatpush1.msra.mxu0 0.0
  %5486 = vmatprep.subr.mxu0 0.0
  %5487 = vmatpush1.msra.mxu0 0.0
  %5488 = vmatprep.subr.mxu0 0.0
  %5489 = vmatpush1.msra.mxu0 0.0
  %5490 = vmatprep.subr.mxu0 0.0
  %5491 = vmatpush1.msra.mxu0 0.0
  %5492 = vmatprep.subr.mxu0 0.0
  %5493 = vmatpush1.msra.mxu0 0.0
  %5494 = vmatprep.subr.mxu0 0.0
  %5495 = vmatpush1.msra.mxu0 0.0
  %5496 = vmatprep.subr.mxu0 0.0
  %5497 = vmatpush1.msra.mxu0 0.0
  %5498 = vmatprep.subr.mxu0 0.0
  %5499 = vmatpush1.msra.mxu0 0.0
  %5500 = vmatprep.subr.mxu0 0.0
  %5501 = vmatpush1.msra.mxu0 0.0
  %5502 = vmatprep.subr.mxu0 0.0
  %5503 = vmatpush1.msra.mxu0 0.0
  %5504 = vmatprep.subr.mxu0 0.0
  %5505 = vmatpush1.msra.mxu0 0.0
  %5506 = vmatprep.subr.mxu0 0.0
  %5507 = vmatpush1.msra.mxu0 0.0
  %5508 = vmatprep.mubr.f32.mxu0 0.0
  %5509 = vmatmul.mubr.f32.gmra.mrb[0].mxu0 %v2481
  %v5510 = vpop.f32.mrb[0].mxu0
  %v5511 = vadd.f32 0.0, %v5510
  %v5512 = vpop.f32.mrb[0].mxu0
  %5513 = vmatprep.mubr.f32.mxu0 0.0
  %5514 = vmatmul.mubr.f32.gmra.mrb[0].mxu0 %v2484
  %v5515 = vpop.f32.mrb[0].mxu0
  %v5516 = vadd.f32 0.0, %v5515
  %v5517 = vpop.f32.mrb[0].mxu0
  %5518 = vmatprep.mubr.f32.mxu0 0.0
  %5519 = vmatmul.mubr.f32.gmra.mrb[0].mxu0 %v2487
  %v5520 = vpop.f32.mrb[0].mxu0
  %v5521 = vadd.f32 0.0, %v5520
  %v5522 = vpop.f32.mrb[0].mxu0
  %5523 = vmatprep.mubr.f32.mxu0 0.0
  %5524 = vmatmul.mubr.f32.gmra.mrb[0].mxu0 %v2490
  %v5525 = vpop.f32.mrb[0].mxu0
  %v5526 = vadd.f32 0.0, %v5525
  %v5527 = vpop.f32.mrb[0].mxu0
  %5528 = vmatprep.mubr.f32.mxu0 0.0
  %5529 = vmatmul.mubr.f32.gmra.mrb[0].mxu0 %v2493
  %v5530 = vpop.f32.mrb[0].mxu0
  %v5531 = vadd.f32 0.0, %v5530
  %v5532 = vpop.f32.mrb[0].mxu0
  %5533 = vmatprep.mubr.f32.mxu0 0.0
  %5534 = vmatmul.mubr.f32.gmra.mrb[0].mxu0 %v2496
  %v5535 = vpop.f32.mrb[0].mxu0
  %v5536 = vadd.f32 0.0, %v5535
  %v5537 = vpop.f32.mrb[0].mxu0
  %5538 = vmatprep.mubr.f32.mxu0 0.0
  %5539 = vmatmul.mubr.f32.gmra.mrb[0].mxu0 %v2499
  %v5540 = vpop.f32.mrb[0].mxu0
  %v5541 = vadd.f32 0.0, %v5540
  %v5542 = vpop.f32.mrb[0].mxu0
  %5543 = vmatprep.mubr.f32.mxu0 0.0
  %5544 = vmatmul.mubr.f32.gmra.mrb[0].mxu0 %v2502
  %v5545 = vpop.f32.mrb[0].mxu0
  %v5546 = vadd.f32 0.0, %v5545
  %v5547 = vpop.f32.mrb[0].mxu0
  %5548 = vmatprep.mubr.f32.mxu0 0.0
  %5549 = vmatmul.mubr.f32.gmra.mrb[0].mxu0 %v2505
  %v5550 = vpop.f32.mrb[0].mxu0
  %v5551 = vadd.f32 0.0, %v5550
  %v5552 = vpop.f32.mrb[0].mxu0
  %5553 = vmatprep.mubr.f32.mxu0 0.0
  %5554 = vmatmul.mubr.f32.gmra.mrb[0].mxu0 %v2508
  %v5555 = vpop.f32.mrb[0].mxu0
  %v5556 = vadd.f32 0.0, %v5555
  %v5557 = vpop.f32.mrb[0].mxu0
  %5558 = vmatprep.mubr.f32.mxu0 0.0
  %5559 = vmatmul.mubr.f32.gmra.mrb[0].mxu0 %v2511
  %v5560 = vpop.f32.mrb[0].mxu0
  %v5561 = vadd.f32 0.0, %v5560
  %v5562 = vpop.f32.mrb[0].mxu0
  %5563 = vmatprep.mubr.f32.mxu0 0.0
  %5564 = vmatmul.mubr.f32.gmra.mrb[0].mxu0 %v2514
  %v5565 = vpop.f32.mrb[0].mxu0
  %v5566 = vadd.f32 0.0, %v5565
  %v5567 = vpop.f32.mrb[0].mxu0
  %5568 = vmatprep.mubr.f32.mxu0 0.0
  %5569 = vmatmul.mubr.f32.gmra.mrb[0].mxu0 %v2517
  %v5570 = vpop.f32.mrb[0].mxu0
  %v5571 = vadd.f32 0.0, %v5570
  %v5572 = vpop.f32.mrb[0].mxu0
  %5573 = vmatprep.mubr.f32.mxu0 0.0
  %5574 = vmatmul.mubr.f32.gmra.mrb[0].mxu0 %v2520
  %v5575 = vpop.f32.mrb[0].mxu0
  %v5576 = vadd.f32 0.0, %v5575
  %v5577 = vpop.f32.mrb[0].mxu0
  %5578 = vmatprep.mubr.f32.mxu0 0.0
  %5579 = vmatmul.mubr.f32.gmra.mrb[0].mxu0 %v2523
  %v5580 = vpop.f32.mrb[0].mxu0
  %v5581 = vadd.f32 0.0, %v5580
  %v5582 = vpop.f32.mrb[0].mxu0
  %5583 = vmatprep.mubr.f32.mxu0 0.0
  %5584 = vmatmul.mubr.f32.gmra.mrb[0].mxu0 %v2526
  %v5585 = vpop.f32.mrb[0].mxu0
  %v5586 = vadd.f32 0.0, %v5585
  %v5587 = vpop.f32.mrb[0].mxu0
  %5588 = vmatprep.mubr.f32.mxu0 0.0
  %5589 = vmatmul.mubr.f32.gmra.mrb[0].mxu0 %v2529
  %v5590 = vpop.f32.mrb[0].mxu0
  %v5591 = vadd.f32 0.0, %v5590
  %v5592 = vpop.f32.mrb[0].mxu0
  %5593 = vmatprep.mubr.f32.mxu0 0.0
  %5594 = vmatmul.mubr.f32.gmra.mrb[0].mxu0 %v2532
  %v5595 = vpop.f32.mrb[0].mxu0
  %v5596 = vadd.f32 0.0, %v5595
  %v5597 = vpop.f32.mrb[0].mxu0
  %5598 = vmatprep.mubr.f32.mxu0 0.0
  %5599 = vmatmul.mubr.f32.gmra.mrb[0].mxu0 %v2535
  %v5600 = vpop.f32.mrb[0].mxu0
  %v5601 = vadd.f32 0.0, %v5600
  %v5602 = vpop.f32.mrb[0].mxu0
  %5603 = vmatprep.mubr.f32.mxu0 0.0
  %5604 = vmatmul.mubr.f32.gmra.mrb[0].mxu0 %v2538
  %v5605 = vpop.f32.mrb[0].mxu0
  %v5606 = vadd.f32 0.0, %v5605
  %v5607 = vpop.f32.mrb[0].mxu0
  %5608 = vmatprep.mubr.f32.mxu0 0.0
  %5609 = vmatmul.mubr.f32.gmra.mrb[0].mxu0 %v2541
  %v5610 = vpop.f32.mrb[0].mxu0
  %v5611 = vadd.f32 0.0, %v5610
  %v5612 = vpop.f32.mrb[0].mxu0
  %5613 = vmatprep.mubr.f32.mxu0 0.0
  %5614 = vmatmul.mubr.f32.gmra.mrb[0].mxu0 %v2544
  %v5615 = vpop.f32.mrb[0].mxu0
  %v5616 = vadd.f32 0.0, %v5615
  %v5617 = vpop.f32.mrb[0].mxu0
  %5618 = vmatprep.mubr.f32.mxu0 0.0
  %5619 = vmatmul.mubr.f32.gmra.mrb[0].mxu0 %v2547
  %v5620 = vpop.f32.mrb[0].mxu0
  %v5621 = vadd.f32 0.0, %v5620
  %v5622 = vpop.f32.mrb[0].mxu0
  %5623 = vmatprep.mubr.f32.mxu0 0.0
  %5624 = vmatmul.mubr.f32.gmra.mrb[0].mxu0 %v2550
  %v5625 = vpop.f32.mrb[0].mxu0
  %v5626 = vadd.f32 0.0, %v5625
  %v5627 = vpop.f32.mrb[0].mxu0
  %5628 = vmatprep.mubr.f32.mxu0 0.0
  %5629 = vmatmul.mubr.f32.gmra.mrb[0].mxu0 %v2553
  %v5630 = vpop.f32.mrb[0].mxu0
  %v5631 = vadd.f32 0.0, %v5630
  %v5632 = vpop.f32.mrb[0].mxu0
  %5633 = vmatprep.mubr.f32.mxu0 0.0
  %5634 = vmatmul.mubr.f32.gmra.mrb[0].mxu0 %v2556
  %v5635 = vpop.f32.mrb[0].mxu0
  %v5636 = vadd.f32 0.0, %v5635
  %v5637 = vpop.f32.mrb[0].mxu0
  %5638 = vmatprep.mubr.f32.mxu0 0.0
  %5639 = vmatmul.mubr.f32.gmra.mrb[0].mxu0 %v2559
  %v5640 = vpop.f32.mrb[0].mxu0
  %v5641 = vadd.f32 0.0, %v5640
  %v5642 = vpop.f32.mrb[0].mxu0
  %5643 = vmatprep.mubr.f32.mxu0 0.0
  %5644 = vmatmul.mubr.f32.gmra.mrb[0].mxu0 %v2562
  %v5645 = vpop.f32.mrb[0].mxu0
  %v5646 = vadd.f32 0.0, %v5645
  %v5647 = vpop.f32.mrb[0].mxu0
  %5648 = vmatprep.mubr.f32.mxu0 0.0
  %5649 = vmatmul.mubr.f32.gmra.mrb[0].mxu0 %v4041
  %v5650 = vpop.f32.mrb[0].mxu0
  %v5651 = vadd.f32 0.0, %v5650
  %v5652 = vpop.f32.mrb[0].mxu0
  %5653 = vmatprep.mubr.f32.mxu0 0.0
  %5654 = vmatmul.mubr.f32.gmra.mrb[0].mxu0 %v4044
  %v5655 = vpop.f32.mrb[0].mxu0
  %v5656 = vadd.f32 0.0, %v5655
  %v5657 = vpop.f32.mrb[0].mxu0
  %5658 = vmatprep.mubr.f32.mxu0 0.0
  %5659 = vmatmul.mubr.f32.gmra.mrb[0].mxu0 %v5433
  %v5660 = vpop.f32.mrb[0].mxu0
  %v5661 = vadd.f32 0.0, %v5660
  %v5662 = vpop.f32.mrb[0].mxu0
  %5663 = vmatprep.mubr.f32.mxu0 0.0
  %5664 = vmatmul.mubr.f32.gmra.mrb[0].mxu0 %v5436
  %v5665 = vpop.f32.mrb[0].mxu0
  %v5666 = vadd.f32 0.0, %v5665
  %v5667 = vpop.f32.mrb[0].mxu0
  %5668 = vmatprep.mubr.f32.mxu0 0.0
  %5669 = vmatmul.mubr.f32.gmra.mrb[0].mxu0 %v2577
  %v5670 = vpop.f32.mrb[0].mxu0
  %v5671 = vadd.f32 0.0, %v5670
  %v5672 = vpop.f32.mrb[0].mxu0
  %5673 = vmatprep.mubr.f32.mxu0 0.0
  %5674 = vmatmul.mubr.f32.gmra.mrb[0].mxu0 %v2580
  %v5675 = vpop.f32.mrb[0].mxu0
  %v5676 = vadd.f32 0.0, %v5675
  %v5677 = vpop.f32.mrb[0].mxu0
  %5678 = vmatprep.mubr.f32.mxu0 0.0
  %5679 = vmatmul.mubr.f32.gmra.mrb[0].mxu0 %v2583
  %v5680 = vpop.f32.mrb[0].mxu0
  %v5681 = vadd.f32 0.0, %v5680
  %v5682 = vpop.f32.mrb[0].mxu0
  %5683 = vmatprep.mubr.f32.mxu0 0.0
  %5684 = vmatmul.mubr.f32.gmra.mrb[0].mxu0 %v2586
  %v5685 = vpop.f32.mrb[0].mxu0
  %v5686 = vadd.f32 0.0, %v5685
  %v5687 = vpop.f32.mrb[0].mxu0
  %5688 = vmatprep.mubr.f32.mxu0 0.0
  %5689 = vmatmul.mubr.f32.gmra.mrb[0].mxu0 %v2589
  %v5690 = vpop.f32.mrb[0].mxu0
  %v5691 = vadd.f32 0.0, %v5690
  %v5692 = vpop.f32.mrb[0].mxu0
  %5693 = vmatprep.mubr.f32.mxu0 0.0
  %5694 = vmatmul.mubr.f32.gmra.mrb[0].mxu0 %v2592
  %v5695 = vpop.f32.mrb[0].mxu0
  %v5696 = vadd.f32 0.0, %v5695
  %v5697 = vpop.f32.mrb[0].mxu0
  %5698 = vmatprep.mubr.f32.mxu0 0.0
  %5699 = vmatmul.mubr.f32.gmra.mrb[0].mxu0 %v2595
  %v5700 = vpop.f32.mrb[0].mxu0
  %v5701 = vadd.f32 0.0, %v5700
  %v5702 = vpop.f32.mrb[0].mxu0
  %5703 = vmatprep.mubr.f32.mxu0 0.0
  %5704 = vmatmul.mubr.f32.gmra.mrb[0].mxu0 %v2598
  %v5705 = vpop.f32.mrb[0].mxu0
  %v5706 = vadd.f32 0.0, %v5705
  %v5707 = vpop.f32.mrb[0].mxu0
  %5708 = vmatprep.mubr.f32.mxu0 0.0
  %5709 = vmatmul.mubr.f32.gmra.mrb[0].mxu0 %v2601
  %v5710 = vpop.f32.mrb[0].mxu0
  %v5711 = vadd.f32 0.0, %v5710
  %v5712 = vpop.f32.mrb[0].mxu0
  %5713 = vmatprep.mubr.f32.mxu0 0.0
  %5714 = vmatmul.mubr.f32.gmra.mrb[0].mxu0 %v2604
  %v5715 = vpop.f32.mrb[0].mxu0
  %v5716 = vadd.f32 0.0, %v5715
  %v5717 = vpop.f32.mrb[0].mxu0
  %5718 = vmatprep.mubr.f32.mxu0 0.0
  %5719 = vmatmul.mubr.f32.gmra.mrb[0].mxu0 %v2607
  %v5720 = vpop.f32.mrb[0].mxu0
  %v5721 = vadd.f32 0.0, %v5720
  %v5722 = vpop.f32.mrb[0].mxu0
  %5723 = vmatprep.mubr.f32.mxu0 0.0
  %5724 = vmatmul.mubr.f32.gmra.mrb[0].mxu0 %v2610
  %v5725 = vpop.f32.mrb[0].mxu0
  %v5726 = vadd.f32 0.0, %v5725
  %v5727 = vpop.f32.mrb[0].mxu0
  %5728 = vmatprep.mubr.f32.mxu0 0.0
  %5729 = vmatmul.mubr.f32.gmra.mrb[0].mxu0 %v2613
  %v5730 = vpop.f32.mrb[0].mxu0
  %v5731 = vadd.f32 0.0, %v5730
  %v5732 = vpop.f32.mrb[0].mxu0
  %5733 = vmatprep.mubr.f32.mxu0 0.0
  %5734 = vmatmul.mubr.f32.gmra.mrb[0].mxu0 %v2616
  %v5735 = vpop.f32.mrb[0].mxu0
  %v5736 = vadd.f32 0.0, %v5735
  %v5737 = vpop.f32.mrb[0].mxu0
  %5738 = vmatprep.mubr.f32.mxu0 0.0
  %5739 = vmatmul.mubr.f32.gmra.mrb[0].mxu0 %v2619
  %v5740 = vpop.f32.mrb[0].mxu0
  %v5741 = vadd.f32 0.0, %v5740
  %v5742 = vpop.f32.mrb[0].mxu0
  %5743 = vmatprep.mubr.f32.mxu0 0.0
  %5744 = vmatmul.mubr.f32.gmra.mrb[0].mxu0 %v2622
  %v5745 = vpop.f32.mrb[0].mxu0
  %v5746 = vadd.f32 0.0, %v5745
  %v5747 = vpop.f32.mrb[0].mxu0
  %5748 = vmatprep.mubr.f32.mxu0 0.0
  %5749 = vmatmul.mubr.f32.gmra.mrb[0].mxu0 %v2625
  %v5750 = vpop.f32.mrb[0].mxu0
  %v5751 = vadd.f32 0.0, %v5750
  %v5752 = vpop.f32.mrb[0].mxu0
  %5753 = vmatprep.mubr.f32.mxu0 0.0
  %5754 = vmatmul.mubr.f32.gmra.mrb[0].mxu0 %v2628
  %v5755 = vpop.f32.mrb[0].mxu0
  %v5756 = vadd.f32 0.0, %v5755
  %v5757 = vpop.f32.mrb[0].mxu0
  %5758 = vmatprep.mubr.f32.mxu0 0.0
  %5759 = vmatmul.mubr.f32.gmra.mrb[0].mxu0 %v2631
  %v5760 = vpop.f32.mrb[0].mxu0
  %v5761 = vadd.f32 0.0, %v5760
  %v5762 = vpop.f32.mrb[0].mxu0
  %5763 = vmatprep.mubr.f32.mxu0 0.0
  %5764 = vmatmul.mubr.f32.gmra.mrb[0].mxu0 %v2634
  %v5765 = vpop.f32.mrb[0].mxu0
  %v5766 = vadd.f32 0.0, %v5765
  %v5767 = vpop.f32.mrb[0].mxu0
  %5768 = vmatprep.mubr.f32.mxu0 0.0
  %5769 = vmatmul.mubr.f32.gmra.mrb[0].mxu0 %v2637
  %v5770 = vpop.f32.mrb[0].mxu0
  %v5771 = vadd.f32 0.0, %v5770
  %v5772 = vpop.f32.mrb[0].mxu0
  %5773 = vmatprep.mubr.f32.mxu0 0.0
  %5774 = vmatmul.mubr.f32.gmra.mrb[0].mxu0 %v2640
  %v5775 = vpop.f32.mrb[0].mxu0
  %v5776 = vadd.f32 0.0, %v5775
  %v5777 = vpop.f32.mrb[0].mxu0
  %5778 = vmatprep.mubr.f32.mxu0 0.0
  %5779 = vmatmul.mubr.f32.gmra.mrb[0].mxu0 %v2643
  %v5780 = vpop.f32.mrb[0].mxu0
  %v5781 = vadd.f32 0.0, %v5780
  %v5782 = vpop.f32.mrb[0].mxu0
  %5783 = vmatprep.mubr.f32.mxu0 0.0
  %5784 = vmatmul.mubr.f32.gmra.mrb[0].mxu0 %v2646
  %v5785 = vpop.f32.mrb[0].mxu0
  %v5786 = vadd.f32 0.0, %v5785
  %v5787 = vpop.f32.mrb[0].mxu0
  %5788 = vmatprep.mubr.f32.mxu0 0.0
  %5789 = vmatmul.mubr.f32.gmra.mrb[0].mxu0 %v2649
  %v5790 = vpop.f32.mrb[0].mxu0
  %v5791 = vadd.f32 0.0, %v5790
  %v5792 = vpop.f32.mrb[0].mxu0
  %5793 = vmatprep.mubr.f32.mxu0 0.0
  %5794 = vmatmul.mubr.f32.gmra.mrb[0].mxu0 %v2652
  %v5795 = vpop.f32.mrb[0].mxu0
  %v5796 = vadd.f32 0.0, %v5795
  %v5797 = vpop.f32.mrb[0].mxu0
  %5798 = vmatprep.mubr.f32.mxu0 0.0
  %5799 = vmatmul.mubr.f32.gmra.mrb[0].mxu0 %v2655
  %v5800 = vpop.f32.mrb[0].mxu0
  %v5801 = vadd.f32 0.0, %v5800
  %v5802 = vpop.f32.mrb[0].mxu0
  %5803 = vmatprep.mubr.f32.mxu0 0.0
  %5804 = vmatmul.mubr.f32.gmra.mrb[0].mxu0 %v2658
  %v5805 = vpop.f32.mrb[0].mxu0
  %v5806 = vadd.f32 0.0, %v5805
  %v5807 = vpop.f32.mrb[0].mxu0
  %5808 = vmatprep.mubr.f32.mxu0 0.0
  %5809 = vmatmul.mubr.f32.gmra.mrb[0].mxu0 %v4047
  %v5810 = vpop.f32.mrb[0].mxu0
  %v5811 = vadd.f32 0.0, %v5810
  %v5812 = vpop.f32.mrb[0].mxu0
  %5813 = vmatprep.mubr.f32.mxu0 0.0
  %5814 = vmatmul.mubr.f32.gmra.mrb[0].mxu0 %v4050
  %v5815 = vpop.f32.mrb[0].mxu0
  %v5816 = vadd.f32 0.0, %v5815
  %v5817 = vpop.f32.mrb[0].mxu0
  %5818 = vmatprep.mubr.f32.mxu0 0.0
  %5819 = vmatmul.mubr.f32.gmra.mrb[0].mxu0 %v5439
  %v5820 = vpop.f32.mrb[0].mxu0
  %v5821 = vadd.f32 0.0, %v5820
  %v5822 = vpop.f32.mrb[0].mxu0
  %5823 = vmatprep.mubr.f32.mxu0 0.0
  %5824 = vmatmul.mubr.f32.gmra.mrb[0].mxu0 %v5442
  %v5825 = vpop.f32.mrb[0].mxu0
  %v5826 = vadd.f32 0.0, %v5825
  %v5827 = vpop.f32.mrb[0].mxu0
  %5828 = vdwg.mxu0
  %v5829 = vadd.f32 %v5365, %v5511
  %v5830 = vadd.f32 %v5366, %v5516
  %v5831 = vadd.f32 %v5367, %v5521
  %v5832 = vadd.f32 %v5368, %v5526
  %v5833 = vadd.f32 %v5369, %v5531
  %v5834 = vadd.f32 %v5370, %v5536
  %v5835 = vadd.f32 %v5371, %v5541
  %v5836 = vadd.f32 %v5372, %v5546
  %v5837 = vadd.f32 %v5373, %v5551
  %v5838 = vadd.f32 %v5374, %v5556
  %v5839 = vadd.f32 %v5375, %v5561
  %v5840 = vadd.f32 %v5376, %v5566
  %v5841 = vadd.f32 %v5377, %v5571
  %v5842 = vadd.f32 %v5378, %v5576
  %v5843 = vadd.f32 %v5379, %v5581
  %v5844 = vadd.f32 %v5380, %v5586
  %v5845 = vadd.f32 %v5381, %v5591
  %v5846 = vadd.f32 %v5382, %v5596
  %v5847 = vadd.f32 %v5383, %v5601
  %v5848 = vadd.f32 %v5384, %v5606
  %v5849 = vadd.f32 %v5385, %v5611
  %v5850 = vadd.f32 %v5386, %v5616
  %v5851 = vadd.f32 %v5387, %v5621
  %v5852 = vadd.f32 %v5388, %v5626
  %v5853 = vadd.f32 %v5389, %v5631
  %v5854 = vadd.f32 %v5390, %v5636
  %v5855 = vadd.f32 %v5391, %v5641
  %v5856 = vadd.f32 %v5392, %v5646
  %v5857 = vadd.f32 %v5393, %v5651
  %v5858 = vadd.f32 %v5394, %v5656
  %v5859 = vadd.f32 %v5395, %v5661
  %v5860 = vadd.f32 %v5396, %v5666
  %v5861 = vadd.f32 %v5397, %v5671
  %v5862 = vadd.f32 %v5398, %v5676
  %v5863 = vadd.f32 %v5399, %v5681
  %v5864 = vadd.f32 %v5400, %v5686
  %v5865 = vadd.f32 %v5401, %v5691
  %v5866 = vadd.f32 %v5402, %v5696
  %v5867 = vadd.f32 %v5403, %v5701
  %v5868 = vadd.f32 %v5404, %v5706
  %v5869 = vadd.f32 %v5405, %v5711
  %v5870 = vadd.f32 %v5406, %v5716
  %v5871 = vadd.f32 %v5407, %v5721
  %v5872 = vadd.f32 %v5408, %v5726
  %v5873 = vadd.f32 %v5409, %v5731
  %v5874 = vadd.f32 %v5410, %v5736
  %v5875 = vadd.f32 %v5411, %v5741
  %v5876 = vadd.f32 %v5412, %v5746
  %v5877 = vadd.f32 %v5413, %v5751
  %v5878 = vadd.f32 %v5414, %v5756
  %v5879 = vadd.f32 %v5415, %v5761
  %v5880 = vadd.f32 %v5416, %v5766
  %v5881 = vadd.f32 %v5417, %v5771
  %v5882 = vadd.f32 %v5418, %v5776
  %v5883 = vadd.f32 %v5419, %v5781
  %v5884 = vadd.f32 %v5420, %v5786
  %v5885 = vadd.f32 %v5421, %v5791
  %v5886 = vadd.f32 %v5422, %v5796
  %v5887 = vadd.f32 %v5423, %v5801
  %v5888 = vadd.f32 %v5424, %v5806
  %v5889 = vadd.f32 %v5425, %v5811
  %v5890 = vadd.f32 %v5426, %v5816
  %v5891 = vadd.f32 %v5427, %v5821
  %v5892 = vadd.f32 %v5428, %v5826
  %v5893 = vld [vmem:[%s4] sm:$0x1]
  %v5895 = vlaneseq
  %v5896 = vshrl.u32 %v5895, 7
  %v5897 = vsub.s32 0, %v5896
  %v5898 = vrot.slane %v5893, %v5897
  %v5900 = vadd.f32 %v5829, %v5898
  %v5901 = vadd.f32 %v5830, %v5898
  %v5902 = vadd.f32 %v5831, %v5898
  %v5903 = vadd.f32 %v5832, %v5898
  %v5904 = vadd.f32 %v5833, %v5898
  %v5905 = vadd.f32 %v5834, %v5898
  %v5906 = vadd.f32 %v5835, %v5898
  %v5907 = vadd.f32 %v5836, %v5898
  %v5908 = vadd.f32 %v5837, %v5898
  %v5909 = vadd.f32 %v5838, %v5898
  %v5910 = vadd.f32 %v5839, %v5898
  %v5911 = vadd.f32 %v5840, %v5898
  %v5912 = vadd.f32 %v5841, %v5898
  %v5913 = vadd.f32 %v5842, %v5898
  %v5914 = vadd.f32 %v5843, %v5898
  %v5915 = vadd.f32 %v5844, %v5898
  %v5916 = vadd.f32 %v5845, %v5898
  %v5917 = vadd.f32 %v5846, %v5898
  %v5918 = vadd.f32 %v5847, %v5898
  %v5919 = vadd.f32 %v5848, %v5898
  %v5920 = vadd.f32 %v5849, %v5898
  %v5921 = vadd.f32 %v5850, %v5898
  %v5922 = vadd.f32 %v5851, %v5898
  %v5923 = vadd.f32 %v5852, %v5898
  %v5924 = vadd.f32 %v5853, %v5898
  %v5925 = vadd.f32 %v5854, %v5898
  %v5926 = vadd.f32 %v5855, %v5898
  %v5927 = vadd.f32 %v5856, %v5898
  %v5928 = vadd.f32 %v5857, %v5898
  %v5929 = vadd.f32 %v5858, %v5898
  %v5930 = vadd.f32 %v5859, %v5898
  %v5931 = vadd.f32 %v5860, %v5898
  %v5932 = vadd.f32 %v5861, %v5898
  %v5933 = vadd.f32 %v5862, %v5898
  %v5934 = vadd.f32 %v5863, %v5898
  %v5935 = vadd.f32 %v5864, %v5898
  %v5936 = vadd.f32 %v5865, %v5898
  %v5937 = vadd.f32 %v5866, %v5898
  %v5938 = vadd.f32 %v5867, %v5898
  %v5939 = vadd.f32 %v5868, %v5898
  %v5940 = vadd.f32 %v5869, %v5898
  %v5941 = vadd.f32 %v5870, %v5898
  %v5942 = vadd.f32 %v5871, %v5898
  %v5943 = vadd.f32 %v5872, %v5898
  %v5944 = vadd.f32 %v5873, %v5898
  %v5945 = vadd.f32 %v5874, %v5898
  %v5946 = vadd.f32 %v5875, %v5898
  %v5947 = vadd.f32 %v5876, %v5898
  %v5948 = vadd.f32 %v5877, %v5898
  %v5949 = vadd.f32 %v5878, %v5898
  %v5950 = vadd.f32 %v5879, %v5898
  %v5951 = vadd.f32 %v5880, %v5898
  %v5952 = vadd.f32 %v5881, %v5898
  %v5953 = vadd.f32 %v5882, %v5898
  %v5954 = vadd.f32 %v5883, %v5898
  %v5955 = vadd.f32 %v5884, %v5898
  %v5956 = vadd.f32 %v5885, %v5898
  %v5957 = vadd.f32 %v5886, %v5898
  %v5958 = vadd.f32 %v5887, %v5898
  %v5959 = vadd.f32 %v5888, %v5898
  %v5960 = vadd.f32 %v5889, %v5898
  %v5961 = vadd.f32 %v5890, %v5898
  %v5962 = vadd.f32 %v5891, %v5898
  %v5963 = vadd.f32 %v5892, %v5898
  %v5964 = vmul.f32 %v5900, 0.2
  %v5965 = vmul.f32 %v5901, 0.2
  %v5966 = vmul.f32 %v5902, 0.2
  %v5967 = vmul.f32 %v5903, 0.2
  %v5968 = vmul.f32 %v5904, 0.2
  %v5969 = vmul.f32 %v5905, 0.2
  %v5970 = vmul.f32 %v5906, 0.2
  %v5971 = vmul.f32 %v5907, 0.2
  %v5972 = vmul.f32 %v5908, 0.2
  %v5973 = vmul.f32 %v5909, 0.2
  %v5974 = vmul.f32 %v5910, 0.2
  %v5975 = vmul.f32 %v5911, 0.2
  %v5976 = vmul.f32 %v5912, 0.2
  %v5977 = vmul.f32 %v5913, 0.2
  %v5978 = vmul.f32 %v5914, 0.2
  %v5979 = vmul.f32 %v5915, 0.2
  %v5980 = vmul.f32 %v5916, 0.2
  %v5981 = vmul.f32 %v5917, 0.2
  %v5982 = vmul.f32 %v5918, 0.2
  %v5983 = vmul.f32 %v5919, 0.2
  %v5984 = vmul.f32 %v5920, 0.2
  %v5985 = vmul.f32 %v5921, 0.2
  %v5986 = vmul.f32 %v5922, 0.2
  %v5987 = vmul.f32 %v5923, 0.2
  %v5988 = vmul.f32 %v5924, 0.2
  %v5989 = vmul.f32 %v5925, 0.2
  %v5990 = vmul.f32 %v5926, 0.2
  %v5991 = vmul.f32 %v5927, 0.2
  %v5992 = vmul.f32 %v5928, 0.2
  %v5993 = vmul.f32 %v5929, 0.2
  %v5994 = vmul.f32 %v5930, 0.2
  %v5995 = vmul.f32 %v5931, 0.2
  %v5996 = vmul.f32 %v5932, 0.2
  %v5997 = vmul.f32 %v5933, 0.2
  %v5998 = vmul.f32 %v5934, 0.2
  %v5999 = vmul.f32 %v5935, 0.2
  %v6000 = vmul.f32 %v5936, 0.2
  %v6001 = vmul.f32 %v5937, 0.2
  %v6002 = vmul.f32 %v5938, 0.2
  %v6003 = vmul.f32 %v5939, 0.2
  %v6004 = vmul.f32 %v5940, 0.2
  %v6005 = vmul.f32 %v5941, 0.2
  %v6006 = vmul.f32 %v5942, 0.2
  %v6007 = vmul.f32 %v5943, 0.2
  %v6008 = vmul.f32 %v5944, 0.2
  %v6009 = vmul.f32 %v5945, 0.2
  %v6010 = vmul.f32 %v5946, 0.2
  %v6011 = vmul.f32 %v5947, 0.2
  %v6012 = vmul.f32 %v5948, 0.2
  %v6013 = vmul.f32 %v5949, 0.2
  %v6014 = vmul.f32 %v5950, 0.2
  %v6015 = vmul.f32 %v5951, 0.2
  %v6016 = vmul.f32 %v5952, 0.2
  %v6017 = vmul.f32 %v5953, 0.2
  %v6018 = vmul.f32 %v5954, 0.2
  %v6019 = vmul.f32 %v5955, 0.2
  %v6020 = vmul.f32 %v5956, 0.2
  %v6021 = vmul.f32 %v5957, 0.2
  %v6022 = vmul.f32 %v5958, 0.2
  %v6023 = vmul.f32 %v5959, 0.2
  %v6024 = vmul.f32 %v5960, 0.2
  %v6025 = vmul.f32 %v5961, 0.2
  %v6026 = vmul.f32 %v5962, 0.2
  %v6027 = vmul.f32 %v5963, 0.2
  %v6028 = vmax.f32 %v5900, %v5964
  %v6029 = vmax.f32 %v5901, %v5965
  %v6030 = vmax.f32 %v5902, %v5966
  %v6031 = vmax.f32 %v5903, %v5967
  %v6032 = vmax.f32 %v5904, %v5968
  %v6033 = vmax.f32 %v5905, %v5969
  %v6034 = vmax.f32 %v5906, %v5970
  %v6035 = vmax.f32 %v5907, %v5971
  %v6036 = vmax.f32 %v5908, %v5972
  %v6037 = vmax.f32 %v5909, %v5973
  %v6038 = vmax.f32 %v5910, %v5974
  %v6039 = vmax.f32 %v5911, %v5975
  %v6040 = vmax.f32 %v5912, %v5976
  %v6041 = vmax.f32 %v5913, %v5977
  %v6042 = vmax.f32 %v5914, %v5978
  %v6043 = vmax.f32 %v5915, %v5979
  %v6044 = vmax.f32 %v5916, %v5980
  %v6045 = vmax.f32 %v5917, %v5981
  %v6046 = vmax.f32 %v5918, %v5982
  %v6047 = vmax.f32 %v5919, %v5983
  %v6048 = vmax.f32 %v5920, %v5984
  %v6049 = vmax.f32 %v5921, %v5985
  %v6050 = vmax.f32 %v5922, %v5986
  %v6051 = vmax.f32 %v5923, %v5987
  %v6052 = vmax.f32 %v5924, %v5988
  %v6053 = vmax.f32 %v5925, %v5989
  %v6054 = vmax.f32 %v5926, %v5990
  %v6055 = vmax.f32 %v5927, %v5991
  %v6056 = vmax.f32 %v5928, %v5992
  %v6057 = vmax.f32 %v5929, %v5993
  %v6058 = vmax.f32 %v5930, %v5994
  %v6059 = vmax.f32 %v5931, %v5995
  %v6060 = vmax.f32 %v5932, %v5996
  %v6061 = vmax.f32 %v5933, %v5997
  %v6062 = vmax.f32 %v5934, %v5998
  %v6063 = vmax.f32 %v5935, %v5999
  %v6064 = vmax.f32 %v5936, %v6000
  %v6065 = vmax.f32 %v5937, %v6001
  %v6066 = vmax.f32 %v5938, %v6002
  %v6067 = vmax.f32 %v5939, %v6003
  %v6068 = vmax.f32 %v5940, %v6004
  %v6069 = vmax.f32 %v5941, %v6005
  %v6070 = vmax.f32 %v5942, %v6006
  %v6071 = vmax.f32 %v5943, %v6007
  %v6072 = vmax.f32 %v5944, %v6008
  %v6073 = vmax.f32 %v5945, %v6009
  %v6074 = vmax.f32 %v5946, %v6010
  %v6075 = vmax.f32 %v5947, %v6011
  %v6076 = vmax.f32 %v5948, %v6012
  %v6077 = vmax.f32 %v5949, %v6013
  %v6078 = vmax.f32 %v5950, %v6014
  %v6079 = vmax.f32 %v5951, %v6015
  %v6080 = vmax.f32 %v5952, %v6016
  %v6081 = vmax.f32 %v5953, %v6017
  %v6082 = vmax.f32 %v5954, %v6018
  %v6083 = vmax.f32 %v5955, %v6019
  %v6084 = vmax.f32 %v5956, %v6020
  %v6085 = vmax.f32 %v5957, %v6021
  %v6086 = vmax.f32 %v5958, %v6022
  %v6087 = vmax.f32 %v5959, %v6023
  %v6088 = vmax.f32 %v5960, %v6024
  %v6089 = vmax.f32 %v5961, %v6025
  %v6090 = vmax.f32 %v5962, %v6026
  %v6091 = vmax.f32 %v5963, %v6027
  %v6092 = vld [vmem:[%s5] sm:$0xff]
  %v6093 = vld [vmem:[%s5 + $0x8] sm:$0xff]
  %v6094 = vld [vmem:[%s6] sm:$0x1]
  %v6096 = vlaneseq
  %v6097 = vshrl.u32 %v6096, 7
  %v6098 = vsub.s32 0, %v6097
  %v6099 = vrot.slane %v6094, %v6098
  %v6102 = vsel %vm230, %v6028, 0
  %v6105 = vsel %vm230, %v6029, 0
  %v6108 = vsel %vm230, %v6030, 0
  %v6111 = vsel %vm230, %v6031, 0
  %v6114 = vsel %vm230, %v6032, 0
  %v6117 = vsel %vm230, %v6033, 0
  %v6120 = vsel %vm230, %v6034, 0
  %v6123 = vsel %vm230, %v6035, 0
  %v6126 = vsel %vm230, %v6036, 0
  %v6129 = vsel %vm230, %v6037, 0
  %v6132 = vsel %vm230, %v6038, 0
  %v6135 = vsel %vm230, %v6039, 0
  %v6138 = vsel %vm230, %v6040, 0
  %v6141 = vsel %vm230, %v6041, 0
  %v6144 = vsel %vm230, %v6042, 0
  %v6147 = vsel %vm230, %v6043, 0
  %v6150 = vsel %vm230, %v6044, 0
  %v6153 = vsel %vm230, %v6045, 0
  %v6156 = vsel %vm230, %v6046, 0
  %v6159 = vsel %vm230, %v6047, 0
  %v6162 = vsel %vm230, %v6048, 0
  %v6165 = vsel %vm230, %v6049, 0
  %v6168 = vsel %vm230, %v6050, 0
  %v6171 = vsel %vm230, %v6051, 0
  %v6174 = vsel %vm230, %v6052, 0
  %v6177 = vsel %vm230, %v6053, 0
  %v6180 = vsel %vm230, %v6054, 0
  %v6183 = vsel %vm230, %v6055, 0
  %v6186 = vsel %vm230, %v6056, 0
  %v6189 = vsel %vm230, %v6057, 0
  %v6192 = vsel %vm230, %v6058, 0
  %v6195 = vsel %vm230, %v6059, 0
  %v6198 = vsel %vm230, %v6060, 0
  %v6201 = vsel %vm230, %v6061, 0
  %v6204 = vsel %vm230, %v6062, 0
  %v6207 = vsel %vm230, %v6063, 0
  %v6210 = vsel %vm230, %v6064, 0
  %v6213 = vsel %vm230, %v6065, 0
  %v6216 = vsel %vm230, %v6066, 0
  %v6219 = vsel %vm230, %v6067, 0
  %v6222 = vsel %vm230, %v6068, 0
  %v6225 = vsel %vm230, %v6069, 0
  %v6228 = vsel %vm230, %v6070, 0
  %v6231 = vsel %vm230, %v6071, 0
  %v6234 = vsel %vm230, %v6072, 0
  %v6237 = vsel %vm230, %v6073, 0
  %v6240 = vsel %vm230, %v6074, 0
  %v6243 = vsel %vm230, %v6075, 0
  %v6246 = vsel %vm230, %v6076, 0
  %v6249 = vsel %vm230, %v6077, 0
  %v6252 = vsel %vm230, %v6078, 0
  %v6255 = vsel %vm230, %v6079, 0
  %v6258 = vsel %vm230, %v6080, 0
  %v6261 = vsel %vm230, %v6081, 0
  %v6264 = vsel %vm230, %v6082, 0
  %v6267 = vsel %vm230, %v6083, 0
  %v6270 = vsel %vm230, %v6084, 0
  %v6273 = vsel %vm230, %v6085, 0
  %v6276 = vsel %vm230, %v6086, 0
  %v6279 = vsel %vm230, %v6087, 0
  %v6282 = vsel %vm230, %v6088, 0
  %v6285 = vsel %vm230, %v6089, 0
  %v6288 = vsel %vm230, %v6090, 0
  %v6291 = vsel %vm230, %v6091, 0
  %6293 = vmatprep.subr.mxu0 0.0
  %6294 = vmatpush1.msra.mxu0 %v6092
  %6295 = vmatprep.subr.mxu0 0.0
  %6296 = vmatpush1.msra.mxu0 %v6093
  %6297 = vmatprep.subr.mxu0 0.0
  %6298 = vmatpush1.msra.mxu0 0.0
  %6299 = vmatprep.subr.mxu0 0.0
  %6300 = vmatpush1.msra.mxu0 0.0
  %6301 = vmatprep.subr.mxu0 0.0
  %6302 = vmatpush1.msra.mxu0 0.0
  %6303 = vmatprep.subr.mxu0 0.0
  %6304 = vmatpush1.msra.mxu0 0.0
  %6305 = vmatprep.subr.mxu0 0.0
  %6306 = vmatpush1.msra.mxu0 0.0
  %6307 = vmatprep.subr.mxu0 0.0
  %6308 = vmatpush1.msra.mxu0 0.0
  %6309 = vmatprep.subr.mxu0 0.0
  %6310 = vmatpush1.msra.mxu0 0.0
  %6311 = vmatprep.subr.mxu0 0.0
  %6312 = vmatpush1.msra.mxu0 0.0
  %6313 = vmatprep.subr.mxu0 0.0
  %6314 = vmatpush1.msra.mxu0 0.0
  %6315 = vmatprep.subr.mxu0 0.0
  %6316 = vmatpush1.msra.mxu0 0.0
  %6317 = vmatprep.subr.mxu0 0.0
  %6318 = vmatpush1.msra.mxu0 0.0
  %6319 = vmatprep.subr.mxu0 0.0
  %6320 = vmatpush1.msra.mxu0 0.0
  %6321 = vmatprep.subr.mxu0 0.0
  %6322 = vmatpush1.msra.mxu0 0.0
  %6323 = vmatprep.subr.mxu0 0.0
  %6324 = vmatpush1.msra.mxu0 0.0
  %6325 = vmatprep.subr.mxu0 0.0
  %6326 = vmatpush1.msra.mxu0 0.0
  %6327 = vmatprep.subr.mxu0 0.0
  %6328 = vmatpush1.msra.mxu0 0.0
  %6329 = vmatprep.subr.mxu0 0.0
  %6330 = vmatpush1.msra.mxu0 0.0
  %6331 = vmatprep.subr.mxu0 0.0
  %6332 = vmatpush1.msra.mxu0 0.0
  %6333 = vmatprep.subr.mxu0 0.0
  %6334 = vmatpush1.msra.mxu0 0.0
  %6335 = vmatprep.subr.mxu0 0.0
  %6336 = vmatpush1.msra.mxu0 0.0
  %6337 = vmatprep.subr.mxu0 0.0
  %6338 = vmatpush1.msra.mxu0 0.0
  %6339 = vmatprep.subr.mxu0 0.0
  %6340 = vmatpush1.msra.mxu0 0.0
  %6341 = vmatprep.subr.mxu0 0.0
  %6342 = vmatpush1.msra.mxu0 0.0
  %6343 = vmatprep.subr.mxu0 0.0
  %6344 = vmatpush1.msra.mxu0 0.0
  %6345 = vmatprep.subr.mxu0 0.0
  %6346 = vmatpush1.msra.mxu0 0.0
  %6347 = vmatprep.subr.mxu0 0.0
  %6348 = vmatpush1.msra.mxu0 0.0
  %6349 = vmatprep.subr.mxu0 0.0
  %6350 = vmatpush1.msra.mxu0 0.0
  %6351 = vmatprep.subr.mxu0 0.0
  %6352 = vmatpush1.msra.mxu0 0.0
  %6353 = vmatprep.subr.mxu0 0.0
  %6354 = vmatpush1.msra.mxu0 0.0
  %6355 = vmatprep.subr.mxu0 0.0
  %6356 = vmatpush1.msra.mxu0 0.0
  %6357 = vmatprep.mubr.f32.mxu0 0.0
  %6358 = vmatmul.mubr.f32.gmra.mrb[0].mxu0 %v6102
  %v6359 = vpop.f32.mrb[0].mxu0
  %v6360 = vadd.f32 %v6099, %v6359
  %v6361 = vpop.f32.mrb[0].mxu0
  %6362 = vmatprep.mubr.f32.mxu0 0.0
  %6363 = vmatmul.mubr.f32.gmra.mrb[0].mxu0 %v6105
  %v6364 = vpop.f32.mrb[0].mxu0
  %v6365 = vadd.f32 %v6099, %v6364
  %v6366 = vpop.f32.mrb[0].mxu0
  %6367 = vmatprep.mubr.f32.mxu0 0.0
  %6368 = vmatmul.mubr.f32.gmra.mrb[0].mxu0 %v6108
  %v6369 = vpop.f32.mrb[0].mxu0
  %v6370 = vadd.f32 %v6099, %v6369
  %v6371 = vpop.f32.mrb[0].mxu0
  %6372 = vmatprep.mubr.f32.mxu0 0.0
  %6373 = vmatmul.mubr.f32.gmra.mrb[0].mxu0 %v6111
  %v6374 = vpop.f32.mrb[0].mxu0
  %v6375 = vadd.f32 %v6099, %v6374
  %v6376 = vpop.f32.mrb[0].mxu0
  %6377 = vmatprep.mubr.f32.mxu0 0.0
  %6378 = vmatmul.mubr.f32.gmra.mrb[0].mxu0 %v6114
  %v6379 = vpop.f32.mrb[0].mxu0
  %v6380 = vadd.f32 %v6099, %v6379
  %v6381 = vpop.f32.mrb[0].mxu0
  %6382 = vmatprep.mubr.f32.mxu0 0.0
  %6383 = vmatmul.mubr.f32.gmra.mrb[0].mxu0 %v6117
  %v6384 = vpop.f32.mrb[0].mxu0
  %v6385 = vadd.f32 %v6099, %v6384
  %v6386 = vpop.f32.mrb[0].mxu0
  %6387 = vmatprep.mubr.f32.mxu0 0.0
  %6388 = vmatmul.mubr.f32.gmra.mrb[0].mxu0 %v6120
  %v6389 = vpop.f32.mrb[0].mxu0
  %v6390 = vadd.f32 %v6099, %v6389
  %v6391 = vpop.f32.mrb[0].mxu0
  %6392 = vmatprep.mubr.f32.mxu0 0.0
  %6393 = vmatmul.mubr.f32.gmra.mrb[0].mxu0 %v6123
  %v6394 = vpop.f32.mrb[0].mxu0
  %v6395 = vadd.f32 %v6099, %v6394
  %v6396 = vpop.f32.mrb[0].mxu0
  %6397 = vmatprep.mubr.f32.mxu0 0.0
  %6398 = vmatmul.mubr.f32.gmra.mrb[0].mxu0 %v6126
  %v6399 = vpop.f32.mrb[0].mxu0
  %v6400 = vadd.f32 %v6099, %v6399
  %v6401 = vpop.f32.mrb[0].mxu0
  %6402 = vmatprep.mubr.f32.mxu0 0.0
  %6403 = vmatmul.mubr.f32.gmra.mrb[0].mxu0 %v6129
  %v6404 = vpop.f32.mrb[0].mxu0
  %v6405 = vadd.f32 %v6099, %v6404
  %v6406 = vpop.f32.mrb[0].mxu0
  %6407 = vmatprep.mubr.f32.mxu0 0.0
  %6408 = vmatmul.mubr.f32.gmra.mrb[0].mxu0 %v6132
  %v6409 = vpop.f32.mrb[0].mxu0
  %v6410 = vadd.f32 %v6099, %v6409
  %v6411 = vpop.f32.mrb[0].mxu0
  %6412 = vmatprep.mubr.f32.mxu0 0.0
  %6413 = vmatmul.mubr.f32.gmra.mrb[0].mxu0 %v6135
  %v6414 = vpop.f32.mrb[0].mxu0
  %v6415 = vadd.f32 %v6099, %v6414
  %v6416 = vpop.f32.mrb[0].mxu0
  %6417 = vmatprep.mubr.f32.mxu0 0.0
  %6418 = vmatmul.mubr.f32.gmra.mrb[0].mxu0 %v6138
  %v6419 = vpop.f32.mrb[0].mxu0
  %v6420 = vadd.f32 %v6099, %v6419
  %v6421 = vpop.f32.mrb[0].mxu0
  %6422 = vmatprep.mubr.f32.mxu0 0.0
  %6423 = vmatmul.mubr.f32.gmra.mrb[0].mxu0 %v6141
  %v6424 = vpop.f32.mrb[0].mxu0
  %v6425 = vadd.f32 %v6099, %v6424
  %v6426 = vpop.f32.mrb[0].mxu0
  %6427 = vmatprep.mubr.f32.mxu0 0.0
  %6428 = vmatmul.mubr.f32.gmra.mrb[0].mxu0 %v6144
  %v6429 = vpop.f32.mrb[0].mxu0
  %v6430 = vadd.f32 %v6099, %v6429
  %v6431 = vpop.f32.mrb[0].mxu0
  %6432 = vmatprep.mubr.f32.mxu0 0.0
  %6433 = vmatmul.mubr.f32.gmra.mrb[0].mxu0 %v6147
  %v6434 = vpop.f32.mrb[0].mxu0
  %v6435 = vadd.f32 %v6099, %v6434
  %v6436 = vpop.f32.mrb[0].mxu0
  %6437 = vmatprep.mubr.f32.mxu0 0.0
  %6438 = vmatmul.mubr.f32.gmra.mrb[0].mxu0 %v6150
  %v6439 = vpop.f32.mrb[0].mxu0
  %v6440 = vadd.f32 %v6099, %v6439
  %v6441 = vpop.f32.mrb[0].mxu0
  %6442 = vmatprep.mubr.f32.mxu0 0.0
  %6443 = vmatmul.mubr.f32.gmra.mrb[0].mxu0 %v6153
  %v6444 = vpop.f32.mrb[0].mxu0
  %v6445 = vadd.f32 %v6099, %v6444
  %v6446 = vpop.f32.mrb[0].mxu0
  %6447 = vmatprep.mubr.f32.mxu0 0.0
  %6448 = vmatmul.mubr.f32.gmra.mrb[0].mxu0 %v6156
  %v6449 = vpop.f32.mrb[0].mxu0
  %v6450 = vadd.f32 %v6099, %v6449
  %v6451 = vpop.f32.mrb[0].mxu0
  %6452 = vmatprep.mubr.f32.mxu0 0.0
  %6453 = vmatmul.mubr.f32.gmra.mrb[0].mxu0 %v6159
  %v6454 = vpop.f32.mrb[0].mxu0
  %v6455 = vadd.f32 %v6099, %v6454
  %v6456 = vpop.f32.mrb[0].mxu0
  %6457 = vmatprep.mubr.f32.mxu0 0.0
  %6458 = vmatmul.mubr.f32.gmra.mrb[0].mxu0 %v6162
  %v6459 = vpop.f32.mrb[0].mxu0
  %v6460 = vadd.f32 %v6099, %v6459
  %v6461 = vpop.f32.mrb[0].mxu0
  %6462 = vmatprep.mubr.f32.mxu0 0.0
  %6463 = vmatmul.mubr.f32.gmra.mrb[0].mxu0 %v6165
  %v6464 = vpop.f32.mrb[0].mxu0
  %v6465 = vadd.f32 %v6099, %v6464
  %v6466 = vpop.f32.mrb[0].mxu0
  %6467 = vmatprep.mubr.f32.mxu0 0.0
  %6468 = vmatmul.mubr.f32.gmra.mrb[0].mxu0 %v6168
  %v6469 = vpop.f32.mrb[0].mxu0
  %v6470 = vadd.f32 %v6099, %v6469
  %v6471 = vpop.f32.mrb[0].mxu0
  %6472 = vmatprep.mubr.f32.mxu0 0.0
  %6473 = vmatmul.mubr.f32.gmra.mrb[0].mxu0 %v6171
  %v6474 = vpop.f32.mrb[0].mxu0
  %v6475 = vadd.f32 %v6099, %v6474
  %v6476 = vpop.f32.mrb[0].mxu0
  %6477 = vmatprep.mubr.f32.mxu0 0.0
  %6478 = vmatmul.mubr.f32.gmra.mrb[0].mxu0 %v6174
  %v6479 = vpop.f32.mrb[0].mxu0
  %v6480 = vadd.f32 %v6099, %v6479
  %v6481 = vpop.f32.mrb[0].mxu0
  %6482 = vmatprep.mubr.f32.mxu0 0.0
  %6483 = vmatmul.mubr.f32.gmra.mrb[0].mxu0 %v6177
  %v6484 = vpop.f32.mrb[0].mxu0
  %v6485 = vadd.f32 %v6099, %v6484
  %v6486 = vpop.f32.mrb[0].mxu0
  %6487 = vmatprep.mubr.f32.mxu0 0.0
  %6488 = vmatmul.mubr.f32.gmra.mrb[0].mxu0 %v6180
  %v6489 = vpop.f32.mrb[0].mxu0
  %v6490 = vadd.f32 %v6099, %v6489
  %v6491 = vpop.f32.mrb[0].mxu0
  %6492 = vmatprep.mubr.f32.mxu0 0.0
  %6493 = vmatmul.mubr.f32.gmra.mrb[0].mxu0 %v6183
  %v6494 = vpop.f32.mrb[0].mxu0
  %v6495 = vadd.f32 %v6099, %v6494
  %v6496 = vpop.f32.mrb[0].mxu0
  %6497 = vmatprep.mubr.f32.mxu0 0.0
  %6498 = vmatmul.mubr.f32.gmra.mrb[0].mxu0 %v6186
  %v6499 = vpop.f32.mrb[0].mxu0
  %v6500 = vadd.f32 %v6099, %v6499
  %v6501 = vpop.f32.mrb[0].mxu0
  %6502 = vmatprep.mubr.f32.mxu0 0.0
  %6503 = vmatmul.mubr.f32.gmra.mrb[0].mxu0 %v6189
  %v6504 = vpop.f32.mrb[0].mxu0
  %v6505 = vadd.f32 %v6099, %v6504
  %v6506 = vpop.f32.mrb[0].mxu0
  %6507 = vmatprep.mubr.f32.mxu0 0.0
  %6508 = vmatmul.mubr.f32.gmra.mrb[0].mxu0 %v6192
  %v6509 = vpop.f32.mrb[0].mxu0
  %v6510 = vadd.f32 %v6099, %v6509
  %v6511 = vpop.f32.mrb[0].mxu0
  %6512 = vmatprep.mubr.f32.mxu0 0.0
  %6513 = vmatmul.mubr.f32.gmra.mrb[0].mxu0 %v6195
  %v6514 = vpop.f32.mrb[0].mxu0
  %v6515 = vadd.f32 %v6099, %v6514
  %v6516 = vpop.f32.mrb[0].mxu0
  %6517 = vmatprep.mubr.f32.mxu0 0.0
  %6518 = vmatmul.mubr.f32.gmra.mrb[0].mxu0 %v6198
  %v6519 = vpop.f32.mrb[0].mxu0
  %v6520 = vadd.f32 %v6099, %v6519
  %v6521 = vpop.f32.mrb[0].mxu0
  %6522 = vmatprep.mubr.f32.mxu0 0.0
  %6523 = vmatmul.mubr.f32.gmra.mrb[0].mxu0 %v6201
  %v6524 = vpop.f32.mrb[0].mxu0
  %v6525 = vadd.f32 %v6099, %v6524
  %v6526 = vpop.f32.mrb[0].mxu0
  %6527 = vmatprep.mubr.f32.mxu0 0.0
  %6528 = vmatmul.mubr.f32.gmra.mrb[0].mxu0 %v6204
  %v6529 = vpop.f32.mrb[0].mxu0
  %v6530 = vadd.f32 %v6099, %v6529
  %v6531 = vpop.f32.mrb[0].mxu0
  %6532 = vmatprep.mubr.f32.mxu0 0.0
  %6533 = vmatmul.mubr.f32.gmra.mrb[0].mxu0 %v6207
  %v6534 = vpop.f32.mrb[0].mxu0
  %v6535 = vadd.f32 %v6099, %v6534
  %v6536 = vpop.f32.mrb[0].mxu0
  %6537 = vmatprep.mubr.f32.mxu0 0.0
  %6538 = vmatmul.mubr.f32.gmra.mrb[0].mxu0 %v6210
  %v6539 = vpop.f32.mrb[0].mxu0
  %v6540 = vadd.f32 %v6099, %v6539
  %v6541 = vpop.f32.mrb[0].mxu0
  %6542 = vmatprep.mubr.f32.mxu0 0.0
  %6543 = vmatmul.mubr.f32.gmra.mrb[0].mxu0 %v6213
  %v6544 = vpop.f32.mrb[0].mxu0
  %v6545 = vadd.f32 %v6099, %v6544
  %v6546 = vpop.f32.mrb[0].mxu0
  %6547 = vmatprep.mubr.f32.mxu0 0.0
  %6548 = vmatmul.mubr.f32.gmra.mrb[0].mxu0 %v6216
  %v6549 = vpop.f32.mrb[0].mxu0
  %v6550 = vadd.f32 %v6099, %v6549
  %v6551 = vpop.f32.mrb[0].mxu0
  %6552 = vmatprep.mubr.f32.mxu0 0.0
  %6553 = vmatmul.mubr.f32.gmra.mrb[0].mxu0 %v6219
  %v6554 = vpop.f32.mrb[0].mxu0
  %v6555 = vadd.f32 %v6099, %v6554
  %v6556 = vpop.f32.mrb[0].mxu0
  %6557 = vmatprep.mubr.f32.mxu0 0.0
  %6558 = vmatmul.mubr.f32.gmra.mrb[0].mxu0 %v6222
  %v6559 = vpop.f32.mrb[0].mxu0
  %v6560 = vadd.f32 %v6099, %v6559
  %v6561 = vpop.f32.mrb[0].mxu0
  %6562 = vmatprep.mubr.f32.mxu0 0.0
  %6563 = vmatmul.mubr.f32.gmra.mrb[0].mxu0 %v6225
  %v6564 = vpop.f32.mrb[0].mxu0
  %v6565 = vadd.f32 %v6099, %v6564
  %v6566 = vpop.f32.mrb[0].mxu0
  %6567 = vmatprep.mubr.f32.mxu0 0.0
  %6568 = vmatmul.mubr.f32.gmra.mrb[0].mxu0 %v6228
  %v6569 = vpop.f32.mrb[0].mxu0
  %v6570 = vadd.f32 %v6099, %v6569
  %v6571 = vpop.f32.mrb[0].mxu0
  %6572 = vmatprep.mubr.f32.mxu0 0.0
  %6573 = vmatmul.mubr.f32.gmra.mrb[0].mxu0 %v6231
  %v6574 = vpop.f32.mrb[0].mxu0
  %v6575 = vadd.f32 %v6099, %v6574
  %v6576 = vpop.f32.mrb[0].mxu0
  %6577 = vmatprep.mubr.f32.mxu0 0.0
  %6578 = vmatmul.mubr.f32.gmra.mrb[0].mxu0 %v6234
  %v6579 = vpop.f32.mrb[0].mxu0
  %v6580 = vadd.f32 %v6099, %v6579
  %v6581 = vpop.f32.mrb[0].mxu0
  %6582 = vmatprep.mubr.f32.mxu0 0.0
  %6583 = vmatmul.mubr.f32.gmra.mrb[0].mxu0 %v6237
  %v6584 = vpop.f32.mrb[0].mxu0
  %v6585 = vadd.f32 %v6099, %v6584
  %v6586 = vpop.f32.mrb[0].mxu0
  %6587 = vmatprep.mubr.f32.mxu0 0.0
  %6588 = vmatmul.mubr.f32.gmra.mrb[0].mxu0 %v6240
  %v6589 = vpop.f32.mrb[0].mxu0
  %v6590 = vadd.f32 %v6099, %v6589
  %v6591 = vpop.f32.mrb[0].mxu0
  %6592 = vmatprep.mubr.f32.mxu0 0.0
  %6593 = vmatmul.mubr.f32.gmra.mrb[0].mxu0 %v6243
  %v6594 = vpop.f32.mrb[0].mxu0
  %v6595 = vadd.f32 %v6099, %v6594
  %v6596 = vpop.f32.mrb[0].mxu0
  %6597 = vmatprep.mubr.f32.mxu0 0.0
  %6598 = vmatmul.mubr.f32.gmra.mrb[0].mxu0 %v6246
  %v6599 = vpop.f32.mrb[0].mxu0
  %v6600 = vadd.f32 %v6099, %v6599
  %v6601 = vpop.f32.mrb[0].mxu0
  %6602 = vmatprep.mubr.f32.mxu0 0.0
  %6603 = vmatmul.mubr.f32.gmra.mrb[0].mxu0 %v6249
  %v6604 = vpop.f32.mrb[0].mxu0
  %v6605 = vadd.f32 %v6099, %v6604
  %v6606 = vpop.f32.mrb[0].mxu0
  %6607 = vmatprep.mubr.f32.mxu0 0.0
  %6608 = vmatmul.mubr.f32.gmra.mrb[0].mxu0 %v6252
  %v6609 = vpop.f32.mrb[0].mxu0
  %v6610 = vadd.f32 %v6099, %v6609
  %v6611 = vpop.f32.mrb[0].mxu0
  %6612 = vmatprep.mubr.f32.mxu0 0.0
  %6613 = vmatmul.mubr.f32.gmra.mrb[0].mxu0 %v6255
  %v6614 = vpop.f32.mrb[0].mxu0
  %v6615 = vadd.f32 %v6099, %v6614
  %v6616 = vpop.f32.mrb[0].mxu0
  %6617 = vmatprep.mubr.f32.mxu0 0.0
  %6618 = vmatmul.mubr.f32.gmra.mrb[0].mxu0 %v6258
  %v6619 = vpop.f32.mrb[0].mxu0
  %v6620 = vadd.f32 %v6099, %v6619
  %v6621 = vpop.f32.mrb[0].mxu0
  %6622 = vmatprep.mubr.f32.mxu0 0.0
  %6623 = vmatmul.mubr.f32.gmra.mrb[0].mxu0 %v6261
  %v6624 = vpop.f32.mrb[0].mxu0
  %v6625 = vadd.f32 %v6099, %v6624
  %v6626 = vpop.f32.mrb[0].mxu0
  %6627 = vmatprep.mubr.f32.mxu0 0.0
  %6628 = vmatmul.mubr.f32.gmra.mrb[0].mxu0 %v6264
  %v6629 = vpop.f32.mrb[0].mxu0
  %v6630 = vadd.f32 %v6099, %v6629
  %v6631 = vpop.f32.mrb[0].mxu0
  %6632 = vmatprep.mubr.f32.mxu0 0.0
  %6633 = vmatmul.mubr.f32.gmra.mrb[0].mxu0 %v6267
  %v6634 = vpop.f32.mrb[0].mxu0
  %v6635 = vadd.f32 %v6099, %v6634
  %v6636 = vpop.f32.mrb[0].mxu0
  %6637 = vmatprep.mubr.f32.mxu0 0.0
  %6638 = vmatmul.mubr.f32.gmra.mrb[0].mxu0 %v6270
  %v6639 = vpop.f32.mrb[0].mxu0
  %v6640 = vadd.f32 %v6099, %v6639
  %v6641 = vpop.f32.mrb[0].mxu0
  %6642 = vmatprep.mubr.f32.mxu0 0.0
  %6643 = vmatmul.mubr.f32.gmra.mrb[0].mxu0 %v6273
  %v6644 = vpop.f32.mrb[0].mxu0
  %v6645 = vadd.f32 %v6099, %v6644
  %v6646 = vpop.f32.mrb[0].mxu0
  %6647 = vmatprep.mubr.f32.mxu0 0.0
  %6648 = vmatmul.mubr.f32.gmra.mrb[0].mxu0 %v6276
  %v6649 = vpop.f32.mrb[0].mxu0
  %v6650 = vadd.f32 %v6099, %v6649
  %v6651 = vpop.f32.mrb[0].mxu0
  %6652 = vmatprep.mubr.f32.mxu0 0.0
  %6653 = vmatmul.mubr.f32.gmra.mrb[0].mxu0 %v6279
  %v6654 = vpop.f32.mrb[0].mxu0
  %v6655 = vadd.f32 %v6099, %v6654
  %v6656 = vpop.f32.mrb[0].mxu0
  %6657 = vmatprep.mubr.f32.mxu0 0.0
  %6658 = vmatmul.mubr.f32.gmra.mrb[0].mxu0 %v6282
  %v6659 = vpop.f32.mrb[0].mxu0
  %v6660 = vadd.f32 %v6099, %v6659
  %v6661 = vpop.f32.mrb[0].mxu0
  %6662 = vmatprep.mubr.f32.mxu0 0.0
  %6663 = vmatmul.mubr.f32.gmra.mrb[0].mxu0 %v6285
  %v6664 = vpop.f32.mrb[0].mxu0
  %v6665 = vadd.f32 %v6099, %v6664
  %v6666 = vpop.f32.mrb[0].mxu0
  %6667 = vmatprep.mubr.f32.mxu0 0.0
  %6668 = vmatmul.mubr.f32.gmra.mrb[0].mxu0 %v6288
  %v6669 = vpop.f32.mrb[0].mxu0
  %v6670 = vadd.f32 %v6099, %v6669
  %v6671 = vpop.f32.mrb[0].mxu0
  %6672 = vmatprep.mubr.f32.mxu0 0.0
  %6673 = vmatmul.mubr.f32.gmra.mrb[0].mxu0 %v6291
  %v6674 = vpop.f32.mrb[0].mxu0
  %v6675 = vadd.f32 %v6099, %v6674
  %v6676 = vpop.f32.mrb[0].mxu0
  %6677 = vdwg.mxu0
  %v6678 = vld [vmem:[%s7] sm:$0xff]
  %v6679 = vld [vmem:[%s7 + $0x8] sm:$0xff]
  %v6681 = vsel %vm230, %v29, 0
  %v6684 = vsel %vm230, %v30, 0
  %v6687 = vsel %vm230, %v31, 0
  %v6690 = vsel %vm230, %v32, 0
  %v6693 = vsel %vm230, %v33, 0
  %v6696 = vsel %vm230, %v34, 0
  %v6699 = vsel %vm230, %v35, 0
  %v6702 = vsel %vm230, %v36, 0
  %v6705 = vsel %vm230, %v37, 0
  %v6708 = vsel %vm230, %v38, 0
  %v6711 = vsel %vm230, %v39, 0
  %v6714 = vsel %vm230, %v40, 0
  %v6717 = vsel %vm230, %v41, 0
  %v6720 = vsel %vm230, %v42, 0
  %v6723 = vsel %vm230, %v43, 0
  %v6726 = vsel %vm230, %v44, 0
  %v6729 = vsel %vm230, %v45, 0
  %v6732 = vsel %vm230, %v46, 0
  %v6735 = vsel %vm230, %v47, 0
  %v6738 = vsel %vm230, %v48, 0
  %v6741 = vsel %vm230, %v49, 0
  %v6744 = vsel %vm230, %v50, 0
  %v6747 = vsel %vm230, %v51, 0
  %v6750 = vsel %vm230, %v52, 0
  %v6753 = vsel %vm230, %v53, 0
  %v6756 = vsel %vm230, %v54, 0
  %v6759 = vsel %vm230, %v55, 0
  %v6762 = vsel %vm230, %v56, 0
  %v6765 = vsel %vm230, %v57, 0
  %v6768 = vsel %vm230, %v58, 0
  %v6771 = vsel %vm230, %v59, 0
  %v6774 = vsel %vm230, %v60, 0
  %v6777 = vsel %vm230, %v61, 0
  %v6780 = vsel %vm230, %v62, 0
  %v6783 = vsel %vm230, %v63, 0
  %v6786 = vsel %vm230, %v64, 0
  %v6789 = vsel %vm230, %v65, 0
  %v6792 = vsel %vm230, %v66, 0
  %v6795 = vsel %vm230, %v67, 0
  %v6798 = vsel %vm230, %v68, 0
  %v6801 = vsel %vm230, %v69, 0
  %v6804 = vsel %vm230, %v70, 0
  %v6807 = vsel %vm230, %v71, 0
  %v6810 = vsel %vm230, %v72, 0
  %v6813 = vsel %vm230, %v73, 0
  %v6816 = vsel %vm230, %v74, 0
  %v6819 = vsel %vm230, %v75, 0
  %v6822 = vsel %vm230, %v76, 0
  %v6825 = vsel %vm230, %v77, 0
  %v6828 = vsel %vm230, %v78, 0
  %v6831 = vsel %vm230, %v79, 0
  %v6834 = vsel %vm230, %v80, 0
  %v6837 = vsel %vm230, %v81, 0
  %v6840 = vsel %vm230, %v82, 0
  %v6843 = vsel %vm230, %v83, 0
  %v6846 = vsel %vm230, %v84, 0
  %v6849 = vsel %vm230, %v85, 0
  %v6852 = vsel %vm230, %v86, 0
  %v6855 = vsel %vm230, %v87, 0
  %v6858 = vsel %vm230, %v88, 0
  %v6861 = vsel %vm230, %v89, 0
  %v6864 = vsel %vm230, %v90, 0
  %v6867 = vsel %vm230, %v91, 0
  %v6870 = vsel %vm230, %v92, 0
  %6872 = vmatprep.subr.mxu0 0.0
  %6873 = vmatpush1.msra.mxu0 %v6678
  %6874 = vmatprep.subr.mxu0 0.0
  %6875 = vmatpush1.msra.mxu0 %v6679
  %6876 = vmatprep.subr.mxu0 0.0
  %6877 = vmatpush1.msra.mxu0 0.0
  %6878 = vmatprep.subr.mxu0 0.0
  %6879 = vmatpush1.msra.mxu0 0.0
  %6880 = vmatprep.subr.mxu0 0.0
  %6881 = vmatpush1.msra.mxu0 0.0
  %6882 = vmatprep.subr.mxu0 0.0
  %6883 = vmatpush1.msra.mxu0 0.0
  %6884 = vmatprep.subr.mxu0 0.0
  %6885 = vmatpush1.msra.mxu0 0.0
  %6886 = vmatprep.subr.mxu0 0.0
  %6887 = vmatpush1.msra.mxu0 0.0
  %6888 = vmatprep.subr.mxu0 0.0
  %6889 = vmatpush1.msra.mxu0 0.0
  %6890 = vmatprep.subr.mxu0 0.0
  %6891 = vmatpush1.msra.mxu0 0.0
  %6892 = vmatprep.subr.mxu0 0.0
  %6893 = vmatpush1.msra.mxu0 0.0
  %6894 = vmatprep.subr.mxu0 0.0
  %6895 = vmatpush1.msra.mxu0 0.0
  %6896 = vmatprep.subr.mxu0 0.0
  %6897 = vmatpush1.msra.mxu0 0.0
  %6898 = vmatprep.subr.mxu0 0.0
  %6899 = vmatpush1.msra.mxu0 0.0
  %6900 = vmatprep.subr.mxu0 0.0
  %6901 = vmatpush1.msra.mxu0 0.0
  %6902 = vmatprep.subr.mxu0 0.0
  %6903 = vmatpush1.msra.mxu0 0.0
  %6904 = vmatprep.subr.mxu0 0.0
  %6905 = vmatpush1.msra.mxu0 0.0
  %6906 = vmatprep.subr.mxu0 0.0
  %6907 = vmatpush1.msra.mxu0 0.0
  %6908 = vmatprep.subr.mxu0 0.0
  %6909 = vmatpush1.msra.mxu0 0.0
  %6910 = vmatprep.subr.mxu0 0.0
  %6911 = vmatpush1.msra.mxu0 0.0
  %6912 = vmatprep.subr.mxu0 0.0
  %6913 = vmatpush1.msra.mxu0 0.0
  %6914 = vmatprep.subr.mxu0 0.0
  %6915 = vmatpush1.msra.mxu0 0.0
  %6916 = vmatprep.subr.mxu0 0.0
  %6917 = vmatpush1.msra.mxu0 0.0
  %6918 = vmatprep.subr.mxu0 0.0
  %6919 = vmatpush1.msra.mxu0 0.0
  %6920 = vmatprep.subr.mxu0 0.0
  %6921 = vmatpush1.msra.mxu0 0.0
  %6922 = vmatprep.subr.mxu0 0.0
  %6923 = vmatpush1.msra.mxu0 0.0
  %6924 = vmatprep.subr.mxu0 0.0
  %6925 = vmatpush1.msra.mxu0 0.0
  %6926 = vmatprep.subr.mxu0 0.0
  %6927 = vmatpush1.msra.mxu0 0.0
  %6928 = vmatprep.subr.mxu0 0.0
  %6929 = vmatpush1.msra.mxu0 0.0
  %6930 = vmatprep.subr.mxu0 0.0
  %6931 = vmatpush1.msra.mxu0 0.0
  %6932 = vmatprep.subr.mxu0 0.0
  %6933 = vmatpush1.msra.mxu0 0.0
  %6934 = vmatprep.subr.mxu0 0.0
  %6935 = vmatpush1.msra.mxu0 0.0
  %6936 = vmatprep.mubr.f32.mxu0 0.0
  %6937 = vmatmul.mubr.f32.gmra.mrb[0].mxu0 %v6681
  %v6938 = vpop.f32.mrb[0].mxu0
  %v6939 = vadd.f32 0.0, %v6938
  %v6940 = vpop.f32.mrb[0].mxu0
  %6941 = vmatprep.mubr.f32.mxu0 0.0
  %6942 = vmatmul.mubr.f32.gmra.mrb[0].mxu0 %v6684
  %v6943 = vpop.f32.mrb[0].mxu0
  %v6944 = vadd.f32 0.0, %v6943
  %v6945 = vpop.f32.mrb[0].mxu0
  %6946 = vmatprep.mubr.f32.mxu0 0.0
  %6947 = vmatmul.mubr.f32.gmra.mrb[0].mxu0 %v6687
  %v6948 = vpop.f32.mrb[0].mxu0
  %v6949 = vadd.f32 0.0, %v6948
  %v6950 = vpop.f32.mrb[0].mxu0
  %6951 = vmatprep.mubr.f32.mxu0 0.0
  %6952 = vmatmul.mubr.f32.gmra.mrb[0].mxu0 %v6690
  %v6953 = vpop.f32.mrb[0].mxu0
  %v6954 = vadd.f32 0.0, %v6953
  %v6955 = vpop.f32.mrb[0].mxu0
  %6956 = vmatprep.mubr.f32.mxu0 0.0
  %6957 = vmatmul.mubr.f32.gmra.mrb[0].mxu0 %v6693
  %v6958 = vpop.f32.mrb[0].mxu0
  %v6959 = vadd.f32 0.0, %v6958
  %v6960 = vpop.f32.mrb[0].mxu0
  %6961 = vmatprep.mubr.f32.mxu0 0.0
  %6962 = vmatmul.mubr.f32.gmra.mrb[0].mxu0 %v6696
  %v6963 = vpop.f32.mrb[0].mxu0
  %v6964 = vadd.f32 0.0, %v6963
  %v6965 = vpop.f32.mrb[0].mxu0
  %6966 = vmatprep.mubr.f32.mxu0 0.0
  %6967 = vmatmul.mubr.f32.gmra.mrb[0].mxu0 %v6699
  %v6968 = vpop.f32.mrb[0].mxu0
  %v6969 = vadd.f32 0.0, %v6968
  %v6970 = vpop.f32.mrb[0].mxu0
  %6971 = vmatprep.mubr.f32.mxu0 0.0
  %6972 = vmatmul.mubr.f32.gmra.mrb[0].mxu0 %v6702
  %v6973 = vpop.f32.mrb[0].mxu0
  %v6974 = vadd.f32 0.0, %v6973
  %v6975 = vpop.f32.mrb[0].mxu0
  %6976 = vmatprep.mubr.f32.mxu0 0.0
  %6977 = vmatmul.mubr.f32.gmra.mrb[0].mxu0 %v6705
  %v6978 = vpop.f32.mrb[0].mxu0
  %v6979 = vadd.f32 0.0, %v6978
  %v6980 = vpop.f32.mrb[0].mxu0
  %6981 = vmatprep.mubr.f32.mxu0 0.0
  %6982 = vmatmul.mubr.f32.gmra.mrb[0].mxu0 %v6708
  %v6983 = vpop.f32.mrb[0].mxu0
  %v6984 = vadd.f32 0.0, %v6983
  %v6985 = vpop.f32.mrb[0].mxu0
  %6986 = vmatprep.mubr.f32.mxu0 0.0
  %6987 = vmatmul.mubr.f32.gmra.mrb[0].mxu0 %v6711
  %v6988 = vpop.f32.mrb[0].mxu0
  %v6989 = vadd.f32 0.0, %v6988
  %v6990 = vpop.f32.mrb[0].mxu0
  %6991 = vmatprep.mubr.f32.mxu0 0.0
  %6992 = vmatmul.mubr.f32.gmra.mrb[0].mxu0 %v6714
  %v6993 = vpop.f32.mrb[0].mxu0
  %v6994 = vadd.f32 0.0, %v6993
  %v6995 = vpop.f32.mrb[0].mxu0
  %6996 = vmatprep.mubr.f32.mxu0 0.0
  %6997 = vmatmul.mubr.f32.gmra.mrb[0].mxu0 %v6717
  %v6998 = vpop.f32.mrb[0].mxu0
  %v6999 = vadd.f32 0.0, %v6998
  %v7000 = vpop.f32.mrb[0].mxu0
  %7001 = vmatprep.mubr.f32.mxu0 0.0
  %7002 = vmatmul.mubr.f32.gmra.mrb[0].mxu0 %v6720
  %v7003 = vpop.f32.mrb[0].mxu0
  %v7004 = vadd.f32 0.0, %v7003
  %v7005 = vpop.f32.mrb[0].mxu0
  %7006 = vmatprep.mubr.f32.mxu0 0.0
  %7007 = vmatmul.mubr.f32.gmra.mrb[0].mxu0 %v6723
  %v7008 = vpop.f32.mrb[0].mxu0
  %v7009 = vadd.f32 0.0, %v7008
  %v7010 = vpop.f32.mrb[0].mxu0
  %7011 = vmatprep.mubr.f32.mxu0 0.0
  %7012 = vmatmul.mubr.f32.gmra.mrb[0].mxu0 %v6726
  %v7013 = vpop.f32.mrb[0].mxu0
  %v7014 = vadd.f32 0.0, %v7013
  %v7015 = vpop.f32.mrb[0].mxu0
  %7016 = vmatprep.mubr.f32.mxu0 0.0
  %7017 = vmatmul.mubr.f32.gmra.mrb[0].mxu0 %v6729
  %v7018 = vpop.f32.mrb[0].mxu0
  %v7019 = vadd.f32 0.0, %v7018
  %v7020 = vpop.f32.mrb[0].mxu0
  %7021 = vmatprep.mubr.f32.mxu0 0.0
  %7022 = vmatmul.mubr.f32.gmra.mrb[0].mxu0 %v6732
  %v7023 = vpop.f32.mrb[0].mxu0
  %v7024 = vadd.f32 0.0, %v7023
  %v7025 = vpop.f32.mrb[0].mxu0
  %7026 = vmatprep.mubr.f32.mxu0 0.0
  %7027 = vmatmul.mubr.f32.gmra.mrb[0].mxu0 %v6735
  %v7028 = vpop.f32.mrb[0].mxu0
  %v7029 = vadd.f32 0.0, %v7028
  %v7030 = vpop.f32.mrb[0].mxu0
  %7031 = vmatprep.mubr.f32.mxu0 0.0
  %7032 = vmatmul.mubr.f32.gmra.mrb[0].mxu0 %v6738
  %v7033 = vpop.f32.mrb[0].mxu0
  %v7034 = vadd.f32 0.0, %v7033
  %v7035 = vpop.f32.mrb[0].mxu0
  %7036 = vmatprep.mubr.f32.mxu0 0.0
  %7037 = vmatmul.mubr.f32.gmra.mrb[0].mxu0 %v6741
  %v7038 = vpop.f32.mrb[0].mxu0
  %v7039 = vadd.f32 0.0, %v7038
  %v7040 = vpop.f32.mrb[0].mxu0
  %7041 = vmatprep.mubr.f32.mxu0 0.0
  %7042 = vmatmul.mubr.f32.gmra.mrb[0].mxu0 %v6744
  %v7043 = vpop.f32.mrb[0].mxu0
  %v7044 = vadd.f32 0.0, %v7043
  %v7045 = vpop.f32.mrb[0].mxu0
  %7046 = vmatprep.mubr.f32.mxu0 0.0
  %7047 = vmatmul.mubr.f32.gmra.mrb[0].mxu0 %v6747
  %v7048 = vpop.f32.mrb[0].mxu0
  %v7049 = vadd.f32 0.0, %v7048
  %v7050 = vpop.f32.mrb[0].mxu0
  %7051 = vmatprep.mubr.f32.mxu0 0.0
  %7052 = vmatmul.mubr.f32.gmra.mrb[0].mxu0 %v6750
  %v7053 = vpop.f32.mrb[0].mxu0
  %v7054 = vadd.f32 0.0, %v7053
  %v7055 = vpop.f32.mrb[0].mxu0
  %7056 = vmatprep.mubr.f32.mxu0 0.0
  %7057 = vmatmul.mubr.f32.gmra.mrb[0].mxu0 %v6753
  %v7058 = vpop.f32.mrb[0].mxu0
  %v7059 = vadd.f32 0.0, %v7058
  %v7060 = vpop.f32.mrb[0].mxu0
  %7061 = vmatprep.mubr.f32.mxu0 0.0
  %7062 = vmatmul.mubr.f32.gmra.mrb[0].mxu0 %v6756
  %v7063 = vpop.f32.mrb[0].mxu0
  %v7064 = vadd.f32 0.0, %v7063
  %v7065 = vpop.f32.mrb[0].mxu0
  %7066 = vmatprep.mubr.f32.mxu0 0.0
  %7067 = vmatmul.mubr.f32.gmra.mrb[0].mxu0 %v6759
  %v7068 = vpop.f32.mrb[0].mxu0
  %v7069 = vadd.f32 0.0, %v7068
  %v7070 = vpop.f32.mrb[0].mxu0
  %7071 = vmatprep.mubr.f32.mxu0 0.0
  %7072 = vmatmul.mubr.f32.gmra.mrb[0].mxu0 %v6762
  %v7073 = vpop.f32.mrb[0].mxu0
  %v7074 = vadd.f32 0.0, %v7073
  %v7075 = vpop.f32.mrb[0].mxu0
  %7076 = vmatprep.mubr.f32.mxu0 0.0
  %7077 = vmatmul.mubr.f32.gmra.mrb[0].mxu0 %v6765
  %v7078 = vpop.f32.mrb[0].mxu0
  %v7079 = vadd.f32 0.0, %v7078
  %v7080 = vpop.f32.mrb[0].mxu0
  %7081 = vmatprep.mubr.f32.mxu0 0.0
  %7082 = vmatmul.mubr.f32.gmra.mrb[0].mxu0 %v6768
  %v7083 = vpop.f32.mrb[0].mxu0
  %v7084 = vadd.f32 0.0, %v7083
  %v7085 = vpop.f32.mrb[0].mxu0
  %7086 = vmatprep.mubr.f32.mxu0 0.0
  %7087 = vmatmul.mubr.f32.gmra.mrb[0].mxu0 %v6771
  %v7088 = vpop.f32.mrb[0].mxu0
  %v7089 = vadd.f32 0.0, %v7088
  %v7090 = vpop.f32.mrb[0].mxu0
  %7091 = vmatprep.mubr.f32.mxu0 0.0
  %7092 = vmatmul.mubr.f32.gmra.mrb[0].mxu0 %v6774
  %v7093 = vpop.f32.mrb[0].mxu0
  %v7094 = vadd.f32 0.0, %v7093
  %v7095 = vpop.f32.mrb[0].mxu0
  %7096 = vmatprep.mubr.f32.mxu0 0.0
  %7097 = vmatmul.mubr.f32.gmra.mrb[0].mxu0 %v6777
  %v7098 = vpop.f32.mrb[0].mxu0
  %v7099 = vadd.f32 0.0, %v7098
  %v7100 = vpop.f32.mrb[0].mxu0
  %7101 = vmatprep.mubr.f32.mxu0 0.0
  %7102 = vmatmul.mubr.f32.gmra.mrb[0].mxu0 %v6780
  %v7103 = vpop.f32.mrb[0].mxu0
  %v7104 = vadd.f32 0.0, %v7103
  %v7105 = vpop.f32.mrb[0].mxu0
  %7106 = vmatprep.mubr.f32.mxu0 0.0
  %7107 = vmatmul.mubr.f32.gmra.mrb[0].mxu0 %v6783
  %v7108 = vpop.f32.mrb[0].mxu0
  %v7109 = vadd.f32 0.0, %v7108
  %v7110 = vpop.f32.mrb[0].mxu0
  %7111 = vmatprep.mubr.f32.mxu0 0.0
  %7112 = vmatmul.mubr.f32.gmra.mrb[0].mxu0 %v6786
  %v7113 = vpop.f32.mrb[0].mxu0
  %v7114 = vadd.f32 0.0, %v7113
  %v7115 = vpop.f32.mrb[0].mxu0
  %7116 = vmatprep.mubr.f32.mxu0 0.0
  %7117 = vmatmul.mubr.f32.gmra.mrb[0].mxu0 %v6789
  %v7118 = vpop.f32.mrb[0].mxu0
  %v7119 = vadd.f32 0.0, %v7118
  %v7120 = vpop.f32.mrb[0].mxu0
  %7121 = vmatprep.mubr.f32.mxu0 0.0
  %7122 = vmatmul.mubr.f32.gmra.mrb[0].mxu0 %v6792
  %v7123 = vpop.f32.mrb[0].mxu0
  %v7124 = vadd.f32 0.0, %v7123
  %v7125 = vpop.f32.mrb[0].mxu0
  %7126 = vmatprep.mubr.f32.mxu0 0.0
  %7127 = vmatmul.mubr.f32.gmra.mrb[0].mxu0 %v6795
  %v7128 = vpop.f32.mrb[0].mxu0
  %v7129 = vadd.f32 0.0, %v7128
  %v7130 = vpop.f32.mrb[0].mxu0
  %7131 = vmatprep.mubr.f32.mxu0 0.0
  %7132 = vmatmul.mubr.f32.gmra.mrb[0].mxu0 %v6798
  %v7133 = vpop.f32.mrb[0].mxu0
  %v7134 = vadd.f32 0.0, %v7133
  %v7135 = vpop.f32.mrb[0].mxu0
  %7136 = vmatprep.mubr.f32.mxu0 0.0
  %7137 = vmatmul.mubr.f32.gmra.mrb[0].mxu0 %v6801
  %v7138 = vpop.f32.mrb[0].mxu0
  %v7139 = vadd.f32 0.0, %v7138
  %v7140 = vpop.f32.mrb[0].mxu0
  %7141 = vmatprep.mubr.f32.mxu0 0.0
  %7142 = vmatmul.mubr.f32.gmra.mrb[0].mxu0 %v6804
  %v7143 = vpop.f32.mrb[0].mxu0
  %v7144 = vadd.f32 0.0, %v7143
  %v7145 = vpop.f32.mrb[0].mxu0
  %7146 = vmatprep.mubr.f32.mxu0 0.0
  %7147 = vmatmul.mubr.f32.gmra.mrb[0].mxu0 %v6807
  %v7148 = vpop.f32.mrb[0].mxu0
  %v7149 = vadd.f32 0.0, %v7148
  %v7150 = vpop.f32.mrb[0].mxu0
  %7151 = vmatprep.mubr.f32.mxu0 0.0
  %7152 = vmatmul.mubr.f32.gmra.mrb[0].mxu0 %v6810
  %v7153 = vpop.f32.mrb[0].mxu0
  %v7154 = vadd.f32 0.0, %v7153
  %v7155 = vpop.f32.mrb[0].mxu0
  %7156 = vmatprep.mubr.f32.mxu0 0.0
  %7157 = vmatmul.mubr.f32.gmra.mrb[0].mxu0 %v6813
  %v7158 = vpop.f32.mrb[0].mxu0
  %v7159 = vadd.f32 0.0, %v7158
  %v7160 = vpop.f32.mrb[0].mxu0
  %7161 = vmatprep.mubr.f32.mxu0 0.0
  %7162 = vmatmul.mubr.f32.gmra.mrb[0].mxu0 %v6816
  %v7163 = vpop.f32.mrb[0].mxu0
  %v7164 = vadd.f32 0.0, %v7163
  %v7165 = vpop.f32.mrb[0].mxu0
  %7166 = vmatprep.mubr.f32.mxu0 0.0
  %7167 = vmatmul.mubr.f32.gmra.mrb[0].mxu0 %v6819
  %v7168 = vpop.f32.mrb[0].mxu0
  %v7169 = vadd.f32 0.0, %v7168
  %v7170 = vpop.f32.mrb[0].mxu0
  %7171 = vmatprep.mubr.f32.mxu0 0.0
  %7172 = vmatmul.mubr.f32.gmra.mrb[0].mxu0 %v6822
  %v7173 = vpop.f32.mrb[0].mxu0
  %v7174 = vadd.f32 0.0, %v7173
  %v7175 = vpop.f32.mrb[0].mxu0
  %7176 = vmatprep.mubr.f32.mxu0 0.0
  %7177 = vmatmul.mubr.f32.gmra.mrb[0].mxu0 %v6825
  %v7178 = vpop.f32.mrb[0].mxu0
  %v7179 = vadd.f32 0.0, %v7178
  %v7180 = vpop.f32.mrb[0].mxu0
  %7181 = vmatprep.mubr.f32.mxu0 0.0
  %7182 = vmatmul.mubr.f32.gmra.mrb[0].mxu0 %v6828
  %v7183 = vpop.f32.mrb[0].mxu0
  %v7184 = vadd.f32 0.0, %v7183
  %v7185 = vpop.f32.mrb[0].mxu0
  %7186 = vmatprep.mubr.f32.mxu0 0.0
  %7187 = vmatmul.mubr.f32.gmra.mrb[0].mxu0 %v6831
  %v7188 = vpop.f32.mrb[0].mxu0
  %v7189 = vadd.f32 0.0, %v7188
  %v7190 = vpop.f32.mrb[0].mxu0
  %7191 = vmatprep.mubr.f32.mxu0 0.0
  %7192 = vmatmul.mubr.f32.gmra.mrb[0].mxu0 %v6834
  %v7193 = vpop.f32.mrb[0].mxu0
  %v7194 = vadd.f32 0.0, %v7193
  %v7195 = vpop.f32.mrb[0].mxu0
  %7196 = vmatprep.mubr.f32.mxu0 0.0
  %7197 = vmatmul.mubr.f32.gmra.mrb[0].mxu0 %v6837
  %v7198 = vpop.f32.mrb[0].mxu0
  %v7199 = vadd.f32 0.0, %v7198
  %v7200 = vpop.f32.mrb[0].mxu0
  %7201 = vmatprep.mubr.f32.mxu0 0.0
  %7202 = vmatmul.mubr.f32.gmra.mrb[0].mxu0 %v6840
  %v7203 = vpop.f32.mrb[0].mxu0
  %v7204 = vadd.f32 0.0, %v7203
  %v7205 = vpop.f32.mrb[0].mxu0
  %7206 = vmatprep.mubr.f32.mxu0 0.0
  %7207 = vmatmul.mubr.f32.gmra.mrb[0].mxu0 %v6843
  %v7208 = vpop.f32.mrb[0].mxu0
  %v7209 = vadd.f32 0.0, %v7208
  %v7210 = vpop.f32.mrb[0].mxu0
  %7211 = vmatprep.mubr.f32.mxu0 0.0
  %7212 = vmatmul.mubr.f32.gmra.mrb[0].mxu0 %v6846
  %v7213 = vpop.f32.mrb[0].mxu0
  %v7214 = vadd.f32 0.0, %v7213
  %v7215 = vpop.f32.mrb[0].mxu0
  %7216 = vmatprep.mubr.f32.mxu0 0.0
  %7217 = vmatmul.mubr.f32.gmra.mrb[0].mxu0 %v6849
  %v7218 = vpop.f32.mrb[0].mxu0
  %v7219 = vadd.f32 0.0, %v7218
  %v7220 = vpop.f32.mrb[0].mxu0
  %7221 = vmatprep.mubr.f32.mxu0 0.0
  %7222 = vmatmul.mubr.f32.gmra.mrb[0].mxu0 %v6852
  %v7223 = vpop.f32.mrb[0].mxu0
  %v7224 = vadd.f32 0.0, %v7223
  %v7225 = vpop.f32.mrb[0].mxu0
  %7226 = vmatprep.mubr.f32.mxu0 0.0
  %7227 = vmatmul.mubr.f32.gmra.mrb[0].mxu0 %v6855
  %v7228 = vpop.f32.mrb[0].mxu0
  %v7229 = vadd.f32 0.0, %v7228
  %v7230 = vpop.f32.mrb[0].mxu0
  %7231 = vmatprep.mubr.f32.mxu0 0.0
  %7232 = vmatmul.mubr.f32.gmra.mrb[0].mxu0 %v6858
  %v7233 = vpop.f32.mrb[0].mxu0
  %v7234 = vadd.f32 0.0, %v7233
  %v7235 = vpop.f32.mrb[0].mxu0
  %7236 = vmatprep.mubr.f32.mxu0 0.0
  %7237 = vmatmul.mubr.f32.gmra.mrb[0].mxu0 %v6861
  %v7238 = vpop.f32.mrb[0].mxu0
  %v7239 = vadd.f32 0.0, %v7238
  %v7240 = vpop.f32.mrb[0].mxu0
  %7241 = vmatprep.mubr.f32.mxu0 0.0
  %7242 = vmatmul.mubr.f32.gmra.mrb[0].mxu0 %v6864
  %v7243 = vpop.f32.mrb[0].mxu0
  %v7244 = vadd.f32 0.0, %v7243
  %v7245 = vpop.f32.mrb[0].mxu0
  %7246 = vmatprep.mubr.f32.mxu0 0.0
  %7247 = vmatmul.mubr.f32.gmra.mrb[0].mxu0 %v6867
  %v7248 = vpop.f32.mrb[0].mxu0
  %v7249 = vadd.f32 0.0, %v7248
  %v7250 = vpop.f32.mrb[0].mxu0
  %7251 = vmatprep.mubr.f32.mxu0 0.0
  %7252 = vmatmul.mubr.f32.gmra.mrb[0].mxu0 %v6870
  %v7253 = vpop.f32.mrb[0].mxu0
  %v7254 = vadd.f32 0.0, %v7253
  %v7255 = vpop.f32.mrb[0].mxu0
  %7256 = vdwg.mxu0
  %v7257 = vadd.f32 %v6360, %v6939
  %v7258 = vadd.f32 %v6365, %v6944
  %v7259 = vadd.f32 %v6370, %v6949
  %v7260 = vadd.f32 %v6375, %v6954
  %v7261 = vadd.f32 %v6380, %v6959
  %v7262 = vadd.f32 %v6385, %v6964
  %v7263 = vadd.f32 %v6390, %v6969
  %v7264 = vadd.f32 %v6395, %v6974
  %v7265 = vadd.f32 %v6400, %v6979
  %v7266 = vadd.f32 %v6405, %v6984
  %v7267 = vadd.f32 %v6410, %v6989
  %v7268 = vadd.f32 %v6415, %v6994
  %v7269 = vadd.f32 %v6420, %v6999
  %v7270 = vadd.f32 %v6425, %v7004
  %v7271 = vadd.f32 %v6430, %v7009
  %v7272 = vadd.f32 %v6435, %v7014
  %v7273 = vadd.f32 %v6440, %v7019
  %v7274 = vadd.f32 %v6445, %v7024
  %v7275 = vadd.f32 %v6450, %v7029
  %v7276 = vadd.f32 %v6455, %v7034
  %v7277 = vadd.f32 %v6460, %v7039
  %v7278 = vadd.f32 %v6465, %v7044
  %v7279 = vadd.f32 %v6470, %v7049
  %v7280 = vadd.f32 %v6475, %v7054
  %v7281 = vadd.f32 %v6480, %v7059
  %v7282 = vadd.f32 %v6485, %v7064
  %v7283 = vadd.f32 %v6490, %v7069
  %v7284 = vadd.f32 %v6495, %v7074
  %v7285 = vadd.f32 %v6500, %v7079
  %v7286 = vadd.f32 %v6505, %v7084
  %v7287 = vadd.f32 %v6510, %v7089
  %v7288 = vadd.f32 %v6515, %v7094
  %v7289 = vadd.f32 %v6520, %v7099
  %v7290 = vadd.f32 %v6525, %v7104
  %v7291 = vadd.f32 %v6530, %v7109
  %v7292 = vadd.f32 %v6535, %v7114
  %v7293 = vadd.f32 %v6540, %v7119
  %v7294 = vadd.f32 %v6545, %v7124
  %v7295 = vadd.f32 %v6550, %v7129
  %v7296 = vadd.f32 %v6555, %v7134
  %v7297 = vadd.f32 %v6560, %v7139
  %v7298 = vadd.f32 %v6565, %v7144
  %v7299 = vadd.f32 %v6570, %v7149
  %v7300 = vadd.f32 %v6575, %v7154
  %v7301 = vadd.f32 %v6580, %v7159
  %v7302 = vadd.f32 %v6585, %v7164
  %v7303 = vadd.f32 %v6590, %v7169
  %v7304 = vadd.f32 %v6595, %v7174
  %v7305 = vadd.f32 %v6600, %v7179
  %v7306 = vadd.f32 %v6605, %v7184
  %v7307 = vadd.f32 %v6610, %v7189
  %v7308 = vadd.f32 %v6615, %v7194
  %v7309 = vadd.f32 %v6620, %v7199
  %v7310 = vadd.f32 %v6625, %v7204
  %v7311 = vadd.f32 %v6630, %v7209
  %v7312 = vadd.f32 %v6635, %v7214
  %v7313 = vadd.f32 %v6640, %v7219
  %v7314 = vadd.f32 %v6645, %v7224
  %v7315 = vadd.f32 %v6650, %v7229
  %v7316 = vadd.f32 %v6655, %v7234
  %v7317 = vadd.f32 %v6660, %v7239
  %v7318 = vadd.f32 %v6665, %v7244
  %v7319 = vadd.f32 %v6670, %v7249
  %v7320 = vadd.f32 %v6675, %v7254
  %vm7321 = vcmask 261120
  %7322 = vst.msk [vmem:[%s8] sm:$0xff] %vm7321, %v7257
  %7323 = vst.msk [vmem:[%s8 + $0x8] sm:$0xff] %vm7321, %v7258
  %7324 = vst.msk [vmem:[%s8 + $0x10] sm:$0xff] %vm7321, %v7259
  %7325 = vst.msk [vmem:[%s8 + $0x18] sm:$0xff] %vm7321, %v7260
  %7326 = vst.msk [vmem:[%s8 + $0x20] sm:$0xff] %vm7321, %v7261
  %7327 = vst.msk [vmem:[%s8 + $0x28] sm:$0xff] %vm7321, %v7262
  %7328 = vst.msk [vmem:[%s8 + $0x30] sm:$0xff] %vm7321, %v7263
  %7329 = vst.msk [vmem:[%s8 + $0x38] sm:$0xff] %vm7321, %v7264
  %7330 = vst.msk [vmem:[%s8 + $0x40] sm:$0xff] %vm7321, %v7265
  %7331 = vst.msk [vmem:[%s8 + $0x48] sm:$0xff] %vm7321, %v7266
  %7332 = vst.msk [vmem:[%s8 + $0x50] sm:$0xff] %vm7321, %v7267
  %7333 = vst.msk [vmem:[%s8 + $0x58] sm:$0xff] %vm7321, %v7268
  %7334 = vst.msk [vmem:[%s8 + $0x60] sm:$0xff] %vm7321, %v7269
  %7335 = vst.msk [vmem:[%s8 + $0x68] sm:$0xff] %vm7321, %v7270
  %7336 = vst.msk [vmem:[%s8 + $0x70] sm:$0xff] %vm7321, %v7271
  %7337 = vst.msk [vmem:[%s8 + $0x78] sm:$0xff] %vm7321, %v7272
  %7338 = vst.msk [vmem:[%s8 + $0x80] sm:$0xff] %vm7321, %v7273
  %7339 = vst.msk [vmem:[%s8 + $0x88] sm:$0xff] %vm7321, %v7274
  %7340 = vst.msk [vmem:[%s8 + $0x90] sm:$0xff] %vm7321, %v7275
  %7341 = vst.msk [vmem:[%s8 + $0x98] sm:$0xff] %vm7321, %v7276
  %7342 = vst.msk [vmem:[%s8 + $0xa0] sm:$0xff] %vm7321, %v7277
  %7343 = vst.msk [vmem:[%s8 + $0xa8] sm:$0xff] %vm7321, %v7278
  %7344 = vst.msk [vmem:[%s8 + $0xb0] sm:$0xff] %vm7321, %v7279
  %7345 = vst.msk [vmem:[%s8 + $0xb8] sm:$0xff] %vm7321, %v7280
  %7346 = vst.msk [vmem:[%s8 + $0xc0] sm:$0xff] %vm7321, %v7281
  %7347 = vst.msk [vmem:[%s8 + $0xc8] sm:$0xff] %vm7321, %v7282
  %7348 = vst.msk [vmem:[%s8 + $0xd0] sm:$0xff] %vm7321, %v7283
  %7349 = vst.msk [vmem:[%s8 + $0xd8] sm:$0xff] %vm7321, %v7284
  %7350 = vst.msk [vmem:[%s8 + $0xe0] sm:$0xff] %vm7321, %v7285
  %7351 = vst.msk [vmem:[%s8 + $0xe8] sm:$0xff] %vm7321, %v7286
  %7352 = vst.msk [vmem:[%s8 + $0xf0] sm:$0xff] %vm7321, %v7287
  %7353 = vst.msk [vmem:[%s8 + $0xf8] sm:$0xff] %vm7321, %v7288
  %7354 = vst.msk [vmem:[%s8 + $0x100] sm:$0xff] %vm7321, %v7289
  %7355 = vst.msk [vmem:[%s8 + $0x108] sm:$0xff] %vm7321, %v7290
  %7356 = vst.msk [vmem:[%s8 + $0x110] sm:$0xff] %vm7321, %v7291
  %7357 = vst.msk [vmem:[%s8 + $0x118] sm:$0xff] %vm7321, %v7292
  %7358 = vst.msk [vmem:[%s8 + $0x120] sm:$0xff] %vm7321, %v7293
  %7359 = vst.msk [vmem:[%s8 + $0x128] sm:$0xff] %vm7321, %v7294
  %7360 = vst.msk [vmem:[%s8 + $0x130] sm:$0xff] %vm7321, %v7295
  %7361 = vst.msk [vmem:[%s8 + $0x138] sm:$0xff] %vm7321, %v7296
  %7362 = vst.msk [vmem:[%s8 + $0x140] sm:$0xff] %vm7321, %v7297
  %7363 = vst.msk [vmem:[%s8 + $0x148] sm:$0xff] %vm7321, %v7298
  %7364 = vst.msk [vmem:[%s8 + $0x150] sm:$0xff] %vm7321, %v7299
  %7365 = vst.msk [vmem:[%s8 + $0x158] sm:$0xff] %vm7321, %v7300
  %7366 = vst.msk [vmem:[%s8 + $0x160] sm:$0xff] %vm7321, %v7301
  %7367 = vst.msk [vmem:[%s8 + $0x168] sm:$0xff] %vm7321, %v7302
  %7368 = vst.msk [vmem:[%s8 + $0x170] sm:$0xff] %vm7321, %v7303
  %7369 = vst.msk [vmem:[%s8 + $0x178] sm:$0xff] %vm7321, %v7304
  %7370 = vst.msk [vmem:[%s8 + $0x180] sm:$0xff] %vm7321, %v7305
  %7371 = vst.msk [vmem:[%s8 + $0x188] sm:$0xff] %vm7321, %v7306
  %7372 = vst.msk [vmem:[%s8 + $0x190] sm:$0xff] %vm7321, %v7307
  %7373 = vst.msk [vmem:[%s8 + $0x198] sm:$0xff] %vm7321, %v7308
  %7374 = vst.msk [vmem:[%s8 + $0x1a0] sm:$0xff] %vm7321, %v7309
  %7375 = vst.msk [vmem:[%s8 + $0x1a8] sm:$0xff] %vm7321, %v7310
  %7376 = vst.msk [vmem:[%s8 + $0x1b0] sm:$0xff] %vm7321, %v7311
  %7377 = vst.msk [vmem:[%s8 + $0x1b8] sm:$0xff] %vm7321, %v7312
  %7378 = vst.msk [vmem:[%s8 + $0x1c0] sm:$0xff] %vm7321, %v7313
  %7379 = vst.msk [vmem:[%s8 + $0x1c8] sm:$0xff] %vm7321, %v7314
  %7380 = vst.msk [vmem:[%s8 + $0x1d0] sm:$0xff] %vm7321, %v7315
  %7381 = vst.msk [vmem:[%s8 + $0x1d8] sm:$0xff] %vm7321, %v7316
  %7382 = vst.msk [vmem:[%s8 + $0x1e0] sm:$0xff] %vm7321, %v7317
  %7383 = vst.msk [vmem:[%s8 + $0x1e8] sm:$0xff] %vm7321, %v7318
  %7384 = vst.msk [vmem:[%s8 + $0x1f0] sm:$0xff] %vm7321, %v7319
  %7385 = vst.msk [vmem:[%s8 + $0x1f8] sm:$0xff] %vm7321, %v7320
  // Predicated region
  $region34: #{tpu_custom_call.1} parent=0 // pred_check
    _
  $region35: #{tpu_custom_call.1} parent=0 // pred_check_branch
    %7387 = sbr.rel (0) target = $region37
  $region36: #{tpu_custom_call.1} parent=0 // pred_region
    _
  $region37: #{tpu_custom_call.1} parent=0 // pred_fallthru
    _
  // Predicated region
  $region38: #{tpu_custom_call.1} parent=0 // pred_check
    _
  $region39: #{tpu_custom_call.1} parent=0 // pred_check_branch
    %7389 = sbr.rel (0) target = $region41
  $region40: #{tpu_custom_call.1} parent=0 // pred_region
    _
  $region41: #{tpu_custom_call.1} parent=0 // pred_fallthru
    _

</llo_original>
